<compile_context>
chip_gen: v5e
topology: v5e:2x2
jax: 0.10.0
libtpu: 0.0.40
codegen_flags: <defaults>
</compile_context>

<pallas_src>
import functools

import numpy as np
import jax
import jax.numpy as jnp
from jax.experimental import pallas as pl
from jax.experimental.pallas import tpu as pltpu

DIM = 32                 # hidden width ("dim" in NetGIN)
OUTPUT_DIM = 16          # args.OUTPUT_DIM
NUM_FEATURES = 3
NUM_GRAPHS = 2
NODES_PER_GRAPH = 16
NUM_NODES = NUM_GRAPHS * NODES_PER_GRAPH
NUM_LAYERS = 6
S2S_STEPS = 6
BN_EPS = 1e-5

_dot = functools.partial(jnp.dot, preferred_element_type=jnp.float32)


def _sigmoid(v):
    return 1.0 / (1.0 + jnp.exp(-v))


def _tanh(v):
    return 2.0 / (1.0 + jnp.exp(-2.0 * v)) - 1.0


# ------------------------------------------------------------------ fused kernel
def netgin_kernel(eps_ref,                                  # SMEM (L,2): 1+eps per (layer, edge set)
                  a1_ref, a2_ref,                           # (N, N) dense adjacencies
                  x_ref,                                    # (N, DIM) zero-padded node features
                  w1a_ref, b1a_ref, w1b_ref, b1b_ref,       # conv* first Lin+BN (BN folded)
                  w2a_ref, b2a_ref, w2b_ref, b2b_ref,       # conv* second Lin+BN
                  wm1a_ref, wm1b_ref, bm1_ref,              # mlp first Lin+BN, rows split
                  wm2_ref, bm2_ref,                         # mlp second Lin+BN
                  wg_ref, wr_ref, bg_ref,                   # LSTM per-gate (i,f,g,o) folded weights
                  hw1q_ref, hw1r_ref, hb1_ref,              # fc1, rows split over [q | r]
                  hw2_ref, hb2_ref,                         # fc4
                  o_ref):
    a1 = a1_ref[...]
    a2 = a2_ref[...]
    h = x_ref[...]

    # ---- 6 fused GIN layers, Python-unrolled, everything resident in VMEM ----
    for l in range(NUM_LAYERS):
        e1 = eps_ref[l, 0]                                  # SMEM scalar: 1 + eps_1
        e2 = eps_ref[l, 1]
        pre1 = e1 * h + _dot(a1, h)                         # (1+eps)*x + sum_{j in N(i)} x_j
        pre2 = e2 * h + _dot(a2, h)
        h1 = jnp.maximum(_dot(pre1, w1a_ref[l]) + b1a_ref[l], 0.0)
        h2 = jnp.maximum(_dot(pre2, w1b_ref[l]) + b1b_ref[l], 0.0)
        x1 = jnp.maximum(_dot(h1, w2a_ref[l]) + b2a_ref[l], 0.0)   # = F.relu(conv_1(h))
        x2 = jnp.maximum(_dot(h2, w2b_ref[l]) + b2b_ref[l], 0.0)   # = F.relu(conv_2(h))
        # mlp(concat([x1, x2])): split the first Linear's rows -> no lane concat needed
        m = jnp.maximum(_dot(x1, wm1a_ref[l]) + _dot(x2, wm1b_ref[l]) + bm1_ref[l], 0.0)
        h = jnp.maximum(_dot(m, wm2_ref[l]) + bm2_ref[l], 0.0)

    # ---- Set2Set(dim, processing_steps=6), graph-major 2D layout ----
    # segment mask: mask[g, i] = (node i belongs to graph g)
    col = jax.lax.broadcasted_iota(jnp.int32, (NUM_GRAPHS, NUM_NODES), 1)
    row = jax.lax.broadcasted_iota(jnp.int32, (NUM_GRAPHS, NUM_NODES), 0)
    seg_mask = (col >= row * NODES_PER_GRAPH) & (col < (row + 1) * NODES_PER_GRAPH)
    seg_maskf = seg_mask.astype(jnp.float32)

    hh = jnp.zeros((NUM_GRAPHS, DIM), jnp.float32)          # LSTM hidden == q half of q_star
    cc = jnp.zeros((NUM_GRAPHS, DIM), jnp.float32)          # LSTM cell state
    r = jnp.zeros((NUM_GRAPHS, DIM), jnp.float32)           # readout half of q_star
    for _ in range(S2S_STEPS):
        # LSTM cell, PyTorch gate order (i, f, g, o); input = [hh | r]
        zi = _dot(hh, wg_ref[0]) + _dot(r, wr_ref[0]) + bg_ref[0]
        zf = _dot(hh, wg_ref[1]) + _dot(r, wr_ref[1]) + bg_ref[1]
        zg = _dot(hh, wg_ref[2]) + _dot(r, wr_ref[2]) + bg_ref[2]
        zo = _dot(hh, wg_ref[3]) + _dot(r, wr_ref[3]) + bg_ref[3]
        cc = _sigmoid(zf) * cc + _sigmoid(zi) * _tanh(zg)
        hh = _sigmoid(zo) * _tanh(cc)
        # attention: e_i = <x_i, q_{batch(i)}>, segment softmax, weighted sum
        scores = _dot(hh, h.T)                              # (G, N)
        scores = jnp.where(seg_mask, scores, -1e30)
        p = jnp.exp(scores - jnp.max(scores, axis=-1, keepdims=True)) * seg_maskf
        denom = jnp.sum(p, axis=-1, keepdims=True)
        attn = p * pl.reciprocal(denom, approx=True)        # EUP slot
        r = _dot(attn, h)                                   # (G, DIM)

    # ---- head: fc4(relu(fc1(q_star))) with q_star = [hh | r] ----
    z = jnp.maximum(_dot(hh, hw1q_ref[...]) + _dot(r, hw1r_ref[...]) + hb1_ref[...], 0.0)
    o_ref[...] = _dot(z, hw2_ref[...]) + hb2_ref[...]


# ------------------------------------------------------------------ wrapper
@jax.jit
def netgin_forward(packed, x, A1, A2):
    x_pad = jnp.pad(x, ((0, 0), (0, DIM - NUM_FEATURES)))
    args = (
        packed["one_plus_eps"], A1, A2, x_pad,
        packed["w1a"], packed["b1a"], packed["w1b"], packed["b1b"],
        packed["w2a"], packed["b2a"], packed["w2b"], packed["b2b"],
        packed["wm1a"], packed["wm1b"], packed["bm1"],
        packed["wm2"], packed["bm2"],
        packed["wg"], packed["wr"], packed["bg"],
        packed["hw1q"], packed["hw1r"], packed["hb1"],
        packed["hw2"], packed["hb2"],
    )
    smem = pl.BlockSpec(memory_space=pltpu.MemorySpace.SMEM)
    vmem = pl.BlockSpec(memory_space=pltpu.MemorySpace.VMEM)
    in_specs = [smem] + [vmem] * (len(args) - 1)
    return pl.pallas_call(
        netgin_kernel,
        out_shape=jax.ShapeDtypeStruct((NUM_GRAPHS, OUTPUT_DIM), jnp.float32),
        in_specs=in_specs,
        out_specs=vmem,
    )(*args)


# ------------------------------------------------------------------ parameters
def lin_bn_params(key, fin, fout):
    """Linear(fin,fout) + BatchNorm1d(fout) (eval), BN folded to (scale, bias)."""
    ks = jax.random.split(key, 6)
    W = jax.random.normal(ks[0], (fin, fout), jnp.float32) / np.sqrt(fin)
    b = jax.random.normal(ks[1], (fout,), jnp.float32) * 0.1
    gamma = jax.random.uniform(ks[2], (fout,), jnp.float32, 0.5, 1.5)
    beta = jax.random.normal(ks[3], (fout,), jnp.float32) * 0.1
    mean = jax.random.normal(ks[4], (fout,), jnp.float32) * 0.1
    var = jax.random.uniform(ks[5], (fout,), jnp.float32, 0.5, 1.5)
    s = gamma / jnp.sqrt(var + BN_EPS)
    return W, s.reshape(1, fout), (beta + (b - mean) * s).reshape(1, fout)


def make_params(key):
    """Raw parameters mirroring the PyTorch NetGIN module (weights as (in,out))."""
    keys = jax.random.split(key, NUM_LAYERS * 3 + 2)

    def conv(k, fi):
        ka, kb = jax.random.split(k)
        w1, s1, b1 = lin_bn_params(ka, fi, DIM)
        w2, s2, b2 = lin_bn_params(kb, DIM, DIM)
        return dict(w1=w1, s1=s1, b1=b1, w2=w2, s2=s2, b2=b2,
                    eps=jnp.float32(0.0))                   # GINConv(train_eps=True) init

    def mlp(k):
        ka, kb = jax.random.split(k)
        w1, s1, b1 = lin_bn_params(ka, 2 * DIM, DIM)
        w2, s2, b2 = lin_bn_params(kb, DIM, DIM)
        return dict(w1=w1, s1=s1, b1=b1, w2=w2, s2=s2, b2=b2)

    layers = []
    fin = NUM_FEATURES
    for l in range(NUM_LAYERS):
        k1, k2, k3 = keys[3 * l: 3 * l + 3]
        layers.append(dict(conv1=conv(k1, fin), conv2=conv(k2, fin), mlp=mlp(k3)))
        fin = DIM

    kl = jax.random.split(keys[-2], 4)
    sc = 1.0 / np.sqrt(DIM)
    lstm = dict(
        w_ih=jax.random.uniform(kl[0], (4 * DIM, 2 * DIM), jnp.float32, -sc, sc),
        w_hh=jax.random.uniform(kl[1], (4 * DIM, DIM), jnp.float32, -sc, sc),
        b_ih=jax.random.uniform(kl[2], (4 * DIM,), jnp.float32, -sc, sc),
        b_hh=jax.random.uniform(kl[3], (4 * DIM,), jnp.float32, -sc, sc),
    )
    kh = jax.random.split(keys[-1], 4)
    head = dict(
        w1=jax.random.normal(kh[0], (2 * DIM, DIM), jnp.float32) / np.sqrt(2 * DIM),
        b1=jax.random.normal(kh[1], (DIM,), jnp.float32) * 0.1,
        w2=jax.random.normal(kh[2], (DIM, OUTPUT_DIM), jnp.float32) / np.sqrt(DIM),
        b2=jax.random.normal(kh[3], (OUTPUT_DIM,), jnp.float32) * 0.1,
    )
    return dict(layers=layers, lstm=lstm, head=head)


def pack_params(p):
    """Fold BN scales into weights, split concat-matmuls, stack per-layer params."""
    def fold(w, s):
        return (w * s).astype(jnp.float32)                  # scale output columns

    w1a, b1a, w1b, b1b = [], [], [], []
    w2a, b2a, w2b, b2b = [], [], [], []
    wm1a, wm1b, bm1, wm2, bm2 = [], [], [], [], []
    one_plus_eps = []
    for lp in p["layers"]:
        c1, c2, m = lp["conv1"], lp["conv2"], lp["mlp"]
        pad = DIM - c1["w1"].shape[0]                       # layer 0: 3 -> DIM zero rows
        w1a.append(jnp.pad(fold(c1["w1"], c1["s1"]), ((0, pad), (0, 0))))
        w1b.append(jnp.pad(fold(c2["w1"], c2["s1"]), ((0, pad), (0, 0))))
        b1a.append(c1["b1"]); b1b.append(c2["b1"])
        w2a.append(fold(c1["w2"], c1["s2"])); b2a.append(c1["b2"])
        w2b.append(fold(c2["w2"], c2["s2"])); b2b.append(c2["b2"])
        wm1 = fold(m["w1"], m["s1"])                        # (2*DIM, DIM)
        wm1a.append(wm1[:DIM]); wm1b.append(wm1[DIM:]); bm1.append(m["b1"])
        wm2.append(fold(m["w2"], m["s2"])); bm2.append(m["b2"])
        one_plus_eps.append(jnp.stack([1.0 + c1["eps"], 1.0 + c2["eps"]]))

    lstm = p["lstm"]
    wg, wr, bg = [], [], []
    for k in range(4):                                      # PyTorch gate order i, f, g, o
        rows = slice(k * DIM, (k + 1) * DIM)
        wih_q = lstm["w_ih"][rows, :DIM].T                  # acts on q half of q_star (== hh)
        wih_r = lstm["w_ih"][rows, DIM:].T                  # acts on r half
        whh = lstm["w_hh"][rows, :].T
        wg.append(wih_q + whh)                              # fold: q half of input == hidden
        wr.append(wih_r)
        bg.append((lstm["b_ih"][rows] + lstm["b_hh"][rows]).reshape(1, DIM))

    head = p["head"]
    return dict(
        one_plus_eps=jnp.stack(one_plus_eps).astype(jnp.float32),   # (L, 2) -> SMEM
        w1a=jnp.stack(w1a), b1a=jnp.stack(b1a),
        w1b=jnp.stack(w1b), b1b=jnp.stack(b1b),
        w2a=jnp.stack(w2a), b2a=jnp.stack(b2a),
        w2b=jnp.stack(w2b), b2b=jnp.stack(b2b),
        wm1a=jnp.stack(wm1a), wm1b=jnp.stack(wm1b), bm1=jnp.stack(bm1),
        wm2=jnp.stack(wm2), bm2=jnp.stack(bm2),
        wg=jnp.stack(wg), wr=jnp.stack(wr), bg=jnp.stack(bg),
        hw1q=head["w1"][:DIM], hw1r=head["w1"][DIM:],
        hb1=head["b1"].reshape(1, DIM),
        hw2=head["w2"], hb2=head["b2"].reshape(1, OUTPUT_DIM),
    )


# ------------------------------------------------------------------ pure-JAX reference
def reference_forward(p, x, A1, A2):
    def lbr(h, w, s, b):
        return jnp.maximum((h @ w) * s + b, 0.0)

    def gin(A, h, c):
        z = (1.0 + c["eps"]) * h + A @ h
        return lbr(lbr(z, c["w1"], c["s1"], c["b1"]), c["w2"], c["s2"], c["b2"])

    h = x
    for lp in p["layers"]:
        x1 = jnp.maximum(gin(A1, h, lp["conv1"]), 0.0)      # outer F.relu (idempotent)
        x2 = jnp.maximum(gin(A2, h, lp["conv2"]), 0.0)
        m = lp["mlp"]
        cat = jnp.concatenate([x1, x2], axis=-1)
        h = lbr(lbr(cat, m["w1"], m["s1"], m["b1"]), m["w2"], m["s2"], m["b2"])

    lstm = p["lstm"]
    h3 = h.reshape(NUM_GRAPHS, NODES_PER_GRAPH, DIM)
    q_star = jnp.zeros((NUM_GRAPHS, 2 * DIM), jnp.float32)
    hh = jnp.zeros((NUM_GRAPHS, DIM), jnp.float32)
    cc = jnp.zeros((NUM_GRAPHS, DIM), jnp.float32)
    for _ in range(S2S_STEPS):
        z = (q_star @ lstm["w_ih"].T + lstm["b_ih"]
             + hh @ lstm["w_hh"].T + lstm["b_hh"])
        i, f, g, o = jnp.split(z, 4, axis=-1)
        cc = jax.nn.sigmoid(f) * cc + jax.nn.sigmoid(i) * jnp.tanh(g)
        hh = jax.nn.sigmoid(o) * jnp.tanh(cc)
        e = jnp.einsum("gnd,gd->gn", h3, hh)
        a = jax.nn.softmax(e, axis=-1)
        r = jnp.einsum("gn,gnd->gd", a, h3)
        q_star = jnp.concatenate([hh, r], axis=-1)

    head = p["head"]
    z = jnp.maximum(q_star @ head["w1"] + head["b1"], 0.0)
    return z @ head["w2"] + head["b2"]


# ------------------------------------------------------------------ data
def make_adjacency(key, num_graphs, nodes_per_graph, p=0.3):
    nb = num_graphs * nodes_per_graph
    r = jax.random.uniform(key, (nb, nb), jnp.float32)
    A = (r < p).astype(jnp.float32)
    A = jnp.maximum(A, A.T)                                 # undirected
    A = A * (1.0 - jnp.eye(nb, dtype=jnp.float32))
    gids = jnp.arange(nb) // nodes_per_graph                # block-diagonal batch
    block = (gids[:, None] == gids[None, :]).astype(jnp.float32)
    return A * block


if __name__ == "__main__":
    key = jax.random.PRNGKey(0)
    kp, kx, ka1, ka2 = jax.random.split(key, 4)

    raw = make_params(kp)
    packed = pack_params(raw)
    x = jax.random.uniform(kx, (NUM_NODES, NUM_FEATURES), jnp.float32)  # data.x
    A1 = make_adjacency(ka1, NUM_GRAPHS, NODES_PER_GRAPH, p=0.30)       # edge_index_1
    A2 = make_adjacency(ka2, NUM_GRAPHS, NODES_PER_GRAPH, p=0.45)       # edge_index_2

    out = jax.block_until_ready(netgin_forward(packed, x, A1, A2))
    assert out.shape == (NUM_GRAPHS, OUTPUT_DIM)
    assert bool(jnp.all(jnp.isfinite(out)))

    ref = jax.block_until_ready(jax.jit(reference_forward)(raw, x, A1, A2))
    np.testing.assert_allclose(np.asarray(out), np.asarray(ref), rtol=1e-1, atol=1e-1)

    print("KERNEL_OK")
</pallas_src>

<mosaic_0001>
module attributes {stable_mosaic.version = 11 : i64} {
  func.func @netgin_kernel(%arg0: memref<6x2xf32, #tpu.memory_space<smem>>, %arg1: memref<32x32xf32, #tpu.memory_space<vmem>>, %arg2: memref<32x32xf32, #tpu.memory_space<vmem>>, %arg3: memref<32x32xf32, #tpu.memory_space<vmem>>, %arg4: memref<6x32x32xf32, #tpu.memory_space<vmem>>, %arg5: memref<6x1x32xf32, #tpu.memory_space<vmem>>, %arg6: memref<6x32x32xf32, #tpu.memory_space<vmem>>, %arg7: memref<6x1x32xf32, #tpu.memory_space<vmem>>, %arg8: memref<6x32x32xf32, #tpu.memory_space<vmem>>, %arg9: memref<6x1x32xf32, #tpu.memory_space<vmem>>, %arg10: memref<6x32x32xf32, #tpu.memory_space<vmem>>, %arg11: memref<6x1x32xf32, #tpu.memory_space<vmem>>, %arg12: memref<6x32x32xf32, #tpu.memory_space<vmem>>, %arg13: memref<6x32x32xf32, #tpu.memory_space<vmem>>, %arg14: memref<6x1x32xf32, #tpu.memory_space<vmem>>, %arg15: memref<6x32x32xf32, #tpu.memory_space<vmem>>, %arg16: memref<6x1x32xf32, #tpu.memory_space<vmem>>, %arg17: memref<4x32x32xf32, #tpu.memory_space<vmem>>, %arg18: memref<4x32x32xf32, #tpu.memory_space<vmem>>, %arg19: memref<4x1x32xf32, #tpu.memory_space<vmem>>, %arg20: memref<32x32xf32, #tpu.memory_space<vmem>>, %arg21: memref<32x32xf32, #tpu.memory_space<vmem>>, %arg22: memref<1x32xf32, #tpu.memory_space<vmem>>, %arg23: memref<32x16xf32, #tpu.memory_space<vmem>>, %arg24: memref<1x16xf32, #tpu.memory_space<vmem>>, %arg25: memref<2x16xf32, #tpu.memory_space<vmem>>) attributes {dimension_semantics = [], scalar_prefetch = 0 : i64, scratch_operands = 0 : i64, tpu.core_type = #tpu.core_type<tc>} {
    %c0 = arith.constant 0 : index
    %c0_0 = arith.constant 0 : index
    %0 = vector.load %arg1[%c0, %c0_0] : memref<32x32xf32, #tpu.memory_space<vmem>>, vector<32x32xf32>
    %c0_1 = arith.constant 0 : index
    %c0_2 = arith.constant 0 : index
    %1 = vector.load %arg2[%c0_1, %c0_2] : memref<32x32xf32, #tpu.memory_space<vmem>>, vector<32x32xf32>
    %c0_3 = arith.constant 0 : index
    %c0_4 = arith.constant 0 : index
    %2 = vector.load %arg3[%c0_3, %c0_4] : memref<32x32xf32, #tpu.memory_space<vmem>>, vector<32x32xf32>
    %c0_5 = arith.constant 0 : index
    %c0_6 = arith.constant 0 : index
    %3 = memref.load %arg0[%c0_5, %c0_6] : memref<6x2xf32, #tpu.memory_space<smem>>
    %c0_7 = arith.constant 0 : index
    %c1 = arith.constant 1 : index
    %4 = memref.load %arg0[%c0_7, %c1] : memref<6x2xf32, #tpu.memory_space<smem>>
    %5 = vector.broadcast %3 : f32 to vector<32x32xf32>
    %6 = arith.mulf %5, %2 : vector<32x32xf32>
    %cst = arith.constant dense<0.000000e+00> : vector<32x32xf32>
    %7 = tpu.matmul %0, %2, %cst {dimension_numbers = #tpu.dot_dimension_numbers<[1], [0], [0], [1], [0, 0, 1, 1], [], []>} : vector<32x32xf32>, vector<32x32xf32>, vector<32x32xf32> -> vector<32x32xf32>
    %8 = arith.addf %6, %7 : vector<32x32xf32>
    %9 = vector.broadcast %4 : f32 to vector<32x32xf32>
    %10 = arith.mulf %9, %2 : vector<32x32xf32>
    %cst_8 = arith.constant dense<0.000000e+00> : vector<32x32xf32>
    %11 = tpu.matmul %1, %2, %cst_8 {dimension_numbers = #tpu.dot_dimension_numbers<[1], [0], [0], [1], [0, 0, 1, 1], [], []>} : vector<32x32xf32>, vector<32x32xf32>, vector<32x32xf32> -> vector<32x32xf32>
    %12 = arith.addf %10, %11 : vector<32x32xf32>
    %c0_9 = arith.constant 0 : index
    %c0_10 = arith.constant 0 : index
    %c0_11 = arith.constant 0 : index
    %13 = vector.load %arg4[%c0_9, %c0_10, %c0_11] : memref<6x32x32xf32, #tpu.memory_space<vmem>>, vector<1x32x32xf32>
    %14 = vector.shape_cast %13 : vector<1x32x32xf32> to vector<32x32xf32>
    %cst_12 = arith.constant dense<0.000000e+00> : vector<32x32xf32>
    %15 = tpu.matmul %8, %14, %cst_12 {dimension_numbers = #tpu.dot_dimension_numbers<[1], [0], [0], [1], [0, 0, 1, 1], [], []>} : vector<32x32xf32>, vector<32x32xf32>, vector<32x32xf32> -> vector<32x32xf32>
    %c0_13 = arith.constant 0 : index
    %c0_14 = arith.constant 0 : index
    %c0_15 = arith.constant 0 : index
    %16 = vector.load %arg5[%c0_13, %c0_14, %c0_15] : memref<6x1x32xf32, #tpu.memory_space<vmem>>, vector<1x1x32xf32>
    %17 = vector.shape_cast %16 : vector<1x1x32xf32> to vector<1x32xf32>
    %18 = vector.broadcast %17 : vector<1x32xf32> to vector<32x32xf32>
    %19 = arith.addf %15, %18 : vector<32x32xf32>
    %cst_16 = arith.constant 0.000000e+00 : f32
    %20 = vector.broadcast %cst_16 : f32 to vector<32x32xf32>
    %21 = arith.maximumf %19, %20 : vector<32x32xf32>
    %c0_17 = arith.constant 0 : index
    %c0_18 = arith.constant 0 : index
    %c0_19 = arith.constant 0 : index
    %22 = vector.load %arg6[%c0_17, %c0_18, %c0_19] : memref<6x32x32xf32, #tpu.memory_space<vmem>>, vector<1x32x32xf32>
    %23 = vector.shape_cast %22 : vector<1x32x32xf32> to vector<32x32xf32>
    %cst_20 = arith.constant dense<0.000000e+00> : vector<32x32xf32>
    %24 = tpu.matmul %12, %23, %cst_20 {dimension_numbers = #tpu.dot_dimension_numbers<[1], [0], [0], [1], [0, 0, 1, 1], [], []>} : vector<32x32xf32>, vector<32x32xf32>, vector<32x32xf32> -> vector<32x32xf32>
    %c0_21 = arith.constant 0 : index
    %c0_22 = arith.constant 0 : index
    %c0_23 = arith.constant 0 : index
    %25 = vector.load %arg7[%c0_21, %c0_22, %c0_23] : memref<6x1x32xf32, #tpu.memory_space<vmem>>, vector<1x1x32xf32>
    %26 = vector.shape_cast %25 : vector<1x1x32xf32> to vector<1x32xf32>
    %27 = vector.broadcast %26 : vector<1x32xf32> to vector<32x32xf32>
    %28 = arith.addf %24, %27 : vector<32x32xf32>
    %cst_24 = arith.constant 0.000000e+00 : f32
    %29 = vector.broadcast %cst_24 : f32 to vector<32x32xf32>
    %30 = arith.maximumf %28, %29 : vector<32x32xf32>
    %c0_25 = arith.constant 0 : index
    %c0_26 = arith.constant 0 : index
    %c0_27 = arith.constant 0 : index
    %31 = vector.load %arg8[%c0_25, %c0_26, %c0_27] : memref<6x32x32xf32, #tpu.memory_space<vmem>>, vector<1x32x32xf32>
    %32 = vector.shape_cast %31 : vector<1x32x32xf32> to vector<32x32xf32>
    %cst_28 = arith.constant dense<0.000000e+00> : vector<32x32xf32>
    %33 = tpu.matmul %21, %32, %cst_28 {dimension_numbers = #tpu.dot_dimension_numbers<[1], [0], [0], [1], [0, 0, 1, 1], [], []>} : vector<32x32xf32>, vector<32x32xf32>, vector<32x32xf32> -> vector<32x32xf32>
    %c0_29 = arith.constant 0 : index
    %c0_30 = arith.constant 0 : index
    %c0_31 = arith.constant 0 : index
    %34 = vector.load %arg9[%c0_29, %c0_30, %c0_31] : memref<6x1x32xf32, #tpu.memory_space<vmem>>, vector<1x1x32xf32>
    %35 = vector.shape_cast %34 : vector<1x1x32xf32> to vector<1x32xf32>
    %36 = vector.broadcast %35 : vector<1x32xf32> to vector<32x32xf32>
    %37 = arith.addf %33, %36 : vector<32x32xf32>
    %cst_32 = arith.constant 0.000000e+00 : f32
    %38 = vector.broadcast %cst_32 : f32 to vector<32x32xf32>
    %39 = arith.maximumf %37, %38 : vector<32x32xf32>
    %c0_33 = arith.constant 0 : index
    %c0_34 = arith.constant 0 : index
    %c0_35 = arith.constant 0 : index
    %40 = vector.load %arg10[%c0_33, %c0_34, %c0_35] : memref<6x32x32xf32, #tpu.memory_space<vmem>>, vector<1x32x32xf32>
    %41 = vector.shape_cast %40 : vector<1x32x32xf32> to vector<32x32xf32>
    %cst_36 = arith.constant dense<0.000000e+00> : vector<32x32xf32>
    %42 = tpu.matmul %30, %41, %cst_36 {dimension_numbers = #tpu.dot_dimension_numbers<[1], [0], [0], [1], [0, 0, 1, 1], [], []>} : vector<32x32xf32>, vector<32x32xf32>, vector<32x32xf32> -> vector<32x32xf32>
    %c0_37 = arith.constant 0 : index
    %c0_38 = arith.constant 0 : index
    %c0_39 = arith.constant 0 : index
    %43 = vector.load %arg11[%c0_37, %c0_38, %c0_39] : memref<6x1x32xf32, #tpu.memory_space<vmem>>, vector<1x1x32xf32>
    %44 = vector.shape_cast %43 : vector<1x1x32xf32> to vector<1x32xf32>
    %45 = vector.broadcast %44 : vector<1x32xf32> to vector<32x32xf32>
    %46 = arith.addf %42, %45 : vector<32x32xf32>
    %cst_40 = arith.constant 0.000000e+00 : f32
    %47 = vector.broadcast %cst_40 : f32 to vector<32x32xf32>
    %48 = arith.maximumf %46, %47 : vector<32x32xf32>
    %c0_41 = arith.constant 0 : index
    %c0_42 = arith.constant 0 : index
    %c0_43 = arith.constant 0 : index
    %49 = vector.load %arg12[%c0_41, %c0_42, %c0_43] : memref<6x32x32xf32, #tpu.memory_space<vmem>>, vector<1x32x32xf32>
    %50 = vector.shape_cast %49 : vector<1x32x32xf32> to vector<32x32xf32>
    %cst_44 = arith.constant dense<0.000000e+00> : vector<32x32xf32>
    %51 = tpu.matmul %39, %50, %cst_44 {dimension_numbers = #tpu.dot_dimension_numbers<[1], [0], [0], [1], [0, 0, 1, 1], [], []>} : vector<32x32xf32>, vector<32x32xf32>, vector<32x32xf32> -> vector<32x32xf32>
    %c0_45 = arith.constant 0 : index
    %c0_46 = arith.constant 0 : index
    %c0_47 = arith.constant 0 : index
    %52 = vector.load %arg13[%c0_45, %c0_46, %c0_47] : memref<6x32x32xf32, #tpu.memory_space<vmem>>, vector<1x32x32xf32>
    %53 = vector.shape_cast %52 : vector<1x32x32xf32> to vector<32x32xf32>
    %cst_48 = arith.constant dense<0.000000e+00> : vector<32x32xf32>
    %54 = tpu.matmul %48, %53, %cst_48 {dimension_numbers = #tpu.dot_dimension_numbers<[1], [0], [0], [1], [0, 0, 1, 1], [], []>} : vector<32x32xf32>, vector<32x32xf32>, vector<32x32xf32> -> vector<32x32xf32>
    %55 = arith.addf %51, %54 : vector<32x32xf32>
    %c0_49 = arith.constant 0 : index
    %c0_50 = arith.constant 0 : index
    %c0_51 = arith.constant 0 : index
    %56 = vector.load %arg14[%c0_49, %c0_50, %c0_51] : memref<6x1x32xf32, #tpu.memory_space<vmem>>, vector<1x1x32xf32>
    %57 = vector.shape_cast %56 : vector<1x1x32xf32> to vector<1x32xf32>
    %58 = vector.broadcast %57 : vector<1x32xf32> to vector<32x32xf32>
    %59 = arith.addf %55, %58 : vector<32x32xf32>
    %cst_52 = arith.constant 0.000000e+00 : f32
    %60 = vector.broadcast %cst_52 : f32 to vector<32x32xf32>
    %61 = arith.maximumf %59, %60 : vector<32x32xf32>
    %c0_53 = arith.constant 0 : index
    %c0_54 = arith.constant 0 : index
    %c0_55 = arith.constant 0 : index
    %62 = vector.load %arg15[%c0_53, %c0_54, %c0_55] : memref<6x32x32xf32, #tpu.memory_space<vmem>>, vector<1x32x32xf32>
    %63 = vector.shape_cast %62 : vector<1x32x32xf32> to vector<32x32xf32>
    %cst_56 = arith.constant dense<0.000000e+00> : vector<32x32xf32>
    %64 = tpu.matmul %61, %63, %cst_56 {dimension_numbers = #tpu.dot_dimension_numbers<[1], [0], [0], [1], [0, 0, 1, 1], [], []>} : vector<32x32xf32>, vector<32x32xf32>, vector<32x32xf32> -> vector<32x32xf32>
    %c0_57 = arith.constant 0 : index
    %c0_58 = arith.constant 0 : index
    %c0_59 = arith.constant 0 : index
    %65 = vector.load %arg16[%c0_57, %c0_58, %c0_59] : memref<6x1x32xf32, #tpu.memory_space<vmem>>, vector<1x1x32xf32>
    %66 = vector.shape_cast %65 : vector<1x1x32xf32> to vector<1x32xf32>
    %67 = vector.broadcast %66 : vector<1x32xf32> to vector<32x32xf32>
    %68 = arith.addf %64, %67 : vector<32x32xf32>
    %cst_60 = arith.constant 0.000000e+00 : f32
    %69 = vector.broadcast %cst_60 : f32 to vector<32x32xf32>
    %70 = arith.maximumf %68, %69 : vector<32x32xf32>
    %c1_61 = arith.constant 1 : index
    %c0_62 = arith.constant 0 : index
    %71 = memref.load %arg0[%c1_61, %c0_62] : memref<6x2xf32, #tpu.memory_space<smem>>
    %c1_63 = arith.constant 1 : index
    %c1_64 = arith.constant 1 : index
    %72 = memref.load %arg0[%c1_63, %c1_64] : memref<6x2xf32, #tpu.memory_space<smem>>
    %73 = vector.broadcast %71 : f32 to vector<32x32xf32>
    %74 = arith.mulf %73, %70 : vector<32x32xf32>
    %cst_65 = arith.constant dense<0.000000e+00> : vector<32x32xf32>
    %75 = tpu.matmul %0, %70, %cst_65 {dimension_numbers = #tpu.dot_dimension_numbers<[1], [0], [0], [1], [0, 0, 1, 1], [], []>} : vector<32x32xf32>, vector<32x32xf32>, vector<32x32xf32> -> vector<32x32xf32>
    %76 = arith.addf %74, %75 : vector<32x32xf32>
    %77 = vector.broadcast %72 : f32 to vector<32x32xf32>
    %78 = arith.mulf %77, %70 : vector<32x32xf32>
    %cst_66 = arith.constant dense<0.000000e+00> : vector<32x32xf32>
    %79 = tpu.matmul %1, %70, %cst_66 {dimension_numbers = #tpu.dot_dimension_numbers<[1], [0], [0], [1], [0, 0, 1, 1], [], []>} : vector<32x32xf32>, vector<32x32xf32>, vector<32x32xf32> -> vector<32x32xf32>
    %80 = arith.addf %78, %79 : vector<32x32xf32>
    %c1_67 = arith.constant 1 : index
    %c0_68 = arith.constant 0 : index
    %c0_69 = arith.constant 0 : index
    %81 = vector.load %arg4[%c1_67, %c0_68, %c0_69] : memref<6x32x32xf32, #tpu.memory_space<vmem>>, vector<1x32x32xf32>
    %82 = vector.shape_cast %81 : vector<1x32x32xf32> to vector<32x32xf32>
    %cst_70 = arith.constant dense<0.000000e+00> : vector<32x32xf32>
    %83 = tpu.matmul %76, %82, %cst_70 {dimension_numbers = #tpu.dot_dimension_numbers<[1], [0], [0], [1], [0, 0, 1, 1], [], []>} : vector<32x32xf32>, vector<32x32xf32>, vector<32x32xf32> -> vector<32x32xf32>
    %c1_71 = arith.constant 1 : index
    %c0_72 = arith.constant 0 : index
    %c0_73 = arith.constant 0 : index
    %84 = vector.load %arg5[%c1_71, %c0_72, %c0_73] : memref<6x1x32xf32, #tpu.memory_space<vmem>>, vector<1x1x32xf32>
    %85 = vector.shape_cast %84 : vector<1x1x32xf32> to vector<1x32xf32>
    %86 = vector.broadcast %85 : vector<1x32xf32> to vector<32x32xf32>
    %87 = arith.addf %83, %86 : vector<32x32xf32>
    %cst_74 = arith.constant 0.000000e+00 : f32
    %88 = vector.broadcast %cst_74 : f32 to vector<32x32xf32>
    %89 = arith.maximumf %87, %88 : vector<32x32xf32>
    %c1_75 = arith.constant 1 : index
    %c0_76 = arith.constant 0 : index
    %c0_77 = arith.constant 0 : index
    %90 = vector.load %arg6[%c1_75, %c0_76, %c0_77] : memref<6x32x32xf32, #tpu.memory_space<vmem>>, vector<1x32x32xf32>
    %91 = vector.shape_cast %90 : vector<1x32x32xf32> to vector<32x32xf32>
    %cst_78 = arith.constant dense<0.000000e+00> : vector<32x32xf32>
    %92 = tpu.matmul %80, %91, %cst_78 {dimension_numbers = #tpu.dot_dimension_numbers<[1], [0], [0], [1], [0, 0, 1, 1], [], []>} : vector<32x32xf32>, vector<32x32xf32>, vector<32x32xf32> -> vector<32x32xf32>
    %c1_79 = arith.constant 1 : index
    %c0_80 = arith.constant 0 : index
    %c0_81 = arith.constant 0 : index
    %93 = vector.load %arg7[%c1_79, %c0_80, %c0_81] : memref<6x1x32xf32, #tpu.memory_space<vmem>>, vector<1x1x32xf32>
    %94 = vector.shape_cast %93 : vector<1x1x32xf32> to vector<1x32xf32>
    %95 = vector.broadcast %94 : vector<1x32xf32> to vector<32x32xf32>
    %96 = arith.addf %92, %95 : vector<32x32xf32>
    %cst_82 = arith.constant 0.000000e+00 : f32
    %97 = vector.broadcast %cst_82 : f32 to vector<32x32xf32>
    %98 = arith.maximumf %96, %97 : vector<32x32xf32>
    %c1_83 = arith.constant 1 : index
    %c0_84 = arith.constant 0 : index
    %c0_85 = arith.constant 0 : index
    %99 = vector.load %arg8[%c1_83, %c0_84, %c0_85] : memref<6x32x32xf32, #tpu.memory_space<vmem>>, vector<1x32x32xf32>
    %100 = vector.shape_cast %99 : vector<1x32x32xf32> to vector<32x32xf32>
    %cst_86 = arith.constant dense<0.000000e+00> : vector<32x32xf32>
    %101 = tpu.matmul %89, %100, %cst_86 {dimension_numbers = #tpu.dot_dimension_numbers<[1], [0], [0], [1], [0, 0, 1, 1], [], []>} : vector<32x32xf32>, vector<32x32xf32>, vector<32x32xf32> -> vector<32x32xf32>
    %c1_87 = arith.constant 1 : index
    %c0_88 = arith.constant 0 : index
    %c0_89 = arith.constant 0 : index
    %102 = vector.load %arg9[%c1_87, %c0_88, %c0_89] : memref<6x1x32xf32, #tpu.memory_space<vmem>>, vector<1x1x32xf32>
    %103 = vector.shape_cast %102 : vector<1x1x32xf32> to vector<1x32xf32>
    %104 = vector.broadcast %103 : vector<1x32xf32> to vector<32x32xf32>
    %105 = arith.addf %101, %104 : vector<32x32xf32>
    %cst_90 = arith.constant 0.000000e+00 : f32
    %106 = vector.broadcast %cst_90 : f32 to vector<32x32xf32>
    %107 = arith.maximumf %105, %106 : vector<32x32xf32>
    %c1_91 = arith.constant 1 : index
    %c0_92 = arith.constant 0 : index
    %c0_93 = arith.constant 0 : index
    %108 = vector.load %arg10[%c1_91, %c0_92, %c0_93] : memref<6x32x32xf32, #tpu.memory_space<vmem>>, vector<1x32x32xf32>
    %109 = vector.shape_cast %108 : vector<1x32x32xf32> to vector<32x32xf32>
    %cst_94 = arith.constant dense<0.000000e+00> : vector<32x32xf32>
    %110 = tpu.matmul %98, %109, %cst_94 {dimension_numbers = #tpu.dot_dimension_numbers<[1], [0], [0], [1], [0, 0, 1, 1], [], []>} : vector<32x32xf32>, vector<32x32xf32>, vector<32x32xf32> -> vector<32x32xf32>
    %c1_95 = arith.constant 1 : index
    %c0_96 = arith.constant 0 : index
    %c0_97 = arith.constant 0 : index
    %111 = vector.load %arg11[%c1_95, %c0_96, %c0_97] : memref<6x1x32xf32, #tpu.memory_space<vmem>>, vector<1x1x32xf32>
    %112 = vector.shape_cast %111 : vector<1x1x32xf32> to vector<1x32xf32>
    %113 = vector.broadcast %112 : vector<1x32xf32> to vector<32x32xf32>
    %114 = arith.addf %110, %113 : vector<32x32xf32>
    %cst_98 = arith.constant 0.000000e+00 : f32
    %115 = vector.broadcast %cst_98 : f32 to vector<32x32xf32>
    %116 = arith.maximumf %114, %115 : vector<32x32xf32>
    %c1_99 = arith.constant 1 : index
    %c0_100 = arith.constant 0 : index
    %c0_101 = arith.constant 0 : index
    %117 = vector.load %arg12[%c1_99, %c0_100, %c0_101] : memref<6x32x32xf32, #tpu.memory_space<vmem>>, vector<1x32x32xf32>
    %118 = vector.shape_cast %117 : vector<1x32x32xf32> to vector<32x32xf32>
    %cst_102 = arith.constant dense<0.000000e+00> : vector<32x32xf32>
    %119 = tpu.matmul %107, %118, %cst_102 {dimension_numbers = #tpu.dot_dimension_numbers<[1], [0], [0], [1], [0, 0, 1, 1], [], []>} : vector<32x32xf32>, vector<32x32xf32>, vector<32x32xf32> -> vector<32x32xf32>
    %c1_103 = arith.constant 1 : index
    %c0_104 = arith.constant 0 : index
    %c0_105 = arith.constant 0 : index
    %120 = vector.load %arg13[%c1_103, %c0_104, %c0_105] : memref<6x32x32xf32, #tpu.memory_space<vmem>>, vector<1x32x32xf32>
    %121 = vector.shape_cast %120 : vector<1x32x32xf32> to vector<32x32xf32>
    %cst_106 = arith.constant dense<0.000000e+00> : vector<32x32xf32>
    %122 = tpu.matmul %116, %121, %cst_106 {dimension_numbers = #tpu.dot_dimension_numbers<[1], [0], [0], [1], [0, 0, 1, 1], [], []>} : vector<32x32xf32>, vector<32x32xf32>, vector<32x32xf32> -> vector<32x32xf32>
    %123 = arith.addf %119, %122 : vector<32x32xf32>
    %c1_107 = arith.constant 1 : index
    %c0_108 = arith.constant 0 : index
    %c0_109 = arith.constant 0 : index
    %124 = vector.load %arg14[%c1_107, %c0_108, %c0_109] : memref<6x1x32xf32, #tpu.memory_space<vmem>>, vector<1x1x32xf32>
    %125 = vector.shape_cast %124 : vector<1x1x32xf32> to vector<1x32xf32>
    %126 = vector.broadcast %125 : vector<1x32xf32> to vector<32x32xf32>
    %127 = arith.addf %123, %126 : vector<32x32xf32>
    %cst_110 = arith.constant 0.000000e+00 : f32
    %128 = vector.broadcast %cst_110 : f32 to vector<32x32xf32>
    %129 = arith.maximumf %127, %128 : vector<32x32xf32>
    %c1_111 = arith.constant 1 : index
    %c0_112 = arith.constant 0 : index
    %c0_113 = arith.constant 0 : index
    %130 = vector.load %arg15[%c1_111, %c0_112, %c0_113] : memref<6x32x32xf32, #tpu.memory_space<vmem>>, vector<1x32x32xf32>
    %131 = vector.shape_cast %130 : vector<1x32x32xf32> to vector<32x32xf32>
    %cst_114 = arith.constant dense<0.000000e+00> : vector<32x32xf32>
    %132 = tpu.matmul %129, %131, %cst_114 {dimension_numbers = #tpu.dot_dimension_numbers<[1], [0], [0], [1], [0, 0, 1, 1], [], []>} : vector<32x32xf32>, vector<32x32xf32>, vector<32x32xf32> -> vector<32x32xf32>
    %c1_115 = arith.constant 1 : index
    %c0_116 = arith.constant 0 : index
    %c0_117 = arith.constant 0 : index
    %133 = vector.load %arg16[%c1_115, %c0_116, %c0_117] : memref<6x1x32xf32, #tpu.memory_space<vmem>>, vector<1x1x32xf32>
    %134 = vector.shape_cast %133 : vector<1x1x32xf32> to vector<1x32xf32>
    %135 = vector.broadcast %134 : vector<1x32xf32> to vector<32x32xf32>
    %136 = arith.addf %132, %135 : vector<32x32xf32>
    %cst_118 = arith.constant 0.000000e+00 : f32
    %137 = vector.broadcast %cst_118 : f32 to vector<32x32xf32>
    %138 = arith.maximumf %136, %137 : vector<32x32xf32>
    %c2 = arith.constant 2 : index
    %c0_119 = arith.constant 0 : index
    %139 = memref.load %arg0[%c2, %c0_119] : memref<6x2xf32, #tpu.memory_space<smem>>
    %c2_120 = arith.constant 2 : index
    %c1_121 = arith.constant 1 : index
    %140 = memref.load %arg0[%c2_120, %c1_121] : memref<6x2xf32, #tpu.memory_space<smem>>
    %141 = vector.broadcast %139 : f32 to vector<32x32xf32>
    %142 = arith.mulf %141, %138 : vector<32x32xf32>
    %cst_122 = arith.constant dense<0.000000e+00> : vector<32x32xf32>
    %143 = tpu.matmul %0, %138, %cst_122 {dimension_numbers = #tpu.dot_dimension_numbers<[1], [0], [0], [1], [0, 0, 1, 1], [], []>} : vector<32x32xf32>, vector<32x32xf32>, vector<32x32xf32> -> vector<32x32xf32>
    %144 = arith.addf %142, %143 : vector<32x32xf32>
    %145 = vector.broadcast %140 : f32 to vector<32x32xf32>
    %146 = arith.mulf %145, %138 : vector<32x32xf32>
    %cst_123 = arith.constant dense<0.000000e+00> : vector<32x32xf32>
    %147 = tpu.matmul %1, %138, %cst_123 {dimension_numbers = #tpu.dot_dimension_numbers<[1], [0], [0], [1], [0, 0, 1, 1], [], []>} : vector<32x32xf32>, vector<32x32xf32>, vector<32x32xf32> -> vector<32x32xf32>
    %148 = arith.addf %146, %147 : vector<32x32xf32>
    %c2_124 = arith.constant 2 : index
    %c0_125 = arith.constant 0 : index
    %c0_126 = arith.constant 0 : index
    %149 = vector.load %arg4[%c2_124, %c0_125, %c0_126] : memref<6x32x32xf32, #tpu.memory_space<vmem>>, vector<1x32x32xf32>
    %150 = vector.shape_cast %149 : vector<1x32x32xf32> to vector<32x32xf32>
    %cst_127 = arith.constant dense<0.000000e+00> : vector<32x32xf32>
    %151 = tpu.matmul %144, %150, %cst_127 {dimension_numbers = #tpu.dot_dimension_numbers<[1], [0], [0], [1], [0, 0, 1, 1], [], []>} : vector<32x32xf32>, vector<32x32xf32>, vector<32x32xf32> -> vector<32x32xf32>
    %c2_128 = arith.constant 2 : index
    %c0_129 = arith.constant 0 : index
    %c0_130 = arith.constant 0 : index
    %152 = vector.load %arg5[%c2_128, %c0_129, %c0_130] : memref<6x1x32xf32, #tpu.memory_space<vmem>>, vector<1x1x32xf32>
    %153 = vector.shape_cast %152 : vector<1x1x32xf32> to vector<1x32xf32>
    %154 = vector.broadcast %153 : vector<1x32xf32> to vector<32x32xf32>
    %155 = arith.addf %151, %154 : vector<32x32xf32>
    %cst_131 = arith.constant 0.000000e+00 : f32
    %156 = vector.broadcast %cst_131 : f32 to vector<32x32xf32>
    %157 = arith.maximumf %155, %156 : vector<32x32xf32>
    %c2_132 = arith.constant 2 : index
    %c0_133 = arith.constant 0 : index
    %c0_134 = arith.constant 0 : index
    %158 = vector.load %arg6[%c2_132, %c0_133, %c0_134] : memref<6x32x32xf32, #tpu.memory_space<vmem>>, vector<1x32x32xf32>
    %159 = vector.shape_cast %158 : vector<1x32x32xf32> to vector<32x32xf32>
    %cst_135 = arith.constant dense<0.000000e+00> : vector<32x32xf32>
    %160 = tpu.matmul %148, %159, %cst_135 {dimension_numbers = #tpu.dot_dimension_numbers<[1], [0], [0], [1], [0, 0, 1, 1], [], []>} : vector<32x32xf32>, vector<32x32xf32>, vector<32x32xf32> -> vector<32x32xf32>
    %c2_136 = arith.constant 2 : index
    %c0_137 = arith.constant 0 : index
    %c0_138 = arith.constant 0 : index
    %161 = vector.load %arg7[%c2_136, %c0_137, %c0_138] : memref<6x1x32xf32, #tpu.memory_space<vmem>>, vector<1x1x32xf32>
    %162 = vector.shape_cast %161 : vector<1x1x32xf32> to vector<1x32xf32>
    %163 = vector.broadcast %162 : vector<1x32xf32> to vector<32x32xf32>
    %164 = arith.addf %160, %163 : vector<32x32xf32>
    %cst_139 = arith.constant 0.000000e+00 : f32
    %165 = vector.broadcast %cst_139 : f32 to vector<32x32xf32>
    %166 = arith.maximumf %164, %165 : vector<32x32xf32>
    %c2_140 = arith.constant 2 : index
    %c0_141 = arith.constant 0 : index
    %c0_142 = arith.constant 0 : index
    %167 = vector.load %arg8[%c2_140, %c0_141, %c0_142] : memref<6x32x32xf32, #tpu.memory_space<vmem>>, vector<1x32x32xf32>
    %168 = vector.shape_cast %167 : vector<1x32x32xf32> to vector<32x32xf32>
    %cst_143 = arith.constant dense<0.000000e+00> : vector<32x32xf32>
    %169 = tpu.matmul %157, %168, %cst_143 {dimension_numbers = #tpu.dot_dimension_numbers<[1], [0], [0], [1], [0, 0, 1, 1], [], []>} : vector<32x32xf32>, vector<32x32xf32>, vector<32x32xf32> -> vector<32x32xf32>
    %c2_144 = arith.constant 2 : index
    %c0_145 = arith.constant 0 : index
    %c0_146 = arith.constant 0 : index
    %170 = vector.load %arg9[%c2_144, %c0_145, %c0_146] : memref<6x1x32xf32, #tpu.memory_space<vmem>>, vector<1x1x32xf32>
    %171 = vector.shape_cast %170 : vector<1x1x32xf32> to vector<1x32xf32>
    %172 = vector.broadcast %171 : vector<1x32xf32> to vector<32x32xf32>
    %173 = arith.addf %169, %172 : vector<32x32xf32>
    %cst_147 = arith.constant 0.000000e+00 : f32
    %174 = vector.broadcast %cst_147 : f32 to vector<32x32xf32>
    %175 = arith.maximumf %173, %174 : vector<32x32xf32>
    %c2_148 = arith.constant 2 : index
    %c0_149 = arith.constant 0 : index
    %c0_150 = arith.constant 0 : index
    %176 = vector.load %arg10[%c2_148, %c0_149, %c0_150] : memref<6x32x32xf32, #tpu.memory_space<vmem>>, vector<1x32x32xf32>
    %177 = vector.shape_cast %176 : vector<1x32x32xf32> to vector<32x32xf32>
    %cst_151 = arith.constant dense<0.000000e+00> : vector<32x32xf32>
    %178 = tpu.matmul %166, %177, %cst_151 {dimension_numbers = #tpu.dot_dimension_numbers<[1], [0], [0], [1], [0, 0, 1, 1], [], []>} : vector<32x32xf32>, vector<32x32xf32>, vector<32x32xf32> -> vector<32x32xf32>
    %c2_152 = arith.constant 2 : index
    %c0_153 = arith.constant 0 : index
    %c0_154 = arith.constant 0 : index
    %179 = vector.load %arg11[%c2_152, %c0_153, %c0_154] : memref<6x1x32xf32, #tpu.memory_space<vmem>>, vector<1x1x32xf32>
    %180 = vector.shape_cast %179 : vector<1x1x32xf32> to vector<1x32xf32>
    %181 = vector.broadcast %180 : vector<1x32xf32> to vector<32x32xf32>
    %182 = arith.addf %178, %181 : vector<32x32xf32>
    %cst_155 = arith.constant 0.000000e+00 : f32
    %183 = vector.broadcast %cst_155 : f32 to vector<32x32xf32>
    %184 = arith.maximumf %182, %183 : vector<32x32xf32>
    %c2_156 = arith.constant 2 : index
    %c0_157 = arith.constant 0 : index
    %c0_158 = arith.constant 0 : index
    %185 = vector.load %arg12[%c2_156, %c0_157, %c0_158] : memref<6x32x32xf32, #tpu.memory_space<vmem>>, vector<1x32x32xf32>
    %186 = vector.shape_cast %185 : vector<1x32x32xf32> to vector<32x32xf32>
    %cst_159 = arith.constant dense<0.000000e+00> : vector<32x32xf32>
    %187 = tpu.matmul %175, %186, %cst_159 {dimension_numbers = #tpu.dot_dimension_numbers<[1], [0], [0], [1], [0, 0, 1, 1], [], []>} : vector<32x32xf32>, vector<32x32xf32>, vector<32x32xf32> -> vector<32x32xf32>
    %c2_160 = arith.constant 2 : index
    %c0_161 = arith.constant 0 : index
    %c0_162 = arith.constant 0 : index
    %188 = vector.load %arg13[%c2_160, %c0_161, %c0_162] : memref<6x32x32xf32, #tpu.memory_space<vmem>>, vector<1x32x32xf32>
    %189 = vector.shape_cast %188 : vector<1x32x32xf32> to vector<32x32xf32>
    %cst_163 = arith.constant dense<0.000000e+00> : vector<32x32xf32>
    %190 = tpu.matmul %184, %189, %cst_163 {dimension_numbers = #tpu.dot_dimension_numbers<[1], [0], [0], [1], [0, 0, 1, 1], [], []>} : vector<32x32xf32>, vector<32x32xf32>, vector<32x32xf32> -> vector<32x32xf32>
    %191 = arith.addf %187, %190 : vector<32x32xf32>
    %c2_164 = arith.constant 2 : index
    %c0_165 = arith.constant 0 : index
    %c0_166 = arith.constant 0 : index
    %192 = vector.load %arg14[%c2_164, %c0_165, %c0_166] : memref<6x1x32xf32, #tpu.memory_space<vmem>>, vector<1x1x32xf32>
    %193 = vector.shape_cast %192 : vector<1x1x32xf32> to vector<1x32xf32>
    %194 = vector.broadcast %193 : vector<1x32xf32> to vector<32x32xf32>
    %195 = arith.addf %191, %194 : vector<32x32xf32>
    %cst_167 = arith.constant 0.000000e+00 : f32
    %196 = vector.broadcast %cst_167 : f32 to vector<32x32xf32>
    %197 = arith.maximumf %195, %196 : vector<32x32xf32>
    %c2_168 = arith.constant 2 : index
    %c0_169 = arith.constant 0 : index
    %c0_170 = arith.constant 0 : index
    %198 = vector.load %arg15[%c2_168, %c0_169, %c0_170] : memref<6x32x32xf32, #tpu.memory_space<vmem>>, vector<1x32x32xf32>
    %199 = vector.shape_cast %198 : vector<1x32x32xf32> to vector<32x32xf32>
    %cst_171 = arith.constant dense<0.000000e+00> : vector<32x32xf32>
    %200 = tpu.matmul %197, %199, %cst_171 {dimension_numbers = #tpu.dot_dimension_numbers<[1], [0], [0], [1], [0, 0, 1, 1], [], []>} : vector<32x32xf32>, vector<32x32xf32>, vector<32x32xf32> -> vector<32x32xf32>
    %c2_172 = arith.constant 2 : index
    %c0_173 = arith.constant 0 : index
    %c0_174 = arith.constant 0 : index
    %201 = vector.load %arg16[%c2_172, %c0_173, %c0_174] : memref<6x1x32xf32, #tpu.memory_space<vmem>>, vector<1x1x32xf32>
    %202 = vector.shape_cast %201 : vector<1x1x32xf32> to vector<1x32xf32>
    %203 = vector.broadcast %202 : vector<1x32xf32> to vector<32x32xf32>
    %204 = arith.addf %200, %203 : vector<32x32xf32>
    %cst_175 = arith.constant 0.000000e+00 : f32
    %205 = vector.broadcast %cst_175 : f32 to vector<32x32xf32>
    %206 = arith.maximumf %204, %205 : vector<32x32xf32>
    %c3 = arith.constant 3 : index
    %c0_176 = arith.constant 0 : index
    %207 = memref.load %arg0[%c3, %c0_176] : memref<6x2xf32, #tpu.memory_space<smem>>
    %c3_177 = arith.constant 3 : index
    %c1_178 = arith.constant 1 : index
    %208 = memref.load %arg0[%c3_177, %c1_178] : memref<6x2xf32, #tpu.memory_space<smem>>
    %209 = vector.broadcast %207 : f32 to vector<32x32xf32>
    %210 = arith.mulf %209, %206 : vector<32x32xf32>
    %cst_179 = arith.constant dense<0.000000e+00> : vector<32x32xf32>
    %211 = tpu.matmul %0, %206, %cst_179 {dimension_numbers = #tpu.dot_dimension_numbers<[1], [0], [0], [1], [0, 0, 1, 1], [], []>} : vector<32x32xf32>, vector<32x32xf32>, vector<32x32xf32> -> vector<32x32xf32>
    %212 = arith.addf %210, %211 : vector<32x32xf32>
    %213 = vector.broadcast %208 : f32 to vector<32x32xf32>
    %214 = arith.mulf %213, %206 : vector<32x32xf32>
    %cst_180 = arith.constant dense<0.000000e+00> : vector<32x32xf32>
    %215 = tpu.matmul %1, %206, %cst_180 {dimension_numbers = #tpu.dot_dimension_numbers<[1], [0], [0], [1], [0, 0, 1, 1], [], []>} : vector<32x32xf32>, vector<32x32xf32>, vector<32x32xf32> -> vector<32x32xf32>
    %216 = arith.addf %214, %215 : vector<32x32xf32>
    %c3_181 = arith.constant 3 : index
    %c0_182 = arith.constant 0 : index
    %c0_183 = arith.constant 0 : index
    %217 = vector.load %arg4[%c3_181, %c0_182, %c0_183] : memref<6x32x32xf32, #tpu.memory_space<vmem>>, vector<1x32x32xf32>
    %218 = vector.shape_cast %217 : vector<1x32x32xf32> to vector<32x32xf32>
    %cst_184 = arith.constant dense<0.000000e+00> : vector<32x32xf32>
    %219 = tpu.matmul %212, %218, %cst_184 {dimension_numbers = #tpu.dot_dimension_numbers<[1], [0], [0], [1], [0, 0, 1, 1], [], []>} : vector<32x32xf32>, vector<32x32xf32>, vector<32x32xf32> -> vector<32x32xf32>
    %c3_185 = arith.constant 3 : index
    %c0_186 = arith.constant 0 : index
    %c0_187 = arith.constant 0 : index
    %220 = vector.load %arg5[%c3_185, %c0_186, %c0_187] : memref<6x1x32xf32, #tpu.memory_space<vmem>>, vector<1x1x32xf32>
    %221 = vector.shape_cast %220 : vector<1x1x32xf32> to vector<1x32xf32>
    %222 = vector.broadcast %221 : vector<1x32xf32> to vector<32x32xf32>
    %223 = arith.addf %219, %222 : vector<32x32xf32>
    %cst_188 = arith.constant 0.000000e+00 : f32
    %224 = vector.broadcast %cst_188 : f32 to vector<32x32xf32>
    %225 = arith.maximumf %223, %224 : vector<32x32xf32>
    %c3_189 = arith.constant 3 : index
    %c0_190 = arith.constant 0 : index
    %c0_191 = arith.constant 0 : index
    %226 = vector.load %arg6[%c3_189, %c0_190, %c0_191] : memref<6x32x32xf32, #tpu.memory_space<vmem>>, vector<1x32x32xf32>
    %227 = vector.shape_cast %226 : vector<1x32x32xf32> to vector<32x32xf32>
    %cst_192 = arith.constant dense<0.000000e+00> : vector<32x32xf32>
    %228 = tpu.matmul %216, %227, %cst_192 {dimension_numbers = #tpu.dot_dimension_numbers<[1], [0], [0], [1], [0, 0, 1, 1], [], []>} : vector<32x32xf32>, vector<32x32xf32>, vector<32x32xf32> -> vector<32x32xf32>
    %c3_193 = arith.constant 3 : index
    %c0_194 = arith.constant 0 : index
    %c0_195 = arith.constant 0 : index
    %229 = vector.load %arg7[%c3_193, %c0_194, %c0_195] : memref<6x1x32xf32, #tpu.memory_space<vmem>>, vector<1x1x32xf32>
    %230 = vector.shape_cast %229 : vector<1x1x32xf32> to vector<1x32xf32>
    %231 = vector.broadcast %230 : vector<1x32xf32> to vector<32x32xf32>
    %232 = arith.addf %228, %231 : vector<32x32xf32>
    %cst_196 = arith.constant 0.000000e+00 : f32
    %233 = vector.broadcast %cst_196 : f32 to vector<32x32xf32>
    %234 = arith.maximumf %232, %233 : vector<32x32xf32>
    %c3_197 = arith.constant 3 : index
    %c0_198 = arith.constant 0 : index
    %c0_199 = arith.constant 0 : index
    %235 = vector.load %arg8[%c3_197, %c0_198, %c0_199] : memref<6x32x32xf32, #tpu.memory_space<vmem>>, vector<1x32x32xf32>
    %236 = vector.shape_cast %235 : vector<1x32x32xf32> to vector<32x32xf32>
    %cst_200 = arith.constant dense<0.000000e+00> : vector<32x32xf32>
    %237 = tpu.matmul %225, %236, %cst_200 {dimension_numbers = #tpu.dot_dimension_numbers<[1], [0], [0], [1], [0, 0, 1, 1], [], []>} : vector<32x32xf32>, vector<32x32xf32>, vector<32x32xf32> -> vector<32x32xf32>
    %c3_201 = arith.constant 3 : index
    %c0_202 = arith.constant 0 : index
    %c0_203 = arith.constant 0 : index
    %238 = vector.load %arg9[%c3_201, %c0_202, %c0_203] : memref<6x1x32xf32, #tpu.memory_space<vmem>>, vector<1x1x32xf32>
    %239 = vector.shape_cast %238 : vector<1x1x32xf32> to vector<1x32xf32>
    %240 = vector.broadcast %239 : vector<1x32xf32> to vector<32x32xf32>
    %241 = arith.addf %237, %240 : vector<32x32xf32>
    %cst_204 = arith.constant 0.000000e+00 : f32
    %242 = vector.broadcast %cst_204 : f32 to vector<32x32xf32>
    %243 = arith.maximumf %241, %242 : vector<32x32xf32>
    %c3_205 = arith.constant 3 : index
    %c0_206 = arith.constant 0 : index
    %c0_207 = arith.constant 0 : index
    %244 = vector.load %arg10[%c3_205, %c0_206, %c0_207] : memref<6x32x32xf32, #tpu.memory_space<vmem>>, vector<1x32x32xf32>
    %245 = vector.shape_cast %244 : vector<1x32x32xf32> to vector<32x32xf32>
    %cst_208 = arith.constant dense<0.000000e+00> : vector<32x32xf32>
    %246 = tpu.matmul %234, %245, %cst_208 {dimension_numbers = #tpu.dot_dimension_numbers<[1], [0], [0], [1], [0, 0, 1, 1], [], []>} : vector<32x32xf32>, vector<32x32xf32>, vector<32x32xf32> -> vector<32x32xf32>
    %c3_209 = arith.constant 3 : index
    %c0_210 = arith.constant 0 : index
    %c0_211 = arith.constant 0 : index
    %247 = vector.load %arg11[%c3_209, %c0_210, %c0_211] : memref<6x1x32xf32, #tpu.memory_space<vmem>>, vector<1x1x32xf32>
    %248 = vector.shape_cast %247 : vector<1x1x32xf32> to vector<1x32xf32>
    %249 = vector.broadcast %248 : vector<1x32xf32> to vector<32x32xf32>
    %250 = arith.addf %246, %249 : vector<32x32xf32>
    %cst_212 = arith.constant 0.000000e+00 : f32
    %251 = vector.broadcast %cst_212 : f32 to vector<32x32xf32>
    %252 = arith.maximumf %250, %251 : vector<32x32xf32>
    %c3_213 = arith.constant 3 : index
    %c0_214 = arith.constant 0 : index
    %c0_215 = arith.constant 0 : index
    %253 = vector.load %arg12[%c3_213, %c0_214, %c0_215] : memref<6x32x32xf32, #tpu.memory_space<vmem>>, vector<1x32x32xf32>
    %254 = vector.shape_cast %253 : vector<1x32x32xf32> to vector<32x32xf32>
    %cst_216 = arith.constant dense<0.000000e+00> : vector<32x32xf32>
    %255 = tpu.matmul %243, %254, %cst_216 {dimension_numbers = #tpu.dot_dimension_numbers<[1], [0], [0], [1], [0, 0, 1, 1], [], []>} : vector<32x32xf32>, vector<32x32xf32>, vector<32x32xf32> -> vector<32x32xf32>
    %c3_217 = arith.constant 3 : index
    %c0_218 = arith.constant 0 : index
    %c0_219 = arith.constant 0 : index
    %256 = vector.load %arg13[%c3_217, %c0_218, %c0_219] : memref<6x32x32xf32, #tpu.memory_space<vmem>>, vector<1x32x32xf32>
    %257 = vector.shape_cast %256 : vector<1x32x32xf32> to vector<32x32xf32>
    %cst_220 = arith.constant dense<0.000000e+00> : vector<32x32xf32>
    %258 = tpu.matmul %252, %257, %cst_220 {dimension_numbers = #tpu.dot_dimension_numbers<[1], [0], [0], [1], [0, 0, 1, 1], [], []>} : vector<32x32xf32>, vector<32x32xf32>, vector<32x32xf32> -> vector<32x32xf32>
    %259 = arith.addf %255, %258 : vector<32x32xf32>
    %c3_221 = arith.constant 3 : index
    %c0_222 = arith.constant 0 : index
    %c0_223 = arith.constant 0 : index
    %260 = vector.load %arg14[%c3_221, %c0_222, %c0_223] : memref<6x1x32xf32, #tpu.memory_space<vmem>>, vector<1x1x32xf32>
    %261 = vector.shape_cast %260 : vector<1x1x32xf32> to vector<1x32xf32>
    %262 = vector.broadcast %261 : vector<1x32xf32> to vector<32x32xf32>
    %263 = arith.addf %259, %262 : vector<32x32xf32>
    %cst_224 = arith.constant 0.000000e+00 : f32
    %264 = vector.broadcast %cst_224 : f32 to vector<32x32xf32>
    %265 = arith.maximumf %263, %264 : vector<32x32xf32>
    %c3_225 = arith.constant 3 : index
    %c0_226 = arith.constant 0 : index
    %c0_227 = arith.constant 0 : index
    %266 = vector.load %arg15[%c3_225, %c0_226, %c0_227] : memref<6x32x32xf32, #tpu.memory_space<vmem>>, vector<1x32x32xf32>
    %267 = vector.shape_cast %266 : vector<1x32x32xf32> to vector<32x32xf32>
    %cst_228 = arith.constant dense<0.000000e+00> : vector<32x32xf32>
    %268 = tpu.matmul %265, %267, %cst_228 {dimension_numbers = #tpu.dot_dimension_numbers<[1], [0], [0], [1], [0, 0, 1, 1], [], []>} : vector<32x32xf32>, vector<32x32xf32>, vector<32x32xf32> -> vector<32x32xf32>
    %c3_229 = arith.constant 3 : index
    %c0_230 = arith.constant 0 : index
    %c0_231 = arith.constant 0 : index
    %269 = vector.load %arg16[%c3_229, %c0_230, %c0_231] : memref<6x1x32xf32, #tpu.memory_space<vmem>>, vector<1x1x32xf32>
    %270 = vector.shape_cast %269 : vector<1x1x32xf32> to vector<1x32xf32>
    %271 = vector.broadcast %270 : vector<1x32xf32> to vector<32x32xf32>
    %272 = arith.addf %268, %271 : vector<32x32xf32>
    %cst_232 = arith.constant 0.000000e+00 : f32
    %273 = vector.broadcast %cst_232 : f32 to vector<32x32xf32>
    %274 = arith.maximumf %272, %273 : vector<32x32xf32>
    %c4 = arith.constant 4 : index
    %c0_233 = arith.constant 0 : index
    %275 = memref.load %arg0[%c4, %c0_233] : memref<6x2xf32, #tpu.memory_space<smem>>
    %c4_234 = arith.constant 4 : index
    %c1_235 = arith.constant 1 : index
    %276 = memref.load %arg0[%c4_234, %c1_235] : memref<6x2xf32, #tpu.memory_space<smem>>
    %277 = vector.broadcast %275 : f32 to vector<32x32xf32>
    %278 = arith.mulf %277, %274 : vector<32x32xf32>
    %cst_236 = arith.constant dense<0.000000e+00> : vector<32x32xf32>
    %279 = tpu.matmul %0, %274, %cst_236 {dimension_numbers = #tpu.dot_dimension_numbers<[1], [0], [0], [1], [0, 0, 1, 1], [], []>} : vector<32x32xf32>, vector<32x32xf32>, vector<32x32xf32> -> vector<32x32xf32>
    %280 = arith.addf %278, %279 : vector<32x32xf32>
    %281 = vector.broadcast %276 : f32 to vector<32x32xf32>
    %282 = arith.mulf %281, %274 : vector<32x32xf32>
    %cst_237 = arith.constant dense<0.000000e+00> : vector<32x32xf32>
    %283 = tpu.matmul %1, %274, %cst_237 {dimension_numbers = #tpu.dot_dimension_numbers<[1], [0], [0], [1], [0, 0, 1, 1], [], []>} : vector<32x32xf32>, vector<32x32xf32>, vector<32x32xf32> -> vector<32x32xf32>
    %284 = arith.addf %282, %283 : vector<32x32xf32>
    %c4_238 = arith.constant 4 : index
    %c0_239 = arith.constant 0 : index
    %c0_240 = arith.constant 0 : index
    %285 = vector.load %arg4[%c4_238, %c0_239, %c0_240] : memref<6x32x32xf32, #tpu.memory_space<vmem>>, vector<1x32x32xf32>
    %286 = vector.shape_cast %285 : vector<1x32x32xf32> to vector<32x32xf32>
    %cst_241 = arith.constant dense<0.000000e+00> : vector<32x32xf32>
    %287 = tpu.matmul %280, %286, %cst_241 {dimension_numbers = #tpu.dot_dimension_numbers<[1], [0], [0], [1], [0, 0, 1, 1], [], []>} : vector<32x32xf32>, vector<32x32xf32>, vector<32x32xf32> -> vector<32x32xf32>
    %c4_242 = arith.constant 4 : index
    %c0_243 = arith.constant 0 : index
    %c0_244 = arith.constant 0 : index
    %288 = vector.load %arg5[%c4_242, %c0_243, %c0_244] : memref<6x1x32xf32, #tpu.memory_space<vmem>>, vector<1x1x32xf32>
    %289 = vector.shape_cast %288 : vector<1x1x32xf32> to vector<1x32xf32>
    %290 = vector.broadcast %289 : vector<1x32xf32> to vector<32x32xf32>
    %291 = arith.addf %287, %290 : vector<32x32xf32>
    %cst_245 = arith.constant 0.000000e+00 : f32
    %292 = vector.broadcast %cst_245 : f32 to vector<32x32xf32>
    %293 = arith.maximumf %291, %292 : vector<32x32xf32>
    %c4_246 = arith.constant 4 : index
    %c0_247 = arith.constant 0 : index
    %c0_248 = arith.constant 0 : index
    %294 = vector.load %arg6[%c4_246, %c0_247, %c0_248] : memref<6x32x32xf32, #tpu.memory_space<vmem>>, vector<1x32x32xf32>
    %295 = vector.shape_cast %294 : vector<1x32x32xf32> to vector<32x32xf32>
    %cst_249 = arith.constant dense<0.000000e+00> : vector<32x32xf32>
    %296 = tpu.matmul %284, %295, %cst_249 {dimension_numbers = #tpu.dot_dimension_numbers<[1], [0], [0], [1], [0, 0, 1, 1], [], []>} : vector<32x32xf32>, vector<32x32xf32>, vector<32x32xf32> -> vector<32x32xf32>
    %c4_250 = arith.constant 4 : index
    %c0_251 = arith.constant 0 : index
    %c0_252 = arith.constant 0 : index
    %297 = vector.load %arg7[%c4_250, %c0_251, %c0_252] : memref<6x1x32xf32, #tpu.memory_space<vmem>>, vector<1x1x32xf32>
    %298 = vector.shape_cast %297 : vector<1x1x32xf32> to vector<1x32xf32>
    %299 = vector.broadcast %298 : vector<1x32xf32> to vector<32x32xf32>
    %300 = arith.addf %296, %299 : vector<32x32xf32>
    %cst_253 = arith.constant 0.000000e+00 : f32
    %301 = vector.broadcast %cst_253 : f32 to vector<32x32xf32>
    %302 = arith.maximumf %300, %301 : vector<32x32xf32>
    %c4_254 = arith.constant 4 : index
    %c0_255 = arith.constant 0 : index
    %c0_256 = arith.constant 0 : index
    %303 = vector.load %arg8[%c4_254, %c0_255, %c0_256] : memref<6x32x32xf32, #tpu.memory_space<vmem>>, vector<1x32x32xf32>
    %304 = vector.shape_cast %303 : vector<1x32x32xf32> to vector<32x32xf32>
    %cst_257 = arith.constant dense<0.000000e+00> : vector<32x32xf32>
    %305 = tpu.matmul %293, %304, %cst_257 {dimension_numbers = #tpu.dot_dimension_numbers<[1], [0], [0], [1], [0, 0, 1, 1], [], []>} : vector<32x32xf32>, vector<32x32xf32>, vector<32x32xf32> -> vector<32x32xf32>
    %c4_258 = arith.constant 4 : index
    %c0_259 = arith.constant 0 : index
    %c0_260 = arith.constant 0 : index
    %306 = vector.load %arg9[%c4_258, %c0_259, %c0_260] : memref<6x1x32xf32, #tpu.memory_space<vmem>>, vector<1x1x32xf32>
    %307 = vector.shape_cast %306 : vector<1x1x32xf32> to vector<1x32xf32>
    %308 = vector.broadcast %307 : vector<1x32xf32> to vector<32x32xf32>
    %309 = arith.addf %305, %308 : vector<32x32xf32>
    %cst_261 = arith.constant 0.000000e+00 : f32
    %310 = vector.broadcast %cst_261 : f32 to vector<32x32xf32>
    %311 = arith.maximumf %309, %310 : vector<32x32xf32>
    %c4_262 = arith.constant 4 : index
    %c0_263 = arith.constant 0 : index
    %c0_264 = arith.constant 0 : index
    %312 = vector.load %arg10[%c4_262, %c0_263, %c0_264] : memref<6x32x32xf32, #tpu.memory_space<vmem>>, vector<1x32x32xf32>
    %313 = vector.shape_cast %312 : vector<1x32x32xf32> to vector<32x32xf32>
    %cst_265 = arith.constant dense<0.000000e+00> : vector<32x32xf32>
    %314 = tpu.matmul %302, %313, %cst_265 {dimension_numbers = #tpu.dot_dimension_numbers<[1], [0], [0], [1], [0, 0, 1, 1], [], []>} : vector<32x32xf32>, vector<32x32xf32>, vector<32x32xf32> -> vector<32x32xf32>
    %c4_266 = arith.constant 4 : index
    %c0_267 = arith.constant 0 : index
    %c0_268 = arith.constant 0 : index
    %315 = vector.load %arg11[%c4_266, %c0_267, %c0_268] : memref<6x1x32xf32, #tpu.memory_space<vmem>>, vector<1x1x32xf32>
    %316 = vector.shape_cast %315 : vector<1x1x32xf32> to vector<1x32xf32>
    %317 = vector.broadcast %316 : vector<1x32xf32> to vector<32x32xf32>
    %318 = arith.addf %314, %317 : vector<32x32xf32>
    %cst_269 = arith.constant 0.000000e+00 : f32
    %319 = vector.broadcast %cst_269 : f32 to vector<32x32xf32>
    %320 = arith.maximumf %318, %319 : vector<32x32xf32>
    %c4_270 = arith.constant 4 : index
    %c0_271 = arith.constant 0 : index
    %c0_272 = arith.constant 0 : index
    %321 = vector.load %arg12[%c4_270, %c0_271, %c0_272] : memref<6x32x32xf32, #tpu.memory_space<vmem>>, vector<1x32x32xf32>
    %322 = vector.shape_cast %321 : vector<1x32x32xf32> to vector<32x32xf32>
    %cst_273 = arith.constant dense<0.000000e+00> : vector<32x32xf32>
    %323 = tpu.matmul %311, %322, %cst_273 {dimension_numbers = #tpu.dot_dimension_numbers<[1], [0], [0], [1], [0, 0, 1, 1], [], []>} : vector<32x32xf32>, vector<32x32xf32>, vector<32x32xf32> -> vector<32x32xf32>
    %c4_274 = arith.constant 4 : index
    %c0_275 = arith.constant 0 : index
    %c0_276 = arith.constant 0 : index
    %324 = vector.load %arg13[%c4_274, %c0_275, %c0_276] : memref<6x32x32xf32, #tpu.memory_space<vmem>>, vector<1x32x32xf32>
    %325 = vector.shape_cast %324 : vector<1x32x32xf32> to vector<32x32xf32>
    %cst_277 = arith.constant dense<0.000000e+00> : vector<32x32xf32>
    %326 = tpu.matmul %320, %325, %cst_277 {dimension_numbers = #tpu.dot_dimension_numbers<[1], [0], [0], [1], [0, 0, 1, 1], [], []>} : vector<32x32xf32>, vector<32x32xf32>, vector<32x32xf32> -> vector<32x32xf32>
    %327 = arith.addf %323, %326 : vector<32x32xf32>
    %c4_278 = arith.constant 4 : index
    %c0_279 = arith.constant 0 : index
    %c0_280 = arith.constant 0 : index
    %328 = vector.load %arg14[%c4_278, %c0_279, %c0_280] : memref<6x1x32xf32, #tpu.memory_space<vmem>>, vector<1x1x32xf32>
    %329 = vector.shape_cast %328 : vector<1x1x32xf32> to vector<1x32xf32>
    %330 = vector.broadcast %329 : vector<1x32xf32> to vector<32x32xf32>
    %331 = arith.addf %327, %330 : vector<32x32xf32>
    %cst_281 = arith.constant 0.000000e+00 : f32
    %332 = vector.broadcast %cst_281 : f32 to vector<32x32xf32>
    %333 = arith.maximumf %331, %332 : vector<32x32xf32>
    %c4_282 = arith.constant 4 : index
    %c0_283 = arith.constant 0 : index
    %c0_284 = arith.constant 0 : index
    %334 = vector.load %arg15[%c4_282, %c0_283, %c0_284] : memref<6x32x32xf32, #tpu.memory_space<vmem>>, vector<1x32x32xf32>
    %335 = vector.shape_cast %334 : vector<1x32x32xf32> to vector<32x32xf32>
    %cst_285 = arith.constant dense<0.000000e+00> : vector<32x32xf32>
    %336 = tpu.matmul %333, %335, %cst_285 {dimension_numbers = #tpu.dot_dimension_numbers<[1], [0], [0], [1], [0, 0, 1, 1], [], []>} : vector<32x32xf32>, vector<32x32xf32>, vector<32x32xf32> -> vector<32x32xf32>
    %c4_286 = arith.constant 4 : index
    %c0_287 = arith.constant 0 : index
    %c0_288 = arith.constant 0 : index
    %337 = vector.load %arg16[%c4_286, %c0_287, %c0_288] : memref<6x1x32xf32, #tpu.memory_space<vmem>>, vector<1x1x32xf32>
    %338 = vector.shape_cast %337 : vector<1x1x32xf32> to vector<1x32xf32>
    %339 = vector.broadcast %338 : vector<1x32xf32> to vector<32x32xf32>
    %340 = arith.addf %336, %339 : vector<32x32xf32>
    %cst_289 = arith.constant 0.000000e+00 : f32
    %341 = vector.broadcast %cst_289 : f32 to vector<32x32xf32>
    %342 = arith.maximumf %340, %341 : vector<32x32xf32>
    %c5 = arith.constant 5 : index
    %c0_290 = arith.constant 0 : index
    %343 = memref.load %arg0[%c5, %c0_290] : memref<6x2xf32, #tpu.memory_space<smem>>
    %c5_291 = arith.constant 5 : index
    %c1_292 = arith.constant 1 : index
    %344 = memref.load %arg0[%c5_291, %c1_292] : memref<6x2xf32, #tpu.memory_space<smem>>
    %345 = vector.broadcast %343 : f32 to vector<32x32xf32>
    %346 = arith.mulf %345, %342 : vector<32x32xf32>
    %cst_293 = arith.constant dense<0.000000e+00> : vector<32x32xf32>
    %347 = tpu.matmul %0, %342, %cst_293 {dimension_numbers = #tpu.dot_dimension_numbers<[1], [0], [0], [1], [0, 0, 1, 1], [], []>} : vector<32x32xf32>, vector<32x32xf32>, vector<32x32xf32> -> vector<32x32xf32>
    %348 = arith.addf %346, %347 : vector<32x32xf32>
    %349 = vector.broadcast %344 : f32 to vector<32x32xf32>
    %350 = arith.mulf %349, %342 : vector<32x32xf32>
    %cst_294 = arith.constant dense<0.000000e+00> : vector<32x32xf32>
    %351 = tpu.matmul %1, %342, %cst_294 {dimension_numbers = #tpu.dot_dimension_numbers<[1], [0], [0], [1], [0, 0, 1, 1], [], []>} : vector<32x32xf32>, vector<32x32xf32>, vector<32x32xf32> -> vector<32x32xf32>
    %352 = arith.addf %350, %351 : vector<32x32xf32>
    %c5_295 = arith.constant 5 : index
    %c0_296 = arith.constant 0 : index
    %c0_297 = arith.constant 0 : index
    %353 = vector.load %arg4[%c5_295, %c0_296, %c0_297] : memref<6x32x32xf32, #tpu.memory_space<vmem>>, vector<1x32x32xf32>
    %354 = vector.shape_cast %353 : vector<1x32x32xf32> to vector<32x32xf32>
    %cst_298 = arith.constant dense<0.000000e+00> : vector<32x32xf32>
    %355 = tpu.matmul %348, %354, %cst_298 {dimension_numbers = #tpu.dot_dimension_numbers<[1], [0], [0], [1], [0, 0, 1, 1], [], []>} : vector<32x32xf32>, vector<32x32xf32>, vector<32x32xf32> -> vector<32x32xf32>
    %c5_299 = arith.constant 5 : index
    %c0_300 = arith.constant 0 : index
    %c0_301 = arith.constant 0 : index
    %356 = vector.load %arg5[%c5_299, %c0_300, %c0_301] : memref<6x1x32xf32, #tpu.memory_space<vmem>>, vector<1x1x32xf32>
    %357 = vector.shape_cast %356 : vector<1x1x32xf32> to vector<1x32xf32>
    %358 = vector.broadcast %357 : vector<1x32xf32> to vector<32x32xf32>
    %359 = arith.addf %355, %358 : vector<32x32xf32>
    %cst_302 = arith.constant 0.000000e+00 : f32
    %360 = vector.broadcast %cst_302 : f32 to vector<32x32xf32>
    %361 = arith.maximumf %359, %360 : vector<32x32xf32>
    %c5_303 = arith.constant 5 : index
    %c0_304 = arith.constant 0 : index
    %c0_305 = arith.constant 0 : index
    %362 = vector.load %arg6[%c5_303, %c0_304, %c0_305] : memref<6x32x32xf32, #tpu.memory_space<vmem>>, vector<1x32x32xf32>
    %363 = vector.shape_cast %362 : vector<1x32x32xf32> to vector<32x32xf32>
    %cst_306 = arith.constant dense<0.000000e+00> : vector<32x32xf32>
    %364 = tpu.matmul %352, %363, %cst_306 {dimension_numbers = #tpu.dot_dimension_numbers<[1], [0], [0], [1], [0, 0, 1, 1], [], []>} : vector<32x32xf32>, vector<32x32xf32>, vector<32x32xf32> -> vector<32x32xf32>
    %c5_307 = arith.constant 5 : index
    %c0_308 = arith.constant 0 : index
    %c0_309 = arith.constant 0 : index
    %365 = vector.load %arg7[%c5_307, %c0_308, %c0_309] : memref<6x1x32xf32, #tpu.memory_space<vmem>>, vector<1x1x32xf32>
    %366 = vector.shape_cast %365 : vector<1x1x32xf32> to vector<1x32xf32>
    %367 = vector.broadcast %366 : vector<1x32xf32> to vector<32x32xf32>
    %368 = arith.addf %364, %367 : vector<32x32xf32>
    %cst_310 = arith.constant 0.000000e+00 : f32
    %369 = vector.broadcast %cst_310 : f32 to vector<32x32xf32>
    %370 = arith.maximumf %368, %369 : vector<32x32xf32>
    %c5_311 = arith.constant 5 : index
    %c0_312 = arith.constant 0 : index
    %c0_313 = arith.constant 0 : index
    %371 = vector.load %arg8[%c5_311, %c0_312, %c0_313] : memref<6x32x32xf32, #tpu.memory_space<vmem>>, vector<1x32x32xf32>
    %372 = vector.shape_cast %371 : vector<1x32x32xf32> to vector<32x32xf32>
    %cst_314 = arith.constant dense<0.000000e+00> : vector<32x32xf32>
    %373 = tpu.matmul %361, %372, %cst_314 {dimension_numbers = #tpu.dot_dimension_numbers<[1], [0], [0], [1], [0, 0, 1, 1], [], []>} : vector<32x32xf32>, vector<32x32xf32>, vector<32x32xf32> -> vector<32x32xf32>
    %c5_315 = arith.constant 5 : index
    %c0_316 = arith.constant 0 : index
    %c0_317 = arith.constant 0 : index
    %374 = vector.load %arg9[%c5_315, %c0_316, %c0_317] : memref<6x1x32xf32, #tpu.memory_space<vmem>>, vector<1x1x32xf32>
    %375 = vector.shape_cast %374 : vector<1x1x32xf32> to vector<1x32xf32>
    %376 = vector.broadcast %375 : vector<1x32xf32> to vector<32x32xf32>
    %377 = arith.addf %373, %376 : vector<32x32xf32>
    %cst_318 = arith.constant 0.000000e+00 : f32
    %378 = vector.broadcast %cst_318 : f32 to vector<32x32xf32>
    %379 = arith.maximumf %377, %378 : vector<32x32xf32>
    %c5_319 = arith.constant 5 : index
    %c0_320 = arith.constant 0 : index
    %c0_321 = arith.constant 0 : index
    %380 = vector.load %arg10[%c5_319, %c0_320, %c0_321] : memref<6x32x32xf32, #tpu.memory_space<vmem>>, vector<1x32x32xf32>
    %381 = vector.shape_cast %380 : vector<1x32x32xf32> to vector<32x32xf32>
    %cst_322 = arith.constant dense<0.000000e+00> : vector<32x32xf32>
    %382 = tpu.matmul %370, %381, %cst_322 {dimension_numbers = #tpu.dot_dimension_numbers<[1], [0], [0], [1], [0, 0, 1, 1], [], []>} : vector<32x32xf32>, vector<32x32xf32>, vector<32x32xf32> -> vector<32x32xf32>
    %c5_323 = arith.constant 5 : index
    %c0_324 = arith.constant 0 : index
    %c0_325 = arith.constant 0 : index
    %383 = vector.load %arg11[%c5_323, %c0_324, %c0_325] : memref<6x1x32xf32, #tpu.memory_space<vmem>>, vector<1x1x32xf32>
    %384 = vector.shape_cast %383 : vector<1x1x32xf32> to vector<1x32xf32>
    %385 = vector.broadcast %384 : vector<1x32xf32> to vector<32x32xf32>
    %386 = arith.addf %382, %385 : vector<32x32xf32>
    %cst_326 = arith.constant 0.000000e+00 : f32
    %387 = vector.broadcast %cst_326 : f32 to vector<32x32xf32>
    %388 = arith.maximumf %386, %387 : vector<32x32xf32>
    %c5_327 = arith.constant 5 : index
    %c0_328 = arith.constant 0 : index
    %c0_329 = arith.constant 0 : index
    %389 = vector.load %arg12[%c5_327, %c0_328, %c0_329] : memref<6x32x32xf32, #tpu.memory_space<vmem>>, vector<1x32x32xf32>
    %390 = vector.shape_cast %389 : vector<1x32x32xf32> to vector<32x32xf32>
    %cst_330 = arith.constant dense<0.000000e+00> : vector<32x32xf32>
    %391 = tpu.matmul %379, %390, %cst_330 {dimension_numbers = #tpu.dot_dimension_numbers<[1], [0], [0], [1], [0, 0, 1, 1], [], []>} : vector<32x32xf32>, vector<32x32xf32>, vector<32x32xf32> -> vector<32x32xf32>
    %c5_331 = arith.constant 5 : index
    %c0_332 = arith.constant 0 : index
    %c0_333 = arith.constant 0 : index
    %392 = vector.load %arg13[%c5_331, %c0_332, %c0_333] : memref<6x32x32xf32, #tpu.memory_space<vmem>>, vector<1x32x32xf32>
    %393 = vector.shape_cast %392 : vector<1x32x32xf32> to vector<32x32xf32>
    %cst_334 = arith.constant dense<0.000000e+00> : vector<32x32xf32>
    %394 = tpu.matmul %388, %393, %cst_334 {dimension_numbers = #tpu.dot_dimension_numbers<[1], [0], [0], [1], [0, 0, 1, 1], [], []>} : vector<32x32xf32>, vector<32x32xf32>, vector<32x32xf32> -> vector<32x32xf32>
    %395 = arith.addf %391, %394 : vector<32x32xf32>
    %c5_335 = arith.constant 5 : index
    %c0_336 = arith.constant 0 : index
    %c0_337 = arith.constant 0 : index
    %396 = vector.load %arg14[%c5_335, %c0_336, %c0_337] : memref<6x1x32xf32, #tpu.memory_space<vmem>>, vector<1x1x32xf32>
    %397 = vector.shape_cast %396 : vector<1x1x32xf32> to vector<1x32xf32>
    %398 = vector.broadcast %397 : vector<1x32xf32> to vector<32x32xf32>
    %399 = arith.addf %395, %398 : vector<32x32xf32>
    %cst_338 = arith.constant 0.000000e+00 : f32
    %400 = vector.broadcast %cst_338 : f32 to vector<32x32xf32>
    %401 = arith.maximumf %399, %400 : vector<32x32xf32>
    %c5_339 = arith.constant 5 : index
    %c0_340 = arith.constant 0 : index
    %c0_341 = arith.constant 0 : index
    %402 = vector.load %arg15[%c5_339, %c0_340, %c0_341] : memref<6x32x32xf32, #tpu.memory_space<vmem>>, vector<1x32x32xf32>
    %403 = vector.shape_cast %402 : vector<1x32x32xf32> to vector<32x32xf32>
    %cst_342 = arith.constant dense<0.000000e+00> : vector<32x32xf32>
    %404 = tpu.matmul %401, %403, %cst_342 {dimension_numbers = #tpu.dot_dimension_numbers<[1], [0], [0], [1], [0, 0, 1, 1], [], []>} : vector<32x32xf32>, vector<32x32xf32>, vector<32x32xf32> -> vector<32x32xf32>
    %c5_343 = arith.constant 5 : index
    %c0_344 = arith.constant 0 : index
    %c0_345 = arith.constant 0 : index
    %405 = vector.load %arg16[%c5_343, %c0_344, %c0_345] : memref<6x1x32xf32, #tpu.memory_space<vmem>>, vector<1x1x32xf32>
    %406 = vector.shape_cast %405 : vector<1x1x32xf32> to vector<1x32xf32>
    %407 = vector.broadcast %406 : vector<1x32xf32> to vector<32x32xf32>
    %408 = arith.addf %404, %407 : vector<32x32xf32>
    %cst_346 = arith.constant 0.000000e+00 : f32
    %409 = vector.broadcast %cst_346 : f32 to vector<32x32xf32>
    %410 = arith.maximumf %408, %409 : vector<32x32xf32>
    %411 = tpu.iota {dimensions = array<i32: 1>} : vector<2x32xi32>
    %412 = tpu.iota {dimensions = array<i32: 0>} : vector<2x32xi32>
    %c16_i32 = arith.constant 16 : i32
    %413 = vector.broadcast %c16_i32 : i32 to vector<2x32xi32>
    %414 = arith.muli %412, %413 : vector<2x32xi32>
    %415 = arith.cmpi sge, %411, %414 : vector<2x32xi32>
    %c1_i32 = arith.constant 1 : i32
    %416 = vector.broadcast %c1_i32 : i32 to vector<2x32xi32>
    %417 = arith.addi %412, %416 : vector<2x32xi32>
    %c16_i32_347 = arith.constant 16 : i32
    %418 = vector.broadcast %c16_i32_347 : i32 to vector<2x32xi32>
    %419 = arith.muli %417, %418 : vector<2x32xi32>
    %420 = arith.cmpi slt, %411, %419 : vector<2x32xi32>
    %421 = arith.andi %415, %420 : vector<2x32xi1>
    %422 = arith.extui %421 : vector<2x32xi1> to vector<2x32xi32>
    %423 = arith.sitofp %422 : vector<2x32xi32> to vector<2x32xf32>
    %cst_348 = arith.constant 0.000000e+00 : f32
    %424 = vector.broadcast %cst_348 : f32 to vector<2x32xf32>
    %cst_349 = arith.constant 0.000000e+00 : f32
    %425 = vector.broadcast %cst_349 : f32 to vector<2x32xf32>
    %cst_350 = arith.constant 0.000000e+00 : f32
    %426 = vector.broadcast %cst_350 : f32 to vector<2x32xf32>
    %c0_351 = arith.constant 0 : index
    %c0_352 = arith.constant 0 : index
    %c0_353 = arith.constant 0 : index
    %427 = vector.load %arg17[%c0_351, %c0_352, %c0_353] : memref<4x32x32xf32, #tpu.memory_space<vmem>>, vector<1x32x32xf32>
    %428 = vector.shape_cast %427 : vector<1x32x32xf32> to vector<32x32xf32>
    %cst_354 = arith.constant dense<0.000000e+00> : vector<2x32xf32>
    %429 = tpu.matmul %424, %428, %cst_354 {dimension_numbers = #tpu.dot_dimension_numbers<[1], [0], [0], [1], [0, 0, 1, 1], [], []>} : vector<2x32xf32>, vector<32x32xf32>, vector<2x32xf32> -> vector<2x32xf32>
    %c0_355 = arith.constant 0 : index
    %c0_356 = arith.constant 0 : index
    %c0_357 = arith.constant 0 : index
    %430 = vector.load %arg18[%c0_355, %c0_356, %c0_357] : memref<4x32x32xf32, #tpu.memory_space<vmem>>, vector<1x32x32xf32>
    %431 = vector.shape_cast %430 : vector<1x32x32xf32> to vector<32x32xf32>
    %cst_358 = arith.constant dense<0.000000e+00> : vector<2x32xf32>
    %432 = tpu.matmul %426, %431, %cst_358 {dimension_numbers = #tpu.dot_dimension_numbers<[1], [0], [0], [1], [0, 0, 1, 1], [], []>} : vector<2x32xf32>, vector<32x32xf32>, vector<2x32xf32> -> vector<2x32xf32>
    %433 = arith.addf %429, %432 : vector<2x32xf32>
    %c0_359 = arith.constant 0 : index
    %c0_360 = arith.constant 0 : index
    %c0_361 = arith.constant 0 : index
    %434 = vector.load %arg19[%c0_359, %c0_360, %c0_361] : memref<4x1x32xf32, #tpu.memory_space<vmem>>, vector<1x1x32xf32>
    %435 = vector.shape_cast %434 : vector<1x1x32xf32> to vector<1x32xf32>
    %436 = vector.broadcast %435 : vector<1x32xf32> to vector<2x32xf32>
    %437 = arith.addf %433, %436 : vector<2x32xf32>
    %c1_362 = arith.constant 1 : index
    %c0_363 = arith.constant 0 : index
    %c0_364 = arith.constant 0 : index
    %438 = vector.load %arg17[%c1_362, %c0_363, %c0_364] : memref<4x32x32xf32, #tpu.memory_space<vmem>>, vector<1x32x32xf32>
    %439 = vector.shape_cast %438 : vector<1x32x32xf32> to vector<32x32xf32>
    %cst_365 = arith.constant dense<0.000000e+00> : vector<2x32xf32>
    %440 = tpu.matmul %424, %439, %cst_365 {dimension_numbers = #tpu.dot_dimension_numbers<[1], [0], [0], [1], [0, 0, 1, 1], [], []>} : vector<2x32xf32>, vector<32x32xf32>, vector<2x32xf32> -> vector<2x32xf32>
    %c1_366 = arith.constant 1 : index
    %c0_367 = arith.constant 0 : index
    %c0_368 = arith.constant 0 : index
    %441 = vector.load %arg18[%c1_366, %c0_367, %c0_368] : memref<4x32x32xf32, #tpu.memory_space<vmem>>, vector<1x32x32xf32>
    %442 = vector.shape_cast %441 : vector<1x32x32xf32> to vector<32x32xf32>
    %cst_369 = arith.constant dense<0.000000e+00> : vector<2x32xf32>
    %443 = tpu.matmul %426, %442, %cst_369 {dimension_numbers = #tpu.dot_dimension_numbers<[1], [0], [0], [1], [0, 0, 1, 1], [], []>} : vector<2x32xf32>, vector<32x32xf32>, vector<2x32xf32> -> vector<2x32xf32>
    %444 = arith.addf %440, %443 : vector<2x32xf32>
    %c1_370 = arith.constant 1 : index
    %c0_371 = arith.constant 0 : index
    %c0_372 = arith.constant 0 : index
    %445 = vector.load %arg19[%c1_370, %c0_371, %c0_372] : memref<4x1x32xf32, #tpu.memory_space<vmem>>, vector<1x1x32xf32>
    %446 = vector.shape_cast %445 : vector<1x1x32xf32> to vector<1x32xf32>
    %447 = vector.broadcast %446 : vector<1x32xf32> to vector<2x32xf32>
    %448 = arith.addf %444, %447 : vector<2x32xf32>
    %c2_373 = arith.constant 2 : index
    %c0_374 = arith.constant 0 : index
    %c0_375 = arith.constant 0 : index
    %449 = vector.load %arg17[%c2_373, %c0_374, %c0_375] : memref<4x32x32xf32, #tpu.memory_space<vmem>>, vector<1x32x32xf32>
    %450 = vector.shape_cast %449 : vector<1x32x32xf32> to vector<32x32xf32>
    %cst_376 = arith.constant dense<0.000000e+00> : vector<2x32xf32>
    %451 = tpu.matmul %424, %450, %cst_376 {dimension_numbers = #tpu.dot_dimension_numbers<[1], [0], [0], [1], [0, 0, 1, 1], [], []>} : vector<2x32xf32>, vector<32x32xf32>, vector<2x32xf32> -> vector<2x32xf32>
    %c2_377 = arith.constant 2 : index
    %c0_378 = arith.constant 0 : index
    %c0_379 = arith.constant 0 : index
    %452 = vector.load %arg18[%c2_377, %c0_378, %c0_379] : memref<4x32x32xf32, #tpu.memory_space<vmem>>, vector<1x32x32xf32>
    %453 = vector.shape_cast %452 : vector<1x32x32xf32> to vector<32x32xf32>
    %cst_380 = arith.constant dense<0.000000e+00> : vector<2x32xf32>
    %454 = tpu.matmul %426, %453, %cst_380 {dimension_numbers = #tpu.dot_dimension_numbers<[1], [0], [0], [1], [0, 0, 1, 1], [], []>} : vector<2x32xf32>, vector<32x32xf32>, vector<2x32xf32> -> vector<2x32xf32>
    %455 = arith.addf %451, %454 : vector<2x32xf32>
    %c2_381 = arith.constant 2 : index
    %c0_382 = arith.constant 0 : index
    %c0_383 = arith.constant 0 : index
    %456 = vector.load %arg19[%c2_381, %c0_382, %c0_383] : memref<4x1x32xf32, #tpu.memory_space<vmem>>, vector<1x1x32xf32>
    %457 = vector.shape_cast %456 : vector<1x1x32xf32> to vector<1x32xf32>
    %458 = vector.broadcast %457 : vector<1x32xf32> to vector<2x32xf32>
    %459 = arith.addf %455, %458 : vector<2x32xf32>
    %c3_384 = arith.constant 3 : index
    %c0_385 = arith.constant 0 : index
    %c0_386 = arith.constant 0 : index
    %460 = vector.load %arg17[%c3_384, %c0_385, %c0_386] : memref<4x32x32xf32, #tpu.memory_space<vmem>>, vector<1x32x32xf32>
    %461 = vector.shape_cast %460 : vector<1x32x32xf32> to vector<32x32xf32>
    %cst_387 = arith.constant dense<0.000000e+00> : vector<2x32xf32>
    %462 = tpu.matmul %424, %461, %cst_387 {dimension_numbers = #tpu.dot_dimension_numbers<[1], [0], [0], [1], [0, 0, 1, 1], [], []>} : vector<2x32xf32>, vector<32x32xf32>, vector<2x32xf32> -> vector<2x32xf32>
    %c3_388 = arith.constant 3 : index
    %c0_389 = arith.constant 0 : index
    %c0_390 = arith.constant 0 : index
    %463 = vector.load %arg18[%c3_388, %c0_389, %c0_390] : memref<4x32x32xf32, #tpu.memory_space<vmem>>, vector<1x32x32xf32>
    %464 = vector.shape_cast %463 : vector<1x32x32xf32> to vector<32x32xf32>
    %cst_391 = arith.constant dense<0.000000e+00> : vector<2x32xf32>
    %465 = tpu.matmul %426, %464, %cst_391 {dimension_numbers = #tpu.dot_dimension_numbers<[1], [0], [0], [1], [0, 0, 1, 1], [], []>} : vector<2x32xf32>, vector<32x32xf32>, vector<2x32xf32> -> vector<2x32xf32>
    %466 = arith.addf %462, %465 : vector<2x32xf32>
    %c3_392 = arith.constant 3 : index
    %c0_393 = arith.constant 0 : index
    %c0_394 = arith.constant 0 : index
    %467 = vector.load %arg19[%c3_392, %c0_393, %c0_394] : memref<4x1x32xf32, #tpu.memory_space<vmem>>, vector<1x1x32xf32>
    %468 = vector.shape_cast %467 : vector<1x1x32xf32> to vector<1x32xf32>
    %469 = vector.broadcast %468 : vector<1x32xf32> to vector<2x32xf32>
    %470 = arith.addf %466, %469 : vector<2x32xf32>
    %cst_395 = arith.constant 0.000000e+00 : f32
    %471 = vector.broadcast %cst_395 : f32 to vector<2x32xf32>
    %472 = arith.subf %471, %448 : vector<2x32xf32>
    %473 = math.exp %472 : vector<2x32xf32>
    %cst_396 = arith.constant 1.000000e+00 : f32
    %474 = vector.broadcast %cst_396 : f32 to vector<2x32xf32>
    %475 = arith.addf %474, %473 : vector<2x32xf32>
    %cst_397 = arith.constant 1.000000e+00 : f32
    %476 = vector.broadcast %cst_397 : f32 to vector<2x32xf32>
    %477 = arith.divf %476, %475 : vector<2x32xf32>
    %478 = arith.mulf %477, %425 : vector<2x32xf32>
    %cst_398 = arith.constant 0.000000e+00 : f32
    %479 = vector.broadcast %cst_398 : f32 to vector<2x32xf32>
    %480 = arith.subf %479, %437 : vector<2x32xf32>
    %481 = math.exp %480 : vector<2x32xf32>
    %cst_399 = arith.constant 1.000000e+00 : f32
    %482 = vector.broadcast %cst_399 : f32 to vector<2x32xf32>
    %483 = arith.addf %482, %481 : vector<2x32xf32>
    %cst_400 = arith.constant 1.000000e+00 : f32
    %484 = vector.broadcast %cst_400 : f32 to vector<2x32xf32>
    %485 = arith.divf %484, %483 : vector<2x32xf32>
    %cst_401 = arith.constant -2.000000e+00 : f32
    %486 = vector.broadcast %cst_401 : f32 to vector<2x32xf32>
    %487 = arith.mulf %486, %459 : vector<2x32xf32>
    %488 = math.exp %487 : vector<2x32xf32>
    %cst_402 = arith.constant 1.000000e+00 : f32
    %489 = vector.broadcast %cst_402 : f32 to vector<2x32xf32>
    %490 = arith.addf %489, %488 : vector<2x32xf32>
    %cst_403 = arith.constant 2.000000e+00 : f32
    %491 = vector.broadcast %cst_403 : f32 to vector<2x32xf32>
    %492 = arith.divf %491, %490 : vector<2x32xf32>
    %cst_404 = arith.constant 1.000000e+00 : f32
    %493 = vector.broadcast %cst_404 : f32 to vector<2x32xf32>
    %494 = arith.subf %492, %493 : vector<2x32xf32>
    %495 = arith.mulf %485, %494 : vector<2x32xf32>
    %496 = arith.addf %478, %495 : vector<2x32xf32>
    %cst_405 = arith.constant 0.000000e+00 : f32
    %497 = vector.broadcast %cst_405 : f32 to vector<2x32xf32>
    %498 = arith.subf %497, %470 : vector<2x32xf32>
    %499 = math.exp %498 : vector<2x32xf32>
    %cst_406 = arith.constant 1.000000e+00 : f32
    %500 = vector.broadcast %cst_406 : f32 to vector<2x32xf32>
    %501 = arith.addf %500, %499 : vector<2x32xf32>
    %cst_407 = arith.constant 1.000000e+00 : f32
    %502 = vector.broadcast %cst_407 : f32 to vector<2x32xf32>
    %503 = arith.divf %502, %501 : vector<2x32xf32>
    %cst_408 = arith.constant -2.000000e+00 : f32
    %504 = vector.broadcast %cst_408 : f32 to vector<2x32xf32>
    %505 = arith.mulf %504, %496 : vector<2x32xf32>
    %506 = math.exp %505 : vector<2x32xf32>
    %cst_409 = arith.constant 1.000000e+00 : f32
    %507 = vector.broadcast %cst_409 : f32 to vector<2x32xf32>
    %508 = arith.addf %507, %506 : vector<2x32xf32>
    %cst_410 = arith.constant 2.000000e+00 : f32
    %509 = vector.broadcast %cst_410 : f32 to vector<2x32xf32>
    %510 = arith.divf %509, %508 : vector<2x32xf32>
    %cst_411 = arith.constant 1.000000e+00 : f32
    %511 = vector.broadcast %cst_411 : f32 to vector<2x32xf32>
    %512 = arith.subf %510, %511 : vector<2x32xf32>
    %513 = arith.mulf %503, %512 : vector<2x32xf32>
    %514 = tpu.transpose %410, [1, 0] : vector<32x32xf32> -> vector<32x32xf32>
    %cst_412 = arith.constant dense<0.000000e+00> : vector<2x32xf32>
    %515 = tpu.matmul %513, %514, %cst_412 {dimension_numbers = #tpu.dot_dimension_numbers<[1], [0], [0], [1], [0, 0, 1, 1], [], []>} : vector<2x32xf32>, vector<32x32xf32>, vector<2x32xf32> -> vector<2x32xf32>
    %cst_413 = arith.constant -1.000000e+30 : f32
    %516 = vector.broadcast %cst_413 : f32 to vector<2x32xf32>
    %517 = arith.select %421, %515, %516 : vector<2x32xi1>, vector<2x32xf32>
    %cst_414 = arith.constant dense<0xFF800000> : vector<2xf32>
    %518 = vector.multi_reduction <maximumf>, %517, %cst_414 [1] : vector<2x32xf32> to vector<2xf32>
    %519 = vector.shape_cast %518 : vector<2xf32> to vector<2x1xf32>
    %520 = vector.broadcast %519 : vector<2x1xf32> to vector<2x32xf32>
    %521 = arith.subf %517, %520 : vector<2x32xf32>
    %522 = math.exp %521 : vector<2x32xf32>
    %523 = arith.mulf %522, %423 : vector<2x32xf32>
    %cst_415 = arith.constant dense<0.000000e+00> : vector<2xf32>
    %524 = vector.multi_reduction <add>, %523, %cst_415 [1] : vector<2x32xf32> to vector<2xf32>
    %525 = vector.shape_cast %524 : vector<2xf32> to vector<2x1xf32>
    %526 = tpu.reciprocal %525 {approx = true} : vector<2x1xf32> -> vector<2x1xf32>
    %527 = vector.broadcast %526 : vector<2x1xf32> to vector<2x32xf32>
    %528 = arith.mulf %523, %527 : vector<2x32xf32>
    %cst_416 = arith.constant dense<0.000000e+00> : vector<2x32xf32>
    %529 = tpu.matmul %528, %410, %cst_416 {dimension_numbers = #tpu.dot_dimension_numbers<[1], [0], [0], [1], [0, 0, 1, 1], [], []>} : vector<2x32xf32>, vector<32x32xf32>, vector<2x32xf32> -> vector<2x32xf32>
    %c0_417 = arith.constant 0 : index
    %c0_418 = arith.constant 0 : index
    %c0_419 = arith.constant 0 : index
    %530 = vector.load %arg17[%c0_417, %c0_418, %c0_419] : memref<4x32x32xf32, #tpu.memory_space<vmem>>, vector<1x32x32xf32>
    %531 = vector.shape_cast %530 : vector<1x32x32xf32> to vector<32x32xf32>
    %cst_420 = arith.constant dense<0.000000e+00> : vector<2x32xf32>
    %532 = tpu.matmul %513, %531, %cst_420 {dimension_numbers = #tpu.dot_dimension_numbers<[1], [0], [0], [1], [0, 0, 1, 1], [], []>} : vector<2x32xf32>, vector<32x32xf32>, vector<2x32xf32> -> vector<2x32xf32>
    %c0_421 = arith.constant 0 : index
    %c0_422 = arith.constant 0 : index
    %c0_423 = arith.constant 0 : index
    %533 = vector.load %arg18[%c0_421, %c0_422, %c0_423] : memref<4x32x32xf32, #tpu.memory_space<vmem>>, vector<1x32x32xf32>
    %534 = vector.shape_cast %533 : vector<1x32x32xf32> to vector<32x32xf32>
    %cst_424 = arith.constant dense<0.000000e+00> : vector<2x32xf32>
    %535 = tpu.matmul %529, %534, %cst_424 {dimension_numbers = #tpu.dot_dimension_numbers<[1], [0], [0], [1], [0, 0, 1, 1], [], []>} : vector<2x32xf32>, vector<32x32xf32>, vector<2x32xf32> -> vector<2x32xf32>
    %536 = arith.addf %532, %535 : vector<2x32xf32>
    %c0_425 = arith.constant 0 : index
    %c0_426 = arith.constant 0 : index
    %c0_427 = arith.constant 0 : index
    %537 = vector.load %arg19[%c0_425, %c0_426, %c0_427] : memref<4x1x32xf32, #tpu.memory_space<vmem>>, vector<1x1x32xf32>
    %538 = vector.shape_cast %537 : vector<1x1x32xf32> to vector<1x32xf32>
    %539 = vector.broadcast %538 : vector<1x32xf32> to vector<2x32xf32>
    %540 = arith.addf %536, %539 : vector<2x32xf32>
    %c1_428 = arith.constant 1 : index
    %c0_429 = arith.constant 0 : index
    %c0_430 = arith.constant 0 : index
    %541 = vector.load %arg17[%c1_428, %c0_429, %c0_430] : memref<4x32x32xf32, #tpu.memory_space<vmem>>, vector<1x32x32xf32>
    %542 = vector.shape_cast %541 : vector<1x32x32xf32> to vector<32x32xf32>
    %cst_431 = arith.constant dense<0.000000e+00> : vector<2x32xf32>
    %543 = tpu.matmul %513, %542, %cst_431 {dimension_numbers = #tpu.dot_dimension_numbers<[1], [0], [0], [1], [0, 0, 1, 1], [], []>} : vector<2x32xf32>, vector<32x32xf32>, vector<2x32xf32> -> vector<2x32xf32>
    %c1_432 = arith.constant 1 : index
    %c0_433 = arith.constant 0 : index
    %c0_434 = arith.constant 0 : index
    %544 = vector.load %arg18[%c1_432, %c0_433, %c0_434] : memref<4x32x32xf32, #tpu.memory_space<vmem>>, vector<1x32x32xf32>
    %545 = vector.shape_cast %544 : vector<1x32x32xf32> to vector<32x32xf32>
    %cst_435 = arith.constant dense<0.000000e+00> : vector<2x32xf32>
    %546 = tpu.matmul %529, %545, %cst_435 {dimension_numbers = #tpu.dot_dimension_numbers<[1], [0], [0], [1], [0, 0, 1, 1], [], []>} : vector<2x32xf32>, vector<32x32xf32>, vector<2x32xf32> -> vector<2x32xf32>
    %547 = arith.addf %543, %546 : vector<2x32xf32>
    %c1_436 = arith.constant 1 : index
    %c0_437 = arith.constant 0 : index
    %c0_438 = arith.constant 0 : index
    %548 = vector.load %arg19[%c1_436, %c0_437, %c0_438] : memref<4x1x32xf32, #tpu.memory_space<vmem>>, vector<1x1x32xf32>
    %549 = vector.shape_cast %548 : vector<1x1x32xf32> to vector<1x32xf32>
    %550 = vector.broadcast %549 : vector<1x32xf32> to vector<2x32xf32>
    %551 = arith.addf %547, %550 : vector<2x32xf32>
    %c2_439 = arith.constant 2 : index
    %c0_440 = arith.constant 0 : index
    %c0_441 = arith.constant 0 : index
    %552 = vector.load %arg17[%c2_439, %c0_440, %c0_441] : memref<4x32x32xf32, #tpu.memory_space<vmem>>, vector<1x32x32xf32>
    %553 = vector.shape_cast %552 : vector<1x32x32xf32> to vector<32x32xf32>
    %cst_442 = arith.constant dense<0.000000e+00> : vector<2x32xf32>
    %554 = tpu.matmul %513, %553, %cst_442 {dimension_numbers = #tpu.dot_dimension_numbers<[1], [0], [0], [1], [0, 0, 1, 1], [], []>} : vector<2x32xf32>, vector<32x32xf32>, vector<2x32xf32> -> vector<2x32xf32>
    %c2_443 = arith.constant 2 : index
    %c0_444 = arith.constant 0 : index
    %c0_445 = arith.constant 0 : index
    %555 = vector.load %arg18[%c2_443, %c0_444, %c0_445] : memref<4x32x32xf32, #tpu.memory_space<vmem>>, vector<1x32x32xf32>
    %556 = vector.shape_cast %555 : vector<1x32x32xf32> to vector<32x32xf32>
    %cst_446 = arith.constant dense<0.000000e+00> : vector<2x32xf32>
    %557 = tpu.matmul %529, %556, %cst_446 {dimension_numbers = #tpu.dot_dimension_numbers<[1], [0], [0], [1], [0, 0, 1, 1], [], []>} : vector<2x32xf32>, vector<32x32xf32>, vector<2x32xf32> -> vector<2x32xf32>
    %558 = arith.addf %554, %557 : vector<2x32xf32>
    %c2_447 = arith.constant 2 : index
    %c0_448 = arith.constant 0 : index
    %c0_449 = arith.constant 0 : index
    %559 = vector.load %arg19[%c2_447, %c0_448, %c0_449] : memref<4x1x32xf32, #tpu.memory_space<vmem>>, vector<1x1x32xf32>
    %560 = vector.shape_cast %559 : vector<1x1x32xf32> to vector<1x32xf32>
    %561 = vector.broadcast %560 : vector<1x32xf32> to vector<2x32xf32>
    %562 = arith.addf %558, %561 : vector<2x32xf32>
    %c3_450 = arith.constant 3 : index
    %c0_451 = arith.constant 0 : index
    %c0_452 = arith.constant 0 : index
    %563 = vector.load %arg17[%c3_450, %c0_451, %c0_452] : memref<4x32x32xf32, #tpu.memory_space<vmem>>, vector<1x32x32xf32>
    %564 = vector.shape_cast %563 : vector<1x32x32xf32> to vector<32x32xf32>
    %cst_453 = arith.constant dense<0.000000e+00> : vector<2x32xf32>
    %565 = tpu.matmul %513, %564, %cst_453 {dimension_numbers = #tpu.dot_dimension_numbers<[1], [0], [0], [1], [0, 0, 1, 1], [], []>} : vector<2x32xf32>, vector<32x32xf32>, vector<2x32xf32> -> vector<2x32xf32>
    %c3_454 = arith.constant 3 : index
    %c0_455 = arith.constant 0 : index
    %c0_456 = arith.constant 0 : index
    %566 = vector.load %arg18[%c3_454, %c0_455, %c0_456] : memref<4x32x32xf32, #tpu.memory_space<vmem>>, vector<1x32x32xf32>
    %567 = vector.shape_cast %566 : vector<1x32x32xf32> to vector<32x32xf32>
    %cst_457 = arith.constant dense<0.000000e+00> : vector<2x32xf32>
    %568 = tpu.matmul %529, %567, %cst_457 {dimension_numbers = #tpu.dot_dimension_numbers<[1], [0], [0], [1], [0, 0, 1, 1], [], []>} : vector<2x32xf32>, vector<32x32xf32>, vector<2x32xf32> -> vector<2x32xf32>
    %569 = arith.addf %565, %568 : vector<2x32xf32>
    %c3_458 = arith.constant 3 : index
    %c0_459 = arith.constant 0 : index
    %c0_460 = arith.constant 0 : index
    %570 = vector.load %arg19[%c3_458, %c0_459, %c0_460] : memref<4x1x32xf32, #tpu.memory_space<vmem>>, vector<1x1x32xf32>
    %571 = vector.shape_cast %570 : vector<1x1x32xf32> to vector<1x32xf32>
    %572 = vector.broadcast %571 : vector<1x32xf32> to vector<2x32xf32>
    %573 = arith.addf %569, %572 : vector<2x32xf32>
    %cst_461 = arith.constant 0.000000e+00 : f32
    %574 = vector.broadcast %cst_461 : f32 to vector<2x32xf32>
    %575 = arith.subf %574, %551 : vector<2x32xf32>
    %576 = math.exp %575 : vector<2x32xf32>
    %cst_462 = arith.constant 1.000000e+00 : f32
    %577 = vector.broadcast %cst_462 : f32 to vector<2x32xf32>
    %578 = arith.addf %577, %576 : vector<2x32xf32>
    %cst_463 = arith.constant 1.000000e+00 : f32
    %579 = vector.broadcast %cst_463 : f32 to vector<2x32xf32>
    %580 = arith.divf %579, %578 : vector<2x32xf32>
    %581 = arith.mulf %580, %496 : vector<2x32xf32>
    %cst_464 = arith.constant 0.000000e+00 : f32
    %582 = vector.broadcast %cst_464 : f32 to vector<2x32xf32>
    %583 = arith.subf %582, %540 : vector<2x32xf32>
    %584 = math.exp %583 : vector<2x32xf32>
    %cst_465 = arith.constant 1.000000e+00 : f32
    %585 = vector.broadcast %cst_465 : f32 to vector<2x32xf32>
    %586 = arith.addf %585, %584 : vector<2x32xf32>
    %cst_466 = arith.constant 1.000000e+00 : f32
    %587 = vector.broadcast %cst_466 : f32 to vector<2x32xf32>
    %588 = arith.divf %587, %586 : vector<2x32xf32>
    %cst_467 = arith.constant -2.000000e+00 : f32
    %589 = vector.broadcast %cst_467 : f32 to vector<2x32xf32>
    %590 = arith.mulf %589, %562 : vector<2x32xf32>
    %591 = math.exp %590 : vector<2x32xf32>
    %cst_468 = arith.constant 1.000000e+00 : f32
    %592 = vector.broadcast %cst_468 : f32 to vector<2x32xf32>
    %593 = arith.addf %592, %591 : vector<2x32xf32>
    %cst_469 = arith.constant 2.000000e+00 : f32
    %594 = vector.broadcast %cst_469 : f32 to vector<2x32xf32>
    %595 = arith.divf %594, %593 : vector<2x32xf32>
    %cst_470 = arith.constant 1.000000e+00 : f32
    %596 = vector.broadcast %cst_470 : f32 to vector<2x32xf32>
    %597 = arith.subf %595, %596 : vector<2x32xf32>
    %598 = arith.mulf %588, %597 : vector<2x32xf32>
    %599 = arith.addf %581, %598 : vector<2x32xf32>
    %cst_471 = arith.constant 0.000000e+00 : f32
    %600 = vector.broadcast %cst_471 : f32 to vector<2x32xf32>
    %601 = arith.subf %600, %573 : vector<2x32xf32>
    %602 = math.exp %601 : vector<2x32xf32>
    %cst_472 = arith.constant 1.000000e+00 : f32
    %603 = vector.broadcast %cst_472 : f32 to vector<2x32xf32>
    %604 = arith.addf %603, %602 : vector<2x32xf32>
    %cst_473 = arith.constant 1.000000e+00 : f32
    %605 = vector.broadcast %cst_473 : f32 to vector<2x32xf32>
    %606 = arith.divf %605, %604 : vector<2x32xf32>
    %cst_474 = arith.constant -2.000000e+00 : f32
    %607 = vector.broadcast %cst_474 : f32 to vector<2x32xf32>
    %608 = arith.mulf %607, %599 : vector<2x32xf32>
    %609 = math.exp %608 : vector<2x32xf32>
    %cst_475 = arith.constant 1.000000e+00 : f32
    %610 = vector.broadcast %cst_475 : f32 to vector<2x32xf32>
    %611 = arith.addf %610, %609 : vector<2x32xf32>
    %cst_476 = arith.constant 2.000000e+00 : f32
    %612 = vector.broadcast %cst_476 : f32 to vector<2x32xf32>
    %613 = arith.divf %612, %611 : vector<2x32xf32>
    %cst_477 = arith.constant 1.000000e+00 : f32
    %614 = vector.broadcast %cst_477 : f32 to vector<2x32xf32>
    %615 = arith.subf %613, %614 : vector<2x32xf32>
    %616 = arith.mulf %606, %615 : vector<2x32xf32>
    %617 = tpu.transpose %410, [1, 0] : vector<32x32xf32> -> vector<32x32xf32>
    %cst_478 = arith.constant dense<0.000000e+00> : vector<2x32xf32>
    %618 = tpu.matmul %616, %617, %cst_478 {dimension_numbers = #tpu.dot_dimension_numbers<[1], [0], [0], [1], [0, 0, 1, 1], [], []>} : vector<2x32xf32>, vector<32x32xf32>, vector<2x32xf32> -> vector<2x32xf32>
    %cst_479 = arith.constant -1.000000e+30 : f32
    %619 = vector.broadcast %cst_479 : f32 to vector<2x32xf32>
    %620 = arith.select %421, %618, %619 : vector<2x32xi1>, vector<2x32xf32>
    %cst_480 = arith.constant dense<0xFF800000> : vector<2xf32>
    %621 = vector.multi_reduction <maximumf>, %620, %cst_480 [1] : vector<2x32xf32> to vector<2xf32>
    %622 = vector.shape_cast %621 : vector<2xf32> to vector<2x1xf32>
    %623 = vector.broadcast %622 : vector<2x1xf32> to vector<2x32xf32>
    %624 = arith.subf %620, %623 : vector<2x32xf32>
    %625 = math.exp %624 : vector<2x32xf32>
    %626 = arith.mulf %625, %423 : vector<2x32xf32>
    %cst_481 = arith.constant dense<0.000000e+00> : vector<2xf32>
    %627 = vector.multi_reduction <add>, %626, %cst_481 [1] : vector<2x32xf32> to vector<2xf32>
    %628 = vector.shape_cast %627 : vector<2xf32> to vector<2x1xf32>
    %629 = tpu.reciprocal %628 {approx = true} : vector<2x1xf32> -> vector<2x1xf32>
    %630 = vector.broadcast %629 : vector<2x1xf32> to vector<2x32xf32>
    %631 = arith.mulf %626, %630 : vector<2x32xf32>
    %cst_482 = arith.constant dense<0.000000e+00> : vector<2x32xf32>
    %632 = tpu.matmul %631, %410, %cst_482 {dimension_numbers = #tpu.dot_dimension_numbers<[1], [0], [0], [1], [0, 0, 1, 1], [], []>} : vector<2x32xf32>, vector<32x32xf32>, vector<2x32xf32> -> vector<2x32xf32>
    %c0_483 = arith.constant 0 : index
    %c0_484 = arith.constant 0 : index
    %c0_485 = arith.constant 0 : index
    %633 = vector.load %arg17[%c0_483, %c0_484, %c0_485] : memref<4x32x32xf32, #tpu.memory_space<vmem>>, vector<1x32x32xf32>
    %634 = vector.shape_cast %633 : vector<1x32x32xf32> to vector<32x32xf32>
    %cst_486 = arith.constant dense<0.000000e+00> : vector<2x32xf32>
    %635 = tpu.matmul %616, %634, %cst_486 {dimension_numbers = #tpu.dot_dimension_numbers<[1], [0], [0], [1], [0, 0, 1, 1], [], []>} : vector<2x32xf32>, vector<32x32xf32>, vector<2x32xf32> -> vector<2x32xf32>
    %c0_487 = arith.constant 0 : index
    %c0_488 = arith.constant 0 : index
    %c0_489 = arith.constant 0 : index
    %636 = vector.load %arg18[%c0_487, %c0_488, %c0_489] : memref<4x32x32xf32, #tpu.memory_space<vmem>>, vector<1x32x32xf32>
    %637 = vector.shape_cast %636 : vector<1x32x32xf32> to vector<32x32xf32>
    %cst_490 = arith.constant dense<0.000000e+00> : vector<2x32xf32>
    %638 = tpu.matmul %632, %637, %cst_490 {dimension_numbers = #tpu.dot_dimension_numbers<[1], [0], [0], [1], [0, 0, 1, 1], [], []>} : vector<2x32xf32>, vector<32x32xf32>, vector<2x32xf32> -> vector<2x32xf32>
    %639 = arith.addf %635, %638 : vector<2x32xf32>
    %c0_491 = arith.constant 0 : index
    %c0_492 = arith.constant 0 : index
    %c0_493 = arith.constant 0 : index
    %640 = vector.load %arg19[%c0_491, %c0_492, %c0_493] : memref<4x1x32xf32, #tpu.memory_space<vmem>>, vector<1x1x32xf32>
    %641 = vector.shape_cast %640 : vector<1x1x32xf32> to vector<1x32xf32>
    %642 = vector.broadcast %641 : vector<1x32xf32> to vector<2x32xf32>
    %643 = arith.addf %639, %642 : vector<2x32xf32>
    %c1_494 = arith.constant 1 : index
    %c0_495 = arith.constant 0 : index
    %c0_496 = arith.constant 0 : index
    %644 = vector.load %arg17[%c1_494, %c0_495, %c0_496] : memref<4x32x32xf32, #tpu.memory_space<vmem>>, vector<1x32x32xf32>
    %645 = vector.shape_cast %644 : vector<1x32x32xf32> to vector<32x32xf32>
    %cst_497 = arith.constant dense<0.000000e+00> : vector<2x32xf32>
    %646 = tpu.matmul %616, %645, %cst_497 {dimension_numbers = #tpu.dot_dimension_numbers<[1], [0], [0], [1], [0, 0, 1, 1], [], []>} : vector<2x32xf32>, vector<32x32xf32>, vector<2x32xf32> -> vector<2x32xf32>
    %c1_498 = arith.constant 1 : index
    %c0_499 = arith.constant 0 : index
    %c0_500 = arith.constant 0 : index
    %647 = vector.load %arg18[%c1_498, %c0_499, %c0_500] : memref<4x32x32xf32, #tpu.memory_space<vmem>>, vector<1x32x32xf32>
    %648 = vector.shape_cast %647 : vector<1x32x32xf32> to vector<32x32xf32>
    %cst_501 = arith.constant dense<0.000000e+00> : vector<2x32xf32>
    %649 = tpu.matmul %632, %648, %cst_501 {dimension_numbers = #tpu.dot_dimension_numbers<[1], [0], [0], [1], [0, 0, 1, 1], [], []>} : vector<2x32xf32>, vector<32x32xf32>, vector<2x32xf32> -> vector<2x32xf32>
    %650 = arith.addf %646, %649 : vector<2x32xf32>
    %c1_502 = arith.constant 1 : index
    %c0_503 = arith.constant 0 : index
    %c0_504 = arith.constant 0 : index
    %651 = vector.load %arg19[%c1_502, %c0_503, %c0_504] : memref<4x1x32xf32, #tpu.memory_space<vmem>>, vector<1x1x32xf32>
    %652 = vector.shape_cast %651 : vector<1x1x32xf32> to vector<1x32xf32>
    %653 = vector.broadcast %652 : vector<1x32xf32> to vector<2x32xf32>
    %654 = arith.addf %650, %653 : vector<2x32xf32>
    %c2_505 = arith.constant 2 : index
    %c0_506 = arith.constant 0 : index
    %c0_507 = arith.constant 0 : index
    %655 = vector.load %arg17[%c2_505, %c0_506, %c0_507] : memref<4x32x32xf32, #tpu.memory_space<vmem>>, vector<1x32x32xf32>
    %656 = vector.shape_cast %655 : vector<1x32x32xf32> to vector<32x32xf32>
    %cst_508 = arith.constant dense<0.000000e+00> : vector<2x32xf32>
    %657 = tpu.matmul %616, %656, %cst_508 {dimension_numbers = #tpu.dot_dimension_numbers<[1], [0], [0], [1], [0, 0, 1, 1], [], []>} : vector<2x32xf32>, vector<32x32xf32>, vector<2x32xf32> -> vector<2x32xf32>
    %c2_509 = arith.constant 2 : index
    %c0_510 = arith.constant 0 : index
    %c0_511 = arith.constant 0 : index
    %658 = vector.load %arg18[%c2_509, %c0_510, %c0_511] : memref<4x32x32xf32, #tpu.memory_space<vmem>>, vector<1x32x32xf32>
    %659 = vector.shape_cast %658 : vector<1x32x32xf32> to vector<32x32xf32>
    %cst_512 = arith.constant dense<0.000000e+00> : vector<2x32xf32>
    %660 = tpu.matmul %632, %659, %cst_512 {dimension_numbers = #tpu.dot_dimension_numbers<[1], [0], [0], [1], [0, 0, 1, 1], [], []>} : vector<2x32xf32>, vector<32x32xf32>, vector<2x32xf32> -> vector<2x32xf32>
    %661 = arith.addf %657, %660 : vector<2x32xf32>
    %c2_513 = arith.constant 2 : index
    %c0_514 = arith.constant 0 : index
    %c0_515 = arith.constant 0 : index
    %662 = vector.load %arg19[%c2_513, %c0_514, %c0_515] : memref<4x1x32xf32, #tpu.memory_space<vmem>>, vector<1x1x32xf32>
    %663 = vector.shape_cast %662 : vector<1x1x32xf32> to vector<1x32xf32>
    %664 = vector.broadcast %663 : vector<1x32xf32> to vector<2x32xf32>
    %665 = arith.addf %661, %664 : vector<2x32xf32>
    %c3_516 = arith.constant 3 : index
    %c0_517 = arith.constant 0 : index
    %c0_518 = arith.constant 0 : index
    %666 = vector.load %arg17[%c3_516, %c0_517, %c0_518] : memref<4x32x32xf32, #tpu.memory_space<vmem>>, vector<1x32x32xf32>
    %667 = vector.shape_cast %666 : vector<1x32x32xf32> to vector<32x32xf32>
    %cst_519 = arith.constant dense<0.000000e+00> : vector<2x32xf32>
    %668 = tpu.matmul %616, %667, %cst_519 {dimension_numbers = #tpu.dot_dimension_numbers<[1], [0], [0], [1], [0, 0, 1, 1], [], []>} : vector<2x32xf32>, vector<32x32xf32>, vector<2x32xf32> -> vector<2x32xf32>
    %c3_520 = arith.constant 3 : index
    %c0_521 = arith.constant 0 : index
    %c0_522 = arith.constant 0 : index
    %669 = vector.load %arg18[%c3_520, %c0_521, %c0_522] : memref<4x32x32xf32, #tpu.memory_space<vmem>>, vector<1x32x32xf32>
    %670 = vector.shape_cast %669 : vector<1x32x32xf32> to vector<32x32xf32>
    %cst_523 = arith.constant dense<0.000000e+00> : vector<2x32xf32>
    %671 = tpu.matmul %632, %670, %cst_523 {dimension_numbers = #tpu.dot_dimension_numbers<[1], [0], [0], [1], [0, 0, 1, 1], [], []>} : vector<2x32xf32>, vector<32x32xf32>, vector<2x32xf32> -> vector<2x32xf32>
    %672 = arith.addf %668, %671 : vector<2x32xf32>
    %c3_524 = arith.constant 3 : index
    %c0_525 = arith.constant 0 : index
    %c0_526 = arith.constant 0 : index
    %673 = vector.load %arg19[%c3_524, %c0_525, %c0_526] : memref<4x1x32xf32, #tpu.memory_space<vmem>>, vector<1x1x32xf32>
    %674 = vector.shape_cast %673 : vector<1x1x32xf32> to vector<1x32xf32>
    %675 = vector.broadcast %674 : vector<1x32xf32> to vector<2x32xf32>
    %676 = arith.addf %672, %675 : vector<2x32xf32>
    %cst_527 = arith.constant 0.000000e+00 : f32
    %677 = vector.broadcast %cst_527 : f32 to vector<2x32xf32>
    %678 = arith.subf %677, %654 : vector<2x32xf32>
    %679 = math.exp %678 : vector<2x32xf32>
    %cst_528 = arith.constant 1.000000e+00 : f32
    %680 = vector.broadcast %cst_528 : f32 to vector<2x32xf32>
    %681 = arith.addf %680, %679 : vector<2x32xf32>
    %cst_529 = arith.constant 1.000000e+00 : f32
    %682 = vector.broadcast %cst_529 : f32 to vector<2x32xf32>
    %683 = arith.divf %682, %681 : vector<2x32xf32>
    %684 = arith.mulf %683, %599 : vector<2x32xf32>
    %cst_530 = arith.constant 0.000000e+00 : f32
    %685 = vector.broadcast %cst_530 : f32 to vector<2x32xf32>
    %686 = arith.subf %685, %643 : vector<2x32xf32>
    %687 = math.exp %686 : vector<2x32xf32>
    %cst_531 = arith.constant 1.000000e+00 : f32
    %688 = vector.broadcast %cst_531 : f32 to vector<2x32xf32>
    %689 = arith.addf %688, %687 : vector<2x32xf32>
    %cst_532 = arith.constant 1.000000e+00 : f32
    %690 = vector.broadcast %cst_532 : f32 to vector<2x32xf32>
    %691 = arith.divf %690, %689 : vector<2x32xf32>
    %cst_533 = arith.constant -2.000000e+00 : f32
    %692 = vector.broadcast %cst_533 : f32 to vector<2x32xf32>
    %693 = arith.mulf %692, %665 : vector<2x32xf32>
    %694 = math.exp %693 : vector<2x32xf32>
    %cst_534 = arith.constant 1.000000e+00 : f32
    %695 = vector.broadcast %cst_534 : f32 to vector<2x32xf32>
    %696 = arith.addf %695, %694 : vector<2x32xf32>
    %cst_535 = arith.constant 2.000000e+00 : f32
    %697 = vector.broadcast %cst_535 : f32 to vector<2x32xf32>
    %698 = arith.divf %697, %696 : vector<2x32xf32>
    %cst_536 = arith.constant 1.000000e+00 : f32
    %699 = vector.broadcast %cst_536 : f32 to vector<2x32xf32>
    %700 = arith.subf %698, %699 : vector<2x32xf32>
    %701 = arith.mulf %691, %700 : vector<2x32xf32>
    %702 = arith.addf %684, %701 : vector<2x32xf32>
    %cst_537 = arith.constant 0.000000e+00 : f32
    %703 = vector.broadcast %cst_537 : f32 to vector<2x32xf32>
    %704 = arith.subf %703, %676 : vector<2x32xf32>
    %705 = math.exp %704 : vector<2x32xf32>
    %cst_538 = arith.constant 1.000000e+00 : f32
    %706 = vector.broadcast %cst_538 : f32 to vector<2x32xf32>
    %707 = arith.addf %706, %705 : vector<2x32xf32>
    %cst_539 = arith.constant 1.000000e+00 : f32
    %708 = vector.broadcast %cst_539 : f32 to vector<2x32xf32>
    %709 = arith.divf %708, %707 : vector<2x32xf32>
    %cst_540 = arith.constant -2.000000e+00 : f32
    %710 = vector.broadcast %cst_540 : f32 to vector<2x32xf32>
    %711 = arith.mulf %710, %702 : vector<2x32xf32>
    %712 = math.exp %711 : vector<2x32xf32>
    %cst_541 = arith.constant 1.000000e+00 : f32
    %713 = vector.broadcast %cst_541 : f32 to vector<2x32xf32>
    %714 = arith.addf %713, %712 : vector<2x32xf32>
    %cst_542 = arith.constant 2.000000e+00 : f32
    %715 = vector.broadcast %cst_542 : f32 to vector<2x32xf32>
    %716 = arith.divf %715, %714 : vector<2x32xf32>
    %cst_543 = arith.constant 1.000000e+00 : f32
    %717 = vector.broadcast %cst_543 : f32 to vector<2x32xf32>
    %718 = arith.subf %716, %717 : vector<2x32xf32>
    %719 = arith.mulf %709, %718 : vector<2x32xf32>
    %720 = tpu.transpose %410, [1, 0] : vector<32x32xf32> -> vector<32x32xf32>
    %cst_544 = arith.constant dense<0.000000e+00> : vector<2x32xf32>
    %721 = tpu.matmul %719, %720, %cst_544 {dimension_numbers = #tpu.dot_dimension_numbers<[1], [0], [0], [1], [0, 0, 1, 1], [], []>} : vector<2x32xf32>, vector<32x32xf32>, vector<2x32xf32> -> vector<2x32xf32>
    %cst_545 = arith.constant -1.000000e+30 : f32
    %722 = vector.broadcast %cst_545 : f32 to vector<2x32xf32>
    %723 = arith.select %421, %721, %722 : vector<2x32xi1>, vector<2x32xf32>
    %cst_546 = arith.constant dense<0xFF800000> : vector<2xf32>
    %724 = vector.multi_reduction <maximumf>, %723, %cst_546 [1] : vector<2x32xf32> to vector<2xf32>
    %725 = vector.shape_cast %724 : vector<2xf32> to vector<2x1xf32>
    %726 = vector.broadcast %725 : vector<2x1xf32> to vector<2x32xf32>
    %727 = arith.subf %723, %726 : vector<2x32xf32>
    %728 = math.exp %727 : vector<2x32xf32>
    %729 = arith.mulf %728, %423 : vector<2x32xf32>
    %cst_547 = arith.constant dense<0.000000e+00> : vector<2xf32>
    %730 = vector.multi_reduction <add>, %729, %cst_547 [1] : vector<2x32xf32> to vector<2xf32>
    %731 = vector.shape_cast %730 : vector<2xf32> to vector<2x1xf32>
    %732 = tpu.reciprocal %731 {approx = true} : vector<2x1xf32> -> vector<2x1xf32>
    %733 = vector.broadcast %732 : vector<2x1xf32> to vector<2x32xf32>
    %734 = arith.mulf %729, %733 : vector<2x32xf32>
    %cst_548 = arith.constant dense<0.000000e+00> : vector<2x32xf32>
    %735 = tpu.matmul %734, %410, %cst_548 {dimension_numbers = #tpu.dot_dimension_numbers<[1], [0], [0], [1], [0, 0, 1, 1], [], []>} : vector<2x32xf32>, vector<32x32xf32>, vector<2x32xf32> -> vector<2x32xf32>
    %c0_549 = arith.constant 0 : index
    %c0_550 = arith.constant 0 : index
    %c0_551 = arith.constant 0 : index
    %736 = vector.load %arg17[%c0_549, %c0_550, %c0_551] : memref<4x32x32xf32, #tpu.memory_space<vmem>>, vector<1x32x32xf32>
    %737 = vector.shape_cast %736 : vector<1x32x32xf32> to vector<32x32xf32>
    %cst_552 = arith.constant dense<0.000000e+00> : vector<2x32xf32>
    %738 = tpu.matmul %719, %737, %cst_552 {dimension_numbers = #tpu.dot_dimension_numbers<[1], [0], [0], [1], [0, 0, 1, 1], [], []>} : vector<2x32xf32>, vector<32x32xf32>, vector<2x32xf32> -> vector<2x32xf32>
    %c0_553 = arith.constant 0 : index
    %c0_554 = arith.constant 0 : index
    %c0_555 = arith.constant 0 : index
    %739 = vector.load %arg18[%c0_553, %c0_554, %c0_555] : memref<4x32x32xf32, #tpu.memory_space<vmem>>, vector<1x32x32xf32>
    %740 = vector.shape_cast %739 : vector<1x32x32xf32> to vector<32x32xf32>
    %cst_556 = arith.constant dense<0.000000e+00> : vector<2x32xf32>
    %741 = tpu.matmul %735, %740, %cst_556 {dimension_numbers = #tpu.dot_dimension_numbers<[1], [0], [0], [1], [0, 0, 1, 1], [], []>} : vector<2x32xf32>, vector<32x32xf32>, vector<2x32xf32> -> vector<2x32xf32>
    %742 = arith.addf %738, %741 : vector<2x32xf32>
    %c0_557 = arith.constant 0 : index
    %c0_558 = arith.constant 0 : index
    %c0_559 = arith.constant 0 : index
    %743 = vector.load %arg19[%c0_557, %c0_558, %c0_559] : memref<4x1x32xf32, #tpu.memory_space<vmem>>, vector<1x1x32xf32>
    %744 = vector.shape_cast %743 : vector<1x1x32xf32> to vector<1x32xf32>
    %745 = vector.broadcast %744 : vector<1x32xf32> to vector<2x32xf32>
    %746 = arith.addf %742, %745 : vector<2x32xf32>
    %c1_560 = arith.constant 1 : index
    %c0_561 = arith.constant 0 : index
    %c0_562 = arith.constant 0 : index
    %747 = vector.load %arg17[%c1_560, %c0_561, %c0_562] : memref<4x32x32xf32, #tpu.memory_space<vmem>>, vector<1x32x32xf32>
    %748 = vector.shape_cast %747 : vector<1x32x32xf32> to vector<32x32xf32>
    %cst_563 = arith.constant dense<0.000000e+00> : vector<2x32xf32>
    %749 = tpu.matmul %719, %748, %cst_563 {dimension_numbers = #tpu.dot_dimension_numbers<[1], [0], [0], [1], [0, 0, 1, 1], [], []>} : vector<2x32xf32>, vector<32x32xf32>, vector<2x32xf32> -> vector<2x32xf32>
    %c1_564 = arith.constant 1 : index
    %c0_565 = arith.constant 0 : index
    %c0_566 = arith.constant 0 : index
    %750 = vector.load %arg18[%c1_564, %c0_565, %c0_566] : memref<4x32x32xf32, #tpu.memory_space<vmem>>, vector<1x32x32xf32>
    %751 = vector.shape_cast %750 : vector<1x32x32xf32> to vector<32x32xf32>
    %cst_567 = arith.constant dense<0.000000e+00> : vector<2x32xf32>
    %752 = tpu.matmul %735, %751, %cst_567 {dimension_numbers = #tpu.dot_dimension_numbers<[1], [0], [0], [1], [0, 0, 1, 1], [], []>} : vector<2x32xf32>, vector<32x32xf32>, vector<2x32xf32> -> vector<2x32xf32>
    %753 = arith.addf %749, %752 : vector<2x32xf32>
    %c1_568 = arith.constant 1 : index
    %c0_569 = arith.constant 0 : index
    %c0_570 = arith.constant 0 : index
    %754 = vector.load %arg19[%c1_568, %c0_569, %c0_570] : memref<4x1x32xf32, #tpu.memory_space<vmem>>, vector<1x1x32xf32>
    %755 = vector.shape_cast %754 : vector<1x1x32xf32> to vector<1x32xf32>
    %756 = vector.broadcast %755 : vector<1x32xf32> to vector<2x32xf32>
    %757 = arith.addf %753, %756 : vector<2x32xf32>
    %c2_571 = arith.constant 2 : index
    %c0_572 = arith.constant 0 : index
    %c0_573 = arith.constant 0 : index
    %758 = vector.load %arg17[%c2_571, %c0_572, %c0_573] : memref<4x32x32xf32, #tpu.memory_space<vmem>>, vector<1x32x32xf32>
    %759 = vector.shape_cast %758 : vector<1x32x32xf32> to vector<32x32xf32>
    %cst_574 = arith.constant dense<0.000000e+00> : vector<2x32xf32>
    %760 = tpu.matmul %719, %759, %cst_574 {dimension_numbers = #tpu.dot_dimension_numbers<[1], [0], [0], [1], [0, 0, 1, 1], [], []>} : vector<2x32xf32>, vector<32x32xf32>, vector<2x32xf32> -> vector<2x32xf32>
    %c2_575 = arith.constant 2 : index
    %c0_576 = arith.constant 0 : index
    %c0_577 = arith.constant 0 : index
    %761 = vector.load %arg18[%c2_575, %c0_576, %c0_577] : memref<4x32x32xf32, #tpu.memory_space<vmem>>, vector<1x32x32xf32>
    %762 = vector.shape_cast %761 : vector<1x32x32xf32> to vector<32x32xf32>
    %cst_578 = arith.constant dense<0.000000e+00> : vector<2x32xf32>
    %763 = tpu.matmul %735, %762, %cst_578 {dimension_numbers = #tpu.dot_dimension_numbers<[1], [0], [0], [1], [0, 0, 1, 1], [], []>} : vector<2x32xf32>, vector<32x32xf32>, vector<2x32xf32> -> vector<2x32xf32>
    %764 = arith.addf %760, %763 : vector<2x32xf32>
    %c2_579 = arith.constant 2 : index
    %c0_580 = arith.constant 0 : index
    %c0_581 = arith.constant 0 : index
    %765 = vector.load %arg19[%c2_579, %c0_580, %c0_581] : memref<4x1x32xf32, #tpu.memory_space<vmem>>, vector<1x1x32xf32>
    %766 = vector.shape_cast %765 : vector<1x1x32xf32> to vector<1x32xf32>
    %767 = vector.broadcast %766 : vector<1x32xf32> to vector<2x32xf32>
    %768 = arith.addf %764, %767 : vector<2x32xf32>
    %c3_582 = arith.constant 3 : index
    %c0_583 = arith.constant 0 : index
    %c0_584 = arith.constant 0 : index
    %769 = vector.load %arg17[%c3_582, %c0_583, %c0_584] : memref<4x32x32xf32, #tpu.memory_space<vmem>>, vector<1x32x32xf32>
    %770 = vector.shape_cast %769 : vector<1x32x32xf32> to vector<32x32xf32>
    %cst_585 = arith.constant dense<0.000000e+00> : vector<2x32xf32>
    %771 = tpu.matmul %719, %770, %cst_585 {dimension_numbers = #tpu.dot_dimension_numbers<[1], [0], [0], [1], [0, 0, 1, 1], [], []>} : vector<2x32xf32>, vector<32x32xf32>, vector<2x32xf32> -> vector<2x32xf32>
    %c3_586 = arith.constant 3 : index
    %c0_587 = arith.constant 0 : index
    %c0_588 = arith.constant 0 : index
    %772 = vector.load %arg18[%c3_586, %c0_587, %c0_588] : memref<4x32x32xf32, #tpu.memory_space<vmem>>, vector<1x32x32xf32>
    %773 = vector.shape_cast %772 : vector<1x32x32xf32> to vector<32x32xf32>
    %cst_589 = arith.constant dense<0.000000e+00> : vector<2x32xf32>
    %774 = tpu.matmul %735, %773, %cst_589 {dimension_numbers = #tpu.dot_dimension_numbers<[1], [0], [0], [1], [0, 0, 1, 1], [], []>} : vector<2x32xf32>, vector<32x32xf32>, vector<2x32xf32> -> vector<2x32xf32>
    %775 = arith.addf %771, %774 : vector<2x32xf32>
    %c3_590 = arith.constant 3 : index
    %c0_591 = arith.constant 0 : index
    %c0_592 = arith.constant 0 : index
    %776 = vector.load %arg19[%c3_590, %c0_591, %c0_592] : memref<4x1x32xf32, #tpu.memory_space<vmem>>, vector<1x1x32xf32>
    %777 = vector.shape_cast %776 : vector<1x1x32xf32> to vector<1x32xf32>
    %778 = vector.broadcast %777 : vector<1x32xf32> to vector<2x32xf32>
    %779 = arith.addf %775, %778 : vector<2x32xf32>
    %cst_593 = arith.constant 0.000000e+00 : f32
    %780 = vector.broadcast %cst_593 : f32 to vector<2x32xf32>
    %781 = arith.subf %780, %757 : vector<2x32xf32>
    %782 = math.exp %781 : vector<2x32xf32>
    %cst_594 = arith.constant 1.000000e+00 : f32
    %783 = vector.broadcast %cst_594 : f32 to vector<2x32xf32>
    %784 = arith.addf %783, %782 : vector<2x32xf32>
    %cst_595 = arith.constant 1.000000e+00 : f32
    %785 = vector.broadcast %cst_595 : f32 to vector<2x32xf32>
    %786 = arith.divf %785, %784 : vector<2x32xf32>
    %787 = arith.mulf %786, %702 : vector<2x32xf32>
    %cst_596 = arith.constant 0.000000e+00 : f32
    %788 = vector.broadcast %cst_596 : f32 to vector<2x32xf32>
    %789 = arith.subf %788, %746 : vector<2x32xf32>
    %790 = math.exp %789 : vector<2x32xf32>
    %cst_597 = arith.constant 1.000000e+00 : f32
    %791 = vector.broadcast %cst_597 : f32 to vector<2x32xf32>
    %792 = arith.addf %791, %790 : vector<2x32xf32>
    %cst_598 = arith.constant 1.000000e+00 : f32
    %793 = vector.broadcast %cst_598 : f32 to vector<2x32xf32>
    %794 = arith.divf %793, %792 : vector<2x32xf32>
    %cst_599 = arith.constant -2.000000e+00 : f32
    %795 = vector.broadcast %cst_599 : f32 to vector<2x32xf32>
    %796 = arith.mulf %795, %768 : vector<2x32xf32>
    %797 = math.exp %796 : vector<2x32xf32>
    %cst_600 = arith.constant 1.000000e+00 : f32
    %798 = vector.broadcast %cst_600 : f32 to vector<2x32xf32>
    %799 = arith.addf %798, %797 : vector<2x32xf32>
    %cst_601 = arith.constant 2.000000e+00 : f32
    %800 = vector.broadcast %cst_601 : f32 to vector<2x32xf32>
    %801 = arith.divf %800, %799 : vector<2x32xf32>
    %cst_602 = arith.constant 1.000000e+00 : f32
    %802 = vector.broadcast %cst_602 : f32 to vector<2x32xf32>
    %803 = arith.subf %801, %802 : vector<2x32xf32>
    %804 = arith.mulf %794, %803 : vector<2x32xf32>
    %805 = arith.addf %787, %804 : vector<2x32xf32>
    %cst_603 = arith.constant 0.000000e+00 : f32
    %806 = vector.broadcast %cst_603 : f32 to vector<2x32xf32>
    %807 = arith.subf %806, %779 : vector<2x32xf32>
    %808 = math.exp %807 : vector<2x32xf32>
    %cst_604 = arith.constant 1.000000e+00 : f32
    %809 = vector.broadcast %cst_604 : f32 to vector<2x32xf32>
    %810 = arith.addf %809, %808 : vector<2x32xf32>
    %cst_605 = arith.constant 1.000000e+00 : f32
    %811 = vector.broadcast %cst_605 : f32 to vector<2x32xf32>
    %812 = arith.divf %811, %810 : vector<2x32xf32>
    %cst_606 = arith.constant -2.000000e+00 : f32
    %813 = vector.broadcast %cst_606 : f32 to vector<2x32xf32>
    %814 = arith.mulf %813, %805 : vector<2x32xf32>
    %815 = math.exp %814 : vector<2x32xf32>
    %cst_607 = arith.constant 1.000000e+00 : f32
    %816 = vector.broadcast %cst_607 : f32 to vector<2x32xf32>
    %817 = arith.addf %816, %815 : vector<2x32xf32>
    %cst_608 = arith.constant 2.000000e+00 : f32
    %818 = vector.broadcast %cst_608 : f32 to vector<2x32xf32>
    %819 = arith.divf %818, %817 : vector<2x32xf32>
    %cst_609 = arith.constant 1.000000e+00 : f32
    %820 = vector.broadcast %cst_609 : f32 to vector<2x32xf32>
    %821 = arith.subf %819, %820 : vector<2x32xf32>
    %822 = arith.mulf %812, %821 : vector<2x32xf32>
    %823 = tpu.transpose %410, [1, 0] : vector<32x32xf32> -> vector<32x32xf32>
    %cst_610 = arith.constant dense<0.000000e+00> : vector<2x32xf32>
    %824 = tpu.matmul %822, %823, %cst_610 {dimension_numbers = #tpu.dot_dimension_numbers<[1], [0], [0], [1], [0, 0, 1, 1], [], []>} : vector<2x32xf32>, vector<32x32xf32>, vector<2x32xf32> -> vector<2x32xf32>
    %cst_611 = arith.constant -1.000000e+30 : f32
    %825 = vector.broadcast %cst_611 : f32 to vector<2x32xf32>
    %826 = arith.select %421, %824, %825 : vector<2x32xi1>, vector<2x32xf32>
    %cst_612 = arith.constant dense<0xFF800000> : vector<2xf32>
    %827 = vector.multi_reduction <maximumf>, %826, %cst_612 [1] : vector<2x32xf32> to vector<2xf32>
    %828 = vector.shape_cast %827 : vector<2xf32> to vector<2x1xf32>
    %829 = vector.broadcast %828 : vector<2x1xf32> to vector<2x32xf32>
    %830 = arith.subf %826, %829 : vector<2x32xf32>
    %831 = math.exp %830 : vector<2x32xf32>
    %832 = arith.mulf %831, %423 : vector<2x32xf32>
    %cst_613 = arith.constant dense<0.000000e+00> : vector<2xf32>
    %833 = vector.multi_reduction <add>, %832, %cst_613 [1] : vector<2x32xf32> to vector<2xf32>
    %834 = vector.shape_cast %833 : vector<2xf32> to vector<2x1xf32>
    %835 = tpu.reciprocal %834 {approx = true} : vector<2x1xf32> -> vector<2x1xf32>
    %836 = vector.broadcast %835 : vector<2x1xf32> to vector<2x32xf32>
    %837 = arith.mulf %832, %836 : vector<2x32xf32>
    %cst_614 = arith.constant dense<0.000000e+00> : vector<2x32xf32>
    %838 = tpu.matmul %837, %410, %cst_614 {dimension_numbers = #tpu.dot_dimension_numbers<[1], [0], [0], [1], [0, 0, 1, 1], [], []>} : vector<2x32xf32>, vector<32x32xf32>, vector<2x32xf32> -> vector<2x32xf32>
    %c0_615 = arith.constant 0 : index
    %c0_616 = arith.constant 0 : index
    %c0_617 = arith.constant 0 : index
    %839 = vector.load %arg17[%c0_615, %c0_616, %c0_617] : memref<4x32x32xf32, #tpu.memory_space<vmem>>, vector<1x32x32xf32>
    %840 = vector.shape_cast %839 : vector<1x32x32xf32> to vector<32x32xf32>
    %cst_618 = arith.constant dense<0.000000e+00> : vector<2x32xf32>
    %841 = tpu.matmul %822, %840, %cst_618 {dimension_numbers = #tpu.dot_dimension_numbers<[1], [0], [0], [1], [0, 0, 1, 1], [], []>} : vector<2x32xf32>, vector<32x32xf32>, vector<2x32xf32> -> vector<2x32xf32>
    %c0_619 = arith.constant 0 : index
    %c0_620 = arith.constant 0 : index
    %c0_621 = arith.constant 0 : index
    %842 = vector.load %arg18[%c0_619, %c0_620, %c0_621] : memref<4x32x32xf32, #tpu.memory_space<vmem>>, vector<1x32x32xf32>
    %843 = vector.shape_cast %842 : vector<1x32x32xf32> to vector<32x32xf32>
    %cst_622 = arith.constant dense<0.000000e+00> : vector<2x32xf32>
    %844 = tpu.matmul %838, %843, %cst_622 {dimension_numbers = #tpu.dot_dimension_numbers<[1], [0], [0], [1], [0, 0, 1, 1], [], []>} : vector<2x32xf32>, vector<32x32xf32>, vector<2x32xf32> -> vector<2x32xf32>
    %845 = arith.addf %841, %844 : vector<2x32xf32>
    %c0_623 = arith.constant 0 : index
    %c0_624 = arith.constant 0 : index
    %c0_625 = arith.constant 0 : index
    %846 = vector.load %arg19[%c0_623, %c0_624, %c0_625] : memref<4x1x32xf32, #tpu.memory_space<vmem>>, vector<1x1x32xf32>
    %847 = vector.shape_cast %846 : vector<1x1x32xf32> to vector<1x32xf32>
    %848 = vector.broadcast %847 : vector<1x32xf32> to vector<2x32xf32>
    %849 = arith.addf %845, %848 : vector<2x32xf32>
    %c1_626 = arith.constant 1 : index
    %c0_627 = arith.constant 0 : index
    %c0_628 = arith.constant 0 : index
    %850 = vector.load %arg17[%c1_626, %c0_627, %c0_628] : memref<4x32x32xf32, #tpu.memory_space<vmem>>, vector<1x32x32xf32>
    %851 = vector.shape_cast %850 : vector<1x32x32xf32> to vector<32x32xf32>
    %cst_629 = arith.constant dense<0.000000e+00> : vector<2x32xf32>
    %852 = tpu.matmul %822, %851, %cst_629 {dimension_numbers = #tpu.dot_dimension_numbers<[1], [0], [0], [1], [0, 0, 1, 1], [], []>} : vector<2x32xf32>, vector<32x32xf32>, vector<2x32xf32> -> vector<2x32xf32>
    %c1_630 = arith.constant 1 : index
    %c0_631 = arith.constant 0 : index
    %c0_632 = arith.constant 0 : index
    %853 = vector.load %arg18[%c1_630, %c0_631, %c0_632] : memref<4x32x32xf32, #tpu.memory_space<vmem>>, vector<1x32x32xf32>
    %854 = vector.shape_cast %853 : vector<1x32x32xf32> to vector<32x32xf32>
    %cst_633 = arith.constant dense<0.000000e+00> : vector<2x32xf32>
    %855 = tpu.matmul %838, %854, %cst_633 {dimension_numbers = #tpu.dot_dimension_numbers<[1], [0], [0], [1], [0, 0, 1, 1], [], []>} : vector<2x32xf32>, vector<32x32xf32>, vector<2x32xf32> -> vector<2x32xf32>
    %856 = arith.addf %852, %855 : vector<2x32xf32>
    %c1_634 = arith.constant 1 : index
    %c0_635 = arith.constant 0 : index
    %c0_636 = arith.constant 0 : index
    %857 = vector.load %arg19[%c1_634, %c0_635, %c0_636] : memref<4x1x32xf32, #tpu.memory_space<vmem>>, vector<1x1x32xf32>
    %858 = vector.shape_cast %857 : vector<1x1x32xf32> to vector<1x32xf32>
    %859 = vector.broadcast %858 : vector<1x32xf32> to vector<2x32xf32>
    %860 = arith.addf %856, %859 : vector<2x32xf32>
    %c2_637 = arith.constant 2 : index
    %c0_638 = arith.constant 0 : index
    %c0_639 = arith.constant 0 : index
    %861 = vector.load %arg17[%c2_637, %c0_638, %c0_639] : memref<4x32x32xf32, #tpu.memory_space<vmem>>, vector<1x32x32xf32>
    %862 = vector.shape_cast %861 : vector<1x32x32xf32> to vector<32x32xf32>
    %cst_640 = arith.constant dense<0.000000e+00> : vector<2x32xf32>
    %863 = tpu.matmul %822, %862, %cst_640 {dimension_numbers = #tpu.dot_dimension_numbers<[1], [0], [0], [1], [0, 0, 1, 1], [], []>} : vector<2x32xf32>, vector<32x32xf32>, vector<2x32xf32> -> vector<2x32xf32>
    %c2_641 = arith.constant 2 : index
    %c0_642 = arith.constant 0 : index
    %c0_643 = arith.constant 0 : index
    %864 = vector.load %arg18[%c2_641, %c0_642, %c0_643] : memref<4x32x32xf32, #tpu.memory_space<vmem>>, vector<1x32x32xf32>
    %865 = vector.shape_cast %864 : vector<1x32x32xf32> to vector<32x32xf32>
    %cst_644 = arith.constant dense<0.000000e+00> : vector<2x32xf32>
    %866 = tpu.matmul %838, %865, %cst_644 {dimension_numbers = #tpu.dot_dimension_numbers<[1], [0], [0], [1], [0, 0, 1, 1], [], []>} : vector<2x32xf32>, vector<32x32xf32>, vector<2x32xf32> -> vector<2x32xf32>
    %867 = arith.addf %863, %866 : vector<2x32xf32>
    %c2_645 = arith.constant 2 : index
    %c0_646 = arith.constant 0 : index
    %c0_647 = arith.constant 0 : index
    %868 = vector.load %arg19[%c2_645, %c0_646, %c0_647] : memref<4x1x32xf32, #tpu.memory_space<vmem>>, vector<1x1x32xf32>
    %869 = vector.shape_cast %868 : vector<1x1x32xf32> to vector<1x32xf32>
    %870 = vector.broadcast %869 : vector<1x32xf32> to vector<2x32xf32>
    %871 = arith.addf %867, %870 : vector<2x32xf32>
    %c3_648 = arith.constant 3 : index
    %c0_649 = arith.constant 0 : index
    %c0_650 = arith.constant 0 : index
    %872 = vector.load %arg17[%c3_648, %c0_649, %c0_650] : memref<4x32x32xf32, #tpu.memory_space<vmem>>, vector<1x32x32xf32>
    %873 = vector.shape_cast %872 : vector<1x32x32xf32> to vector<32x32xf32>
    %cst_651 = arith.constant dense<0.000000e+00> : vector<2x32xf32>
    %874 = tpu.matmul %822, %873, %cst_651 {dimension_numbers = #tpu.dot_dimension_numbers<[1], [0], [0], [1], [0, 0, 1, 1], [], []>} : vector<2x32xf32>, vector<32x32xf32>, vector<2x32xf32> -> vector<2x32xf32>
    %c3_652 = arith.constant 3 : index
    %c0_653 = arith.constant 0 : index
    %c0_654 = arith.constant 0 : index
    %875 = vector.load %arg18[%c3_652, %c0_653, %c0_654] : memref<4x32x32xf32, #tpu.memory_space<vmem>>, vector<1x32x32xf32>
    %876 = vector.shape_cast %875 : vector<1x32x32xf32> to vector<32x32xf32>
    %cst_655 = arith.constant dense<0.000000e+00> : vector<2x32xf32>
    %877 = tpu.matmul %838, %876, %cst_655 {dimension_numbers = #tpu.dot_dimension_numbers<[1], [0], [0], [1], [0, 0, 1, 1], [], []>} : vector<2x32xf32>, vector<32x32xf32>, vector<2x32xf32> -> vector<2x32xf32>
    %878 = arith.addf %874, %877 : vector<2x32xf32>
    %c3_656 = arith.constant 3 : index
    %c0_657 = arith.constant 0 : index
    %c0_658 = arith.constant 0 : index
    %879 = vector.load %arg19[%c3_656, %c0_657, %c0_658] : memref<4x1x32xf32, #tpu.memory_space<vmem>>, vector<1x1x32xf32>
    %880 = vector.shape_cast %879 : vector<1x1x32xf32> to vector<1x32xf32>
    %881 = vector.broadcast %880 : vector<1x32xf32> to vector<2x32xf32>
    %882 = arith.addf %878, %881 : vector<2x32xf32>
    %cst_659 = arith.constant 0.000000e+00 : f32
    %883 = vector.broadcast %cst_659 : f32 to vector<2x32xf32>
    %884 = arith.subf %883, %860 : vector<2x32xf32>
    %885 = math.exp %884 : vector<2x32xf32>
    %cst_660 = arith.constant 1.000000e+00 : f32
    %886 = vector.broadcast %cst_660 : f32 to vector<2x32xf32>
    %887 = arith.addf %886, %885 : vector<2x32xf32>
    %cst_661 = arith.constant 1.000000e+00 : f32
    %888 = vector.broadcast %cst_661 : f32 to vector<2x32xf32>
    %889 = arith.divf %888, %887 : vector<2x32xf32>
    %890 = arith.mulf %889, %805 : vector<2x32xf32>
    %cst_662 = arith.constant 0.000000e+00 : f32
    %891 = vector.broadcast %cst_662 : f32 to vector<2x32xf32>
    %892 = arith.subf %891, %849 : vector<2x32xf32>
    %893 = math.exp %892 : vector<2x32xf32>
    %cst_663 = arith.constant 1.000000e+00 : f32
    %894 = vector.broadcast %cst_663 : f32 to vector<2x32xf32>
    %895 = arith.addf %894, %893 : vector<2x32xf32>
    %cst_664 = arith.constant 1.000000e+00 : f32
    %896 = vector.broadcast %cst_664 : f32 to vector<2x32xf32>
    %897 = arith.divf %896, %895 : vector<2x32xf32>
    %cst_665 = arith.constant -2.000000e+00 : f32
    %898 = vector.broadcast %cst_665 : f32 to vector<2x32xf32>
    %899 = arith.mulf %898, %871 : vector<2x32xf32>
    %900 = math.exp %899 : vector<2x32xf32>
    %cst_666 = arith.constant 1.000000e+00 : f32
    %901 = vector.broadcast %cst_666 : f32 to vector<2x32xf32>
    %902 = arith.addf %901, %900 : vector<2x32xf32>
    %cst_667 = arith.constant 2.000000e+00 : f32
    %903 = vector.broadcast %cst_667 : f32 to vector<2x32xf32>
    %904 = arith.divf %903, %902 : vector<2x32xf32>
    %cst_668 = arith.constant 1.000000e+00 : f32
    %905 = vector.broadcast %cst_668 : f32 to vector<2x32xf32>
    %906 = arith.subf %904, %905 : vector<2x32xf32>
    %907 = arith.mulf %897, %906 : vector<2x32xf32>
    %908 = arith.addf %890, %907 : vector<2x32xf32>
    %cst_669 = arith.constant 0.000000e+00 : f32
    %909 = vector.broadcast %cst_669 : f32 to vector<2x32xf32>
    %910 = arith.subf %909, %882 : vector<2x32xf32>
    %911 = math.exp %910 : vector<2x32xf32>
    %cst_670 = arith.constant 1.000000e+00 : f32
    %912 = vector.broadcast %cst_670 : f32 to vector<2x32xf32>
    %913 = arith.addf %912, %911 : vector<2x32xf32>
    %cst_671 = arith.constant 1.000000e+00 : f32
    %914 = vector.broadcast %cst_671 : f32 to vector<2x32xf32>
    %915 = arith.divf %914, %913 : vector<2x32xf32>
    %cst_672 = arith.constant -2.000000e+00 : f32
    %916 = vector.broadcast %cst_672 : f32 to vector<2x32xf32>
    %917 = arith.mulf %916, %908 : vector<2x32xf32>
    %918 = math.exp %917 : vector<2x32xf32>
    %cst_673 = arith.constant 1.000000e+00 : f32
    %919 = vector.broadcast %cst_673 : f32 to vector<2x32xf32>
    %920 = arith.addf %919, %918 : vector<2x32xf32>
    %cst_674 = arith.constant 2.000000e+00 : f32
    %921 = vector.broadcast %cst_674 : f32 to vector<2x32xf32>
    %922 = arith.divf %921, %920 : vector<2x32xf32>
    %cst_675 = arith.constant 1.000000e+00 : f32
    %923 = vector.broadcast %cst_675 : f32 to vector<2x32xf32>
    %924 = arith.subf %922, %923 : vector<2x32xf32>
    %925 = arith.mulf %915, %924 : vector<2x32xf32>
    %926 = tpu.transpose %410, [1, 0] : vector<32x32xf32> -> vector<32x32xf32>
    %cst_676 = arith.constant dense<0.000000e+00> : vector<2x32xf32>
    %927 = tpu.matmul %925, %926, %cst_676 {dimension_numbers = #tpu.dot_dimension_numbers<[1], [0], [0], [1], [0, 0, 1, 1], [], []>} : vector<2x32xf32>, vector<32x32xf32>, vector<2x32xf32> -> vector<2x32xf32>
    %cst_677 = arith.constant -1.000000e+30 : f32
    %928 = vector.broadcast %cst_677 : f32 to vector<2x32xf32>
    %929 = arith.select %421, %927, %928 : vector<2x32xi1>, vector<2x32xf32>
    %cst_678 = arith.constant dense<0xFF800000> : vector<2xf32>
    %930 = vector.multi_reduction <maximumf>, %929, %cst_678 [1] : vector<2x32xf32> to vector<2xf32>
    %931 = vector.shape_cast %930 : vector<2xf32> to vector<2x1xf32>
    %932 = vector.broadcast %931 : vector<2x1xf32> to vector<2x32xf32>
    %933 = arith.subf %929, %932 : vector<2x32xf32>
    %934 = math.exp %933 : vector<2x32xf32>
    %935 = arith.mulf %934, %423 : vector<2x32xf32>
    %cst_679 = arith.constant dense<0.000000e+00> : vector<2xf32>
    %936 = vector.multi_reduction <add>, %935, %cst_679 [1] : vector<2x32xf32> to vector<2xf32>
    %937 = vector.shape_cast %936 : vector<2xf32> to vector<2x1xf32>
    %938 = tpu.reciprocal %937 {approx = true} : vector<2x1xf32> -> vector<2x1xf32>
    %939 = vector.broadcast %938 : vector<2x1xf32> to vector<2x32xf32>
    %940 = arith.mulf %935, %939 : vector<2x32xf32>
    %cst_680 = arith.constant dense<0.000000e+00> : vector<2x32xf32>
    %941 = tpu.matmul %940, %410, %cst_680 {dimension_numbers = #tpu.dot_dimension_numbers<[1], [0], [0], [1], [0, 0, 1, 1], [], []>} : vector<2x32xf32>, vector<32x32xf32>, vector<2x32xf32> -> vector<2x32xf32>
    %c0_681 = arith.constant 0 : index
    %c0_682 = arith.constant 0 : index
    %c0_683 = arith.constant 0 : index
    %942 = vector.load %arg17[%c0_681, %c0_682, %c0_683] : memref<4x32x32xf32, #tpu.memory_space<vmem>>, vector<1x32x32xf32>
    %943 = vector.shape_cast %942 : vector<1x32x32xf32> to vector<32x32xf32>
    %cst_684 = arith.constant dense<0.000000e+00> : vector<2x32xf32>
    %944 = tpu.matmul %925, %943, %cst_684 {dimension_numbers = #tpu.dot_dimension_numbers<[1], [0], [0], [1], [0, 0, 1, 1], [], []>} : vector<2x32xf32>, vector<32x32xf32>, vector<2x32xf32> -> vector<2x32xf32>
    %c0_685 = arith.constant 0 : index
    %c0_686 = arith.constant 0 : index
    %c0_687 = arith.constant 0 : index
    %945 = vector.load %arg18[%c0_685, %c0_686, %c0_687] : memref<4x32x32xf32, #tpu.memory_space<vmem>>, vector<1x32x32xf32>
    %946 = vector.shape_cast %945 : vector<1x32x32xf32> to vector<32x32xf32>
    %cst_688 = arith.constant dense<0.000000e+00> : vector<2x32xf32>
    %947 = tpu.matmul %941, %946, %cst_688 {dimension_numbers = #tpu.dot_dimension_numbers<[1], [0], [0], [1], [0, 0, 1, 1], [], []>} : vector<2x32xf32>, vector<32x32xf32>, vector<2x32xf32> -> vector<2x32xf32>
    %948 = arith.addf %944, %947 : vector<2x32xf32>
    %c0_689 = arith.constant 0 : index
    %c0_690 = arith.constant 0 : index
    %c0_691 = arith.constant 0 : index
    %949 = vector.load %arg19[%c0_689, %c0_690, %c0_691] : memref<4x1x32xf32, #tpu.memory_space<vmem>>, vector<1x1x32xf32>
    %950 = vector.shape_cast %949 : vector<1x1x32xf32> to vector<1x32xf32>
    %951 = vector.broadcast %950 : vector<1x32xf32> to vector<2x32xf32>
    %952 = arith.addf %948, %951 : vector<2x32xf32>
    %c1_692 = arith.constant 1 : index
    %c0_693 = arith.constant 0 : index
    %c0_694 = arith.constant 0 : index
    %953 = vector.load %arg17[%c1_692, %c0_693, %c0_694] : memref<4x32x32xf32, #tpu.memory_space<vmem>>, vector<1x32x32xf32>
    %954 = vector.shape_cast %953 : vector<1x32x32xf32> to vector<32x32xf32>
    %cst_695 = arith.constant dense<0.000000e+00> : vector<2x32xf32>
    %955 = tpu.matmul %925, %954, %cst_695 {dimension_numbers = #tpu.dot_dimension_numbers<[1], [0], [0], [1], [0, 0, 1, 1], [], []>} : vector<2x32xf32>, vector<32x32xf32>, vector<2x32xf32> -> vector<2x32xf32>
    %c1_696 = arith.constant 1 : index
    %c0_697 = arith.constant 0 : index
    %c0_698 = arith.constant 0 : index
    %956 = vector.load %arg18[%c1_696, %c0_697, %c0_698] : memref<4x32x32xf32, #tpu.memory_space<vmem>>, vector<1x32x32xf32>
    %957 = vector.shape_cast %956 : vector<1x32x32xf32> to vector<32x32xf32>
    %cst_699 = arith.constant dense<0.000000e+00> : vector<2x32xf32>
    %958 = tpu.matmul %941, %957, %cst_699 {dimension_numbers = #tpu.dot_dimension_numbers<[1], [0], [0], [1], [0, 0, 1, 1], [], []>} : vector<2x32xf32>, vector<32x32xf32>, vector<2x32xf32> -> vector<2x32xf32>
    %959 = arith.addf %955, %958 : vector<2x32xf32>
    %c1_700 = arith.constant 1 : index
    %c0_701 = arith.constant 0 : index
    %c0_702 = arith.constant 0 : index
    %960 = vector.load %arg19[%c1_700, %c0_701, %c0_702] : memref<4x1x32xf32, #tpu.memory_space<vmem>>, vector<1x1x32xf32>
    %961 = vector.shape_cast %960 : vector<1x1x32xf32> to vector<1x32xf32>
    %962 = vector.broadcast %961 : vector<1x32xf32> to vector<2x32xf32>
    %963 = arith.addf %959, %962 : vector<2x32xf32>
    %c2_703 = arith.constant 2 : index
    %c0_704 = arith.constant 0 : index
    %c0_705 = arith.constant 0 : index
    %964 = vector.load %arg17[%c2_703, %c0_704, %c0_705] : memref<4x32x32xf32, #tpu.memory_space<vmem>>, vector<1x32x32xf32>
    %965 = vector.shape_cast %964 : vector<1x32x32xf32> to vector<32x32xf32>
    %cst_706 = arith.constant dense<0.000000e+00> : vector<2x32xf32>
    %966 = tpu.matmul %925, %965, %cst_706 {dimension_numbers = #tpu.dot_dimension_numbers<[1], [0], [0], [1], [0, 0, 1, 1], [], []>} : vector<2x32xf32>, vector<32x32xf32>, vector<2x32xf32> -> vector<2x32xf32>
    %c2_707 = arith.constant 2 : index
    %c0_708 = arith.constant 0 : index
    %c0_709 = arith.constant 0 : index
    %967 = vector.load %arg18[%c2_707, %c0_708, %c0_709] : memref<4x32x32xf32, #tpu.memory_space<vmem>>, vector<1x32x32xf32>
    %968 = vector.shape_cast %967 : vector<1x32x32xf32> to vector<32x32xf32>
    %cst_710 = arith.constant dense<0.000000e+00> : vector<2x32xf32>
    %969 = tpu.matmul %941, %968, %cst_710 {dimension_numbers = #tpu.dot_dimension_numbers<[1], [0], [0], [1], [0, 0, 1, 1], [], []>} : vector<2x32xf32>, vector<32x32xf32>, vector<2x32xf32> -> vector<2x32xf32>
    %970 = arith.addf %966, %969 : vector<2x32xf32>
    %c2_711 = arith.constant 2 : index
    %c0_712 = arith.constant 0 : index
    %c0_713 = arith.constant 0 : index
    %971 = vector.load %arg19[%c2_711, %c0_712, %c0_713] : memref<4x1x32xf32, #tpu.memory_space<vmem>>, vector<1x1x32xf32>
    %972 = vector.shape_cast %971 : vector<1x1x32xf32> to vector<1x32xf32>
    %973 = vector.broadcast %972 : vector<1x32xf32> to vector<2x32xf32>
    %974 = arith.addf %970, %973 : vector<2x32xf32>
    %c3_714 = arith.constant 3 : index
    %c0_715 = arith.constant 0 : index
    %c0_716 = arith.constant 0 : index
    %975 = vector.load %arg17[%c3_714, %c0_715, %c0_716] : memref<4x32x32xf32, #tpu.memory_space<vmem>>, vector<1x32x32xf32>
    %976 = vector.shape_cast %975 : vector<1x32x32xf32> to vector<32x32xf32>
    %cst_717 = arith.constant dense<0.000000e+00> : vector<2x32xf32>
    %977 = tpu.matmul %925, %976, %cst_717 {dimension_numbers = #tpu.dot_dimension_numbers<[1], [0], [0], [1], [0, 0, 1, 1], [], []>} : vector<2x32xf32>, vector<32x32xf32>, vector<2x32xf32> -> vector<2x32xf32>
    %c3_718 = arith.constant 3 : index
    %c0_719 = arith.constant 0 : index
    %c0_720 = arith.constant 0 : index
    %978 = vector.load %arg18[%c3_718, %c0_719, %c0_720] : memref<4x32x32xf32, #tpu.memory_space<vmem>>, vector<1x32x32xf32>
    %979 = vector.shape_cast %978 : vector<1x32x32xf32> to vector<32x32xf32>
    %cst_721 = arith.constant dense<0.000000e+00> : vector<2x32xf32>
    %980 = tpu.matmul %941, %979, %cst_721 {dimension_numbers = #tpu.dot_dimension_numbers<[1], [0], [0], [1], [0, 0, 1, 1], [], []>} : vector<2x32xf32>, vector<32x32xf32>, vector<2x32xf32> -> vector<2x32xf32>
    %981 = arith.addf %977, %980 : vector<2x32xf32>
    %c3_722 = arith.constant 3 : index
    %c0_723 = arith.constant 0 : index
    %c0_724 = arith.constant 0 : index
    %982 = vector.load %arg19[%c3_722, %c0_723, %c0_724] : memref<4x1x32xf32, #tpu.memory_space<vmem>>, vector<1x1x32xf32>
    %983 = vector.shape_cast %982 : vector<1x1x32xf32> to vector<1x32xf32>
    %984 = vector.broadcast %983 : vector<1x32xf32> to vector<2x32xf32>
    %985 = arith.addf %981, %984 : vector<2x32xf32>
    %cst_725 = arith.constant 0.000000e+00 : f32
    %986 = vector.broadcast %cst_725 : f32 to vector<2x32xf32>
    %987 = arith.subf %986, %963 : vector<2x32xf32>
    %988 = math.exp %987 : vector<2x32xf32>
    %cst_726 = arith.constant 1.000000e+00 : f32
    %989 = vector.broadcast %cst_726 : f32 to vector<2x32xf32>
    %990 = arith.addf %989, %988 : vector<2x32xf32>
    %cst_727 = arith.constant 1.000000e+00 : f32
    %991 = vector.broadcast %cst_727 : f32 to vector<2x32xf32>
    %992 = arith.divf %991, %990 : vector<2x32xf32>
    %993 = arith.mulf %992, %908 : vector<2x32xf32>
    %cst_728 = arith.constant 0.000000e+00 : f32
    %994 = vector.broadcast %cst_728 : f32 to vector<2x32xf32>
    %995 = arith.subf %994, %952 : vector<2x32xf32>
    %996 = math.exp %995 : vector<2x32xf32>
    %cst_729 = arith.constant 1.000000e+00 : f32
    %997 = vector.broadcast %cst_729 : f32 to vector<2x32xf32>
    %998 = arith.addf %997, %996 : vector<2x32xf32>
    %cst_730 = arith.constant 1.000000e+00 : f32
    %999 = vector.broadcast %cst_730 : f32 to vector<2x32xf32>
    %1000 = arith.divf %999, %998 : vector<2x32xf32>
    %cst_731 = arith.constant -2.000000e+00 : f32
    %1001 = vector.broadcast %cst_731 : f32 to vector<2x32xf32>
    %1002 = arith.mulf %1001, %974 : vector<2x32xf32>
    %1003 = math.exp %1002 : vector<2x32xf32>
    %cst_732 = arith.constant 1.000000e+00 : f32
    %1004 = vector.broadcast %cst_732 : f32 to vector<2x32xf32>
    %1005 = arith.addf %1004, %1003 : vector<2x32xf32>
    %cst_733 = arith.constant 2.000000e+00 : f32
    %1006 = vector.broadcast %cst_733 : f32 to vector<2x32xf32>
    %1007 = arith.divf %1006, %1005 : vector<2x32xf32>
    %cst_734 = arith.constant 1.000000e+00 : f32
    %1008 = vector.broadcast %cst_734 : f32 to vector<2x32xf32>
    %1009 = arith.subf %1007, %1008 : vector<2x32xf32>
    %1010 = arith.mulf %1000, %1009 : vector<2x32xf32>
    %1011 = arith.addf %993, %1010 : vector<2x32xf32>
    %cst_735 = arith.constant 0.000000e+00 : f32
    %1012 = vector.broadcast %cst_735 : f32 to vector<2x32xf32>
    %1013 = arith.subf %1012, %985 : vector<2x32xf32>
    %1014 = math.exp %1013 : vector<2x32xf32>
    %cst_736 = arith.constant 1.000000e+00 : f32
    %1015 = vector.broadcast %cst_736 : f32 to vector<2x32xf32>
    %1016 = arith.addf %1015, %1014 : vector<2x32xf32>
    %cst_737 = arith.constant 1.000000e+00 : f32
    %1017 = vector.broadcast %cst_737 : f32 to vector<2x32xf32>
    %1018 = arith.divf %1017, %1016 : vector<2x32xf32>
    %cst_738 = arith.constant -2.000000e+00 : f32
    %1019 = vector.broadcast %cst_738 : f32 to vector<2x32xf32>
    %1020 = arith.mulf %1019, %1011 : vector<2x32xf32>
    %1021 = math.exp %1020 : vector<2x32xf32>
    %cst_739 = arith.constant 1.000000e+00 : f32
    %1022 = vector.broadcast %cst_739 : f32 to vector<2x32xf32>
    %1023 = arith.addf %1022, %1021 : vector<2x32xf32>
    %cst_740 = arith.constant 2.000000e+00 : f32
    %1024 = vector.broadcast %cst_740 : f32 to vector<2x32xf32>
    %1025 = arith.divf %1024, %1023 : vector<2x32xf32>
    %cst_741 = arith.constant 1.000000e+00 : f32
    %1026 = vector.broadcast %cst_741 : f32 to vector<2x32xf32>
    %1027 = arith.subf %1025, %1026 : vector<2x32xf32>
    %1028 = arith.mulf %1018, %1027 : vector<2x32xf32>
    %1029 = tpu.transpose %410, [1, 0] : vector<32x32xf32> -> vector<32x32xf32>
    %cst_742 = arith.constant dense<0.000000e+00> : vector<2x32xf32>
    %1030 = tpu.matmul %1028, %1029, %cst_742 {dimension_numbers = #tpu.dot_dimension_numbers<[1], [0], [0], [1], [0, 0, 1, 1], [], []>} : vector<2x32xf32>, vector<32x32xf32>, vector<2x32xf32> -> vector<2x32xf32>
    %cst_743 = arith.constant -1.000000e+30 : f32
    %1031 = vector.broadcast %cst_743 : f32 to vector<2x32xf32>
    %1032 = arith.select %421, %1030, %1031 : vector<2x32xi1>, vector<2x32xf32>
    %cst_744 = arith.constant dense<0xFF800000> : vector<2xf32>
    %1033 = vector.multi_reduction <maximumf>, %1032, %cst_744 [1] : vector<2x32xf32> to vector<2xf32>
    %1034 = vector.shape_cast %1033 : vector<2xf32> to vector<2x1xf32>
    %1035 = vector.broadcast %1034 : vector<2x1xf32> to vector<2x32xf32>
    %1036 = arith.subf %1032, %1035 : vector<2x32xf32>
    %1037 = math.exp %1036 : vector<2x32xf32>
    %1038 = arith.mulf %1037, %423 : vector<2x32xf32>
    %cst_745 = arith.constant dense<0.000000e+00> : vector<2xf32>
    %1039 = vector.multi_reduction <add>, %1038, %cst_745 [1] : vector<2x32xf32> to vector<2xf32>
    %1040 = vector.shape_cast %1039 : vector<2xf32> to vector<2x1xf32>
    %1041 = tpu.reciprocal %1040 {approx = true} : vector<2x1xf32> -> vector<2x1xf32>
    %1042 = vector.broadcast %1041 : vector<2x1xf32> to vector<2x32xf32>
    %1043 = arith.mulf %1038, %1042 : vector<2x32xf32>
    %cst_746 = arith.constant dense<0.000000e+00> : vector<2x32xf32>
    %1044 = tpu.matmul %1043, %410, %cst_746 {dimension_numbers = #tpu.dot_dimension_numbers<[1], [0], [0], [1], [0, 0, 1, 1], [], []>} : vector<2x32xf32>, vector<32x32xf32>, vector<2x32xf32> -> vector<2x32xf32>
    %c0_747 = arith.constant 0 : index
    %c0_748 = arith.constant 0 : index
    %1045 = vector.load %arg20[%c0_747, %c0_748] : memref<32x32xf32, #tpu.memory_space<vmem>>, vector<32x32xf32>
    %cst_749 = arith.constant dense<0.000000e+00> : vector<2x32xf32>
    %1046 = tpu.matmul %1028, %1045, %cst_749 {dimension_numbers = #tpu.dot_dimension_numbers<[1], [0], [0], [1], [0, 0, 1, 1], [], []>} : vector<2x32xf32>, vector<32x32xf32>, vector<2x32xf32> -> vector<2x32xf32>
    %c0_750 = arith.constant 0 : index
    %c0_751 = arith.constant 0 : index
    %1047 = vector.load %arg21[%c0_750, %c0_751] : memref<32x32xf32, #tpu.memory_space<vmem>>, vector<32x32xf32>
    %cst_752 = arith.constant dense<0.000000e+00> : vector<2x32xf32>
    %1048 = tpu.matmul %1044, %1047, %cst_752 {dimension_numbers = #tpu.dot_dimension_numbers<[1], [0], [0], [1], [0, 0, 1, 1], [], []>} : vector<2x32xf32>, vector<32x32xf32>, vector<2x32xf32> -> vector<2x32xf32>
    %1049 = arith.addf %1046, %1048 : vector<2x32xf32>
    %c0_753 = arith.constant 0 : index
    %c0_754 = arith.constant 0 : index
    %1050 = vector.load %arg22[%c0_753, %c0_754] : memref<1x32xf32, #tpu.memory_space<vmem>>, vector<1x32xf32>
    %1051 = vector.broadcast %1050 : vector<1x32xf32> to vector<2x32xf32>
    %1052 = arith.addf %1049, %1051 : vector<2x32xf32>
    %cst_755 = arith.constant 0.000000e+00 : f32
    %1053 = vector.broadcast %cst_755 : f32 to vector<2x32xf32>
    %1054 = arith.maximumf %1052, %1053 : vector<2x32xf32>
    %c0_756 = arith.constant 0 : index
    %c0_757 = arith.constant 0 : index
    %1055 = vector.load %arg23[%c0_756, %c0_757] : memref<32x16xf32, #tpu.memory_space<vmem>>, vector<32x16xf32>
    %cst_758 = arith.constant dense<0.000000e+00> : vector<2x16xf32>
    %1056 = tpu.matmul %1054, %1055, %cst_758 {dimension_numbers = #tpu.dot_dimension_numbers<[1], [0], [0], [1], [0, 0, 1, 1], [], []>} : vector<2x32xf32>, vector<32x16xf32>, vector<2x16xf32> -> vector<2x16xf32>
    %c0_759 = arith.constant 0 : index
    %c0_760 = arith.constant 0 : index
    %1057 = vector.load %arg24[%c0_759, %c0_760] : memref<1x16xf32, #tpu.memory_space<vmem>>, vector<1x16xf32>
    %1058 = vector.broadcast %1057 : vector<1x16xf32> to vector<2x16xf32>
    %1059 = arith.addf %1056, %1058 : vector<2x16xf32>
    %c0_761 = arith.constant 0 : index
    %c0_762 = arith.constant 0 : index
    %1060 = vector.load %arg25[%c0_761, %c0_762] : memref<2x16xf32, #tpu.memory_space<vmem>>, vector<2x16xf32>
    tpu.vector_store %arg25[%c0_761, %c0_762], %1059 {strides = array<i32>} : memref<2x16xf32, #tpu.memory_space<vmem>>, vector<2x16xf32>,
    return
  }
}

</mosaic_0001>

<llo_original>
// kernel: netgin_forward.1
$region0: #{netgin_forward.1}
  #allocation0 [shape = 'u32[]', space=smem, size = 0x4, offset = 0x4, fixed_abs, tag = 'smem constant byte address 0x4 - core index']
  #allocation1 [shape = 'u32[72,128]{1,0:T(1,128)}', space=vmem, size = 0x9000, scoped, tag = 'internal scratch']
  %s0 = inlined_call_operand.vmem [shape: f32[6,2], index: 0, kind: input, shape index: {}]
  %s1 = inlined_call_operand.vmem [shape: f32[32,32], index: 1, kind: input, shape index: {}]
  %s2 = inlined_call_operand.vmem [shape: f32[32,32], index: 2, kind: input, shape index: {}]
  %s3 = inlined_call_operand.vmem [shape: f32[32,32], index: 3, kind: input, shape index: {}]
  %s4 = inlined_call_operand.hbm [shape: f32[6,32,32], index: 4, kind: input, shape index: {}]
  %s5 = inlined_call_operand.vmem [shape: f32[6,1,32], index: 5, kind: input, shape index: {}]
  %s6 = inlined_call_operand.hbm [shape: f32[6,32,32], index: 6, kind: input, shape index: {}]
  %s7 = inlined_call_operand.vmem [shape: f32[6,1,32], index: 7, kind: input, shape index: {}]
  %s8 = inlined_call_operand.hbm [shape: f32[6,32,32], index: 8, kind: input, shape index: {}]
  %s9 = inlined_call_operand.vmem [shape: f32[6,1,32], index: 9, kind: input, shape index: {}]
  %s10 = inlined_call_operand.hbm [shape: f32[6,32,32], index: 10, kind: input, shape index: {}]
  %s11 = inlined_call_operand.hbm [shape: f32[6,1,32], index: 11, kind: input, shape index: {}]
  %s12 = inlined_call_operand.hbm [shape: f32[6,32,32], index: 12, kind: input, shape index: {}]
  %s13 = inlined_call_operand.hbm [shape: f32[6,32,32], index: 13, kind: input, shape index: {}]
  %s14 = inlined_call_operand.hbm [shape: f32[6,1,32], index: 14, kind: input, shape index: {}]
  %s15 = inlined_call_operand.hbm [shape: f32[6,32,32], index: 15, kind: input, shape index: {}]
  %s16 = inlined_call_operand.hbm [shape: f32[6,1,32], index: 16, kind: input, shape index: {}]
  %s17 = inlined_call_operand.hbm [shape: f32[4,32,32], index: 17, kind: input, shape index: {}]
  %s18 = inlined_call_operand.hbm [shape: f32[4,32,32], index: 18, kind: input, shape index: {}]
  %s19 = inlined_call_operand.hbm [shape: f32[4,1,32], index: 19, kind: input, shape index: {}]
  %s20 = inlined_call_operand.vmem [shape: f32[32,32], index: 20, kind: input, shape index: {}]
  %s21 = inlined_call_operand.vmem [shape: f32[32,32], index: 21, kind: input, shape index: {}]
  %s22 = inlined_call_operand.vmem [shape: f32[1,32], index: 22, kind: input, shape index: {}]
  %s23 = inlined_call_operand.vmem [shape: f32[32,16], index: 23, kind: input, shape index: {}]
  %s24 = inlined_call_operand.vmem [shape: f32[1,16], index: 24, kind: input, shape index: {}]
  %s25 = inlined_call_operand.hbm [shape: f32[2,16], index: 25, kind: output, shape index: {}]
  %s26 = sld [smem:[#allocation0]]
  $region166: #{netgin_forward.1} parent=0
    _
  %s28 = ssub.s32 1, %s26
  %s29 = scalar_select 0, %s28, %s26
  $region1: #{netgin_forward.1} parent=0
    #allocation2 [shape = 'u8[4096]{0}', space=smem, size = 0x1000, scoped, tag = 'input window, operand 0, single buffered']
    #allocation3 [shape = 's32[1]{0}', space=sflag, size = 0x4, scoped, tag = 'scoped memory for netgin_forward.1']
    #allocation4 [shape = 's32[1]{0}', space=sflag, size = 0x4, scoped, tag = 'scoped memory for netgin_forward.1']
    #allocation5 [shape = 's32[1]{0}', space=sflag, size = 0x4, scoped, tag = 'scoped memory for netgin_forward.1']
    #allocation6 [shape = 'u8[98304]{0}', space=vmem, size = 0x18000, scoped, tag = 'input window, operand 4, single buffered']
    #allocation7 [shape = 'u8[98304]{0}', space=vmem, size = 0x18000, scoped, tag = 'input window, operand 6, single buffered']
    #allocation8 [shape = 's32[1]{0}', space=sflag, size = 0x4, scoped, tag = 'scoped memory for netgin_forward.1']
    #allocation9 [shape = 'u8[98304]{0}', space=vmem, size = 0x18000, scoped, tag = 'input window, operand 8, single buffered']
    #allocation10 [shape = 'u8[98304]{0}', space=vmem, size = 0x18000, scoped, tag = 'input window, operand 10, single buffered']
    #allocation11 [shape = 's32[1]{0}', space=sflag, size = 0x4, scoped, tag = 'scoped memory for netgin_forward.1']
    #allocation12 [shape = 'u8[3072]{0}', space=vmem, size = 0xc00, scoped, tag = 'input window, operand 11, single buffered']
    #allocation13 [shape = 'u8[98304]{0}', space=vmem, size = 0x18000, scoped, tag = 'input window, operand 12, single buffered']
    #allocation14 [shape = 's32[1]{0}', space=sflag, size = 0x4, scoped, tag = 'scoped memory for netgin_forward.1']
    #allocation15 [shape = 'u8[98304]{0}', space=vmem, size = 0x18000, scoped, tag = 'input window, operand 13, single buffered']
    #allocation16 [shape = 'u8[3072]{0}', space=vmem, size = 0xc00, scoped, tag = 'input window, operand 14, single buffered']
    #allocation17 [shape = 's32[1]{0}', space=sflag, size = 0x4, scoped, tag = 'scoped memory for netgin_forward.1']
    #allocation18 [shape = 'u8[98304]{0}', space=vmem, size = 0x18000, scoped, tag = 'input window, operand 15, single buffered']
    #allocation19 [shape = 'u8[3072]{0}', space=vmem, size = 0xc00, scoped, tag = 'input window, operand 16, single buffered']
    #allocation20 [shape = 's32[1]{0}', space=sflag, size = 0x4, scoped, tag = 'scoped memory for netgin_forward.1']
    #allocation21 [shape = 'u8[65536]{0}', space=vmem, size = 0x10000, scoped, tag = 'input window, operand 17, single buffered']
    #allocation22 [shape = 'u8[65536]{0}', space=vmem, size = 0x10000, scoped, tag = 'input window, operand 18, single buffered']
    #allocation23 [shape = 's32[1]{0}', space=sflag, size = 0x4, scoped, tag = 'scoped memory for netgin_forward.1']
    #allocation24 [shape = 'u8[2048]{0}', space=vmem, size = 0x800, scoped, tag = 'input window, operand 19, single buffered']
    #allocation25 [shape = 'u8[1024]{0}', space=vmem, size = 0x400, scoped, tag = 'output window, operand 0, single buffered']
    %30 = vsyncpa [#allocation5], 0
    %31 = vsyncpa [#allocation3], 0
    %32 = vsyncpa [#allocation8], 0
    %33 = vsyncpa [#allocation11], 0
    %34 = vsyncpa [#allocation14], 0
    %35 = vsyncpa [#allocation17], 0
    %36 = vsyncpa [#allocation20], 0
    %37 = vsyncpa [#allocation23], 0
    %38 = vsyncpa [#allocation4], 0
    // Predicated region
    $region2: #{netgin_forward.1} parent=1 // pred_check
      _
    $region3: #{netgin_forward.1} parent=1 // pred_check_branch
      %40 = sbr.rel (0) target = $region5
    $region4: #{netgin_forward.1} parent=1 // pred_region
      %42 = vsyncadd [#allocation5], 0
      %s44 = sshll.u32 %s0, 4
      %s45 = int_to_ptr.vmem [resolvable:$true] %s44
      %47 = dma.vmem_to_smem %s45, 128, [#allocation2], [#allocation5]
    $region5: #{netgin_forward.1} parent=1 // pred_fallthru
      _
    // Predicated region
    $region6: #{netgin_forward.1} parent=1 // pred_check
      _
    $region7: #{netgin_forward.1} parent=1 // pred_check_branch
      %49 = sbr.rel (0) target = $region9
    $region8: #{netgin_forward.1} parent=1 // pred_region
      _
    $region9: #{netgin_forward.1} parent=1 // pred_fallthru
      _
    // Predicated region
    $region10: #{netgin_forward.1} parent=1 // pred_check
      _
    $region11: #{netgin_forward.1} parent=1 // pred_check_branch
      %51 = sbr.rel (0) target = $region13
    $region12: #{netgin_forward.1} parent=1 // pred_region
      _
    $region13: #{netgin_forward.1} parent=1 // pred_fallthru
      _
    // Predicated region
    $region14: #{netgin_forward.1} parent=1 // pred_check
      _
    $region15: #{netgin_forward.1} parent=1 // pred_check_branch
      %53 = sbr.rel (0) target = $region17
    $region16: #{netgin_forward.1} parent=1 // pred_region
      _
    $region17: #{netgin_forward.1} parent=1 // pred_fallthru
      _
    // Predicated region
    $region18: #{netgin_forward.1} parent=1 // pred_check
      _
    $region19: #{netgin_forward.1} parent=1 // pred_check_branch
      %55 = sbr.rel (0) target = $region21
    $region20: #{netgin_forward.1} parent=1 // pred_region
      %57 = vsyncadd [#allocation3], 0
      %s58 = sshll.u32 %s4, 4
      %s59 = int_to_ptr.hbm [resolvable:$true] %s58
      %s60 = sshll.u32 [#allocation6], 4
      %s61 = int_to_ptr.vmem [resolvable:$true] %s60
      %66 = dma.hbm_to_vmem [thread:$0]  %s59, 3072, %s61, [#allocation3], 128, 128, 8
    $region21: #{netgin_forward.1} parent=1 // pred_fallthru
      _
    // Predicated region
    $region22: #{netgin_forward.1} parent=1 // pred_check
      _
    $region23: #{netgin_forward.1} parent=1 // pred_check_branch
      %68 = sbr.rel (0) target = $region25
    $region24: #{netgin_forward.1} parent=1 // pred_region
      _
    $region25: #{netgin_forward.1} parent=1 // pred_fallthru
      _
    // Predicated region
    $region26: #{netgin_forward.1} parent=1 // pred_check
      _
    $region27: #{netgin_forward.1} parent=1 // pred_check_branch
      %70 = sbr.rel (0) target = $region29
    $region28: #{netgin_forward.1} parent=1 // pred_region
      %72 = vsyncadd [#allocation8], 0
      %s73 = sshll.u32 %s6, 4
      %s74 = int_to_ptr.hbm [resolvable:$true] %s73
      %s75 = sshll.u32 [#allocation7], 4
      %s76 = int_to_ptr.vmem [resolvable:$true] %s75
      %81 = dma.hbm_to_vmem [thread:$0]  %s74, 3072, %s76, [#allocation8], 128, 128, 8
    $region29: #{netgin_forward.1} parent=1 // pred_fallthru
      _
    // Predicated region
    $region30: #{netgin_forward.1} parent=1 // pred_check
      _
    $region31: #{netgin_forward.1} parent=1 // pred_check_branch
      %83 = sbr.rel (0) target = $region33
    $region32: #{netgin_forward.1} parent=1 // pred_region
      _
    $region33: #{netgin_forward.1} parent=1 // pred_fallthru
      _
    // Predicated region
    $region34: #{netgin_forward.1} parent=1 // pred_check
      _
    $region35: #{netgin_forward.1} parent=1 // pred_check_branch
      %85 = sbr.rel (0) target = $region37
    $region36: #{netgin_forward.1} parent=1 // pred_region
      %87 = vsyncadd [#allocation8], 0
      %s88 = sshll.u32 %s8, 4
      %s89 = int_to_ptr.hbm [resolvable:$true] %s88
      %s90 = sshll.u32 [#allocation9], 4
      %s91 = int_to_ptr.vmem [resolvable:$true] %s90
      %96 = dma.hbm_to_vmem [thread:$0]  %s89, 3072, %s91, [#allocation8], 128, 128, 8
    $region37: #{netgin_forward.1} parent=1 // pred_fallthru
      _
    // Predicated region
    $region38: #{netgin_forward.1} parent=1 // pred_check
      _
    $region39: #{netgin_forward.1} parent=1 // pred_check_branch
      %98 = sbr.rel (0) target = $region41
    $region40: #{netgin_forward.1} parent=1 // pred_region
      _
    $region41: #{netgin_forward.1} parent=1 // pred_fallthru
      _
    // Predicated region
    $region42: #{netgin_forward.1} parent=1 // pred_check
      _
    $region43: #{netgin_forward.1} parent=1 // pred_check_branch
      %100 = sbr.rel (0) target = $region45
    $region44: #{netgin_forward.1} parent=1 // pred_region
      %102 = vsyncadd [#allocation11], 0
      %s103 = sshll.u32 %s10, 4
      %s104 = int_to_ptr.hbm [resolvable:$true] %s103
      %s105 = sshll.u32 [#allocation10], 4
      %s106 = int_to_ptr.vmem [resolvable:$true] %s105
      %111 = dma.hbm_to_vmem [thread:$0]  %s104, 3072, %s106, [#allocation11], 128, 128, 8
    $region45: #{netgin_forward.1} parent=1 // pred_fallthru
      _
    // Predicated region
    $region46: #{netgin_forward.1} parent=1 // pred_check
      _
    $region47: #{netgin_forward.1} parent=1 // pred_check_branch
      %113 = sbr.rel (0) target = $region49
    $region48: #{netgin_forward.1} parent=1 // pred_region
      %115 = vsyncadd [#allocation11], 0
      %s116 = sshll.u32 %s11, 4
      %s117 = int_to_ptr.hbm [resolvable:$true] %s116
      %s118 = sshll.u32 [#allocation12], 4
      %s119 = int_to_ptr.vmem [resolvable:$true] %s118
      %124 = dma.hbm_to_vmem [thread:$0]  %s117, 96, %s119, [#allocation11], 16, 16, 1
    $region49: #{netgin_forward.1} parent=1 // pred_fallthru
      _
    // Predicated region
    $region50: #{netgin_forward.1} parent=1 // pred_check
      _
    $region51: #{netgin_forward.1} parent=1 // pred_check_branch
      %126 = sbr.rel (0) target = $region53
    $region52: #{netgin_forward.1} parent=1 // pred_region
      %128 = vsyncadd [#allocation14], 0
      %s129 = sshll.u32 %s12, 4
      %s130 = int_to_ptr.hbm [resolvable:$true] %s129
      %s131 = sshll.u32 [#allocation13], 4
      %s132 = int_to_ptr.vmem [resolvable:$true] %s131
      %137 = dma.hbm_to_vmem [thread:$0]  %s130, 3072, %s132, [#allocation14], 128, 128, 8
    $region53: #{netgin_forward.1} parent=1 // pred_fallthru
      _
    // Predicated region
    $region54: #{netgin_forward.1} parent=1 // pred_check
      _
    $region55: #{netgin_forward.1} parent=1 // pred_check_branch
      %139 = sbr.rel (0) target = $region57
    $region56: #{netgin_forward.1} parent=1 // pred_region
      %141 = vsyncadd [#allocation14], 0
      %s142 = sshll.u32 %s13, 4
      %s143 = int_to_ptr.hbm [resolvable:$true] %s142
      %s144 = sshll.u32 [#allocation15], 4
      %s145 = int_to_ptr.vmem [resolvable:$true] %s144
      %150 = dma.hbm_to_vmem [thread:$0]  %s143, 3072, %s145, [#allocation14], 128, 128, 8
    $region57: #{netgin_forward.1} parent=1 // pred_fallthru
      _
    // Predicated region
    $region58: #{netgin_forward.1} parent=1 // pred_check
      _
    $region59: #{netgin_forward.1} parent=1 // pred_check_branch
      %152 = sbr.rel (0) target = $region61
    $region60: #{netgin_forward.1} parent=1 // pred_region
      %154 = vsyncadd [#allocation17], 0
      %s155 = sshll.u32 %s14, 4
      %s156 = int_to_ptr.hbm [resolvable:$true] %s155
      %s157 = sshll.u32 [#allocation16], 4
      %s158 = int_to_ptr.vmem [resolvable:$true] %s157
      %163 = dma.hbm_to_vmem [thread:$0]  %s156, 96, %s158, [#allocation17], 16, 16, 1
    $region61: #{netgin_forward.1} parent=1 // pred_fallthru
      _
    // Predicated region
    $region62: #{netgin_forward.1} parent=1 // pred_check
      _
    $region63: #{netgin_forward.1} parent=1 // pred_check_branch
      %165 = sbr.rel (0) target = $region65
    $region64: #{netgin_forward.1} parent=1 // pred_region
      %167 = vsyncadd [#allocation17], 0
      %s168 = sshll.u32 %s15, 4
      %s169 = int_to_ptr.hbm [resolvable:$true] %s168
      %s170 = sshll.u32 [#allocation18], 4
      %s171 = int_to_ptr.vmem [resolvable:$true] %s170
      %176 = dma.hbm_to_vmem [thread:$0]  %s169, 3072, %s171, [#allocation17], 128, 128, 8
    $region65: #{netgin_forward.1} parent=1 // pred_fallthru
      _
    // Predicated region
    $region66: #{netgin_forward.1} parent=1 // pred_check
      _
    $region67: #{netgin_forward.1} parent=1 // pred_check_branch
      %178 = sbr.rel (0) target = $region69
    $region68: #{netgin_forward.1} parent=1 // pred_region
      %180 = vsyncadd [#allocation20], 0
      %s181 = sshll.u32 %s16, 4
      %s182 = int_to_ptr.hbm [resolvable:$true] %s181
      %s183 = sshll.u32 [#allocation19], 4
      %s184 = int_to_ptr.vmem [resolvable:$true] %s183
      %189 = dma.hbm_to_vmem [thread:$0]  %s182, 96, %s184, [#allocation20], 16, 16, 1
    $region69: #{netgin_forward.1} parent=1 // pred_fallthru
      _
    // Predicated region
    $region70: #{netgin_forward.1} parent=1 // pred_check
      _
    $region71: #{netgin_forward.1} parent=1 // pred_check_branch
      %191 = sbr.rel (0) target = $region73
    $region72: #{netgin_forward.1} parent=1 // pred_region
      %193 = vsyncadd [#allocation20], 0
      %s194 = sshll.u32 %s17, 4
      %s195 = int_to_ptr.hbm [resolvable:$true] %s194
      %s196 = sshll.u32 [#allocation21], 4
      %s197 = int_to_ptr.vmem [resolvable:$true] %s196
      %202 = dma.hbm_to_vmem [thread:$0]  %s195, 2048, %s197, [#allocation20], 128, 128, 8
    $region73: #{netgin_forward.1} parent=1 // pred_fallthru
      _
    // Predicated region
    $region74: #{netgin_forward.1} parent=1 // pred_check
      _
    $region75: #{netgin_forward.1} parent=1 // pred_check_branch
      %204 = sbr.rel (0) target = $region77
    $region76: #{netgin_forward.1} parent=1 // pred_region
      %206 = vsyncadd [#allocation23], 0
      %s207 = sshll.u32 %s18, 4
      %s208 = int_to_ptr.hbm [resolvable:$true] %s207
      %s209 = sshll.u32 [#allocation22], 4
      %s210 = int_to_ptr.vmem [resolvable:$true] %s209
      %215 = dma.hbm_to_vmem [thread:$0]  %s208, 2048, %s210, [#allocation23], 128, 128, 8
    $region77: #{netgin_forward.1} parent=1 // pred_fallthru
      _
    // Predicated region
    $region78: #{netgin_forward.1} parent=1 // pred_check
      _
    $region79: #{netgin_forward.1} parent=1 // pred_check_branch
      %217 = sbr.rel (0) target = $region81
    $region80: #{netgin_forward.1} parent=1 // pred_region
      %219 = vsyncadd [#allocation23], 0
      %s220 = sshll.u32 %s19, 4
      %s221 = int_to_ptr.hbm [resolvable:$true] %s220
      %s222 = sshll.u32 [#allocation24], 4
      %s223 = int_to_ptr.vmem [resolvable:$true] %s222
      %228 = dma.hbm_to_vmem [thread:$0]  %s221, 64, %s223, [#allocation23], 16, 16, 1
    $region81: #{netgin_forward.1} parent=1 // pred_fallthru
      _
    // Predicated region
    $region82: #{netgin_forward.1} parent=1 // pred_check
      _
    $region83: #{netgin_forward.1} parent=1 // pred_check_branch
      %230 = sbr.rel (0) target = $region85
    $region84: #{netgin_forward.1} parent=1 // pred_region
      _
    $region85: #{netgin_forward.1} parent=1 // pred_fallthru
      _
    // Predicated region
    $region86: #{netgin_forward.1} parent=1 // pred_check
      _
    $region87: #{netgin_forward.1} parent=1 // pred_check_branch
      %232 = sbr.rel (0) target = $region89
    $region88: #{netgin_forward.1} parent=1 // pred_region
      _
    $region89: #{netgin_forward.1} parent=1 // pred_fallthru
      _
    // Predicated region
    $region90: #{netgin_forward.1} parent=1 // pred_check
      _
    $region91: #{netgin_forward.1} parent=1 // pred_check_branch
      %234 = sbr.rel (0) target = $region93
    $region92: #{netgin_forward.1} parent=1 // pred_region
      _
    $region93: #{netgin_forward.1} parent=1 // pred_fallthru
      _
    // Predicated region
    $region94: #{netgin_forward.1} parent=1 // pred_check
      _
    $region95: #{netgin_forward.1} parent=1 // pred_check_branch
      %236 = sbr.rel (0) target = $region97
    $region96: #{netgin_forward.1} parent=1 // pred_region
      _
    $region97: #{netgin_forward.1} parent=1 // pred_fallthru
      _
    // Predicated region
    $region98: #{netgin_forward.1} parent=1 // pred_check
      _
    $region99: #{netgin_forward.1} parent=1 // pred_check_branch
      %238 = sbr.rel (0) target = $region101
    $region100: #{netgin_forward.1} parent=1 // pred_region
      _
    $region101: #{netgin_forward.1} parent=1 // pred_fallthru
      _
    // Predicated region
    $region102: #{netgin_forward.1} parent=1 // pred_check
      _
    $region103: #{netgin_forward.1} parent=1 // pred_check_branch
      %240 = sbr.rel (0) target = $region105
    $region104: #{netgin_forward.1} parent=1 // pred_region
      %242 = dma.done [#allocation5], 128
    $region105: #{netgin_forward.1} parent=1 // pred_fallthru
      _
    // Predicated region
    $region106: #{netgin_forward.1} parent=1 // pred_check
      _
    $region107: #{netgin_forward.1} parent=1 // pred_check_branch
      %244 = sbr.rel (0) target = $region109
    $region108: #{netgin_forward.1} parent=1 // pred_region
      %246 = dma.done [#allocation3], 3072
    $region109: #{netgin_forward.1} parent=1 // pred_fallthru
      _
    // Predicated region
    $region110: #{netgin_forward.1} parent=1 // pred_check
      _
    $region111: #{netgin_forward.1} parent=1 // pred_check_branch
      %248 = sbr.rel (0) target = $region113
    $region112: #{netgin_forward.1} parent=1 // pred_region
      %250 = dma.done [#allocation8], 3072
    $region113: #{netgin_forward.1} parent=1 // pred_fallthru
      _
    // Predicated region
    $region114: #{netgin_forward.1} parent=1 // pred_check
      _
    $region115: #{netgin_forward.1} parent=1 // pred_check_branch
      %252 = sbr.rel (0) target = $region117
    $region116: #{netgin_forward.1} parent=1 // pred_region
      %254 = dma.done [#allocation8], 3072
    $region117: #{netgin_forward.1} parent=1 // pred_fallthru
      _
    // Predicated region
    $region118: #{netgin_forward.1} parent=1 // pred_check
      _
    $region119: #{netgin_forward.1} parent=1 // pred_check_branch
      %256 = sbr.rel (0) target = $region121
    $region120: #{netgin_forward.1} parent=1 // pred_region
      %258 = dma.done [#allocation11], 3072
    $region121: #{netgin_forward.1} parent=1 // pred_fallthru
      _
    // Predicated region
    $region122: #{netgin_forward.1} parent=1 // pred_check
      _
    $region123: #{netgin_forward.1} parent=1 // pred_check_branch
      %260 = sbr.rel (0) target = $region125
    $region124: #{netgin_forward.1} parent=1 // pred_region
      %262 = dma.done [#allocation11], 96
    $region125: #{netgin_forward.1} parent=1 // pred_fallthru
      _
    // Predicated region
    $region126: #{netgin_forward.1} parent=1 // pred_check
      _
    $region127: #{netgin_forward.1} parent=1 // pred_check_branch
      %264 = sbr.rel (0) target = $region129
    $region128: #{netgin_forward.1} parent=1 // pred_region
      %266 = dma.done [#allocation14], 3072
    $region129: #{netgin_forward.1} parent=1 // pred_fallthru
      _
    // Predicated region
    $region130: #{netgin_forward.1} parent=1 // pred_check
      _
    $region131: #{netgin_forward.1} parent=1 // pred_check_branch
      %268 = sbr.rel (0) target = $region133
    $region132: #{netgin_forward.1} parent=1 // pred_region
      %270 = dma.done [#allocation14], 3072
    $region133: #{netgin_forward.1} parent=1 // pred_fallthru
      _
    // Predicated region
    $region134: #{netgin_forward.1} parent=1 // pred_check
      _
    $region135: #{netgin_forward.1} parent=1 // pred_check_branch
      %272 = sbr.rel (0) target = $region137
    $region136: #{netgin_forward.1} parent=1 // pred_region
      %274 = dma.done [#allocation17], 96
    $region137: #{netgin_forward.1} parent=1 // pred_fallthru
      _
    // Predicated region
    $region138: #{netgin_forward.1} parent=1 // pred_check
      _
    $region139: #{netgin_forward.1} parent=1 // pred_check_branch
      %276 = sbr.rel (0) target = $region141
    $region140: #{netgin_forward.1} parent=1 // pred_region
      %278 = dma.done [#allocation17], 3072
    $region141: #{netgin_forward.1} parent=1 // pred_fallthru
      _
    // Predicated region
    $region142: #{netgin_forward.1} parent=1 // pred_check
      _
    $region143: #{netgin_forward.1} parent=1 // pred_check_branch
      %280 = sbr.rel (0) target = $region145
    $region144: #{netgin_forward.1} parent=1 // pred_region
      %282 = dma.done [#allocation20], 96
    $region145: #{netgin_forward.1} parent=1 // pred_fallthru
      _
    // Predicated region
    $region146: #{netgin_forward.1} parent=1 // pred_check
      _
    $region147: #{netgin_forward.1} parent=1 // pred_check_branch
      %284 = sbr.rel (0) target = $region149
    $region148: #{netgin_forward.1} parent=1 // pred_region
      %286 = dma.done [#allocation20], 2048
    $region149: #{netgin_forward.1} parent=1 // pred_fallthru
      _
    // Predicated region
    $region150: #{netgin_forward.1} parent=1 // pred_check
      _
    $region151: #{netgin_forward.1} parent=1 // pred_check_branch
      %288 = sbr.rel (0) target = $region153
    $region152: #{netgin_forward.1} parent=1 // pred_region
      %290 = dma.done [#allocation23], 2048
    $region153: #{netgin_forward.1} parent=1 // pred_fallthru
      _
    // Predicated region
    $region154: #{netgin_forward.1} parent=1 // pred_check
      _
    $region155: #{netgin_forward.1} parent=1 // pred_check_branch
      %292 = sbr.rel (0) target = $region157
    $region156: #{netgin_forward.1} parent=1 // pred_region
      %294 = dma.done [#allocation23], 64
    $region157: #{netgin_forward.1} parent=1 // pred_fallthru
      _
    %295 = sfence
    %v296 = vld [vmem:[%s1] sm:$0xff]
    %v297 = vld [vmem:[%s1 + $0x8] sm:$0xff]
    %v298 = vld [vmem:[%s1 + $0x10] sm:$0xff]
    %v299 = vld [vmem:[%s1 + $0x18] sm:$0xff]
    %v300 = vld [vmem:[%s2] sm:$0xff]
    %v301 = vld [vmem:[%s2 + $0x8] sm:$0xff]
    %v302 = vld [vmem:[%s2 + $0x10] sm:$0xff]
    %v303 = vld [vmem:[%s2 + $0x18] sm:$0xff]
    %v304 = vld [vmem:[%s3] sm:$0xff]
    %v305 = vld [vmem:[%s3 + $0x8] sm:$0xff]
    %v306 = vld [vmem:[%s3 + $0x10] sm:$0xff]
    %v307 = vld [vmem:[%s3 + $0x18] sm:$0xff]
    %s308 = sld [smem:[#allocation2]]
    %s309 = sld [smem:[#allocation2 + $0x1]]
    %v310 = vstv %s308
    %v311 = vmul.f32 %v310, %v304
    %v312 = vmul.f32 %v310, %v305
    %v313 = vmul.f32 %v310, %v306
    %v314 = vmul.f32 %v310, %v307
    %vm315 = vcmask 261120
    %v317 = vsel %vm315, %v296, 0
    %v320 = vsel %vm315, %v297, 0
    %v323 = vsel %vm315, %v298, 0
    %v326 = vsel %vm315, %v299, 0
    %328 = vmatpush.msra.mxu0 0.0
    %329 = vmatpush.msra.mxu0 0.0
    %330 = vmatpush.msra.mxu0 0.0
    %331 = vmatpush.msra.mxu0 0.0
    %332 = vmatpush.msra.mxu0 0.0
    %333 = vmatpush.msra.mxu0 0.0
    %334 = vmatpush.msra.mxu0 0.0
    %335 = vmatpush.msra.mxu0 0.0
    %336 = vmatpush.msra.mxu0 0.0
    %337 = vmatpush.msra.mxu0 0.0
    %338 = vmatpush.msra.mxu0 0.0
    %339 = vmatpush.msra.mxu0 0.0
    %340 = vmatpush.msra.mxu0 %v307
    %341 = vmatpush.msra.mxu0 %v306
    %342 = vmatpush.msra.mxu0 %v305
    %343 = vmatpush.msra.mxu0 %v304
    %344 = vmatmul.f32.gmra.mxu0 %v317
    %v345 = vpop.f32.mrf.mxu0
    %v346 = vadd.f32 0.0, %v345
    %347 = vmatmul.f32.gmra.mxu0 %v320
    %v348 = vpop.f32.mrf.mxu0
    %v349 = vadd.f32 0.0, %v348
    %350 = vmatmul.f32.gmra.mxu0 %v323
    %v351 = vpop.f32.mrf.mxu0
    %v352 = vadd.f32 0.0, %v351
    %353 = vmatmul.f32.gmra.mxu0 %v326
    %v354 = vpop.f32.mrf.mxu0
    %v355 = vadd.f32 0.0, %v354
    %356 = vdwg.mxu0
    %v357 = vadd.f32 %v311, %v346
    %v358 = vadd.f32 %v312, %v349
    %v359 = vadd.f32 %v313, %v352
    %v360 = vadd.f32 %v314, %v355
    %v361 = vstv %s309
    %v362 = vmul.f32 %v361, %v304
    %v363 = vmul.f32 %v361, %v305
    %v364 = vmul.f32 %v361, %v306
    %v365 = vmul.f32 %v361, %v307
    %v367 = vsel %vm315, %v300, 0
    %v370 = vsel %vm315, %v301, 0
    %v373 = vsel %vm315, %v302, 0
    %v376 = vsel %vm315, %v303, 0
    %378 = vmatpush.msra.mxu0 0.0
    %379 = vmatpush.msra.mxu0 0.0
    %380 = vmatpush.msra.mxu0 0.0
    %381 = vmatpush.msra.mxu0 0.0
    %382 = vmatpush.msra.mxu0 0.0
    %383 = vmatpush.msra.mxu0 0.0
    %384 = vmatpush.msra.mxu0 0.0
    %385 = vmatpush.msra.mxu0 0.0
    %386 = vmatpush.msra.mxu0 0.0
    %387 = vmatpush.msra.mxu0 0.0
    %388 = vmatpush.msra.mxu0 0.0
    %389 = vmatpush.msra.mxu0 0.0
    %390 = vmatpush.msra.mxu0 %v307
    %391 = vmatpush.msra.mxu0 %v306
    %392 = vmatpush.msra.mxu0 %v305
    %393 = vmatpush.msra.mxu0 %v304
    %394 = vmatmul.f32.gmra.mxu0 %v367
    %v395 = vpop.f32.mrf.mxu0
    %v396 = vadd.f32 0.0, %v395
    %397 = vmatmul.f32.gmra.mxu0 %v370
    %v398 = vpop.f32.mrf.mxu0
    %v399 = vadd.f32 0.0, %v398
    %400 = vmatmul.f32.gmra.mxu0 %v373
    %v401 = vpop.f32.mrf.mxu0
    %v402 = vadd.f32 0.0, %v401
    %403 = vmatmul.f32.gmra.mxu0 %v376
    %v404 = vpop.f32.mrf.mxu0
    %v405 = vadd.f32 0.0, %v404
    %406 = vdwg.mxu0
    %v407 = vadd.f32 %v362, %v396
    %v408 = vadd.f32 %v363, %v399
    %v409 = vadd.f32 %v364, %v402
    %v410 = vadd.f32 %v365, %v405
    %v411 = vld [vmem:[#allocation6] sm:$0xff]
    %v412 = vld [vmem:[#allocation6 + $0x8] sm:$0xff]
    %v413 = vld [vmem:[#allocation6 + $0x10] sm:$0xff]
    %v414 = vld [vmem:[#allocation6 + $0x18] sm:$0xff]
    %v415 = vld [vmem:[%s5] sm:$0x1]
    %v417 = vperm.slane %v415, 0
    %v420 = vsel %vm315, %v357, 0
    %v423 = vsel %vm315, %v358, 0
    %v426 = vsel %vm315, %v359, 0
    %v429 = vsel %vm315, %v360, 0
    %431 = vmatpush.msra.mxu0 0.0
    %432 = vmatpush.msra.mxu0 0.0
    %433 = vmatpush.msra.mxu0 0.0
    %434 = vmatpush.msra.mxu0 0.0
    %435 = vmatpush.msra.mxu0 0.0
    %436 = vmatpush.msra.mxu0 0.0
    %437 = vmatpush.msra.mxu0 0.0
    %438 = vmatpush.msra.mxu0 0.0
    %439 = vmatpush.msra.mxu0 0.0
    %440 = vmatpush.msra.mxu0 0.0
    %441 = vmatpush.msra.mxu0 0.0
    %442 = vmatpush.msra.mxu0 0.0
    %443 = vmatpush.msra.mxu0 %v414
    %444 = vmatpush.msra.mxu0 %v413
    %445 = vmatpush.msra.mxu0 %v412
    %446 = vmatpush.msra.mxu0 %v411
    %447 = vmatmul.f32.gmra.mxu0 %v420
    %v448 = vpop.f32.mrf.mxu0
    %v449 = vadd.f32 %v417, %v448
    %450 = vmatmul.f32.gmra.mxu0 %v423
    %v451 = vpop.f32.mrf.mxu0
    %v452 = vadd.f32 %v417, %v451
    %453 = vmatmul.f32.gmra.mxu0 %v426
    %v454 = vpop.f32.mrf.mxu0
    %v455 = vadd.f32 %v417, %v454
    %456 = vmatmul.f32.gmra.mxu0 %v429
    %v457 = vpop.f32.mrf.mxu0
    %v458 = vadd.f32 %v417, %v457
    %459 = vdwg.mxu0
    %v460 = vmax.f32 %v449, 0.0
    %v461 = vmax.f32 %v452, 0.0
    %v462 = vmax.f32 %v455, 0.0
    %v463 = vmax.f32 %v458, 0.0
    %v464 = vld [vmem:[#allocation7] sm:$0xff]
    %v465 = vld [vmem:[#allocation7 + $0x8] sm:$0xff]
    %v466 = vld [vmem:[#allocation7 + $0x10] sm:$0xff]
    %v467 = vld [vmem:[#allocation7 + $0x18] sm:$0xff]
    %v468 = vld [vmem:[%s7] sm:$0x1]
    %v470 = vperm.slane %v468, 0
    %v473 = vsel %vm315, %v407, 0
    %v476 = vsel %vm315, %v408, 0
    %v479 = vsel %vm315, %v409, 0
    %v482 = vsel %vm315, %v410, 0
    %484 = vmatpush.msra.mxu0 0.0
    %485 = vmatpush.msra.mxu0 0.0
    %486 = vmatpush.msra.mxu0 0.0
    %487 = vmatpush.msra.mxu0 0.0
    %488 = vmatpush.msra.mxu0 0.0
    %489 = vmatpush.msra.mxu0 0.0
    %490 = vmatpush.msra.mxu0 0.0
    %491 = vmatpush.msra.mxu0 0.0
    %492 = vmatpush.msra.mxu0 0.0
    %493 = vmatpush.msra.mxu0 0.0
    %494 = vmatpush.msra.mxu0 0.0
    %495 = vmatpush.msra.mxu0 0.0
    %496 = vmatpush.msra.mxu0 %v467
    %497 = vmatpush.msra.mxu0 %v466
    %498 = vmatpush.msra.mxu0 %v465
    %499 = vmatpush.msra.mxu0 %v464
    %500 = vmatmul.f32.gmra.mxu0 %v473
    %v501 = vpop.f32.mrf.mxu0
    %v502 = vadd.f32 %v470, %v501
    %503 = vmatmul.f32.gmra.mxu0 %v476
    %v504 = vpop.f32.mrf.mxu0
    %v505 = vadd.f32 %v470, %v504
    %506 = vmatmul.f32.gmra.mxu0 %v479
    %v507 = vpop.f32.mrf.mxu0
    %v508 = vadd.f32 %v470, %v507
    %509 = vmatmul.f32.gmra.mxu0 %v482
    %v510 = vpop.f32.mrf.mxu0
    %v511 = vadd.f32 %v470, %v510
    %512 = vdwg.mxu0
    %v513 = vmax.f32 %v502, 0.0
    %v514 = vmax.f32 %v505, 0.0
    %v515 = vmax.f32 %v508, 0.0
    %v516 = vmax.f32 %v511, 0.0
    %v517 = vld [vmem:[#allocation9] sm:$0xff]
    %v518 = vld [vmem:[#allocation9 + $0x8] sm:$0xff]
    %v519 = vld [vmem:[#allocation9 + $0x10] sm:$0xff]
    %v520 = vld [vmem:[#allocation9 + $0x18] sm:$0xff]
    %v521 = vld [vmem:[%s9] sm:$0x1]
    %v523 = vperm.slane %v521, 0
    %v526 = vsel %vm315, %v460, 0
    %v529 = vsel %vm315, %v461, 0
    %v532 = vsel %vm315, %v462, 0
    %v535 = vsel %vm315, %v463, 0
    %537 = vmatpush.msra.mxu0 0.0
    %538 = vmatpush.msra.mxu0 0.0
    %539 = vmatpush.msra.mxu0 0.0
    %540 = vmatpush.msra.mxu0 0.0
    %541 = vmatpush.msra.mxu0 0.0
    %542 = vmatpush.msra.mxu0 0.0
    %543 = vmatpush.msra.mxu0 0.0
    %544 = vmatpush.msra.mxu0 0.0
    %545 = vmatpush.msra.mxu0 0.0
    %546 = vmatpush.msra.mxu0 0.0
    %547 = vmatpush.msra.mxu0 0.0
    %548 = vmatpush.msra.mxu0 0.0
    %549 = vmatpush.msra.mxu0 %v520
    %550 = vmatpush.msra.mxu0 %v519
    %551 = vmatpush.msra.mxu0 %v518
    %552 = vmatpush.msra.mxu0 %v517
    %553 = vmatmul.f32.gmra.mxu0 %v526
    %v554 = vpop.f32.mrf.mxu0
    %v555 = vadd.f32 %v523, %v554
    %556 = vmatmul.f32.gmra.mxu0 %v529
    %v557 = vpop.f32.mrf.mxu0
    %v558 = vadd.f32 %v523, %v557
    %559 = vmatmul.f32.gmra.mxu0 %v532
    %v560 = vpop.f32.mrf.mxu0
    %v561 = vadd.f32 %v523, %v560
    %562 = vmatmul.f32.gmra.mxu0 %v535
    %v563 = vpop.f32.mrf.mxu0
    %v564 = vadd.f32 %v523, %v563
    %565 = vdwg.mxu0
    %v566 = vmax.f32 %v555, 0.0
    %v567 = vmax.f32 %v558, 0.0
    %v568 = vmax.f32 %v561, 0.0
    %v569 = vmax.f32 %v564, 0.0
    %v570 = vld [vmem:[#allocation10] sm:$0xff]
    %v571 = vld [vmem:[#allocation10 + $0x8] sm:$0xff]
    %v572 = vld [vmem:[#allocation10 + $0x10] sm:$0xff]
    %v573 = vld [vmem:[#allocation10 + $0x18] sm:$0xff]
    %v574 = vld [vmem:[#allocation12] sm:$0x1]
    %v576 = vperm.slane %v574, 0
    %v579 = vsel %vm315, %v513, 0
    %v582 = vsel %vm315, %v514, 0
    %v585 = vsel %vm315, %v515, 0
    %v588 = vsel %vm315, %v516, 0
    %590 = vmatpush.msra.mxu0 0.0
    %591 = vmatpush.msra.mxu0 0.0
    %592 = vmatpush.msra.mxu0 0.0
    %593 = vmatpush.msra.mxu0 0.0
    %594 = vmatpush.msra.mxu0 0.0
    %595 = vmatpush.msra.mxu0 0.0
    %596 = vmatpush.msra.mxu0 0.0
    %597 = vmatpush.msra.mxu0 0.0
    %598 = vmatpush.msra.mxu0 0.0
    %599 = vmatpush.msra.mxu0 0.0
    %600 = vmatpush.msra.mxu0 0.0
    %601 = vmatpush.msra.mxu0 0.0
    %602 = vmatpush.msra.mxu0 %v573
    %603 = vmatpush.msra.mxu0 %v572
    %604 = vmatpush.msra.mxu0 %v571
    %605 = vmatpush.msra.mxu0 %v570
    %606 = vmatmul.f32.gmra.mxu0 %v579
    %v607 = vpop.f32.mrf.mxu0
    %v608 = vadd.f32 %v576, %v607
    %609 = vmatmul.f32.gmra.mxu0 %v582
    %v610 = vpop.f32.mrf.mxu0
    %v611 = vadd.f32 %v576, %v610
    %612 = vmatmul.f32.gmra.mxu0 %v585
    %v613 = vpop.f32.mrf.mxu0
    %v614 = vadd.f32 %v576, %v613
    %615 = vmatmul.f32.gmra.mxu0 %v588
    %v616 = vpop.f32.mrf.mxu0
    %v617 = vadd.f32 %v576, %v616
    %618 = vdwg.mxu0
    %v619 = vmax.f32 %v608, 0.0
    %v620 = vmax.f32 %v611, 0.0
    %v621 = vmax.f32 %v614, 0.0
    %v622 = vmax.f32 %v617, 0.0
    %v623 = vld [vmem:[#allocation13] sm:$0xff]
    %v624 = vld [vmem:[#allocation13 + $0x8] sm:$0xff]
    %v625 = vld [vmem:[#allocation13 + $0x10] sm:$0xff]
    %v626 = vld [vmem:[#allocation13 + $0x18] sm:$0xff]
    %v627 = vld [vmem:[#allocation15] sm:$0xff]
    %v628 = vld [vmem:[#allocation15 + $0x8] sm:$0xff]
    %v629 = vld [vmem:[#allocation15 + $0x10] sm:$0xff]
    %v630 = vld [vmem:[#allocation15 + $0x18] sm:$0xff]
    %v632 = vsel %vm315, %v619, 0
    %v635 = vsel %vm315, %v620, 0
    %v638 = vsel %vm315, %v621, 0
    %v641 = vsel %vm315, %v622, 0
    %643 = vmatpush.msra.mxu0 0.0
    %644 = vmatpush.msra.mxu0 0.0
    %645 = vmatpush.msra.mxu0 0.0
    %646 = vmatpush.msra.mxu0 0.0
    %647 = vmatpush.msra.mxu0 0.0
    %648 = vmatpush.msra.mxu0 0.0
    %649 = vmatpush.msra.mxu0 0.0
    %650 = vmatpush.msra.mxu0 0.0
    %651 = vmatpush.msra.mxu0 0.0
    %652 = vmatpush.msra.mxu0 0.0
    %653 = vmatpush.msra.mxu0 0.0
    %654 = vmatpush.msra.mxu0 0.0
    %655 = vmatpush.msra.mxu0 %v630
    %656 = vmatpush.msra.mxu0 %v629
    %657 = vmatpush.msra.mxu0 %v628
    %658 = vmatpush.msra.mxu0 %v627
    %659 = vmatmul.f32.gmra.mxu0 %v632
    %v660 = vpop.f32.mrf.mxu0
    %v661 = vadd.f32 0.0, %v660
    %662 = vmatmul.f32.gmra.mxu0 %v635
    %v663 = vpop.f32.mrf.mxu0
    %v664 = vadd.f32 0.0, %v663
    %665 = vmatmul.f32.gmra.mxu0 %v638
    %v666 = vpop.f32.mrf.mxu0
    %v667 = vadd.f32 0.0, %v666
    %668 = vmatmul.f32.gmra.mxu0 %v641
    %v669 = vpop.f32.mrf.mxu0
    %v670 = vadd.f32 0.0, %v669
    %671 = vdwg.mxu0
    %v673 = vsel %vm315, %v566, 0
    %v676 = vsel %vm315, %v567, 0
    %v679 = vsel %vm315, %v568, 0
    %v682 = vsel %vm315, %v569, 0
    %684 = vmatpush.msra.mxu0 0.0
    %685 = vmatpush.msra.mxu0 0.0
    %686 = vmatpush.msra.mxu0 0.0
    %687 = vmatpush.msra.mxu0 0.0
    %688 = vmatpush.msra.mxu0 0.0
    %689 = vmatpush.msra.mxu0 0.0
    %690 = vmatpush.msra.mxu0 0.0
    %691 = vmatpush.msra.mxu0 0.0
    %692 = vmatpush.msra.mxu0 0.0
    %693 = vmatpush.msra.mxu0 0.0
    %694 = vmatpush.msra.mxu0 0.0
    %695 = vmatpush.msra.mxu0 0.0
    %696 = vmatpush.msra.mxu0 %v626
    %697 = vmatpush.msra.mxu0 %v625
    %698 = vmatpush.msra.mxu0 %v624
    %699 = vmatpush.msra.mxu0 %v623
    %700 = vmatmul.f32.gmra.mxu0 %v673
    %v701 = vpop.f32.mrf.mxu0
    %v702 = vadd.f32 %v661, %v701
    %703 = vmatmul.f32.gmra.mxu0 %v676
    %v704 = vpop.f32.mrf.mxu0
    %v705 = vadd.f32 %v664, %v704
    %706 = vmatmul.f32.gmra.mxu0 %v679
    %v707 = vpop.f32.mrf.mxu0
    %v708 = vadd.f32 %v667, %v707
    %709 = vmatmul.f32.gmra.mxu0 %v682
    %v710 = vpop.f32.mrf.mxu0
    %v711 = vadd.f32 %v670, %v710
    %712 = vdwg.mxu0
    %v713 = vld [vmem:[#allocation16] sm:$0x1]
    %v715 = vperm.slane %v713, 0
    %v717 = vadd.f32 %v702, %v715
    %v718 = vadd.f32 %v705, %v715
    %v719 = vadd.f32 %v708, %v715
    %v720 = vadd.f32 %v711, %v715
    %v721 = vmax.f32 %v717, 0.0
    %v722 = vmax.f32 %v718, 0.0
    %v723 = vmax.f32 %v719, 0.0
    %v724 = vmax.f32 %v720, 0.0
    %v725 = vld [vmem:[#allocation18] sm:$0xff]
    %v726 = vld [vmem:[#allocation18 + $0x8] sm:$0xff]
    %v727 = vld [vmem:[#allocation18 + $0x10] sm:$0xff]
    %v728 = vld [vmem:[#allocation18 + $0x18] sm:$0xff]
    %v729 = vld [vmem:[#allocation19] sm:$0x1]
    %v731 = vperm.slane %v729, 0
    %v734 = vsel %vm315, %v721, 0
    %v737 = vsel %vm315, %v722, 0
    %v740 = vsel %vm315, %v723, 0
    %v743 = vsel %vm315, %v724, 0
    %745 = vmatpush.msra.mxu0 0.0
    %746 = vmatpush.msra.mxu0 0.0
    %747 = vmatpush.msra.mxu0 0.0
    %748 = vmatpush.msra.mxu0 0.0
    %749 = vmatpush.msra.mxu0 0.0
    %750 = vmatpush.msra.mxu0 0.0
    %751 = vmatpush.msra.mxu0 0.0
    %752 = vmatpush.msra.mxu0 0.0
    %753 = vmatpush.msra.mxu0 0.0
    %754 = vmatpush.msra.mxu0 0.0
    %755 = vmatpush.msra.mxu0 0.0
    %756 = vmatpush.msra.mxu0 0.0
    %757 = vmatpush.msra.mxu0 %v728
    %758 = vmatpush.msra.mxu0 %v727
    %759 = vmatpush.msra.mxu0 %v726
    %760 = vmatpush.msra.mxu0 %v725
    %761 = vmatmul.f32.gmra.mxu0 %v734
    %v762 = vpop.f32.mrf.mxu0
    %v763 = vadd.f32 %v731, %v762
    %764 = vmatmul.f32.gmra.mxu0 %v737
    %v765 = vpop.f32.mrf.mxu0
    %v766 = vadd.f32 %v731, %v765
    %767 = vmatmul.f32.gmra.mxu0 %v740
    %v768 = vpop.f32.mrf.mxu0
    %v769 = vadd.f32 %v731, %v768
    %770 = vmatmul.f32.gmra.mxu0 %v743
    %v771 = vpop.f32.mrf.mxu0
    %v772 = vadd.f32 %v731, %v771
    %773 = vdwg.mxu0
    %v774 = vmax.f32 %v763, 0.0
    %v775 = vmax.f32 %v766, 0.0
    %v776 = vmax.f32 %v769, 0.0
    %v777 = vmax.f32 %v772, 0.0
    %s778 = sld [smem:[#allocation2 + $0x80]]
    %s779 = sld [smem:[#allocation2 + $0x81]]
    %v780 = vstv %s778
    %v781 = vmul.f32 %v780, %v774
    %v782 = vmul.f32 %v780, %v775
    %v783 = vmul.f32 %v780, %v776
    %v784 = vmul.f32 %v780, %v777
    %785 = vmatpush.msra.mxu0 0.0
    %786 = vmatpush.msra.mxu0 0.0
    %787 = vmatpush.msra.mxu0 0.0
    %788 = vmatpush.msra.mxu0 0.0
    %789 = vmatpush.msra.mxu0 0.0
    %790 = vmatpush.msra.mxu0 0.0
    %791 = vmatpush.msra.mxu0 0.0
    %792 = vmatpush.msra.mxu0 0.0
    %793 = vmatpush.msra.mxu0 0.0
    %794 = vmatpush.msra.mxu0 0.0
    %795 = vmatpush.msra.mxu0 0.0
    %796 = vmatpush.msra.mxu0 0.0
    %797 = vmatpush.msra.mxu0 %v777
    %798 = vmatpush.msra.mxu0 %v776
    %799 = vmatpush.msra.mxu0 %v775
    %800 = vmatpush.msra.mxu0 %v774
    %801 = vmatmul.f32.gmra.mxu0 %v317
    %v802 = vpop.f32.mrf.mxu0
    %v803 = vadd.f32 0.0, %v802
    %804 = vmatmul.f32.gmra.mxu0 %v320
    %v805 = vpop.f32.mrf.mxu0
    %v806 = vadd.f32 0.0, %v805
    %807 = vmatmul.f32.gmra.mxu0 %v323
    %v808 = vpop.f32.mrf.mxu0
    %v809 = vadd.f32 0.0, %v808
    %810 = vmatmul.f32.gmra.mxu0 %v326
    %v811 = vpop.f32.mrf.mxu0
    %v812 = vadd.f32 0.0, %v811
    %813 = vdwg.mxu0
    %v814 = vadd.f32 %v781, %v803
    %v815 = vadd.f32 %v782, %v806
    %v816 = vadd.f32 %v783, %v809
    %v817 = vadd.f32 %v784, %v812
    %v818 = vstv %s779
    %v819 = vmul.f32 %v818, %v774
    %v820 = vmul.f32 %v818, %v775
    %v821 = vmul.f32 %v818, %v776
    %v822 = vmul.f32 %v818, %v777
    %823 = vmatpush.msra.mxu0 0.0
    %824 = vmatpush.msra.mxu0 0.0
    %825 = vmatpush.msra.mxu0 0.0
    %826 = vmatpush.msra.mxu0 0.0
    %827 = vmatpush.msra.mxu0 0.0
    %828 = vmatpush.msra.mxu0 0.0
    %829 = vmatpush.msra.mxu0 0.0
    %830 = vmatpush.msra.mxu0 0.0
    %831 = vmatpush.msra.mxu0 0.0
    %832 = vmatpush.msra.mxu0 0.0
    %833 = vmatpush.msra.mxu0 0.0
    %834 = vmatpush.msra.mxu0 0.0
    %835 = vmatpush.msra.mxu0 %v777
    %836 = vmatpush.msra.mxu0 %v776
    %837 = vmatpush.msra.mxu0 %v775
    %838 = vmatpush.msra.mxu0 %v774
    %839 = vmatmul.f32.gmra.mxu0 %v367
    %v840 = vpop.f32.mrf.mxu0
    %v841 = vadd.f32 0.0, %v840
    %842 = vmatmul.f32.gmra.mxu0 %v370
    %v843 = vpop.f32.mrf.mxu0
    %v844 = vadd.f32 0.0, %v843
    %845 = vmatmul.f32.gmra.mxu0 %v373
    %v846 = vpop.f32.mrf.mxu0
    %v847 = vadd.f32 0.0, %v846
    %848 = vmatmul.f32.gmra.mxu0 %v376
    %v849 = vpop.f32.mrf.mxu0
    %v850 = vadd.f32 0.0, %v849
    %851 = vdwg.mxu0
    %v852 = vadd.f32 %v819, %v841
    %v853 = vadd.f32 %v820, %v844
    %v854 = vadd.f32 %v821, %v847
    %v855 = vadd.f32 %v822, %v850
    %s856 = scalar_lea.vmem [#allocation6], 32
    %v857 = vld [vmem:[%s856] sm:$0xff]
    %v858 = vld [vmem:[%s856 + $0x8] sm:$0xff]
    %v859 = vld [vmem:[%s856 + $0x10] sm:$0xff]
    %v860 = vld [vmem:[%s856 + $0x18] sm:$0xff]
    %s861 = scalar_lea.vmem %s5, 1
    %v862 = vld [vmem:[%s861] sm:$0x1]
    %v864 = vperm.slane %v862, 0
    %v867 = vsel %vm315, %v814, 0
    %v870 = vsel %vm315, %v815, 0
    %v873 = vsel %vm315, %v816, 0
    %v876 = vsel %vm315, %v817, 0
    %878 = vmatpush.msra.mxu0 0.0
    %879 = vmatpush.msra.mxu0 0.0
    %880 = vmatpush.msra.mxu0 0.0
    %881 = vmatpush.msra.mxu0 0.0
    %882 = vmatpush.msra.mxu0 0.0
    %883 = vmatpush.msra.mxu0 0.0
    %884 = vmatpush.msra.mxu0 0.0
    %885 = vmatpush.msra.mxu0 0.0
    %886 = vmatpush.msra.mxu0 0.0
    %887 = vmatpush.msra.mxu0 0.0
    %888 = vmatpush.msra.mxu0 0.0
    %889 = vmatpush.msra.mxu0 0.0
    %890 = vmatpush.msra.mxu0 %v860
    %891 = vmatpush.msra.mxu0 %v859
    %892 = vmatpush.msra.mxu0 %v858
    %893 = vmatpush.msra.mxu0 %v857
    %894 = vmatmul.f32.gmra.mxu0 %v867
    %v895 = vpop.f32.mrf.mxu0
    %v896 = vadd.f32 %v864, %v895
    %897 = vmatmul.f32.gmra.mxu0 %v870
    %v898 = vpop.f32.mrf.mxu0
    %v899 = vadd.f32 %v864, %v898
    %900 = vmatmul.f32.gmra.mxu0 %v873
    %v901 = vpop.f32.mrf.mxu0
    %v902 = vadd.f32 %v864, %v901
    %903 = vmatmul.f32.gmra.mxu0 %v876
    %v904 = vpop.f32.mrf.mxu0
    %v905 = vadd.f32 %v864, %v904
    %906 = vdwg.mxu0
    %v907 = vmax.f32 %v896, 0.0
    %v908 = vmax.f32 %v899, 0.0
    %v909 = vmax.f32 %v902, 0.0
    %v910 = vmax.f32 %v905, 0.0
    %s911 = scalar_lea.vmem [#allocation7], 32
    %v912 = vld [vmem:[%s911] sm:$0xff]
    %v913 = vld [vmem:[%s911 + $0x8] sm:$0xff]
    %v914 = vld [vmem:[%s911 + $0x10] sm:$0xff]
    %v915 = vld [vmem:[%s911 + $0x18] sm:$0xff]
    %s916 = scalar_lea.vmem %s7, 1
    %v917 = vld [vmem:[%s916] sm:$0x1]
    %v919 = vperm.slane %v917, 0
    %v922 = vsel %vm315, %v852, 0
    %v925 = vsel %vm315, %v853, 0
    %v928 = vsel %vm315, %v854, 0
    %v931 = vsel %vm315, %v855, 0
    %933 = vmatpush.msra.mxu0 0.0
    %934 = vmatpush.msra.mxu0 0.0
    %935 = vmatpush.msra.mxu0 0.0
    %936 = vmatpush.msra.mxu0 0.0
    %937 = vmatpush.msra.mxu0 0.0
    %938 = vmatpush.msra.mxu0 0.0
    %939 = vmatpush.msra.mxu0 0.0
    %940 = vmatpush.msra.mxu0 0.0
    %941 = vmatpush.msra.mxu0 0.0
    %942 = vmatpush.msra.mxu0 0.0
    %943 = vmatpush.msra.mxu0 0.0
    %944 = vmatpush.msra.mxu0 0.0
    %945 = vmatpush.msra.mxu0 %v915
    %946 = vmatpush.msra.mxu0 %v914
    %947 = vmatpush.msra.mxu0 %v913
    %948 = vmatpush.msra.mxu0 %v912
    %949 = vmatmul.f32.gmra.mxu0 %v922
    %v950 = vpop.f32.mrf.mxu0
    %v951 = vadd.f32 %v919, %v950
    %952 = vmatmul.f32.gmra.mxu0 %v925
    %v953 = vpop.f32.mrf.mxu0
    %v954 = vadd.f32 %v919, %v953
    %955 = vmatmul.f32.gmra.mxu0 %v928
    %v956 = vpop.f32.mrf.mxu0
    %v957 = vadd.f32 %v919, %v956
    %958 = vmatmul.f32.gmra.mxu0 %v931
    %v959 = vpop.f32.mrf.mxu0
    %v960 = vadd.f32 %v919, %v959
    %961 = vdwg.mxu0
    %v962 = vmax.f32 %v951, 0.0
    %v963 = vmax.f32 %v954, 0.0
    %v964 = vmax.f32 %v957, 0.0
    %v965 = vmax.f32 %v960, 0.0
    %s966 = scalar_lea.vmem [#allocation9], 32
    %v967 = vld [vmem:[%s966] sm:$0xff]
    %v968 = vld [vmem:[%s966 + $0x8] sm:$0xff]
    %v969 = vld [vmem:[%s966 + $0x10] sm:$0xff]
    %v970 = vld [vmem:[%s966 + $0x18] sm:$0xff]
    %s971 = scalar_lea.vmem %s9, 1
    %v972 = vld [vmem:[%s971] sm:$0x1]
    %v974 = vperm.slane %v972, 0
    %v977 = vsel %vm315, %v907, 0
    %v980 = vsel %vm315, %v908, 0
    %v983 = vsel %vm315, %v909, 0
    %v986 = vsel %vm315, %v910, 0
    %988 = vmatpush.msra.mxu0 0.0
    %989 = vmatpush.msra.mxu0 0.0
    %990 = vmatpush.msra.mxu0 0.0
    %991 = vmatpush.msra.mxu0 0.0
    %992 = vmatpush.msra.mxu0 0.0
    %993 = vmatpush.msra.mxu0 0.0
    %994 = vmatpush.msra.mxu0 0.0
    %995 = vmatpush.msra.mxu0 0.0
    %996 = vmatpush.msra.mxu0 0.0
    %997 = vmatpush.msra.mxu0 0.0
    %998 = vmatpush.msra.mxu0 0.0
    %999 = vmatpush.msra.mxu0 0.0
    %1000 = vmatpush.msra.mxu0 %v970
    %1001 = vmatpush.msra.mxu0 %v969
    %1002 = vmatpush.msra.mxu0 %v968
    %1003 = vmatpush.msra.mxu0 %v967
    %1004 = vmatmul.f32.gmra.mxu0 %v977
    %v1005 = vpop.f32.mrf.mxu0
    %v1006 = vadd.f32 %v974, %v1005
    %1007 = vmatmul.f32.gmra.mxu0 %v980
    %v1008 = vpop.f32.mrf.mxu0
    %v1009 = vadd.f32 %v974, %v1008
    %1010 = vmatmul.f32.gmra.mxu0 %v983
    %v1011 = vpop.f32.mrf.mxu0
    %v1012 = vadd.f32 %v974, %v1011
    %1013 = vmatmul.f32.gmra.mxu0 %v986
    %v1014 = vpop.f32.mrf.mxu0
    %v1015 = vadd.f32 %v974, %v1014
    %1016 = vdwg.mxu0
    %v1017 = vmax.f32 %v1006, 0.0
    %v1018 = vmax.f32 %v1009, 0.0
    %v1019 = vmax.f32 %v1012, 0.0
    %v1020 = vmax.f32 %v1015, 0.0
    %s1021 = scalar_lea.vmem [#allocation10], 32
    %v1022 = vld [vmem:[%s1021] sm:$0xff]
    %v1023 = vld [vmem:[%s1021 + $0x8] sm:$0xff]
    %v1024 = vld [vmem:[%s1021 + $0x10] sm:$0xff]
    %v1025 = vld [vmem:[%s1021 + $0x18] sm:$0xff]
    %s1026 = scalar_lea.vmem [#allocation12], 1
    %v1027 = vld [vmem:[%s1026] sm:$0x1]
    %v1029 = vperm.slane %v1027, 0
    %v1032 = vsel %vm315, %v962, 0
    %v1035 = vsel %vm315, %v963, 0
    %v1038 = vsel %vm315, %v964, 0
    %v1041 = vsel %vm315, %v965, 0
    %1043 = vmatpush.msra.mxu0 0.0
    %1044 = vmatpush.msra.mxu0 0.0
    %1045 = vmatpush.msra.mxu0 0.0
    %1046 = vmatpush.msra.mxu0 0.0
    %1047 = vmatpush.msra.mxu0 0.0
    %1048 = vmatpush.msra.mxu0 0.0
    %1049 = vmatpush.msra.mxu0 0.0
    %1050 = vmatpush.msra.mxu0 0.0
    %1051 = vmatpush.msra.mxu0 0.0
    %1052 = vmatpush.msra.mxu0 0.0
    %1053 = vmatpush.msra.mxu0 0.0
    %1054 = vmatpush.msra.mxu0 0.0
    %1055 = vmatpush.msra.mxu0 %v1025
    %1056 = vmatpush.msra.mxu0 %v1024
    %1057 = vmatpush.msra.mxu0 %v1023
    %1058 = vmatpush.msra.mxu0 %v1022
    %1059 = vmatmul.f32.gmra.mxu0 %v1032
    %v1060 = vpop.f32.mrf.mxu0
    %v1061 = vadd.f32 %v1029, %v1060
    %1062 = vmatmul.f32.gmra.mxu0 %v1035
    %v1063 = vpop.f32.mrf.mxu0
    %v1064 = vadd.f32 %v1029, %v1063
    %1065 = vmatmul.f32.gmra.mxu0 %v1038
    %v1066 = vpop.f32.mrf.mxu0
    %v1067 = vadd.f32 %v1029, %v1066
    %1068 = vmatmul.f32.gmra.mxu0 %v1041
    %v1069 = vpop.f32.mrf.mxu0
    %v1070 = vadd.f32 %v1029, %v1069
    %1071 = vdwg.mxu0
    %v1072 = vmax.f32 %v1061, 0.0
    %v1073 = vmax.f32 %v1064, 0.0
    %v1074 = vmax.f32 %v1067, 0.0
    %v1075 = vmax.f32 %v1070, 0.0
    %s1076 = scalar_lea.vmem [#allocation13], 32
    %v1077 = vld [vmem:[%s1076] sm:$0xff]
    %v1078 = vld [vmem:[%s1076 + $0x8] sm:$0xff]
    %v1079 = vld [vmem:[%s1076 + $0x10] sm:$0xff]
    %v1080 = vld [vmem:[%s1076 + $0x18] sm:$0xff]
    %s1081 = scalar_lea.vmem [#allocation15], 32
    %v1082 = vld [vmem:[%s1081] sm:$0xff]
    %v1083 = vld [vmem:[%s1081 + $0x8] sm:$0xff]
    %v1084 = vld [vmem:[%s1081 + $0x10] sm:$0xff]
    %v1085 = vld [vmem:[%s1081 + $0x18] sm:$0xff]
    %v1087 = vsel %vm315, %v1072, 0
    %v1090 = vsel %vm315, %v1073, 0
    %v1093 = vsel %vm315, %v1074, 0
    %v1096 = vsel %vm315, %v1075, 0
    %1098 = vmatpush.msra.mxu0 0.0
    %1099 = vmatpush.msra.mxu0 0.0
    %1100 = vmatpush.msra.mxu0 0.0
    %1101 = vmatpush.msra.mxu0 0.0
    %1102 = vmatpush.msra.mxu0 0.0
    %1103 = vmatpush.msra.mxu0 0.0
    %1104 = vmatpush.msra.mxu0 0.0
    %1105 = vmatpush.msra.mxu0 0.0
    %1106 = vmatpush.msra.mxu0 0.0
    %1107 = vmatpush.msra.mxu0 0.0
    %1108 = vmatpush.msra.mxu0 0.0
    %1109 = vmatpush.msra.mxu0 0.0
    %1110 = vmatpush.msra.mxu0 %v1085
    %1111 = vmatpush.msra.mxu0 %v1084
    %1112 = vmatpush.msra.mxu0 %v1083
    %1113 = vmatpush.msra.mxu0 %v1082
    %1114 = vmatmul.f32.gmra.mxu0 %v1087
    %v1115 = vpop.f32.mrf.mxu0
    %v1116 = vadd.f32 0.0, %v1115
    %1117 = vmatmul.f32.gmra.mxu0 %v1090
    %v1118 = vpop.f32.mrf.mxu0
    %v1119 = vadd.f32 0.0, %v1118
    %1120 = vmatmul.f32.gmra.mxu0 %v1093
    %v1121 = vpop.f32.mrf.mxu0
    %v1122 = vadd.f32 0.0, %v1121
    %1123 = vmatmul.f32.gmra.mxu0 %v1096
    %v1124 = vpop.f32.mrf.mxu0
    %v1125 = vadd.f32 0.0, %v1124
    %1126 = vdwg.mxu0
    %v1128 = vsel %vm315, %v1017, 0
    %v1131 = vsel %vm315, %v1018, 0
    %v1134 = vsel %vm315, %v1019, 0
    %v1137 = vsel %vm315, %v1020, 0
    %1139 = vmatpush.msra.mxu0 0.0
    %1140 = vmatpush.msra.mxu0 0.0
    %1141 = vmatpush.msra.mxu0 0.0
    %1142 = vmatpush.msra.mxu0 0.0
    %1143 = vmatpush.msra.mxu0 0.0
    %1144 = vmatpush.msra.mxu0 0.0
    %1145 = vmatpush.msra.mxu0 0.0
    %1146 = vmatpush.msra.mxu0 0.0
    %1147 = vmatpush.msra.mxu0 0.0
    %1148 = vmatpush.msra.mxu0 0.0
    %1149 = vmatpush.msra.mxu0 0.0
    %1150 = vmatpush.msra.mxu0 0.0
    %1151 = vmatpush.msra.mxu0 %v1080
    %1152 = vmatpush.msra.mxu0 %v1079
    %1153 = vmatpush.msra.mxu0 %v1078
    %1154 = vmatpush.msra.mxu0 %v1077
    %1155 = vmatmul.f32.gmra.mxu0 %v1128
    %v1156 = vpop.f32.mrf.mxu0
    %v1157 = vadd.f32 %v1116, %v1156
    %1158 = vmatmul.f32.gmra.mxu0 %v1131
    %v1159 = vpop.f32.mrf.mxu0
    %v1160 = vadd.f32 %v1119, %v1159
    %1161 = vmatmul.f32.gmra.mxu0 %v1134
    %v1162 = vpop.f32.mrf.mxu0
    %v1163 = vadd.f32 %v1122, %v1162
    %1164 = vmatmul.f32.gmra.mxu0 %v1137
    %v1165 = vpop.f32.mrf.mxu0
    %v1166 = vadd.f32 %v1125, %v1165
    %1167 = vdwg.mxu0
    %s1168 = scalar_lea.vmem [#allocation16], 1
    %v1169 = vld [vmem:[%s1168] sm:$0x1]
    %v1171 = vperm.slane %v1169, 0
    %v1173 = vadd.f32 %v1157, %v1171
    %v1174 = vadd.f32 %v1160, %v1171
    %v1175 = vadd.f32 %v1163, %v1171
    %v1176 = vadd.f32 %v1166, %v1171
    %v1177 = vmax.f32 %v1173, 0.0
    %v1178 = vmax.f32 %v1174, 0.0
    %v1179 = vmax.f32 %v1175, 0.0
    %v1180 = vmax.f32 %v1176, 0.0
    %s1181 = scalar_lea.vmem [#allocation18], 32
    %v1182 = vld [vmem:[%s1181] sm:$0xff]
    %v1183 = vld [vmem:[%s1181 + $0x8] sm:$0xff]
    %v1184 = vld [vmem:[%s1181 + $0x10] sm:$0xff]
    %v1185 = vld [vmem:[%s1181 + $0x18] sm:$0xff]
    %s1186 = scalar_lea.vmem [#allocation19], 1
    %v1187 = vld [vmem:[%s1186] sm:$0x1]
    %v1189 = vperm.slane %v1187, 0
    %v1192 = vsel %vm315, %v1177, 0
    %v1195 = vsel %vm315, %v1178, 0
    %v1198 = vsel %vm315, %v1179, 0
    %v1201 = vsel %vm315, %v1180, 0
    %1203 = vmatpush.msra.mxu0 0.0
    %1204 = vmatpush.msra.mxu0 0.0
    %1205 = vmatpush.msra.mxu0 0.0
    %1206 = vmatpush.msra.mxu0 0.0
    %1207 = vmatpush.msra.mxu0 0.0
    %1208 = vmatpush.msra.mxu0 0.0
    %1209 = vmatpush.msra.mxu0 0.0
    %1210 = vmatpush.msra.mxu0 0.0
    %1211 = vmatpush.msra.mxu0 0.0
    %1212 = vmatpush.msra.mxu0 0.0
    %1213 = vmatpush.msra.mxu0 0.0
    %1214 = vmatpush.msra.mxu0 0.0
    %1215 = vmatpush.msra.mxu0 %v1185
    %1216 = vmatpush.msra.mxu0 %v1184
    %1217 = vmatpush.msra.mxu0 %v1183
    %1218 = vmatpush.msra.mxu0 %v1182
    %1219 = vmatmul.f32.gmra.mxu0 %v1192
    %v1220 = vpop.f32.mrf.mxu0
    %v1221 = vadd.f32 %v1189, %v1220
    %1222 = vmatmul.f32.gmra.mxu0 %v1195
    %v1223 = vpop.f32.mrf.mxu0
    %v1224 = vadd.f32 %v1189, %v1223
    %1225 = vmatmul.f32.gmra.mxu0 %v1198
    %v1226 = vpop.f32.mrf.mxu0
    %v1227 = vadd.f32 %v1189, %v1226
    %1228 = vmatmul.f32.gmra.mxu0 %v1201
    %v1229 = vpop.f32.mrf.mxu0
    %v1230 = vadd.f32 %v1189, %v1229
    %1231 = vdwg.mxu0
    %v1232 = vmax.f32 %v1221, 0.0
    %v1233 = vmax.f32 %v1224, 0.0
    %v1234 = vmax.f32 %v1227, 0.0
    %v1235 = vmax.f32 %v1230, 0.0
    %s1236 = sld [smem:[#allocation2 + $0x100]]
    %s1237 = sld [smem:[#allocation2 + $0x101]]
    %v1238 = vstv %s1236
    %v1239 = vmul.f32 %v1238, %v1232
    %v1240 = vmul.f32 %v1238, %v1233
    %v1241 = vmul.f32 %v1238, %v1234
    %v1242 = vmul.f32 %v1238, %v1235
    %1243 = vmatpush.msra.mxu0 0.0
    %1244 = vmatpush.msra.mxu0 0.0
    %1245 = vmatpush.msra.mxu0 0.0
    %1246 = vmatpush.msra.mxu0 0.0
    %1247 = vmatpush.msra.mxu0 0.0
    %1248 = vmatpush.msra.mxu0 0.0
    %1249 = vmatpush.msra.mxu0 0.0
    %1250 = vmatpush.msra.mxu0 0.0
    %1251 = vmatpush.msra.mxu0 0.0
    %1252 = vmatpush.msra.mxu0 0.0
    %1253 = vmatpush.msra.mxu0 0.0
    %1254 = vmatpush.msra.mxu0 0.0
    %1255 = vmatpush.msra.mxu0 %v1235
    %1256 = vmatpush.msra.mxu0 %v1234
    %1257 = vmatpush.msra.mxu0 %v1233
    %1258 = vmatpush.msra.mxu0 %v1232
    %1259 = vmatmul.f32.gmra.mxu0 %v317
    %v1260 = vpop.f32.mrf.mxu0
    %v1261 = vadd.f32 0.0, %v1260
    %1262 = vmatmul.f32.gmra.mxu0 %v320
    %v1263 = vpop.f32.mrf.mxu0
    %v1264 = vadd.f32 0.0, %v1263
    %1265 = vmatmul.f32.gmra.mxu0 %v323
    %v1266 = vpop.f32.mrf.mxu0
    %v1267 = vadd.f32 0.0, %v1266
    %1268 = vmatmul.f32.gmra.mxu0 %v326
    %v1269 = vpop.f32.mrf.mxu0
    %v1270 = vadd.f32 0.0, %v1269
    %1271 = vdwg.mxu0
    %v1272 = vadd.f32 %v1239, %v1261
    %v1273 = vadd.f32 %v1240, %v1264
    %v1274 = vadd.f32 %v1241, %v1267
    %v1275 = vadd.f32 %v1242, %v1270
    %v1276 = vstv %s1237
    %v1277 = vmul.f32 %v1276, %v1232
    %v1278 = vmul.f32 %v1276, %v1233
    %v1279 = vmul.f32 %v1276, %v1234
    %v1280 = vmul.f32 %v1276, %v1235
    %1281 = vmatpush.msra.mxu0 0.0
    %1282 = vmatpush.msra.mxu0 0.0
    %1283 = vmatpush.msra.mxu0 0.0
    %1284 = vmatpush.msra.mxu0 0.0
    %1285 = vmatpush.msra.mxu0 0.0
    %1286 = vmatpush.msra.mxu0 0.0
    %1287 = vmatpush.msra.mxu0 0.0
    %1288 = vmatpush.msra.mxu0 0.0
    %1289 = vmatpush.msra.mxu0 0.0
    %1290 = vmatpush.msra.mxu0 0.0
    %1291 = vmatpush.msra.mxu0 0.0
    %1292 = vmatpush.msra.mxu0 0.0
    %1293 = vmatpush.msra.mxu0 %v1235
    %1294 = vmatpush.msra.mxu0 %v1234
    %1295 = vmatpush.msra.mxu0 %v1233
    %1296 = vmatpush.msra.mxu0 %v1232
    %1297 = vmatmul.f32.gmra.mxu0 %v367
    %v1298 = vpop.f32.mrf.mxu0
    %v1299 = vadd.f32 0.0, %v1298
    %1300 = vmatmul.f32.gmra.mxu0 %v370
    %v1301 = vpop.f32.mrf.mxu0
    %v1302 = vadd.f32 0.0, %v1301
    %1303 = vmatmul.f32.gmra.mxu0 %v373
    %v1304 = vpop.f32.mrf.mxu0
    %v1305 = vadd.f32 0.0, %v1304
    %1306 = vmatmul.f32.gmra.mxu0 %v376
    %v1307 = vpop.f32.mrf.mxu0
    %v1308 = vadd.f32 0.0, %v1307
    %1309 = vdwg.mxu0
    %v1310 = vadd.f32 %v1277, %v1299
    %v1311 = vadd.f32 %v1278, %v1302
    %v1312 = vadd.f32 %v1279, %v1305
    %v1313 = vadd.f32 %v1280, %v1308
    %s1314 = scalar_lea.vmem [#allocation6], 64
    %v1315 = vld [vmem:[%s1314] sm:$0xff]
    %v1316 = vld [vmem:[%s1314 + $0x8] sm:$0xff]
    %v1317 = vld [vmem:[%s1314 + $0x10] sm:$0xff]
    %v1318 = vld [vmem:[%s1314 + $0x18] sm:$0xff]
    %s1319 = scalar_lea.vmem %s5, 2
    %v1320 = vld [vmem:[%s1319] sm:$0x1]
    %v1322 = vperm.slane %v1320, 0
    %v1325 = vsel %vm315, %v1272, 0
    %v1328 = vsel %vm315, %v1273, 0
    %v1331 = vsel %vm315, %v1274, 0
    %v1334 = vsel %vm315, %v1275, 0
    %1336 = vmatpush.msra.mxu0 0.0
    %1337 = vmatpush.msra.mxu0 0.0
    %1338 = vmatpush.msra.mxu0 0.0
    %1339 = vmatpush.msra.mxu0 0.0
    %1340 = vmatpush.msra.mxu0 0.0
    %1341 = vmatpush.msra.mxu0 0.0
    %1342 = vmatpush.msra.mxu0 0.0
    %1343 = vmatpush.msra.mxu0 0.0
    %1344 = vmatpush.msra.mxu0 0.0
    %1345 = vmatpush.msra.mxu0 0.0
    %1346 = vmatpush.msra.mxu0 0.0
    %1347 = vmatpush.msra.mxu0 0.0
    %1348 = vmatpush.msra.mxu0 %v1318
    %1349 = vmatpush.msra.mxu0 %v1317
    %1350 = vmatpush.msra.mxu0 %v1316
    %1351 = vmatpush.msra.mxu0 %v1315
    %1352 = vmatmul.f32.gmra.mxu0 %v1325
    %v1353 = vpop.f32.mrf.mxu0
    %v1354 = vadd.f32 %v1322, %v1353
    %1355 = vmatmul.f32.gmra.mxu0 %v1328
    %v1356 = vpop.f32.mrf.mxu0
    %v1357 = vadd.f32 %v1322, %v1356
    %1358 = vmatmul.f32.gmra.mxu0 %v1331
    %v1359 = vpop.f32.mrf.mxu0
    %v1360 = vadd.f32 %v1322, %v1359
    %1361 = vmatmul.f32.gmra.mxu0 %v1334
    %v1362 = vpop.f32.mrf.mxu0
    %v1363 = vadd.f32 %v1322, %v1362
    %1364 = vdwg.mxu0
    %v1365 = vmax.f32 %v1354, 0.0
    %v1366 = vmax.f32 %v1357, 0.0
    %v1367 = vmax.f32 %v1360, 0.0
    %v1368 = vmax.f32 %v1363, 0.0
    %s1369 = scalar_lea.vmem [#allocation7], 64
    %v1370 = vld [vmem:[%s1369] sm:$0xff]
    %v1371 = vld [vmem:[%s1369 + $0x8] sm:$0xff]
    %v1372 = vld [vmem:[%s1369 + $0x10] sm:$0xff]
    %v1373 = vld [vmem:[%s1369 + $0x18] sm:$0xff]
    %s1374 = scalar_lea.vmem %s7, 2
    %v1375 = vld [vmem:[%s1374] sm:$0x1]
    %v1377 = vperm.slane %v1375, 0
    %v1380 = vsel %vm315, %v1310, 0
    %v1383 = vsel %vm315, %v1311, 0
    %v1386 = vsel %vm315, %v1312, 0
    %v1389 = vsel %vm315, %v1313, 0
    %1391 = vmatpush.msra.mxu0 0.0
    %1392 = vmatpush.msra.mxu0 0.0
    %1393 = vmatpush.msra.mxu0 0.0
    %1394 = vmatpush.msra.mxu0 0.0
    %1395 = vmatpush.msra.mxu0 0.0
    %1396 = vmatpush.msra.mxu0 0.0
    %1397 = vmatpush.msra.mxu0 0.0
    %1398 = vmatpush.msra.mxu0 0.0
    %1399 = vmatpush.msra.mxu0 0.0
    %1400 = vmatpush.msra.mxu0 0.0
    %1401 = vmatpush.msra.mxu0 0.0
    %1402 = vmatpush.msra.mxu0 0.0
    %1403 = vmatpush.msra.mxu0 %v1373
    %1404 = vmatpush.msra.mxu0 %v1372
    %1405 = vmatpush.msra.mxu0 %v1371
    %1406 = vmatpush.msra.mxu0 %v1370
    %1407 = vmatmul.f32.gmra.mxu0 %v1380
    %v1408 = vpop.f32.mrf.mxu0
    %v1409 = vadd.f32 %v1377, %v1408
    %1410 = vmatmul.f32.gmra.mxu0 %v1383
    %v1411 = vpop.f32.mrf.mxu0
    %v1412 = vadd.f32 %v1377, %v1411
    %1413 = vmatmul.f32.gmra.mxu0 %v1386
    %v1414 = vpop.f32.mrf.mxu0
    %v1415 = vadd.f32 %v1377, %v1414
    %1416 = vmatmul.f32.gmra.mxu0 %v1389
    %v1417 = vpop.f32.mrf.mxu0
    %v1418 = vadd.f32 %v1377, %v1417
    %1419 = vdwg.mxu0
    %v1420 = vmax.f32 %v1409, 0.0
    %v1421 = vmax.f32 %v1412, 0.0
    %v1422 = vmax.f32 %v1415, 0.0
    %v1423 = vmax.f32 %v1418, 0.0
    %s1424 = scalar_lea.vmem [#allocation9], 64
    %v1425 = vld [vmem:[%s1424] sm:$0xff]
    %v1426 = vld [vmem:[%s1424 + $0x8] sm:$0xff]
    %v1427 = vld [vmem:[%s1424 + $0x10] sm:$0xff]
    %v1428 = vld [vmem:[%s1424 + $0x18] sm:$0xff]
    %s1429 = scalar_lea.vmem %s9, 2
    %v1430 = vld [vmem:[%s1429] sm:$0x1]
    %v1432 = vperm.slane %v1430, 0
    %v1435 = vsel %vm315, %v1365, 0
    %v1438 = vsel %vm315, %v1366, 0
    %v1441 = vsel %vm315, %v1367, 0
    %v1444 = vsel %vm315, %v1368, 0
    %1446 = vmatpush.msra.mxu0 0.0
    %1447 = vmatpush.msra.mxu0 0.0
    %1448 = vmatpush.msra.mxu0 0.0
    %1449 = vmatpush.msra.mxu0 0.0
    %1450 = vmatpush.msra.mxu0 0.0
    %1451 = vmatpush.msra.mxu0 0.0
    %1452 = vmatpush.msra.mxu0 0.0
    %1453 = vmatpush.msra.mxu0 0.0
    %1454 = vmatpush.msra.mxu0 0.0
    %1455 = vmatpush.msra.mxu0 0.0
    %1456 = vmatpush.msra.mxu0 0.0
    %1457 = vmatpush.msra.mxu0 0.0
    %1458 = vmatpush.msra.mxu0 %v1428
    %1459 = vmatpush.msra.mxu0 %v1427
    %1460 = vmatpush.msra.mxu0 %v1426
    %1461 = vmatpush.msra.mxu0 %v1425
    %1462 = vmatmul.f32.gmra.mxu0 %v1435
    %v1463 = vpop.f32.mrf.mxu0
    %v1464 = vadd.f32 %v1432, %v1463
    %1465 = vmatmul.f32.gmra.mxu0 %v1438
    %v1466 = vpop.f32.mrf.mxu0
    %v1467 = vadd.f32 %v1432, %v1466
    %1468 = vmatmul.f32.gmra.mxu0 %v1441
    %v1469 = vpop.f32.mrf.mxu0
    %v1470 = vadd.f32 %v1432, %v1469
    %1471 = vmatmul.f32.gmra.mxu0 %v1444
    %v1472 = vpop.f32.mrf.mxu0
    %v1473 = vadd.f32 %v1432, %v1472
    %1474 = vdwg.mxu0
    %v1475 = vmax.f32 %v1464, 0.0
    %v1476 = vmax.f32 %v1467, 0.0
    %v1477 = vmax.f32 %v1470, 0.0
    %v1478 = vmax.f32 %v1473, 0.0
    %s1479 = scalar_lea.vmem [#allocation10], 64
    %v1480 = vld [vmem:[%s1479] sm:$0xff]
    %v1481 = vld [vmem:[%s1479 + $0x8] sm:$0xff]
    %v1482 = vld [vmem:[%s1479 + $0x10] sm:$0xff]
    %v1483 = vld [vmem:[%s1479 + $0x18] sm:$0xff]
    %s1484 = scalar_lea.vmem [#allocation12], 2
    %v1485 = vld [vmem:[%s1484] sm:$0x1]
    %v1487 = vperm.slane %v1485, 0
    %v1490 = vsel %vm315, %v1420, 0
    %v1493 = vsel %vm315, %v1421, 0
    %v1496 = vsel %vm315, %v1422, 0
    %v1499 = vsel %vm315, %v1423, 0
    %1501 = vmatpush.msra.mxu0 0.0
    %1502 = vmatpush.msra.mxu0 0.0
    %1503 = vmatpush.msra.mxu0 0.0
    %1504 = vmatpush.msra.mxu0 0.0
    %1505 = vmatpush.msra.mxu0 0.0
    %1506 = vmatpush.msra.mxu0 0.0
    %1507 = vmatpush.msra.mxu0 0.0
    %1508 = vmatpush.msra.mxu0 0.0
    %1509 = vmatpush.msra.mxu0 0.0
    %1510 = vmatpush.msra.mxu0 0.0
    %1511 = vmatpush.msra.mxu0 0.0
    %1512 = vmatpush.msra.mxu0 0.0
    %1513 = vmatpush.msra.mxu0 %v1483
    %1514 = vmatpush.msra.mxu0 %v1482
    %1515 = vmatpush.msra.mxu0 %v1481
    %1516 = vmatpush.msra.mxu0 %v1480
    %1517 = vmatmul.f32.gmra.mxu0 %v1490
    %v1518 = vpop.f32.mrf.mxu0
    %v1519 = vadd.f32 %v1487, %v1518
    %1520 = vmatmul.f32.gmra.mxu0 %v1493
    %v1521 = vpop.f32.mrf.mxu0
    %v1522 = vadd.f32 %v1487, %v1521
    %1523 = vmatmul.f32.gmra.mxu0 %v1496
    %v1524 = vpop.f32.mrf.mxu0
    %v1525 = vadd.f32 %v1487, %v1524
    %1526 = vmatmul.f32.gmra.mxu0 %v1499
    %v1527 = vpop.f32.mrf.mxu0
    %v1528 = vadd.f32 %v1487, %v1527
    %1529 = vdwg.mxu0
    %v1530 = vmax.f32 %v1519, 0.0
    %v1531 = vmax.f32 %v1522, 0.0
    %v1532 = vmax.f32 %v1525, 0.0
    %v1533 = vmax.f32 %v1528, 0.0
    %s1534 = scalar_lea.vmem [#allocation13], 64
    %v1535 = vld [vmem:[%s1534] sm:$0xff]
    %v1536 = vld [vmem:[%s1534 + $0x8] sm:$0xff]
    %v1537 = vld [vmem:[%s1534 + $0x10] sm:$0xff]
    %v1538 = vld [vmem:[%s1534 + $0x18] sm:$0xff]
    %s1539 = scalar_lea.vmem [#allocation15], 64
    %v1540 = vld [vmem:[%s1539] sm:$0xff]
    %v1541 = vld [vmem:[%s1539 + $0x8] sm:$0xff]
    %v1542 = vld [vmem:[%s1539 + $0x10] sm:$0xff]
    %v1543 = vld [vmem:[%s1539 + $0x18] sm:$0xff]
    %v1545 = vsel %vm315, %v1530, 0
    %v1548 = vsel %vm315, %v1531, 0
    %v1551 = vsel %vm315, %v1532, 0
    %v1554 = vsel %vm315, %v1533, 0
    %1556 = vmatpush.msra.mxu0 0.0
    %1557 = vmatpush.msra.mxu0 0.0
    %1558 = vmatpush.msra.mxu0 0.0
    %1559 = vmatpush.msra.mxu0 0.0
    %1560 = vmatpush.msra.mxu0 0.0
    %1561 = vmatpush.msra.mxu0 0.0
    %1562 = vmatpush.msra.mxu0 0.0
    %1563 = vmatpush.msra.mxu0 0.0
    %1564 = vmatpush.msra.mxu0 0.0
    %1565 = vmatpush.msra.mxu0 0.0
    %1566 = vmatpush.msra.mxu0 0.0
    %1567 = vmatpush.msra.mxu0 0.0
    %1568 = vmatpush.msra.mxu0 %v1543
    %1569 = vmatpush.msra.mxu0 %v1542
    %1570 = vmatpush.msra.mxu0 %v1541
    %1571 = vmatpush.msra.mxu0 %v1540
    %1572 = vmatmul.f32.gmra.mxu0 %v1545
    %v1573 = vpop.f32.mrf.mxu0
    %v1574 = vadd.f32 0.0, %v1573
    %1575 = vmatmul.f32.gmra.mxu0 %v1548
    %v1576 = vpop.f32.mrf.mxu0
    %v1577 = vadd.f32 0.0, %v1576
    %1578 = vmatmul.f32.gmra.mxu0 %v1551
    %v1579 = vpop.f32.mrf.mxu0
    %v1580 = vadd.f32 0.0, %v1579
    %1581 = vmatmul.f32.gmra.mxu0 %v1554
    %v1582 = vpop.f32.mrf.mxu0
    %v1583 = vadd.f32 0.0, %v1582
    %1584 = vdwg.mxu0
    %v1586 = vsel %vm315, %v1475, 0
    %v1589 = vsel %vm315, %v1476, 0
    %v1592 = vsel %vm315, %v1477, 0
    %v1595 = vsel %vm315, %v1478, 0
    %1597 = vmatpush.msra.mxu0 0.0
    %1598 = vmatpush.msra.mxu0 0.0
    %1599 = vmatpush.msra.mxu0 0.0
    %1600 = vmatpush.msra.mxu0 0.0
    %1601 = vmatpush.msra.mxu0 0.0
    %1602 = vmatpush.msra.mxu0 0.0
    %1603 = vmatpush.msra.mxu0 0.0
    %1604 = vmatpush.msra.mxu0 0.0
    %1605 = vmatpush.msra.mxu0 0.0
    %1606 = vmatpush.msra.mxu0 0.0
    %1607 = vmatpush.msra.mxu0 0.0
    %1608 = vmatpush.msra.mxu0 0.0
    %1609 = vmatpush.msra.mxu0 %v1538
    %1610 = vmatpush.msra.mxu0 %v1537
    %1611 = vmatpush.msra.mxu0 %v1536
    %1612 = vmatpush.msra.mxu0 %v1535
    %1613 = vmatmul.f32.gmra.mxu0 %v1586
    %v1614 = vpop.f32.mrf.mxu0
    %v1615 = vadd.f32 %v1574, %v1614
    %1616 = vmatmul.f32.gmra.mxu0 %v1589
    %v1617 = vpop.f32.mrf.mxu0
    %v1618 = vadd.f32 %v1577, %v1617
    %1619 = vmatmul.f32.gmra.mxu0 %v1592
    %v1620 = vpop.f32.mrf.mxu0
    %v1621 = vadd.f32 %v1580, %v1620
    %1622 = vmatmul.f32.gmra.mxu0 %v1595
    %v1623 = vpop.f32.mrf.mxu0
    %v1624 = vadd.f32 %v1583, %v1623
    %1625 = vdwg.mxu0
    %s1626 = scalar_lea.vmem [#allocation16], 2
    %v1627 = vld [vmem:[%s1626] sm:$0x1]
    %v1629 = vperm.slane %v1627, 0
    %v1631 = vadd.f32 %v1615, %v1629
    %v1632 = vadd.f32 %v1618, %v1629
    %v1633 = vadd.f32 %v1621, %v1629
    %v1634 = vadd.f32 %v1624, %v1629
    %v1635 = vmax.f32 %v1631, 0.0
    %v1636 = vmax.f32 %v1632, 0.0
    %v1637 = vmax.f32 %v1633, 0.0
    %v1638 = vmax.f32 %v1634, 0.0
    %s1639 = scalar_lea.vmem [#allocation18], 64
    %v1640 = vld [vmem:[%s1639] sm:$0xff]
    %v1641 = vld [vmem:[%s1639 + $0x8] sm:$0xff]
    %v1642 = vld [vmem:[%s1639 + $0x10] sm:$0xff]
    %v1643 = vld [vmem:[%s1639 + $0x18] sm:$0xff]
    %s1644 = scalar_lea.vmem [#allocation19], 2
    %v1645 = vld [vmem:[%s1644] sm:$0x1]
    %v1647 = vperm.slane %v1645, 0
    %v1650 = vsel %vm315, %v1635, 0
    %v1653 = vsel %vm315, %v1636, 0
    %v1656 = vsel %vm315, %v1637, 0
    %v1659 = vsel %vm315, %v1638, 0
    %1661 = vmatpush.msra.mxu0 0.0
    %1662 = vmatpush.msra.mxu0 0.0
    %1663 = vmatpush.msra.mxu0 0.0
    %1664 = vmatpush.msra.mxu0 0.0
    %1665 = vmatpush.msra.mxu0 0.0
    %1666 = vmatpush.msra.mxu0 0.0
    %1667 = vmatpush.msra.mxu0 0.0
    %1668 = vmatpush.msra.mxu0 0.0
    %1669 = vmatpush.msra.mxu0 0.0
    %1670 = vmatpush.msra.mxu0 0.0
    %1671 = vmatpush.msra.mxu0 0.0
    %1672 = vmatpush.msra.mxu0 0.0
    %1673 = vmatpush.msra.mxu0 %v1643
    %1674 = vmatpush.msra.mxu0 %v1642
    %1675 = vmatpush.msra.mxu0 %v1641
    %1676 = vmatpush.msra.mxu0 %v1640
    %1677 = vmatmul.f32.gmra.mxu0 %v1650
    %v1678 = vpop.f32.mrf.mxu0
    %v1679 = vadd.f32 %v1647, %v1678
    %1680 = vmatmul.f32.gmra.mxu0 %v1653
    %v1681 = vpop.f32.mrf.mxu0
    %v1682 = vadd.f32 %v1647, %v1681
    %1683 = vmatmul.f32.gmra.mxu0 %v1656
    %v1684 = vpop.f32.mrf.mxu0
    %v1685 = vadd.f32 %v1647, %v1684
    %1686 = vmatmul.f32.gmra.mxu0 %v1659
    %v1687 = vpop.f32.mrf.mxu0
    %v1688 = vadd.f32 %v1647, %v1687
    %1689 = vdwg.mxu0
    %v1690 = vmax.f32 %v1679, 0.0
    %v1691 = vmax.f32 %v1682, 0.0
    %v1692 = vmax.f32 %v1685, 0.0
    %v1693 = vmax.f32 %v1688, 0.0
    %s1694 = sld [smem:[#allocation2 + $0x180]]
    %s1695 = sld [smem:[#allocation2 + $0x181]]
    %v1696 = vstv %s1694
    %v1697 = vmul.f32 %v1696, %v1690
    %v1698 = vmul.f32 %v1696, %v1691
    %v1699 = vmul.f32 %v1696, %v1692
    %v1700 = vmul.f32 %v1696, %v1693
    %1701 = vmatpush.msra.mxu0 0.0
    %1702 = vmatpush.msra.mxu0 0.0
    %1703 = vmatpush.msra.mxu0 0.0
    %1704 = vmatpush.msra.mxu0 0.0
    %1705 = vmatpush.msra.mxu0 0.0
    %1706 = vmatpush.msra.mxu0 0.0
    %1707 = vmatpush.msra.mxu0 0.0
    %1708 = vmatpush.msra.mxu0 0.0
    %1709 = vmatpush.msra.mxu0 0.0
    %1710 = vmatpush.msra.mxu0 0.0
    %1711 = vmatpush.msra.mxu0 0.0
    %1712 = vmatpush.msra.mxu0 0.0
    %1713 = vmatpush.msra.mxu0 %v1693
    %1714 = vmatpush.msra.mxu0 %v1692
    %1715 = vmatpush.msra.mxu0 %v1691
    %1716 = vmatpush.msra.mxu0 %v1690
    %1717 = vmatmul.f32.gmra.mxu0 %v317
    %v1718 = vpop.f32.mrf.mxu0
    %v1719 = vadd.f32 0.0, %v1718
    %1720 = vmatmul.f32.gmra.mxu0 %v320
    %v1721 = vpop.f32.mrf.mxu0
    %v1722 = vadd.f32 0.0, %v1721
    %1723 = vmatmul.f32.gmra.mxu0 %v323
    %v1724 = vpop.f32.mrf.mxu0
    %v1725 = vadd.f32 0.0, %v1724
    %1726 = vmatmul.f32.gmra.mxu0 %v326
    %v1727 = vpop.f32.mrf.mxu0
    %v1728 = vadd.f32 0.0, %v1727
    %1729 = vdwg.mxu0
    %v1730 = vadd.f32 %v1697, %v1719
    %v1731 = vadd.f32 %v1698, %v1722
    %v1732 = vadd.f32 %v1699, %v1725
    %v1733 = vadd.f32 %v1700, %v1728
    %v1734 = vstv %s1695
    %v1735 = vmul.f32 %v1734, %v1690
    %v1736 = vmul.f32 %v1734, %v1691
    %v1737 = vmul.f32 %v1734, %v1692
    %v1738 = vmul.f32 %v1734, %v1693
    %1739 = vmatpush.msra.mxu0 0.0
    %1740 = vmatpush.msra.mxu0 0.0
    %1741 = vmatpush.msra.mxu0 0.0
    %1742 = vmatpush.msra.mxu0 0.0
    %1743 = vmatpush.msra.mxu0 0.0
    %1744 = vmatpush.msra.mxu0 0.0
    %1745 = vmatpush.msra.mxu0 0.0
    %1746 = vmatpush.msra.mxu0 0.0
    %1747 = vmatpush.msra.mxu0 0.0
    %1748 = vmatpush.msra.mxu0 0.0
    %1749 = vmatpush.msra.mxu0 0.0
    %1750 = vmatpush.msra.mxu0 0.0
    %1751 = vmatpush.msra.mxu0 %v1693
    %1752 = vmatpush.msra.mxu0 %v1692
    %1753 = vmatpush.msra.mxu0 %v1691
    %1754 = vmatpush.msra.mxu0 %v1690
    %1755 = vmatmul.f32.gmra.mxu0 %v367
    %v1756 = vpop.f32.mrf.mxu0
    %v1757 = vadd.f32 0.0, %v1756
    %1758 = vmatmul.f32.gmra.mxu0 %v370
    %v1759 = vpop.f32.mrf.mxu0
    %v1760 = vadd.f32 0.0, %v1759
    %1761 = vmatmul.f32.gmra.mxu0 %v373
    %v1762 = vpop.f32.mrf.mxu0
    %v1763 = vadd.f32 0.0, %v1762
    %1764 = vmatmul.f32.gmra.mxu0 %v376
    %v1765 = vpop.f32.mrf.mxu0
    %v1766 = vadd.f32 0.0, %v1765
    %1767 = vdwg.mxu0
    %v1768 = vadd.f32 %v1735, %v1757
    %v1769 = vadd.f32 %v1736, %v1760
    %v1770 = vadd.f32 %v1737, %v1763
    %v1771 = vadd.f32 %v1738, %v1766
    %s1772 = scalar_lea.vmem [#allocation6], 96
    %v1773 = vld [vmem:[%s1772] sm:$0xff]
    %v1774 = vld [vmem:[%s1772 + $0x8] sm:$0xff]
    %v1775 = vld [vmem:[%s1772 + $0x10] sm:$0xff]
    %v1776 = vld [vmem:[%s1772 + $0x18] sm:$0xff]
    %s1777 = scalar_lea.vmem %s5, 3
    %v1778 = vld [vmem:[%s1777] sm:$0x1]
    %v1780 = vperm.slane %v1778, 0
    %v1783 = vsel %vm315, %v1730, 0
    %v1786 = vsel %vm315, %v1731, 0
    %v1789 = vsel %vm315, %v1732, 0
    %v1792 = vsel %vm315, %v1733, 0
    %1794 = vmatpush.msra.mxu0 0.0
    %1795 = vmatpush.msra.mxu0 0.0
    %1796 = vmatpush.msra.mxu0 0.0
    %1797 = vmatpush.msra.mxu0 0.0
    %1798 = vmatpush.msra.mxu0 0.0
    %1799 = vmatpush.msra.mxu0 0.0
    %1800 = vmatpush.msra.mxu0 0.0
    %1801 = vmatpush.msra.mxu0 0.0
    %1802 = vmatpush.msra.mxu0 0.0
    %1803 = vmatpush.msra.mxu0 0.0
    %1804 = vmatpush.msra.mxu0 0.0
    %1805 = vmatpush.msra.mxu0 0.0
    %1806 = vmatpush.msra.mxu0 %v1776
    %1807 = vmatpush.msra.mxu0 %v1775
    %1808 = vmatpush.msra.mxu0 %v1774
    %1809 = vmatpush.msra.mxu0 %v1773
    %1810 = vmatmul.f32.gmra.mxu0 %v1783
    %v1811 = vpop.f32.mrf.mxu0
    %v1812 = vadd.f32 %v1780, %v1811
    %1813 = vmatmul.f32.gmra.mxu0 %v1786
    %v1814 = vpop.f32.mrf.mxu0
    %v1815 = vadd.f32 %v1780, %v1814
    %1816 = vmatmul.f32.gmra.mxu0 %v1789
    %v1817 = vpop.f32.mrf.mxu0
    %v1818 = vadd.f32 %v1780, %v1817
    %1819 = vmatmul.f32.gmra.mxu0 %v1792
    %v1820 = vpop.f32.mrf.mxu0
    %v1821 = vadd.f32 %v1780, %v1820
    %1822 = vdwg.mxu0
    %v1823 = vmax.f32 %v1812, 0.0
    %v1824 = vmax.f32 %v1815, 0.0
    %v1825 = vmax.f32 %v1818, 0.0
    %v1826 = vmax.f32 %v1821, 0.0
    %s1827 = scalar_lea.vmem [#allocation7], 96
    %v1828 = vld [vmem:[%s1827] sm:$0xff]
    %v1829 = vld [vmem:[%s1827 + $0x8] sm:$0xff]
    %v1830 = vld [vmem:[%s1827 + $0x10] sm:$0xff]
    %v1831 = vld [vmem:[%s1827 + $0x18] sm:$0xff]
    %s1832 = scalar_lea.vmem %s7, 3
    %v1833 = vld [vmem:[%s1832] sm:$0x1]
    %v1835 = vperm.slane %v1833, 0
    %v1838 = vsel %vm315, %v1768, 0
    %v1841 = vsel %vm315, %v1769, 0
    %v1844 = vsel %vm315, %v1770, 0
    %v1847 = vsel %vm315, %v1771, 0
    %1849 = vmatpush.msra.mxu0 0.0
    %1850 = vmatpush.msra.mxu0 0.0
    %1851 = vmatpush.msra.mxu0 0.0
    %1852 = vmatpush.msra.mxu0 0.0
    %1853 = vmatpush.msra.mxu0 0.0
    %1854 = vmatpush.msra.mxu0 0.0
    %1855 = vmatpush.msra.mxu0 0.0
    %1856 = vmatpush.msra.mxu0 0.0
    %1857 = vmatpush.msra.mxu0 0.0
    %1858 = vmatpush.msra.mxu0 0.0
    %1859 = vmatpush.msra.mxu0 0.0
    %1860 = vmatpush.msra.mxu0 0.0
    %1861 = vmatpush.msra.mxu0 %v1831
    %1862 = vmatpush.msra.mxu0 %v1830
    %1863 = vmatpush.msra.mxu0 %v1829
    %1864 = vmatpush.msra.mxu0 %v1828
    %1865 = vmatmul.f32.gmra.mxu0 %v1838
    %v1866 = vpop.f32.mrf.mxu0
    %v1867 = vadd.f32 %v1835, %v1866
    %1868 = vmatmul.f32.gmra.mxu0 %v1841
    %v1869 = vpop.f32.mrf.mxu0
    %v1870 = vadd.f32 %v1835, %v1869
    %1871 = vmatmul.f32.gmra.mxu0 %v1844
    %v1872 = vpop.f32.mrf.mxu0
    %v1873 = vadd.f32 %v1835, %v1872
    %1874 = vmatmul.f32.gmra.mxu0 %v1847
    %v1875 = vpop.f32.mrf.mxu0
    %v1876 = vadd.f32 %v1835, %v1875
    %1877 = vdwg.mxu0
    %v1878 = vmax.f32 %v1867, 0.0
    %v1879 = vmax.f32 %v1870, 0.0
    %v1880 = vmax.f32 %v1873, 0.0
    %v1881 = vmax.f32 %v1876, 0.0
    %s1882 = scalar_lea.vmem [#allocation9], 96
    %v1883 = vld [vmem:[%s1882] sm:$0xff]
    %v1884 = vld [vmem:[%s1882 + $0x8] sm:$0xff]
    %v1885 = vld [vmem:[%s1882 + $0x10] sm:$0xff]
    %v1886 = vld [vmem:[%s1882 + $0x18] sm:$0xff]
    %s1887 = scalar_lea.vmem %s9, 3
    %v1888 = vld [vmem:[%s1887] sm:$0x1]
    %v1890 = vperm.slane %v1888, 0
    %v1893 = vsel %vm315, %v1823, 0
    %v1896 = vsel %vm315, %v1824, 0
    %v1899 = vsel %vm315, %v1825, 0
    %v1902 = vsel %vm315, %v1826, 0
    %1904 = vmatpush.msra.mxu0 0.0
    %1905 = vmatpush.msra.mxu0 0.0
    %1906 = vmatpush.msra.mxu0 0.0
    %1907 = vmatpush.msra.mxu0 0.0
    %1908 = vmatpush.msra.mxu0 0.0
    %1909 = vmatpush.msra.mxu0 0.0
    %1910 = vmatpush.msra.mxu0 0.0
    %1911 = vmatpush.msra.mxu0 0.0
    %1912 = vmatpush.msra.mxu0 0.0
    %1913 = vmatpush.msra.mxu0 0.0
    %1914 = vmatpush.msra.mxu0 0.0
    %1915 = vmatpush.msra.mxu0 0.0
    %1916 = vmatpush.msra.mxu0 %v1886
    %1917 = vmatpush.msra.mxu0 %v1885
    %1918 = vmatpush.msra.mxu0 %v1884
    %1919 = vmatpush.msra.mxu0 %v1883
    %1920 = vmatmul.f32.gmra.mxu0 %v1893
    %v1921 = vpop.f32.mrf.mxu0
    %v1922 = vadd.f32 %v1890, %v1921
    %1923 = vmatmul.f32.gmra.mxu0 %v1896
    %v1924 = vpop.f32.mrf.mxu0
    %v1925 = vadd.f32 %v1890, %v1924
    %1926 = vmatmul.f32.gmra.mxu0 %v1899
    %v1927 = vpop.f32.mrf.mxu0
    %v1928 = vadd.f32 %v1890, %v1927
    %1929 = vmatmul.f32.gmra.mxu0 %v1902
    %v1930 = vpop.f32.mrf.mxu0
    %v1931 = vadd.f32 %v1890, %v1930
    %1932 = vdwg.mxu0
    %v1933 = vmax.f32 %v1922, 0.0
    %v1934 = vmax.f32 %v1925, 0.0
    %v1935 = vmax.f32 %v1928, 0.0
    %v1936 = vmax.f32 %v1931, 0.0
    %s1937 = scalar_lea.vmem [#allocation10], 96
    %v1938 = vld [vmem:[%s1937] sm:$0xff]
    %v1939 = vld [vmem:[%s1937 + $0x8] sm:$0xff]
    %v1940 = vld [vmem:[%s1937 + $0x10] sm:$0xff]
    %v1941 = vld [vmem:[%s1937 + $0x18] sm:$0xff]
    %s1942 = scalar_lea.vmem [#allocation12], 3
    %v1943 = vld [vmem:[%s1942] sm:$0x1]
    %v1945 = vperm.slane %v1943, 0
    %v1948 = vsel %vm315, %v1878, 0
    %v1951 = vsel %vm315, %v1879, 0
    %v1954 = vsel %vm315, %v1880, 0
    %v1957 = vsel %vm315, %v1881, 0
    %1959 = vmatpush.msra.mxu0 0.0
    %1960 = vmatpush.msra.mxu0 0.0
    %1961 = vmatpush.msra.mxu0 0.0
    %1962 = vmatpush.msra.mxu0 0.0
    %1963 = vmatpush.msra.mxu0 0.0
    %1964 = vmatpush.msra.mxu0 0.0
    %1965 = vmatpush.msra.mxu0 0.0
    %1966 = vmatpush.msra.mxu0 0.0
    %1967 = vmatpush.msra.mxu0 0.0
    %1968 = vmatpush.msra.mxu0 0.0
    %1969 = vmatpush.msra.mxu0 0.0
    %1970 = vmatpush.msra.mxu0 0.0
    %1971 = vmatpush.msra.mxu0 %v1941
    %1972 = vmatpush.msra.mxu0 %v1940
    %1973 = vmatpush.msra.mxu0 %v1939
    %1974 = vmatpush.msra.mxu0 %v1938
    %1975 = vmatmul.f32.gmra.mxu0 %v1948
    %v1976 = vpop.f32.mrf.mxu0
    %v1977 = vadd.f32 %v1945, %v1976
    %1978 = vmatmul.f32.gmra.mxu0 %v1951
    %v1979 = vpop.f32.mrf.mxu0
    %v1980 = vadd.f32 %v1945, %v1979
    %1981 = vmatmul.f32.gmra.mxu0 %v1954
    %v1982 = vpop.f32.mrf.mxu0
    %v1983 = vadd.f32 %v1945, %v1982
    %1984 = vmatmul.f32.gmra.mxu0 %v1957
    %v1985 = vpop.f32.mrf.mxu0
    %v1986 = vadd.f32 %v1945, %v1985
    %1987 = vdwg.mxu0
    %v1988 = vmax.f32 %v1977, 0.0
    %v1989 = vmax.f32 %v1980, 0.0
    %v1990 = vmax.f32 %v1983, 0.0
    %v1991 = vmax.f32 %v1986, 0.0
    %s1992 = scalar_lea.vmem [#allocation13], 96
    %v1993 = vld [vmem:[%s1992] sm:$0xff]
    %v1994 = vld [vmem:[%s1992 + $0x8] sm:$0xff]
    %v1995 = vld [vmem:[%s1992 + $0x10] sm:$0xff]
    %v1996 = vld [vmem:[%s1992 + $0x18] sm:$0xff]
    %s1997 = scalar_lea.vmem [#allocation15], 96
    %v1998 = vld [vmem:[%s1997] sm:$0xff]
    %v1999 = vld [vmem:[%s1997 + $0x8] sm:$0xff]
    %v2000 = vld [vmem:[%s1997 + $0x10] sm:$0xff]
    %v2001 = vld [vmem:[%s1997 + $0x18] sm:$0xff]
    %v2003 = vsel %vm315, %v1988, 0
    %v2006 = vsel %vm315, %v1989, 0
    %v2009 = vsel %vm315, %v1990, 0
    %v2012 = vsel %vm315, %v1991, 0
    %2014 = vmatpush.msra.mxu0 0.0
    %2015 = vmatpush.msra.mxu0 0.0
    %2016 = vmatpush.msra.mxu0 0.0
    %2017 = vmatpush.msra.mxu0 0.0
    %2018 = vmatpush.msra.mxu0 0.0
    %2019 = vmatpush.msra.mxu0 0.0
    %2020 = vmatpush.msra.mxu0 0.0
    %2021 = vmatpush.msra.mxu0 0.0
    %2022 = vmatpush.msra.mxu0 0.0
    %2023 = vmatpush.msra.mxu0 0.0
    %2024 = vmatpush.msra.mxu0 0.0
    %2025 = vmatpush.msra.mxu0 0.0
    %2026 = vmatpush.msra.mxu0 %v2001
    %2027 = vmatpush.msra.mxu0 %v2000
    %2028 = vmatpush.msra.mxu0 %v1999
    %2029 = vmatpush.msra.mxu0 %v1998
    %2030 = vmatmul.f32.gmra.mxu0 %v2003
    %v2031 = vpop.f32.mrf.mxu0
    %v2032 = vadd.f32 0.0, %v2031
    %2033 = vmatmul.f32.gmra.mxu0 %v2006
    %v2034 = vpop.f32.mrf.mxu0
    %v2035 = vadd.f32 0.0, %v2034
    %2036 = vmatmul.f32.gmra.mxu0 %v2009
    %v2037 = vpop.f32.mrf.mxu0
    %v2038 = vadd.f32 0.0, %v2037
    %2039 = vmatmul.f32.gmra.mxu0 %v2012
    %v2040 = vpop.f32.mrf.mxu0
    %v2041 = vadd.f32 0.0, %v2040
    %2042 = vdwg.mxu0
    %v2044 = vsel %vm315, %v1933, 0
    %v2047 = vsel %vm315, %v1934, 0
    %v2050 = vsel %vm315, %v1935, 0
    %v2053 = vsel %vm315, %v1936, 0
    %2055 = vmatpush.msra.mxu0 0.0
    %2056 = vmatpush.msra.mxu0 0.0
    %2057 = vmatpush.msra.mxu0 0.0
    %2058 = vmatpush.msra.mxu0 0.0
    %2059 = vmatpush.msra.mxu0 0.0
    %2060 = vmatpush.msra.mxu0 0.0
    %2061 = vmatpush.msra.mxu0 0.0
    %2062 = vmatpush.msra.mxu0 0.0
    %2063 = vmatpush.msra.mxu0 0.0
    %2064 = vmatpush.msra.mxu0 0.0
    %2065 = vmatpush.msra.mxu0 0.0
    %2066 = vmatpush.msra.mxu0 0.0
    %2067 = vmatpush.msra.mxu0 %v1996
    %2068 = vmatpush.msra.mxu0 %v1995
    %2069 = vmatpush.msra.mxu0 %v1994
    %2070 = vmatpush.msra.mxu0 %v1993
    %2071 = vmatmul.f32.gmra.mxu0 %v2044
    %v2072 = vpop.f32.mrf.mxu0
    %v2073 = vadd.f32 %v2032, %v2072
    %2074 = vmatmul.f32.gmra.mxu0 %v2047
    %v2075 = vpop.f32.mrf.mxu0
    %v2076 = vadd.f32 %v2035, %v2075
    %2077 = vmatmul.f32.gmra.mxu0 %v2050
    %v2078 = vpop.f32.mrf.mxu0
    %v2079 = vadd.f32 %v2038, %v2078
    %2080 = vmatmul.f32.gmra.mxu0 %v2053
    %v2081 = vpop.f32.mrf.mxu0
    %v2082 = vadd.f32 %v2041, %v2081
    %2083 = vdwg.mxu0
    %s2084 = scalar_lea.vmem [#allocation16], 3
    %v2085 = vld [vmem:[%s2084] sm:$0x1]
    %v2087 = vperm.slane %v2085, 0
    %v2089 = vadd.f32 %v2073, %v2087
    %v2090 = vadd.f32 %v2076, %v2087
    %v2091 = vadd.f32 %v2079, %v2087
    %v2092 = vadd.f32 %v2082, %v2087
    %v2093 = vmax.f32 %v2089, 0.0
    %v2094 = vmax.f32 %v2090, 0.0
    %v2095 = vmax.f32 %v2091, 0.0
    %v2096 = vmax.f32 %v2092, 0.0
    %s2097 = scalar_lea.vmem [#allocation18], 96
    %v2098 = vld [vmem:[%s2097] sm:$0xff]
    %v2099 = vld [vmem:[%s2097 + $0x8] sm:$0xff]
    %v2100 = vld [vmem:[%s2097 + $0x10] sm:$0xff]
    %v2101 = vld [vmem:[%s2097 + $0x18] sm:$0xff]
    %s2102 = scalar_lea.vmem [#allocation19], 3
    %v2103 = vld [vmem:[%s2102] sm:$0x1]
    %v2105 = vperm.slane %v2103, 0
    %v2108 = vsel %vm315, %v2093, 0
    %v2111 = vsel %vm315, %v2094, 0
    %v2114 = vsel %vm315, %v2095, 0
    %v2117 = vsel %vm315, %v2096, 0
    %2119 = vmatpush.msra.mxu0 0.0
    %2120 = vmatpush.msra.mxu0 0.0
    %2121 = vmatpush.msra.mxu0 0.0
    %2122 = vmatpush.msra.mxu0 0.0
    %2123 = vmatpush.msra.mxu0 0.0
    %2124 = vmatpush.msra.mxu0 0.0
    %2125 = vmatpush.msra.mxu0 0.0
    %2126 = vmatpush.msra.mxu0 0.0
    %2127 = vmatpush.msra.mxu0 0.0
    %2128 = vmatpush.msra.mxu0 0.0
    %2129 = vmatpush.msra.mxu0 0.0
    %2130 = vmatpush.msra.mxu0 0.0
    %2131 = vmatpush.msra.mxu0 %v2101
    %2132 = vmatpush.msra.mxu0 %v2100
    %2133 = vmatpush.msra.mxu0 %v2099
    %2134 = vmatpush.msra.mxu0 %v2098
    %2135 = vmatmul.f32.gmra.mxu0 %v2108
    %v2136 = vpop.f32.mrf.mxu0
    %v2137 = vadd.f32 %v2105, %v2136
    %2138 = vmatmul.f32.gmra.mxu0 %v2111
    %v2139 = vpop.f32.mrf.mxu0
    %v2140 = vadd.f32 %v2105, %v2139
    %2141 = vmatmul.f32.gmra.mxu0 %v2114
    %v2142 = vpop.f32.mrf.mxu0
    %v2143 = vadd.f32 %v2105, %v2142
    %2144 = vmatmul.f32.gmra.mxu0 %v2117
    %v2145 = vpop.f32.mrf.mxu0
    %v2146 = vadd.f32 %v2105, %v2145
    %2147 = vdwg.mxu0
    %v2148 = vmax.f32 %v2137, 0.0
    %v2149 = vmax.f32 %v2140, 0.0
    %v2150 = vmax.f32 %v2143, 0.0
    %v2151 = vmax.f32 %v2146, 0.0
    %s2152 = sld [smem:[#allocation2 + $0x200]]
    %s2153 = sld [smem:[#allocation2 + $0x201]]
    %v2154 = vstv %s2152
    %v2155 = vmul.f32 %v2154, %v2148
    %v2156 = vmul.f32 %v2154, %v2149
    %v2157 = vmul.f32 %v2154, %v2150
    %v2158 = vmul.f32 %v2154, %v2151
    %2159 = vmatpush.msra.mxu0 0.0
    %2160 = vmatpush.msra.mxu0 0.0
    %2161 = vmatpush.msra.mxu0 0.0
    %2162 = vmatpush.msra.mxu0 0.0
    %2163 = vmatpush.msra.mxu0 0.0
    %2164 = vmatpush.msra.mxu0 0.0
    %2165 = vmatpush.msra.mxu0 0.0
    %2166 = vmatpush.msra.mxu0 0.0
    %2167 = vmatpush.msra.mxu0 0.0
    %2168 = vmatpush.msra.mxu0 0.0
    %2169 = vmatpush.msra.mxu0 0.0
    %2170 = vmatpush.msra.mxu0 0.0
    %2171 = vmatpush.msra.mxu0 %v2151
    %2172 = vmatpush.msra.mxu0 %v2150
    %2173 = vmatpush.msra.mxu0 %v2149
    %2174 = vmatpush.msra.mxu0 %v2148
    %2175 = vmatmul.f32.gmra.mxu0 %v317
    %v2176 = vpop.f32.mrf.mxu0
    %v2177 = vadd.f32 0.0, %v2176
    %2178 = vmatmul.f32.gmra.mxu0 %v320
    %v2179 = vpop.f32.mrf.mxu0
    %v2180 = vadd.f32 0.0, %v2179
    %2181 = vmatmul.f32.gmra.mxu0 %v323
    %v2182 = vpop.f32.mrf.mxu0
    %v2183 = vadd.f32 0.0, %v2182
    %2184 = vmatmul.f32.gmra.mxu0 %v326
    %v2185 = vpop.f32.mrf.mxu0
    %v2186 = vadd.f32 0.0, %v2185
    %2187 = vdwg.mxu0
    %v2188 = vadd.f32 %v2155, %v2177
    %v2189 = vadd.f32 %v2156, %v2180
    %v2190 = vadd.f32 %v2157, %v2183
    %v2191 = vadd.f32 %v2158, %v2186
    %v2192 = vstv %s2153
    %v2193 = vmul.f32 %v2192, %v2148
    %v2194 = vmul.f32 %v2192, %v2149
    %v2195 = vmul.f32 %v2192, %v2150
    %v2196 = vmul.f32 %v2192, %v2151
    %2197 = vmatpush.msra.mxu0 0.0
    %2198 = vmatpush.msra.mxu0 0.0
    %2199 = vmatpush.msra.mxu0 0.0
    %2200 = vmatpush.msra.mxu0 0.0
    %2201 = vmatpush.msra.mxu0 0.0
    %2202 = vmatpush.msra.mxu0 0.0
    %2203 = vmatpush.msra.mxu0 0.0
    %2204 = vmatpush.msra.mxu0 0.0
    %2205 = vmatpush.msra.mxu0 0.0
    %2206 = vmatpush.msra.mxu0 0.0
    %2207 = vmatpush.msra.mxu0 0.0
    %2208 = vmatpush.msra.mxu0 0.0
    %2209 = vmatpush.msra.mxu0 %v2151
    %2210 = vmatpush.msra.mxu0 %v2150
    %2211 = vmatpush.msra.mxu0 %v2149
    %2212 = vmatpush.msra.mxu0 %v2148
    %2213 = vmatmul.f32.gmra.mxu0 %v367
    %v2214 = vpop.f32.mrf.mxu0
    %v2215 = vadd.f32 0.0, %v2214
    %2216 = vmatmul.f32.gmra.mxu0 %v370
    %v2217 = vpop.f32.mrf.mxu0
    %v2218 = vadd.f32 0.0, %v2217
    %2219 = vmatmul.f32.gmra.mxu0 %v373
    %v2220 = vpop.f32.mrf.mxu0
    %v2221 = vadd.f32 0.0, %v2220
    %2222 = vmatmul.f32.gmra.mxu0 %v376
    %v2223 = vpop.f32.mrf.mxu0
    %v2224 = vadd.f32 0.0, %v2223
    %2225 = vdwg.mxu0
    %v2226 = vadd.f32 %v2193, %v2215
    %v2227 = vadd.f32 %v2194, %v2218
    %v2228 = vadd.f32 %v2195, %v2221
    %v2229 = vadd.f32 %v2196, %v2224
    %s2230 = scalar_lea.vmem [#allocation6], 128
    %v2231 = vld [vmem:[%s2230] sm:$0xff]
    %v2232 = vld [vmem:[%s2230 + $0x8] sm:$0xff]
    %v2233 = vld [vmem:[%s2230 + $0x10] sm:$0xff]
    %v2234 = vld [vmem:[%s2230 + $0x18] sm:$0xff]
    %s2235 = scalar_lea.vmem %s5, 4
    %v2236 = vld [vmem:[%s2235] sm:$0x1]
    %v2238 = vperm.slane %v2236, 0
    %v2241 = vsel %vm315, %v2188, 0
    %v2244 = vsel %vm315, %v2189, 0
    %v2247 = vsel %vm315, %v2190, 0
    %v2250 = vsel %vm315, %v2191, 0
    %2252 = vmatpush.msra.mxu0 0.0
    %2253 = vmatpush.msra.mxu0 0.0
    %2254 = vmatpush.msra.mxu0 0.0
    %2255 = vmatpush.msra.mxu0 0.0
    %2256 = vmatpush.msra.mxu0 0.0
    %2257 = vmatpush.msra.mxu0 0.0
    %2258 = vmatpush.msra.mxu0 0.0
    %2259 = vmatpush.msra.mxu0 0.0
    %2260 = vmatpush.msra.mxu0 0.0
    %2261 = vmatpush.msra.mxu0 0.0
    %2262 = vmatpush.msra.mxu0 0.0
    %2263 = vmatpush.msra.mxu0 0.0
    %2264 = vmatpush.msra.mxu0 %v2234
    %2265 = vmatpush.msra.mxu0 %v2233
    %2266 = vmatpush.msra.mxu0 %v2232
    %2267 = vmatpush.msra.mxu0 %v2231
    %2268 = vmatmul.f32.gmra.mxu0 %v2241
    %v2269 = vpop.f32.mrf.mxu0
    %v2270 = vadd.f32 %v2238, %v2269
    %2271 = vmatmul.f32.gmra.mxu0 %v2244
    %v2272 = vpop.f32.mrf.mxu0
    %v2273 = vadd.f32 %v2238, %v2272
    %2274 = vmatmul.f32.gmra.mxu0 %v2247
    %v2275 = vpop.f32.mrf.mxu0
    %v2276 = vadd.f32 %v2238, %v2275
    %2277 = vmatmul.f32.gmra.mxu0 %v2250
    %v2278 = vpop.f32.mrf.mxu0
    %v2279 = vadd.f32 %v2238, %v2278
    %2280 = vdwg.mxu0
    %v2281 = vmax.f32 %v2270, 0.0
    %v2282 = vmax.f32 %v2273, 0.0
    %v2283 = vmax.f32 %v2276, 0.0
    %v2284 = vmax.f32 %v2279, 0.0
    %s2285 = scalar_lea.vmem [#allocation7], 128
    %v2286 = vld [vmem:[%s2285] sm:$0xff]
    %v2287 = vld [vmem:[%s2285 + $0x8] sm:$0xff]
    %v2288 = vld [vmem:[%s2285 + $0x10] sm:$0xff]
    %v2289 = vld [vmem:[%s2285 + $0x18] sm:$0xff]
    %s2290 = scalar_lea.vmem %s7, 4
    %v2291 = vld [vmem:[%s2290] sm:$0x1]
    %v2293 = vperm.slane %v2291, 0
    %v2296 = vsel %vm315, %v2226, 0
    %v2299 = vsel %vm315, %v2227, 0
    %v2302 = vsel %vm315, %v2228, 0
    %v2305 = vsel %vm315, %v2229, 0
    %2307 = vmatpush.msra.mxu0 0.0
    %2308 = vmatpush.msra.mxu0 0.0
    %2309 = vmatpush.msra.mxu0 0.0
    %2310 = vmatpush.msra.mxu0 0.0
    %2311 = vmatpush.msra.mxu0 0.0
    %2312 = vmatpush.msra.mxu0 0.0
    %2313 = vmatpush.msra.mxu0 0.0
    %2314 = vmatpush.msra.mxu0 0.0
    %2315 = vmatpush.msra.mxu0 0.0
    %2316 = vmatpush.msra.mxu0 0.0
    %2317 = vmatpush.msra.mxu0 0.0
    %2318 = vmatpush.msra.mxu0 0.0
    %2319 = vmatpush.msra.mxu0 %v2289
    %2320 = vmatpush.msra.mxu0 %v2288
    %2321 = vmatpush.msra.mxu0 %v2287
    %2322 = vmatpush.msra.mxu0 %v2286
    %2323 = vmatmul.f32.gmra.mxu0 %v2296
    %v2324 = vpop.f32.mrf.mxu0
    %v2325 = vadd.f32 %v2293, %v2324
    %2326 = vmatmul.f32.gmra.mxu0 %v2299
    %v2327 = vpop.f32.mrf.mxu0
    %v2328 = vadd.f32 %v2293, %v2327
    %2329 = vmatmul.f32.gmra.mxu0 %v2302
    %v2330 = vpop.f32.mrf.mxu0
    %v2331 = vadd.f32 %v2293, %v2330
    %2332 = vmatmul.f32.gmra.mxu0 %v2305
    %v2333 = vpop.f32.mrf.mxu0
    %v2334 = vadd.f32 %v2293, %v2333
    %2335 = vdwg.mxu0
    %v2336 = vmax.f32 %v2325, 0.0
    %v2337 = vmax.f32 %v2328, 0.0
    %v2338 = vmax.f32 %v2331, 0.0
    %v2339 = vmax.f32 %v2334, 0.0
    %s2340 = scalar_lea.vmem [#allocation9], 128
    %v2341 = vld [vmem:[%s2340] sm:$0xff]
    %v2342 = vld [vmem:[%s2340 + $0x8] sm:$0xff]
    %v2343 = vld [vmem:[%s2340 + $0x10] sm:$0xff]
    %v2344 = vld [vmem:[%s2340 + $0x18] sm:$0xff]
    %s2345 = scalar_lea.vmem %s9, 4
    %v2346 = vld [vmem:[%s2345] sm:$0x1]
    %v2348 = vperm.slane %v2346, 0
    %v2351 = vsel %vm315, %v2281, 0
    %v2354 = vsel %vm315, %v2282, 0
    %v2357 = vsel %vm315, %v2283, 0
    %v2360 = vsel %vm315, %v2284, 0
    %2362 = vmatpush.msra.mxu0 0.0
    %2363 = vmatpush.msra.mxu0 0.0
    %2364 = vmatpush.msra.mxu0 0.0
    %2365 = vmatpush.msra.mxu0 0.0
    %2366 = vmatpush.msra.mxu0 0.0
    %2367 = vmatpush.msra.mxu0 0.0
    %2368 = vmatpush.msra.mxu0 0.0
    %2369 = vmatpush.msra.mxu0 0.0
    %2370 = vmatpush.msra.mxu0 0.0
    %2371 = vmatpush.msra.mxu0 0.0
    %2372 = vmatpush.msra.mxu0 0.0
    %2373 = vmatpush.msra.mxu0 0.0
    %2374 = vmatpush.msra.mxu0 %v2344
    %2375 = vmatpush.msra.mxu0 %v2343
    %2376 = vmatpush.msra.mxu0 %v2342
    %2377 = vmatpush.msra.mxu0 %v2341
    %2378 = vmatmul.f32.gmra.mxu0 %v2351
    %v2379 = vpop.f32.mrf.mxu0
    %v2380 = vadd.f32 %v2348, %v2379
    %2381 = vmatmul.f32.gmra.mxu0 %v2354
    %v2382 = vpop.f32.mrf.mxu0
    %v2383 = vadd.f32 %v2348, %v2382
    %2384 = vmatmul.f32.gmra.mxu0 %v2357
    %v2385 = vpop.f32.mrf.mxu0
    %v2386 = vadd.f32 %v2348, %v2385
    %2387 = vmatmul.f32.gmra.mxu0 %v2360
    %v2388 = vpop.f32.mrf.mxu0
    %v2389 = vadd.f32 %v2348, %v2388
    %2390 = vdwg.mxu0
    %v2391 = vmax.f32 %v2380, 0.0
    %v2392 = vmax.f32 %v2383, 0.0
    %v2393 = vmax.f32 %v2386, 0.0
    %v2394 = vmax.f32 %v2389, 0.0
    %s2395 = scalar_lea.vmem [#allocation10], 128
    %v2396 = vld [vmem:[%s2395] sm:$0xff]
    %v2397 = vld [vmem:[%s2395 + $0x8] sm:$0xff]
    %v2398 = vld [vmem:[%s2395 + $0x10] sm:$0xff]
    %v2399 = vld [vmem:[%s2395 + $0x18] sm:$0xff]
    %s2400 = scalar_lea.vmem [#allocation12], 4
    %v2401 = vld [vmem:[%s2400] sm:$0x1]
    %v2403 = vperm.slane %v2401, 0
    %v2406 = vsel %vm315, %v2336, 0
    %v2409 = vsel %vm315, %v2337, 0
    %v2412 = vsel %vm315, %v2338, 0
    %v2415 = vsel %vm315, %v2339, 0
    %2417 = vmatpush.msra.mxu0 0.0
    %2418 = vmatpush.msra.mxu0 0.0
    %2419 = vmatpush.msra.mxu0 0.0
    %2420 = vmatpush.msra.mxu0 0.0
    %2421 = vmatpush.msra.mxu0 0.0
    %2422 = vmatpush.msra.mxu0 0.0
    %2423 = vmatpush.msra.mxu0 0.0
    %2424 = vmatpush.msra.mxu0 0.0
    %2425 = vmatpush.msra.mxu0 0.0
    %2426 = vmatpush.msra.mxu0 0.0
    %2427 = vmatpush.msra.mxu0 0.0
    %2428 = vmatpush.msra.mxu0 0.0
    %2429 = vmatpush.msra.mxu0 %v2399
    %2430 = vmatpush.msra.mxu0 %v2398
    %2431 = vmatpush.msra.mxu0 %v2397
    %2432 = vmatpush.msra.mxu0 %v2396
    %2433 = vmatmul.f32.gmra.mxu0 %v2406
    %v2434 = vpop.f32.mrf.mxu0
    %v2435 = vadd.f32 %v2403, %v2434
    %2436 = vmatmul.f32.gmra.mxu0 %v2409
    %v2437 = vpop.f32.mrf.mxu0
    %v2438 = vadd.f32 %v2403, %v2437
    %2439 = vmatmul.f32.gmra.mxu0 %v2412
    %v2440 = vpop.f32.mrf.mxu0
    %v2441 = vadd.f32 %v2403, %v2440
    %2442 = vmatmul.f32.gmra.mxu0 %v2415
    %v2443 = vpop.f32.mrf.mxu0
    %v2444 = vadd.f32 %v2403, %v2443
    %2445 = vdwg.mxu0
    %v2446 = vmax.f32 %v2435, 0.0
    %v2447 = vmax.f32 %v2438, 0.0
    %v2448 = vmax.f32 %v2441, 0.0
    %v2449 = vmax.f32 %v2444, 0.0
    %s2450 = scalar_lea.vmem [#allocation13], 128
    %v2451 = vld [vmem:[%s2450] sm:$0xff]
    %v2452 = vld [vmem:[%s2450 + $0x8] sm:$0xff]
    %v2453 = vld [vmem:[%s2450 + $0x10] sm:$0xff]
    %v2454 = vld [vmem:[%s2450 + $0x18] sm:$0xff]
    %s2455 = scalar_lea.vmem [#allocation15], 128
    %v2456 = vld [vmem:[%s2455] sm:$0xff]
    %v2457 = vld [vmem:[%s2455 + $0x8] sm:$0xff]
    %v2458 = vld [vmem:[%s2455 + $0x10] sm:$0xff]
    %v2459 = vld [vmem:[%s2455 + $0x18] sm:$0xff]
    %v2461 = vsel %vm315, %v2446, 0
    %v2464 = vsel %vm315, %v2447, 0
    %v2467 = vsel %vm315, %v2448, 0
    %v2470 = vsel %vm315, %v2449, 0
    %2472 = vmatpush.msra.mxu0 0.0
    %2473 = vmatpush.msra.mxu0 0.0
    %2474 = vmatpush.msra.mxu0 0.0
    %2475 = vmatpush.msra.mxu0 0.0
    %2476 = vmatpush.msra.mxu0 0.0
    %2477 = vmatpush.msra.mxu0 0.0
    %2478 = vmatpush.msra.mxu0 0.0
    %2479 = vmatpush.msra.mxu0 0.0
    %2480 = vmatpush.msra.mxu0 0.0
    %2481 = vmatpush.msra.mxu0 0.0
    %2482 = vmatpush.msra.mxu0 0.0
    %2483 = vmatpush.msra.mxu0 0.0
    %2484 = vmatpush.msra.mxu0 %v2459
    %2485 = vmatpush.msra.mxu0 %v2458
    %2486 = vmatpush.msra.mxu0 %v2457
    %2487 = vmatpush.msra.mxu0 %v2456
    %2488 = vmatmul.f32.gmra.mxu0 %v2461
    %v2489 = vpop.f32.mrf.mxu0
    %v2490 = vadd.f32 0.0, %v2489
    %2491 = vmatmul.f32.gmra.mxu0 %v2464
    %v2492 = vpop.f32.mrf.mxu0
    %v2493 = vadd.f32 0.0, %v2492
    %2494 = vmatmul.f32.gmra.mxu0 %v2467
    %v2495 = vpop.f32.mrf.mxu0
    %v2496 = vadd.f32 0.0, %v2495
    %2497 = vmatmul.f32.gmra.mxu0 %v2470
    %v2498 = vpop.f32.mrf.mxu0
    %v2499 = vadd.f32 0.0, %v2498
    %2500 = vdwg.mxu0
    %v2502 = vsel %vm315, %v2391, 0
    %v2505 = vsel %vm315, %v2392, 0
    %v2508 = vsel %vm315, %v2393, 0
    %v2511 = vsel %vm315, %v2394, 0
    %2513 = vmatpush.msra.mxu0 0.0
    %2514 = vmatpush.msra.mxu0 0.0
    %2515 = vmatpush.msra.mxu0 0.0
    %2516 = vmatpush.msra.mxu0 0.0
    %2517 = vmatpush.msra.mxu0 0.0
    %2518 = vmatpush.msra.mxu0 0.0
    %2519 = vmatpush.msra.mxu0 0.0
    %2520 = vmatpush.msra.mxu0 0.0
    %2521 = vmatpush.msra.mxu0 0.0
    %2522 = vmatpush.msra.mxu0 0.0
    %2523 = vmatpush.msra.mxu0 0.0
    %2524 = vmatpush.msra.mxu0 0.0
    %2525 = vmatpush.msra.mxu0 %v2454
    %2526 = vmatpush.msra.mxu0 %v2453
    %2527 = vmatpush.msra.mxu0 %v2452
    %2528 = vmatpush.msra.mxu0 %v2451
    %2529 = vmatmul.f32.gmra.mxu0 %v2502
    %v2530 = vpop.f32.mrf.mxu0
    %v2531 = vadd.f32 %v2490, %v2530
    %2532 = vmatmul.f32.gmra.mxu0 %v2505
    %v2533 = vpop.f32.mrf.mxu0
    %v2534 = vadd.f32 %v2493, %v2533
    %2535 = vmatmul.f32.gmra.mxu0 %v2508
    %v2536 = vpop.f32.mrf.mxu0
    %v2537 = vadd.f32 %v2496, %v2536
    %2538 = vmatmul.f32.gmra.mxu0 %v2511
    %v2539 = vpop.f32.mrf.mxu0
    %v2540 = vadd.f32 %v2499, %v2539
    %2541 = vdwg.mxu0
    %s2542 = scalar_lea.vmem [#allocation16], 4
    %v2543 = vld [vmem:[%s2542] sm:$0x1]
    %v2545 = vperm.slane %v2543, 0
    %v2547 = vadd.f32 %v2531, %v2545
    %v2548 = vadd.f32 %v2534, %v2545
    %v2549 = vadd.f32 %v2537, %v2545
    %v2550 = vadd.f32 %v2540, %v2545
    %v2551 = vmax.f32 %v2547, 0.0
    %v2552 = vmax.f32 %v2548, 0.0
    %v2553 = vmax.f32 %v2549, 0.0
    %v2554 = vmax.f32 %v2550, 0.0
    %s2555 = scalar_lea.vmem [#allocation18], 128
    %v2556 = vld [vmem:[%s2555] sm:$0xff]
    %v2557 = vld [vmem:[%s2555 + $0x8] sm:$0xff]
    %v2558 = vld [vmem:[%s2555 + $0x10] sm:$0xff]
    %v2559 = vld [vmem:[%s2555 + $0x18] sm:$0xff]
    %s2560 = scalar_lea.vmem [#allocation19], 4
    %v2561 = vld [vmem:[%s2560] sm:$0x1]
    %v2563 = vperm.slane %v2561, 0
    %v2566 = vsel %vm315, %v2551, 0
    %v2569 = vsel %vm315, %v2552, 0
    %v2572 = vsel %vm315, %v2553, 0
    %v2575 = vsel %vm315, %v2554, 0
    %2577 = vmatpush.msra.mxu0 0.0
    %2578 = vmatpush.msra.mxu0 0.0
    %2579 = vmatpush.msra.mxu0 0.0
    %2580 = vmatpush.msra.mxu0 0.0
    %2581 = vmatpush.msra.mxu0 0.0
    %2582 = vmatpush.msra.mxu0 0.0
    %2583 = vmatpush.msra.mxu0 0.0
    %2584 = vmatpush.msra.mxu0 0.0
    %2585 = vmatpush.msra.mxu0 0.0
    %2586 = vmatpush.msra.mxu0 0.0
    %2587 = vmatpush.msra.mxu0 0.0
    %2588 = vmatpush.msra.mxu0 0.0
    %2589 = vmatpush.msra.mxu0 %v2559
    %2590 = vmatpush.msra.mxu0 %v2558
    %2591 = vmatpush.msra.mxu0 %v2557
    %2592 = vmatpush.msra.mxu0 %v2556
    %2593 = vmatmul.f32.gmra.mxu0 %v2566
    %v2594 = vpop.f32.mrf.mxu0
    %v2595 = vadd.f32 %v2563, %v2594
    %2596 = vmatmul.f32.gmra.mxu0 %v2569
    %v2597 = vpop.f32.mrf.mxu0
    %v2598 = vadd.f32 %v2563, %v2597
    %2599 = vmatmul.f32.gmra.mxu0 %v2572
    %v2600 = vpop.f32.mrf.mxu0
    %v2601 = vadd.f32 %v2563, %v2600
    %2602 = vmatmul.f32.gmra.mxu0 %v2575
    %v2603 = vpop.f32.mrf.mxu0
    %v2604 = vadd.f32 %v2563, %v2603
    %2605 = vdwg.mxu0
    %v2606 = vmax.f32 %v2595, 0.0
    %v2607 = vmax.f32 %v2598, 0.0
    %v2608 = vmax.f32 %v2601, 0.0
    %v2609 = vmax.f32 %v2604, 0.0
    %s2610 = sld [smem:[#allocation2 + $0x280]]
    %s2611 = sld [smem:[#allocation2 + $0x281]]
    %v2612 = vstv %s2610
    %v2613 = vmul.f32 %v2612, %v2606
    %v2614 = vmul.f32 %v2612, %v2607
    %v2615 = vmul.f32 %v2612, %v2608
    %v2616 = vmul.f32 %v2612, %v2609
    %2617 = vmatpush.msra.mxu0 0.0
    %2618 = vmatpush.msra.mxu0 0.0
    %2619 = vmatpush.msra.mxu0 0.0
    %2620 = vmatpush.msra.mxu0 0.0
    %2621 = vmatpush.msra.mxu0 0.0
    %2622 = vmatpush.msra.mxu0 0.0
    %2623 = vmatpush.msra.mxu0 0.0
    %2624 = vmatpush.msra.mxu0 0.0
    %2625 = vmatpush.msra.mxu0 0.0
    %2626 = vmatpush.msra.mxu0 0.0
    %2627 = vmatpush.msra.mxu0 0.0
    %2628 = vmatpush.msra.mxu0 0.0
    %2629 = vmatpush.msra.mxu0 %v2609
    %2630 = vmatpush.msra.mxu0 %v2608
    %2631 = vmatpush.msra.mxu0 %v2607
    %2632 = vmatpush.msra.mxu0 %v2606
    %2633 = vmatmul.f32.gmra.mxu0 %v317
    %v2634 = vpop.f32.mrf.mxu0
    %v2635 = vadd.f32 0.0, %v2634
    %2636 = vmatmul.f32.gmra.mxu0 %v320
    %v2637 = vpop.f32.mrf.mxu0
    %v2638 = vadd.f32 0.0, %v2637
    %2639 = vmatmul.f32.gmra.mxu0 %v323
    %v2640 = vpop.f32.mrf.mxu0
    %v2641 = vadd.f32 0.0, %v2640
    %2642 = vmatmul.f32.gmra.mxu0 %v326
    %v2643 = vpop.f32.mrf.mxu0
    %v2644 = vadd.f32 0.0, %v2643
    %2645 = vdwg.mxu0
    %v2646 = vadd.f32 %v2613, %v2635
    %v2647 = vadd.f32 %v2614, %v2638
    %v2648 = vadd.f32 %v2615, %v2641
    %v2649 = vadd.f32 %v2616, %v2644
    %v2650 = vstv %s2611
    %v2651 = vmul.f32 %v2650, %v2606
    %v2652 = vmul.f32 %v2650, %v2607
    %v2653 = vmul.f32 %v2650, %v2608
    %v2654 = vmul.f32 %v2650, %v2609
    %2655 = vmatpush.msra.mxu0 0.0
    %2656 = vmatpush.msra.mxu0 0.0
    %2657 = vmatpush.msra.mxu0 0.0
    %2658 = vmatpush.msra.mxu0 0.0
    %2659 = vmatpush.msra.mxu0 0.0
    %2660 = vmatpush.msra.mxu0 0.0
    %2661 = vmatpush.msra.mxu0 0.0
    %2662 = vmatpush.msra.mxu0 0.0
    %2663 = vmatpush.msra.mxu0 0.0
    %2664 = vmatpush.msra.mxu0 0.0
    %2665 = vmatpush.msra.mxu0 0.0
    %2666 = vmatpush.msra.mxu0 0.0
    %2667 = vmatpush.msra.mxu0 %v2609
    %2668 = vmatpush.msra.mxu0 %v2608
    %2669 = vmatpush.msra.mxu0 %v2607
    %2670 = vmatpush.msra.mxu0 %v2606
    %2671 = vmatmul.f32.gmra.mxu0 %v367
    %v2672 = vpop.f32.mrf.mxu0
    %v2673 = vadd.f32 0.0, %v2672
    %2674 = vmatmul.f32.gmra.mxu0 %v370
    %v2675 = vpop.f32.mrf.mxu0
    %v2676 = vadd.f32 0.0, %v2675
    %2677 = vmatmul.f32.gmra.mxu0 %v373
    %v2678 = vpop.f32.mrf.mxu0
    %v2679 = vadd.f32 0.0, %v2678
    %2680 = vmatmul.f32.gmra.mxu0 %v376
    %v2681 = vpop.f32.mrf.mxu0
    %v2682 = vadd.f32 0.0, %v2681
    %2683 = vdwg.mxu0
    %v2684 = vadd.f32 %v2651, %v2673
    %v2685 = vadd.f32 %v2652, %v2676
    %v2686 = vadd.f32 %v2653, %v2679
    %v2687 = vadd.f32 %v2654, %v2682
    %s2688 = scalar_lea.vmem [#allocation6], 160
    %v2689 = vld [vmem:[%s2688] sm:$0xff]
    %v2690 = vld [vmem:[%s2688 + $0x8] sm:$0xff]
    %v2691 = vld [vmem:[%s2688 + $0x10] sm:$0xff]
    %v2692 = vld [vmem:[%s2688 + $0x18] sm:$0xff]
    %s2693 = scalar_lea.vmem %s5, 5
    %v2694 = vld [vmem:[%s2693] sm:$0x1]
    %v2696 = vperm.slane %v2694, 0
    %v2699 = vsel %vm315, %v2646, 0
    %v2702 = vsel %vm315, %v2647, 0
    %v2705 = vsel %vm315, %v2648, 0
    %v2708 = vsel %vm315, %v2649, 0
    %2710 = vmatpush.msra.mxu0 0.0
    %2711 = vmatpush.msra.mxu0 0.0
    %2712 = vmatpush.msra.mxu0 0.0
    %2713 = vmatpush.msra.mxu0 0.0
    %2714 = vmatpush.msra.mxu0 0.0
    %2715 = vmatpush.msra.mxu0 0.0
    %2716 = vmatpush.msra.mxu0 0.0
    %2717 = vmatpush.msra.mxu0 0.0
    %2718 = vmatpush.msra.mxu0 0.0
    %2719 = vmatpush.msra.mxu0 0.0
    %2720 = vmatpush.msra.mxu0 0.0
    %2721 = vmatpush.msra.mxu0 0.0
    %2722 = vmatpush.msra.mxu0 %v2692
    %2723 = vmatpush.msra.mxu0 %v2691
    %2724 = vmatpush.msra.mxu0 %v2690
    %2725 = vmatpush.msra.mxu0 %v2689
    %2726 = vmatmul.f32.gmra.mxu0 %v2699
    %v2727 = vpop.f32.mrf.mxu0
    %v2728 = vadd.f32 %v2696, %v2727
    %2729 = vmatmul.f32.gmra.mxu0 %v2702
    %v2730 = vpop.f32.mrf.mxu0
    %v2731 = vadd.f32 %v2696, %v2730
    %2732 = vmatmul.f32.gmra.mxu0 %v2705
    %v2733 = vpop.f32.mrf.mxu0
    %v2734 = vadd.f32 %v2696, %v2733
    %2735 = vmatmul.f32.gmra.mxu0 %v2708
    %v2736 = vpop.f32.mrf.mxu0
    %v2737 = vadd.f32 %v2696, %v2736
    %2738 = vdwg.mxu0
    %v2739 = vmax.f32 %v2728, 0.0
    %v2740 = vmax.f32 %v2731, 0.0
    %v2741 = vmax.f32 %v2734, 0.0
    %v2742 = vmax.f32 %v2737, 0.0
    %s2743 = scalar_lea.vmem [#allocation7], 160
    %v2744 = vld [vmem:[%s2743] sm:$0xff]
    %v2745 = vld [vmem:[%s2743 + $0x8] sm:$0xff]
    %v2746 = vld [vmem:[%s2743 + $0x10] sm:$0xff]
    %v2747 = vld [vmem:[%s2743 + $0x18] sm:$0xff]
    %s2748 = scalar_lea.vmem %s7, 5
    %v2749 = vld [vmem:[%s2748] sm:$0x1]
    %v2751 = vperm.slane %v2749, 0
    %v2754 = vsel %vm315, %v2684, 0
    %v2757 = vsel %vm315, %v2685, 0
    %v2760 = vsel %vm315, %v2686, 0
    %v2763 = vsel %vm315, %v2687, 0
    %2765 = vmatpush.msra.mxu0 0.0
    %2766 = vmatpush.msra.mxu0 0.0
    %2767 = vmatpush.msra.mxu0 0.0
    %2768 = vmatpush.msra.mxu0 0.0
    %2769 = vmatpush.msra.mxu0 0.0
    %2770 = vmatpush.msra.mxu0 0.0
    %2771 = vmatpush.msra.mxu0 0.0
    %2772 = vmatpush.msra.mxu0 0.0
    %2773 = vmatpush.msra.mxu0 0.0
    %2774 = vmatpush.msra.mxu0 0.0
    %2775 = vmatpush.msra.mxu0 0.0
    %2776 = vmatpush.msra.mxu0 0.0
    %2777 = vmatpush.msra.mxu0 %v2747
    %2778 = vmatpush.msra.mxu0 %v2746
    %2779 = vmatpush.msra.mxu0 %v2745
    %2780 = vmatpush.msra.mxu0 %v2744
    %2781 = vmatmul.f32.gmra.mxu0 %v2754
    %v2782 = vpop.f32.mrf.mxu0
    %v2783 = vadd.f32 %v2751, %v2782
    %2784 = vmatmul.f32.gmra.mxu0 %v2757
    %v2785 = vpop.f32.mrf.mxu0
    %v2786 = vadd.f32 %v2751, %v2785
    %2787 = vmatmul.f32.gmra.mxu0 %v2760
    %v2788 = vpop.f32.mrf.mxu0
    %v2789 = vadd.f32 %v2751, %v2788
    %2790 = vmatmul.f32.gmra.mxu0 %v2763
    %v2791 = vpop.f32.mrf.mxu0
    %v2792 = vadd.f32 %v2751, %v2791
    %2793 = vdwg.mxu0
    %v2794 = vmax.f32 %v2783, 0.0
    %v2795 = vmax.f32 %v2786, 0.0
    %v2796 = vmax.f32 %v2789, 0.0
    %v2797 = vmax.f32 %v2792, 0.0
    %s2798 = scalar_lea.vmem [#allocation9], 160
    %v2799 = vld [vmem:[%s2798] sm:$0xff]
    %v2800 = vld [vmem:[%s2798 + $0x8] sm:$0xff]
    %v2801 = vld [vmem:[%s2798 + $0x10] sm:$0xff]
    %v2802 = vld [vmem:[%s2798 + $0x18] sm:$0xff]
    %s2803 = scalar_lea.vmem %s9, 5
    %v2804 = vld [vmem:[%s2803] sm:$0x1]
    %v2806 = vperm.slane %v2804, 0
    %v2809 = vsel %vm315, %v2739, 0
    %v2812 = vsel %vm315, %v2740, 0
    %v2815 = vsel %vm315, %v2741, 0
    %v2818 = vsel %vm315, %v2742, 0
    %2820 = vmatpush.msra.mxu0 0.0
    %2821 = vmatpush.msra.mxu0 0.0
    %2822 = vmatpush.msra.mxu0 0.0
    %2823 = vmatpush.msra.mxu0 0.0
    %2824 = vmatpush.msra.mxu0 0.0
    %2825 = vmatpush.msra.mxu0 0.0
    %2826 = vmatpush.msra.mxu0 0.0
    %2827 = vmatpush.msra.mxu0 0.0
    %2828 = vmatpush.msra.mxu0 0.0
    %2829 = vmatpush.msra.mxu0 0.0
    %2830 = vmatpush.msra.mxu0 0.0
    %2831 = vmatpush.msra.mxu0 0.0
    %2832 = vmatpush.msra.mxu0 %v2802
    %2833 = vmatpush.msra.mxu0 %v2801
    %2834 = vmatpush.msra.mxu0 %v2800
    %2835 = vmatpush.msra.mxu0 %v2799
    %2836 = vmatmul.f32.gmra.mxu0 %v2809
    %v2837 = vpop.f32.mrf.mxu0
    %v2838 = vadd.f32 %v2806, %v2837
    %2839 = vmatmul.f32.gmra.mxu0 %v2812
    %v2840 = vpop.f32.mrf.mxu0
    %v2841 = vadd.f32 %v2806, %v2840
    %2842 = vmatmul.f32.gmra.mxu0 %v2815
    %v2843 = vpop.f32.mrf.mxu0
    %v2844 = vadd.f32 %v2806, %v2843
    %2845 = vmatmul.f32.gmra.mxu0 %v2818
    %v2846 = vpop.f32.mrf.mxu0
    %v2847 = vadd.f32 %v2806, %v2846
    %2848 = vdwg.mxu0
    %v2849 = vmax.f32 %v2838, 0.0
    %v2850 = vmax.f32 %v2841, 0.0
    %v2851 = vmax.f32 %v2844, 0.0
    %v2852 = vmax.f32 %v2847, 0.0
    %s2853 = scalar_lea.vmem [#allocation10], 160
    %v2854 = vld [vmem:[%s2853] sm:$0xff]
    %v2855 = vld [vmem:[%s2853 + $0x8] sm:$0xff]
    %v2856 = vld [vmem:[%s2853 + $0x10] sm:$0xff]
    %v2857 = vld [vmem:[%s2853 + $0x18] sm:$0xff]
    %s2858 = scalar_lea.vmem [#allocation12], 5
    %v2859 = vld [vmem:[%s2858] sm:$0x1]
    %v2861 = vperm.slane %v2859, 0
    %v2864 = vsel %vm315, %v2794, 0
    %v2867 = vsel %vm315, %v2795, 0
    %v2870 = vsel %vm315, %v2796, 0
    %v2873 = vsel %vm315, %v2797, 0
    %2875 = vmatpush.msra.mxu0 0.0
    %2876 = vmatpush.msra.mxu0 0.0
    %2877 = vmatpush.msra.mxu0 0.0
    %2878 = vmatpush.msra.mxu0 0.0
    %2879 = vmatpush.msra.mxu0 0.0
    %2880 = vmatpush.msra.mxu0 0.0
    %2881 = vmatpush.msra.mxu0 0.0
    %2882 = vmatpush.msra.mxu0 0.0
    %2883 = vmatpush.msra.mxu0 0.0
    %2884 = vmatpush.msra.mxu0 0.0
    %2885 = vmatpush.msra.mxu0 0.0
    %2886 = vmatpush.msra.mxu0 0.0
    %2887 = vmatpush.msra.mxu0 %v2857
    %2888 = vmatpush.msra.mxu0 %v2856
    %2889 = vmatpush.msra.mxu0 %v2855
    %2890 = vmatpush.msra.mxu0 %v2854
    %2891 = vmatmul.f32.gmra.mxu0 %v2864
    %v2892 = vpop.f32.mrf.mxu0
    %v2893 = vadd.f32 %v2861, %v2892
    %2894 = vmatmul.f32.gmra.mxu0 %v2867
    %v2895 = vpop.f32.mrf.mxu0
    %v2896 = vadd.f32 %v2861, %v2895
    %2897 = vmatmul.f32.gmra.mxu0 %v2870
    %v2898 = vpop.f32.mrf.mxu0
    %v2899 = vadd.f32 %v2861, %v2898
    %2900 = vmatmul.f32.gmra.mxu0 %v2873
    %v2901 = vpop.f32.mrf.mxu0
    %v2902 = vadd.f32 %v2861, %v2901
    %2903 = vdwg.mxu0
    %v2904 = vmax.f32 %v2893, 0.0
    %v2905 = vmax.f32 %v2896, 0.0
    %v2906 = vmax.f32 %v2899, 0.0
    %v2907 = vmax.f32 %v2902, 0.0
    %s2908 = scalar_lea.vmem [#allocation13], 160
    %v2909 = vld [vmem:[%s2908] sm:$0xff]
    %v2910 = vld [vmem:[%s2908 + $0x8] sm:$0xff]
    %v2911 = vld [vmem:[%s2908 + $0x10] sm:$0xff]
    %v2912 = vld [vmem:[%s2908 + $0x18] sm:$0xff]
    %s2913 = scalar_lea.vmem [#allocation15], 160
    %v2914 = vld [vmem:[%s2913] sm:$0xff]
    %v2915 = vld [vmem:[%s2913 + $0x8] sm:$0xff]
    %v2916 = vld [vmem:[%s2913 + $0x10] sm:$0xff]
    %v2917 = vld [vmem:[%s2913 + $0x18] sm:$0xff]
    %v2919 = vsel %vm315, %v2904, 0
    %v2922 = vsel %vm315, %v2905, 0
    %v2925 = vsel %vm315, %v2906, 0
    %v2928 = vsel %vm315, %v2907, 0
    %2930 = vmatpush.msra.mxu0 0.0
    %2931 = vmatpush.msra.mxu0 0.0
    %2932 = vmatpush.msra.mxu0 0.0
    %2933 = vmatpush.msra.mxu0 0.0
    %2934 = vmatpush.msra.mxu0 0.0
    %2935 = vmatpush.msra.mxu0 0.0
    %2936 = vmatpush.msra.mxu0 0.0
    %2937 = vmatpush.msra.mxu0 0.0
    %2938 = vmatpush.msra.mxu0 0.0
    %2939 = vmatpush.msra.mxu0 0.0
    %2940 = vmatpush.msra.mxu0 0.0
    %2941 = vmatpush.msra.mxu0 0.0
    %2942 = vmatpush.msra.mxu0 %v2917
    %2943 = vmatpush.msra.mxu0 %v2916
    %2944 = vmatpush.msra.mxu0 %v2915
    %2945 = vmatpush.msra.mxu0 %v2914
    %2946 = vmatmul.f32.gmra.mxu0 %v2919
    %v2947 = vpop.f32.mrf.mxu0
    %v2948 = vadd.f32 0.0, %v2947
    %2949 = vmatmul.f32.gmra.mxu0 %v2922
    %v2950 = vpop.f32.mrf.mxu0
    %v2951 = vadd.f32 0.0, %v2950
    %2952 = vmatmul.f32.gmra.mxu0 %v2925
    %v2953 = vpop.f32.mrf.mxu0
    %v2954 = vadd.f32 0.0, %v2953
    %2955 = vmatmul.f32.gmra.mxu0 %v2928
    %v2956 = vpop.f32.mrf.mxu0
    %v2957 = vadd.f32 0.0, %v2956
    %2958 = vdwg.mxu0
    %v2960 = vsel %vm315, %v2849, 0
    %v2963 = vsel %vm315, %v2850, 0
    %v2966 = vsel %vm315, %v2851, 0
    %v2969 = vsel %vm315, %v2852, 0
    %2971 = vmatpush.msra.mxu0 0.0
    %2972 = vmatpush.msra.mxu0 0.0
    %2973 = vmatpush.msra.mxu0 0.0
    %2974 = vmatpush.msra.mxu0 0.0
    %2975 = vmatpush.msra.mxu0 0.0
    %2976 = vmatpush.msra.mxu0 0.0
    %2977 = vmatpush.msra.mxu0 0.0
    %2978 = vmatpush.msra.mxu0 0.0
    %2979 = vmatpush.msra.mxu0 0.0
    %2980 = vmatpush.msra.mxu0 0.0
    %2981 = vmatpush.msra.mxu0 0.0
    %2982 = vmatpush.msra.mxu0 0.0
    %2983 = vmatpush.msra.mxu0 %v2912
    %2984 = vmatpush.msra.mxu0 %v2911
    %2985 = vmatpush.msra.mxu0 %v2910
    %2986 = vmatpush.msra.mxu0 %v2909
    %2987 = vmatmul.f32.gmra.mxu0 %v2960
    %v2988 = vpop.f32.mrf.mxu0
    %v2989 = vadd.f32 %v2948, %v2988
    %2990 = vmatmul.f32.gmra.mxu0 %v2963
    %v2991 = vpop.f32.mrf.mxu0
    %v2992 = vadd.f32 %v2951, %v2991
    %2993 = vmatmul.f32.gmra.mxu0 %v2966
    %v2994 = vpop.f32.mrf.mxu0
    %v2995 = vadd.f32 %v2954, %v2994
    %2996 = vmatmul.f32.gmra.mxu0 %v2969
    %v2997 = vpop.f32.mrf.mxu0
    %v2998 = vadd.f32 %v2957, %v2997
    %2999 = vdwg.mxu0
    %s3000 = scalar_lea.vmem [#allocation16], 5
    %v3001 = vld [vmem:[%s3000] sm:$0x1]
    %v3003 = vperm.slane %v3001, 0
    %v3005 = vadd.f32 %v2989, %v3003
    %v3006 = vadd.f32 %v2992, %v3003
    %v3007 = vadd.f32 %v2995, %v3003
    %v3008 = vadd.f32 %v2998, %v3003
    %v3009 = vmax.f32 %v3005, 0.0
    %v3010 = vmax.f32 %v3006, 0.0
    %v3011 = vmax.f32 %v3007, 0.0
    %v3012 = vmax.f32 %v3008, 0.0
    %s3013 = scalar_lea.vmem [#allocation18], 160
    %v3014 = vld [vmem:[%s3013] sm:$0xff]
    %v3015 = vld [vmem:[%s3013 + $0x8] sm:$0xff]
    %v3016 = vld [vmem:[%s3013 + $0x10] sm:$0xff]
    %v3017 = vld [vmem:[%s3013 + $0x18] sm:$0xff]
    %s3018 = scalar_lea.vmem [#allocation19], 5
    %v3019 = vld [vmem:[%s3018] sm:$0x1]
    %v3021 = vperm.slane %v3019, 0
    %v3024 = vsel %vm315, %v3009, 0
    %v3027 = vsel %vm315, %v3010, 0
    %v3030 = vsel %vm315, %v3011, 0
    %v3033 = vsel %vm315, %v3012, 0
    %3035 = vmatpush.msra.mxu0 0.0
    %3036 = vmatpush.msra.mxu0 0.0
    %3037 = vmatpush.msra.mxu0 0.0
    %3038 = vmatpush.msra.mxu0 0.0
    %3039 = vmatpush.msra.mxu0 0.0
    %3040 = vmatpush.msra.mxu0 0.0
    %3041 = vmatpush.msra.mxu0 0.0
    %3042 = vmatpush.msra.mxu0 0.0
    %3043 = vmatpush.msra.mxu0 0.0
    %3044 = vmatpush.msra.mxu0 0.0
    %3045 = vmatpush.msra.mxu0 0.0
    %3046 = vmatpush.msra.mxu0 0.0
    %3047 = vmatpush.msra.mxu0 %v3017
    %3048 = vmatpush.msra.mxu0 %v3016
    %3049 = vmatpush.msra.mxu0 %v3015
    %3050 = vmatpush.msra.mxu0 %v3014
    %3051 = vmatmul.f32.gmra.mxu0 %v3024
    %v3052 = vpop.f32.mrf.mxu0
    %v3053 = vadd.f32 %v3021, %v3052
    %3054 = vmatmul.f32.gmra.mxu0 %v3027
    %v3055 = vpop.f32.mrf.mxu0
    %v3056 = vadd.f32 %v3021, %v3055
    %3057 = vmatmul.f32.gmra.mxu0 %v3030
    %v3058 = vpop.f32.mrf.mxu0
    %v3059 = vadd.f32 %v3021, %v3058
    %3060 = vmatmul.f32.gmra.mxu0 %v3033
    %v3061 = vpop.f32.mrf.mxu0
    %v3062 = vadd.f32 %v3021, %v3061
    %3063 = vdwg.mxu0
    %v3064 = vmax.f32 %v3053, 0.0
    %v3065 = vmax.f32 %v3056, 0.0
    %v3066 = vmax.f32 %v3059, 0.0
    %v3067 = vmax.f32 %v3062, 0.0
    %v3068 = vlaneseq
    %v3069 = vand.u32 %v3068, 127
    %v3070 = vlaneseq
    %v3071 = vshrl.u32 %v3070, 7
    %v3072 = vmul.u32 %v3071, 16
    %vm3073 = vcmp.ge.s32.totalorder %v3069, %v3072
    %v3074 = vadd.s32 %v3071, 1
    %v3075 = vmul.u32 %v3074, 16
    %vm3076 = vcmp.lt.s32.totalorder %v3069, %v3075
    %vm3077 = vmand %vm3073, %vm3076
    %v3078 = vsel %vm3077, 1, 0
    %v3079 = vcvt.s32.f32 %v3078
    %v3080 = vld [vmem:[#allocation21] sm:$0xff]
    %v3081 = vld [vmem:[#allocation21 + $0x8] sm:$0xff]
    %v3082 = vld [vmem:[#allocation21 + $0x10] sm:$0xff]
    %v3083 = vld [vmem:[#allocation21 + $0x18] sm:$0xff]
    %v3084 = vld [vmem:[#allocation22] sm:$0xff]
    %v3085 = vld [vmem:[#allocation22 + $0x8] sm:$0xff]
    %v3086 = vld [vmem:[#allocation22 + $0x10] sm:$0xff]
    %v3087 = vld [vmem:[#allocation22 + $0x18] sm:$0xff]
    %v3089 = vsel %vm315, 0.0, 0
    %3091 = vmatpush.msra.mxu0 0.0
    %3092 = vmatpush.msra.mxu0 0.0
    %3093 = vmatpush.msra.mxu0 0.0
    %3094 = vmatpush.msra.mxu0 0.0
    %3095 = vmatpush.msra.mxu0 0.0
    %3096 = vmatpush.msra.mxu0 0.0
    %3097 = vmatpush.msra.mxu0 0.0
    %3098 = vmatpush.msra.mxu0 0.0
    %3099 = vmatpush.msra.mxu0 0.0
    %3100 = vmatpush.msra.mxu0 0.0
    %3101 = vmatpush.msra.mxu0 0.0
    %3102 = vmatpush.msra.mxu0 0.0
    %3103 = vmatpush.msra.mxu0 %v3087
    %3104 = vmatpush.msra.mxu0 %v3086
    %3105 = vmatpush.msra.mxu0 %v3085
    %3106 = vmatpush.msra.mxu0 %v3084
    %3107 = vmatmul.f32.gmra.mxu0 %v3089
    %v3108 = vpop.f32.mrf.mxu0
    %v3109 = vadd.f32 0.0, %v3108
    %3110 = vdwg.mxu0
    %3111 = vmatpush.msra.mxu0 0.0
    %3112 = vmatpush.msra.mxu0 0.0
    %3113 = vmatpush.msra.mxu0 0.0
    %3114 = vmatpush.msra.mxu0 0.0
    %3115 = vmatpush.msra.mxu0 0.0
    %3116 = vmatpush.msra.mxu0 0.0
    %3117 = vmatpush.msra.mxu0 0.0
    %3118 = vmatpush.msra.mxu0 0.0
    %3119 = vmatpush.msra.mxu0 0.0
    %3120 = vmatpush.msra.mxu0 0.0
    %3121 = vmatpush.msra.mxu0 0.0
    %3122 = vmatpush.msra.mxu0 0.0
    %3123 = vmatpush.msra.mxu0 %v3083
    %3124 = vmatpush.msra.mxu0 %v3082
    %3125 = vmatpush.msra.mxu0 %v3081
    %3126 = vmatpush.msra.mxu0 %v3080
    %3127 = vmatmul.f32.gmra.mxu0 %v3089
    %v3128 = vpop.f32.mrf.mxu0
    %v3129 = vadd.f32 %v3109, %v3128
    %3130 = vdwg.mxu0
    %v3131 = vld [vmem:[#allocation24] sm:$0x1]
    %v3133 = vperm.slane %v3131, 0
    %v3135 = vadd.f32 %v3129, %v3133
    %s3136 = scalar_lea.vmem [#allocation21], 32
    %v3137 = vld [vmem:[%s3136] sm:$0xff]
    %v3138 = vld [vmem:[%s3136 + $0x8] sm:$0xff]
    %v3139 = vld [vmem:[%s3136 + $0x10] sm:$0xff]
    %v3140 = vld [vmem:[%s3136 + $0x18] sm:$0xff]
    %s3141 = scalar_lea.vmem [#allocation22], 32
    %v3142 = vld [vmem:[%s3141] sm:$0xff]
    %v3143 = vld [vmem:[%s3141 + $0x8] sm:$0xff]
    %v3144 = vld [vmem:[%s3141 + $0x10] sm:$0xff]
    %v3145 = vld [vmem:[%s3141 + $0x18] sm:$0xff]
    %3146 = vmatpush.msra.mxu0 0.0
    %3147 = vmatpush.msra.mxu0 0.0
    %3148 = vmatpush.msra.mxu0 0.0
    %3149 = vmatpush.msra.mxu0 0.0
    %3150 = vmatpush.msra.mxu0 0.0
    %3151 = vmatpush.msra.mxu0 0.0
    %3152 = vmatpush.msra.mxu0 0.0
    %3153 = vmatpush.msra.mxu0 0.0
    %3154 = vmatpush.msra.mxu0 0.0
    %3155 = vmatpush.msra.mxu0 0.0
    %3156 = vmatpush.msra.mxu0 0.0
    %3157 = vmatpush.msra.mxu0 0.0
    %3158 = vmatpush.msra.mxu0 %v3145
    %3159 = vmatpush.msra.mxu0 %v3144
    %3160 = vmatpush.msra.mxu0 %v3143
    %3161 = vmatpush.msra.mxu0 %v3142
    %3162 = vmatmul.f32.gmra.mxu0 %v3089
    %v3163 = vpop.f32.mrf.mxu0
    %v3164 = vadd.f32 0.0, %v3163
    %3165 = vdwg.mxu0
    %3166 = vmatpush.msra.mxu0 0.0
    %3167 = vmatpush.msra.mxu0 0.0
    %3168 = vmatpush.msra.mxu0 0.0
    %3169 = vmatpush.msra.mxu0 0.0
    %3170 = vmatpush.msra.mxu0 0.0
    %3171 = vmatpush.msra.mxu0 0.0
    %3172 = vmatpush.msra.mxu0 0.0
    %3173 = vmatpush.msra.mxu0 0.0
    %3174 = vmatpush.msra.mxu0 0.0
    %3175 = vmatpush.msra.mxu0 0.0
    %3176 = vmatpush.msra.mxu0 0.0
    %3177 = vmatpush.msra.mxu0 0.0
    %3178 = vmatpush.msra.mxu0 %v3140
    %3179 = vmatpush.msra.mxu0 %v3139
    %3180 = vmatpush.msra.mxu0 %v3138
    %3181 = vmatpush.msra.mxu0 %v3137
    %3182 = vmatmul.f32.gmra.mxu0 %v3089
    %v3183 = vpop.f32.mrf.mxu0
    %v3184 = vadd.f32 %v3164, %v3183
    %3185 = vdwg.mxu0
    %s3186 = scalar_lea.vmem [#allocation24], 1
    %v3187 = vld [vmem:[%s3186] sm:$0x1]
    %v3189 = vperm.slane %v3187, 0
    %v3191 = vadd.f32 %v3184, %v3189
    %s3192 = scalar_lea.vmem [#allocation21], 64
    %v3193 = vld [vmem:[%s3192] sm:$0xff]
    %v3194 = vld [vmem:[%s3192 + $0x8] sm:$0xff]
    %v3195 = vld [vmem:[%s3192 + $0x10] sm:$0xff]
    %v3196 = vld [vmem:[%s3192 + $0x18] sm:$0xff]
    %s3197 = scalar_lea.vmem [#allocation22], 64
    %v3198 = vld [vmem:[%s3197] sm:$0xff]
    %v3199 = vld [vmem:[%s3197 + $0x8] sm:$0xff]
    %v3200 = vld [vmem:[%s3197 + $0x10] sm:$0xff]
    %v3201 = vld [vmem:[%s3197 + $0x18] sm:$0xff]
    %3202 = vmatpush.msra.mxu0 0.0
    %3203 = vmatpush.msra.mxu0 0.0
    %3204 = vmatpush.msra.mxu0 0.0
    %3205 = vmatpush.msra.mxu0 0.0
    %3206 = vmatpush.msra.mxu0 0.0
    %3207 = vmatpush.msra.mxu0 0.0
    %3208 = vmatpush.msra.mxu0 0.0
    %3209 = vmatpush.msra.mxu0 0.0
    %3210 = vmatpush.msra.mxu0 0.0
    %3211 = vmatpush.msra.mxu0 0.0
    %3212 = vmatpush.msra.mxu0 0.0
    %3213 = vmatpush.msra.mxu0 0.0
    %3214 = vmatpush.msra.mxu0 %v3201
    %3215 = vmatpush.msra.mxu0 %v3200
    %3216 = vmatpush.msra.mxu0 %v3199
    %3217 = vmatpush.msra.mxu0 %v3198
    %3218 = vmatmul.f32.gmra.mxu0 %v3089
    %v3219 = vpop.f32.mrf.mxu0
    %v3220 = vadd.f32 0.0, %v3219
    %3221 = vdwg.mxu0
    %3222 = vmatpush.msra.mxu0 0.0
    %3223 = vmatpush.msra.mxu0 0.0
    %3224 = vmatpush.msra.mxu0 0.0
    %3225 = vmatpush.msra.mxu0 0.0
    %3226 = vmatpush.msra.mxu0 0.0
    %3227 = vmatpush.msra.mxu0 0.0
    %3228 = vmatpush.msra.mxu0 0.0
    %3229 = vmatpush.msra.mxu0 0.0
    %3230 = vmatpush.msra.mxu0 0.0
    %3231 = vmatpush.msra.mxu0 0.0
    %3232 = vmatpush.msra.mxu0 0.0
    %3233 = vmatpush.msra.mxu0 0.0
    %3234 = vmatpush.msra.mxu0 %v3196
    %3235 = vmatpush.msra.mxu0 %v3195
    %3236 = vmatpush.msra.mxu0 %v3194
    %3237 = vmatpush.msra.mxu0 %v3193
    %3238 = vmatmul.f32.gmra.mxu0 %v3089
    %v3239 = vpop.f32.mrf.mxu0
    %v3240 = vadd.f32 %v3220, %v3239
    %3241 = vdwg.mxu0
    %s3242 = scalar_lea.vmem [#allocation24], 2
    %v3243 = vld [vmem:[%s3242] sm:$0x1]
    %v3245 = vperm.slane %v3243, 0
    %v3247 = vadd.f32 %v3240, %v3245
    %s3248 = scalar_lea.vmem [#allocation21], 96
    %v3249 = vld [vmem:[%s3248] sm:$0xff]
    %v3250 = vld [vmem:[%s3248 + $0x8] sm:$0xff]
    %v3251 = vld [vmem:[%s3248 + $0x10] sm:$0xff]
    %v3252 = vld [vmem:[%s3248 + $0x18] sm:$0xff]
    %s3253 = scalar_lea.vmem [#allocation22], 96
    %v3254 = vld [vmem:[%s3253] sm:$0xff]
    %v3255 = vld [vmem:[%s3253 + $0x8] sm:$0xff]
    %v3256 = vld [vmem:[%s3253 + $0x10] sm:$0xff]
    %v3257 = vld [vmem:[%s3253 + $0x18] sm:$0xff]
    %3258 = vmatpush.msra.mxu0 0.0
    %3259 = vmatpush.msra.mxu0 0.0
    %3260 = vmatpush.msra.mxu0 0.0
    %3261 = vmatpush.msra.mxu0 0.0
    %3262 = vmatpush.msra.mxu0 0.0
    %3263 = vmatpush.msra.mxu0 0.0
    %3264 = vmatpush.msra.mxu0 0.0
    %3265 = vmatpush.msra.mxu0 0.0
    %3266 = vmatpush.msra.mxu0 0.0
    %3267 = vmatpush.msra.mxu0 0.0
    %3268 = vmatpush.msra.mxu0 0.0
    %3269 = vmatpush.msra.mxu0 0.0
    %3270 = vmatpush.msra.mxu0 %v3257
    %3271 = vmatpush.msra.mxu0 %v3256
    %3272 = vmatpush.msra.mxu0 %v3255
    %3273 = vmatpush.msra.mxu0 %v3254
    %3274 = vmatmul.f32.gmra.mxu0 %v3089
    %v3275 = vpop.f32.mrf.mxu0
    %v3276 = vadd.f32 0.0, %v3275
    %3277 = vdwg.mxu0
    %3278 = vmatpush.msra.mxu0 0.0
    %3279 = vmatpush.msra.mxu0 0.0
    %3280 = vmatpush.msra.mxu0 0.0
    %3281 = vmatpush.msra.mxu0 0.0
    %3282 = vmatpush.msra.mxu0 0.0
    %3283 = vmatpush.msra.mxu0 0.0
    %3284 = vmatpush.msra.mxu0 0.0
    %3285 = vmatpush.msra.mxu0 0.0
    %3286 = vmatpush.msra.mxu0 0.0
    %3287 = vmatpush.msra.mxu0 0.0
    %3288 = vmatpush.msra.mxu0 0.0
    %3289 = vmatpush.msra.mxu0 0.0
    %3290 = vmatpush.msra.mxu0 %v3252
    %3291 = vmatpush.msra.mxu0 %v3251
    %3292 = vmatpush.msra.mxu0 %v3250
    %3293 = vmatpush.msra.mxu0 %v3249
    %3294 = vmatmul.f32.gmra.mxu0 %v3089
    %v3295 = vpop.f32.mrf.mxu0
    %v3296 = vadd.f32 %v3276, %v3295
    %3297 = vdwg.mxu0
    %s3298 = scalar_lea.vmem [#allocation24], 3
    %v3299 = vld [vmem:[%s3298] sm:$0x1]
    %v3301 = vperm.slane %v3299, 0
    %v3303 = vadd.f32 %v3296, %v3301
    %v3304 = vsub.f32 0.0, %v3191
    %v3305 = vmul.f32 %v3304, 1.442695
    %v3306 = vpow.pop %v3305
    %v3307 = vadd.f32 %v3306, 1.0
    %v3308 = vrcp.pop %v3307
    %v3309 = vmul.f32 %v3307, %v3308
    %v3310 = vsub.f32 1.0, %v3309
    %v3311 = vmul.f32 %v3308, %v3310
    %v3312 = vadd.f32 %v3308, %v3311
    %vm3313 = vweird.f32 %v3307
    %vm3314 = vweird.f32 %v3308
    %vm3315 = vmor %vm3313, %vm3314
    %v3316 = vsel %vm3315, %v3308, %v3312
    %v3317 = vand.u32 2147483647, %v3307
    %vm3318 = vcmp.eq.f32.partialorder %v3317, 8.507059e+37
    %v3319 = vand.u32 %v3307, 2147483648
    %v3320 = vor.u32 1.1754944e-38, %v3319
    %v3321 = vsel %vm3318, %v3320, %v3316
    %v3322 = vmul.f32 1.0, %v3321
    %v3323 = vmul.f32 %v3322, 0.0
    %v3324 = vsub.f32 0.0, %v3135
    %v3325 = vmul.f32 %v3324, 1.442695
    %v3326 = vpow.pop %v3325
    %v3327 = vadd.f32 %v3326, 1.0
    %v3328 = vrcp.pop %v3327
    %v3329 = vmul.f32 %v3327, %v3328
    %v3330 = vsub.f32 1.0, %v3329
    %v3331 = vmul.f32 %v3328, %v3330
    %v3332 = vadd.f32 %v3328, %v3331
    %vm3333 = vweird.f32 %v3327
    %vm3334 = vweird.f32 %v3328
    %vm3335 = vmor %vm3333, %vm3334
    %v3336 = vsel %vm3335, %v3328, %v3332
    %v3337 = vand.u32 2147483647, %v3327
    %vm3338 = vcmp.eq.f32.partialorder %v3337, 8.507059e+37
    %v3339 = vand.u32 %v3327, 2147483648
    %v3340 = vor.u32 1.1754944e-38, %v3339
    %v3341 = vsel %vm3338, %v3340, %v3336
    %v3342 = vmul.f32 1.0, %v3341
    %v3343 = vmul.f32 %v3247, -2.0
    %v3344 = vmul.f32 %v3343, 1.442695
    %v3345 = vpow.pop %v3344
    %v3346 = vadd.f32 %v3345, 1.0
    %v3347 = vrcp.pop %v3346
    %v3348 = vmul.f32 %v3346, %v3347
    %v3349 = vsub.f32 1.0, %v3348
    %v3350 = vmul.f32 %v3347, %v3349
    %v3351 = vadd.f32 %v3347, %v3350
    %vm3352 = vweird.f32 %v3346
    %vm3353 = vweird.f32 %v3347
    %vm3354 = vmor %vm3352, %vm3353
    %v3355 = vsel %vm3354, %v3347, %v3351
    %v3356 = vand.u32 2147483647, %v3346
    %vm3357 = vcmp.eq.f32.partialorder %v3356, 8.507059e+37
    %v3358 = vand.u32 %v3346, 2147483648
    %v3359 = vor.u32 1.1754944e-38, %v3358
    %v3360 = vsel %vm3357, %v3359, %v3355
    %v3361 = vmul.f32 2.0, %v3360
    %v3362 = vsub.f32 %v3361, 1.0
    %v3363 = vmul.f32 %v3342, %v3362
    %v3364 = vadd.f32 %v3323, %v3363
    %v3365 = vsub.f32 0.0, %v3303
    %v3366 = vmul.f32 %v3365, 1.442695
    %v3367 = vpow.pop %v3366
    %v3368 = vadd.f32 %v3367, 1.0
    %v3369 = vrcp.pop %v3368
    %v3370 = vmul.f32 %v3368, %v3369
    %v3371 = vsub.f32 1.0, %v3370
    %v3372 = vmul.f32 %v3369, %v3371
    %v3373 = vadd.f32 %v3369, %v3372
    %vm3374 = vweird.f32 %v3368
    %vm3375 = vweird.f32 %v3369
    %vm3376 = vmor %vm3374, %vm3375
    %v3377 = vsel %vm3376, %v3369, %v3373
    %v3378 = vand.u32 2147483647, %v3368
    %vm3379 = vcmp.eq.f32.partialorder %v3378, 8.507059e+37
    %v3380 = vand.u32 %v3368, 2147483648
    %v3381 = vor.u32 1.1754944e-38, %v3380
    %v3382 = vsel %vm3379, %v3381, %v3377
    %v3383 = vmul.f32 1.0, %v3382
    %v3384 = vmul.f32 %v3364, -2.0
    %v3385 = vmul.f32 %v3384, 1.442695
    %v3386 = vpow.pop %v3385
    %v3387 = vadd.f32 %v3386, 1.0
    %v3388 = vrcp.pop %v3387
    %v3389 = vmul.f32 %v3387, %v3388
    %v3390 = vsub.f32 1.0, %v3389
    %v3391 = vmul.f32 %v3388, %v3390
    %v3392 = vadd.f32 %v3388, %v3391
    %vm3393 = vweird.f32 %v3387
    %vm3394 = vweird.f32 %v3388
    %vm3395 = vmor %vm3393, %vm3394
    %v3396 = vsel %vm3395, %v3388, %v3392
    %v3397 = vand.u32 2147483647, %v3387
    %vm3398 = vcmp.eq.f32.partialorder %v3397, 8.507059e+37
    %v3399 = vand.u32 %v3387, 2147483648
    %v3400 = vor.u32 1.1754944e-38, %v3399
    %v3401 = vsel %vm3398, %v3400, %v3396
    %v3402 = vmul.f32 2.0, %v3401
    %v3403 = vsub.f32 %v3402, 1.0
    %v3404 = vmul.f32 %v3383, %v3403
    %v3406 = vsel %vm315, %v3404, 0
    %v3409 = vsel %vm315, %v3064, 0
    %v3412 = vsel %vm315, %v3065, 0
    %v3415 = vsel %vm315, %v3066, 0
    %v3418 = vsel %vm315, %v3067, 0
    %3420 = vmatpush.xpose.msra.mxu0 0.0
    %3421 = vmatpush.xpose.msra.mxu0 0.0
    %3422 = vmatpush.xpose.msra.mxu0 0.0
    %3423 = vmatpush.xpose.msra.mxu0 0.0
    %3424 = vmatpush.xpose.msra.mxu0 0.0
    %3425 = vmatpush.xpose.msra.mxu0 0.0
    %3426 = vmatpush.xpose.msra.mxu0 0.0
    %3427 = vmatpush.xpose.msra.mxu0 0.0
    %3428 = vmatpush.xpose.msra.mxu0 0.0
    %3429 = vmatpush.xpose.msra.mxu0 0.0
    %3430 = vmatpush.xpose.msra.mxu0 0.0
    %3431 = vmatpush.xpose.msra.mxu0 0.0
    %3432 = vmatpush.xpose.msra.mxu0 %v3418
    %3433 = vmatpush.xpose.msra.mxu0 %v3415
    %3434 = vmatpush.xpose.msra.mxu0 %v3412
    %3435 = vmatpush.xpose.msra.mxu0 %v3409
    %3436 = vmatmul.f32.gmra.mxu0 %v3406
    %v3437 = vpop.f32.mrf.mxu0
    %v3438 = vadd.f32 0.0, %v3437
    %3439 = vdwg.mxu0
    %v3440 = vsel %vm3077, %v3438, -1e+30
    %vm3441 = vcmask 254976
    %v3442 = vsel %vm3441, %v3440, -inf
    %3443 = vmax.xlane.f32.xlu0 %v3442
    %v3444 = vpop.xlane.xlu0 %3443
    %v3445 = vsub.f32 %v3440, %v3444
    %v3446 = vmul.f32 %v3445, 1.442695
    %v3447 = vpow.pop %v3446
    %v3448 = vmul.f32 %v3447, %v3079
    %v3449 = vsel %vm3441, %v3448, 0.0
    %3450 = vadd.xlane.f32.xlu0 %v3449
    %v3451 = vpop.xlane.xlu0 %3450
    %v3452 = vrcp.pop %v3451
    %v3453 = vmul.f32 %v3448, %v3452
    %v3455 = vsel %vm315, %v3453, 0
    %3457 = vmatpush.msra.mxu0 0.0
    %3458 = vmatpush.msra.mxu0 0.0
    %3459 = vmatpush.msra.mxu0 0.0
    %3460 = vmatpush.msra.mxu0 0.0
    %3461 = vmatpush.msra.mxu0 0.0
    %3462 = vmatpush.msra.mxu0 0.0
    %3463 = vmatpush.msra.mxu0 0.0
    %3464 = vmatpush.msra.mxu0 0.0
    %3465 = vmatpush.msra.mxu0 0.0
    %3466 = vmatpush.msra.mxu0 0.0
    %3467 = vmatpush.msra.mxu0 0.0
    %3468 = vmatpush.msra.mxu0 0.0
    %3469 = vmatpush.msra.mxu0 %v3067
    %3470 = vmatpush.msra.mxu0 %v3066
    %3471 = vmatpush.msra.mxu0 %v3065
    %3472 = vmatpush.msra.mxu0 %v3064
    %3473 = vmatmul.f32.gmra.mxu0 %v3455
    %v3474 = vpop.f32.mrf.mxu0
    %v3475 = vadd.f32 0.0, %v3474
    %3476 = vdwg.mxu0
    %v3478 = vsel %vm315, %v3475, 0
    %3480 = vmatpush.msra.mxu0 0.0
    %3481 = vmatpush.msra.mxu0 0.0
    %3482 = vmatpush.msra.mxu0 0.0
    %3483 = vmatpush.msra.mxu0 0.0
    %3484 = vmatpush.msra.mxu0 0.0
    %3485 = vmatpush.msra.mxu0 0.0
    %3486 = vmatpush.msra.mxu0 0.0
    %3487 = vmatpush.msra.mxu0 0.0
    %3488 = vmatpush.msra.mxu0 0.0
    %3489 = vmatpush.msra.mxu0 0.0
    %3490 = vmatpush.msra.mxu0 0.0
    %3491 = vmatpush.msra.mxu0 0.0
    %3492 = vmatpush.msra.mxu0 %v3087
    %3493 = vmatpush.msra.mxu0 %v3086
    %3494 = vmatpush.msra.mxu0 %v3085
    %3495 = vmatpush.msra.mxu0 %v3084
    %3496 = vmatmul.f32.gmra.mxu0 %v3478
    %v3497 = vpop.f32.mrf.mxu0
    %v3498 = vadd.f32 0.0, %v3497
    %3499 = vdwg.mxu0
    %3500 = vmatpush.msra.mxu0 0.0
    %3501 = vmatpush.msra.mxu0 0.0
    %3502 = vmatpush.msra.mxu0 0.0
    %3503 = vmatpush.msra.mxu0 0.0
    %3504 = vmatpush.msra.mxu0 0.0
    %3505 = vmatpush.msra.mxu0 0.0
    %3506 = vmatpush.msra.mxu0 0.0
    %3507 = vmatpush.msra.mxu0 0.0
    %3508 = vmatpush.msra.mxu0 0.0
    %3509 = vmatpush.msra.mxu0 0.0
    %3510 = vmatpush.msra.mxu0 0.0
    %3511 = vmatpush.msra.mxu0 0.0
    %3512 = vmatpush.msra.mxu0 %v3083
    %3513 = vmatpush.msra.mxu0 %v3082
    %3514 = vmatpush.msra.mxu0 %v3081
    %3515 = vmatpush.msra.mxu0 %v3080
    %3516 = vmatmul.f32.gmra.mxu0 %v3406
    %v3517 = vpop.f32.mrf.mxu0
    %v3518 = vadd.f32 %v3498, %v3517
    %3519 = vdwg.mxu0
    %v3520 = vadd.f32 %v3518, %v3133
    %3521 = vmatpush.msra.mxu0 0.0
    %3522 = vmatpush.msra.mxu0 0.0
    %3523 = vmatpush.msra.mxu0 0.0
    %3524 = vmatpush.msra.mxu0 0.0
    %3525 = vmatpush.msra.mxu0 0.0
    %3526 = vmatpush.msra.mxu0 0.0
    %3527 = vmatpush.msra.mxu0 0.0
    %3528 = vmatpush.msra.mxu0 0.0
    %3529 = vmatpush.msra.mxu0 0.0
    %3530 = vmatpush.msra.mxu0 0.0
    %3531 = vmatpush.msra.mxu0 0.0
    %3532 = vmatpush.msra.mxu0 0.0
    %3533 = vmatpush.msra.mxu0 %v3145
    %3534 = vmatpush.msra.mxu0 %v3144
    %3535 = vmatpush.msra.mxu0 %v3143
    %3536 = vmatpush.msra.mxu0 %v3142
    %3537 = vmatmul.f32.gmra.mxu0 %v3478
    %v3538 = vpop.f32.mrf.mxu0
    %v3539 = vadd.f32 0.0, %v3538
    %3540 = vdwg.mxu0
    %3541 = vmatpush.msra.mxu0 0.0
    %3542 = vmatpush.msra.mxu0 0.0
    %3543 = vmatpush.msra.mxu0 0.0
    %3544 = vmatpush.msra.mxu0 0.0
    %3545 = vmatpush.msra.mxu0 0.0
    %3546 = vmatpush.msra.mxu0 0.0
    %3547 = vmatpush.msra.mxu0 0.0
    %3548 = vmatpush.msra.mxu0 0.0
    %3549 = vmatpush.msra.mxu0 0.0
    %3550 = vmatpush.msra.mxu0 0.0
    %3551 = vmatpush.msra.mxu0 0.0
    %3552 = vmatpush.msra.mxu0 0.0
    %3553 = vmatpush.msra.mxu0 %v3140
    %3554 = vmatpush.msra.mxu0 %v3139
    %3555 = vmatpush.msra.mxu0 %v3138
    %3556 = vmatpush.msra.mxu0 %v3137
    %3557 = vmatmul.f32.gmra.mxu0 %v3406
    %v3558 = vpop.f32.mrf.mxu0
    %v3559 = vadd.f32 %v3539, %v3558
    %3560 = vdwg.mxu0
    %v3561 = vadd.f32 %v3559, %v3189
    %3562 = vmatpush.msra.mxu0 0.0
    %3563 = vmatpush.msra.mxu0 0.0
    %3564 = vmatpush.msra.mxu0 0.0
    %3565 = vmatpush.msra.mxu0 0.0
    %3566 = vmatpush.msra.mxu0 0.0
    %3567 = vmatpush.msra.mxu0 0.0
    %3568 = vmatpush.msra.mxu0 0.0
    %3569 = vmatpush.msra.mxu0 0.0
    %3570 = vmatpush.msra.mxu0 0.0
    %3571 = vmatpush.msra.mxu0 0.0
    %3572 = vmatpush.msra.mxu0 0.0
    %3573 = vmatpush.msra.mxu0 0.0
    %3574 = vmatpush.msra.mxu0 %v3201
    %3575 = vmatpush.msra.mxu0 %v3200
    %3576 = vmatpush.msra.mxu0 %v3199
    %3577 = vmatpush.msra.mxu0 %v3198
    %3578 = vmatmul.f32.gmra.mxu0 %v3478
    %v3579 = vpop.f32.mrf.mxu0
    %v3580 = vadd.f32 0.0, %v3579
    %3581 = vdwg.mxu0
    %3582 = vmatpush.msra.mxu0 0.0
    %3583 = vmatpush.msra.mxu0 0.0
    %3584 = vmatpush.msra.mxu0 0.0
    %3585 = vmatpush.msra.mxu0 0.0
    %3586 = vmatpush.msra.mxu0 0.0
    %3587 = vmatpush.msra.mxu0 0.0
    %3588 = vmatpush.msra.mxu0 0.0
    %3589 = vmatpush.msra.mxu0 0.0
    %3590 = vmatpush.msra.mxu0 0.0
    %3591 = vmatpush.msra.mxu0 0.0
    %3592 = vmatpush.msra.mxu0 0.0
    %3593 = vmatpush.msra.mxu0 0.0
    %3594 = vmatpush.msra.mxu0 %v3196
    %3595 = vmatpush.msra.mxu0 %v3195
    %3596 = vmatpush.msra.mxu0 %v3194
    %3597 = vmatpush.msra.mxu0 %v3193
    %3598 = vmatmul.f32.gmra.mxu0 %v3406
    %v3599 = vpop.f32.mrf.mxu0
    %v3600 = vadd.f32 %v3580, %v3599
    %3601 = vdwg.mxu0
    %v3602 = vadd.f32 %v3600, %v3245
    %3603 = vmatpush.msra.mxu0 0.0
    %3604 = vmatpush.msra.mxu0 0.0
    %3605 = vmatpush.msra.mxu0 0.0
    %3606 = vmatpush.msra.mxu0 0.0
    %3607 = vmatpush.msra.mxu0 0.0
    %3608 = vmatpush.msra.mxu0 0.0
    %3609 = vmatpush.msra.mxu0 0.0
    %3610 = vmatpush.msra.mxu0 0.0
    %3611 = vmatpush.msra.mxu0 0.0
    %3612 = vmatpush.msra.mxu0 0.0
    %3613 = vmatpush.msra.mxu0 0.0
    %3614 = vmatpush.msra.mxu0 0.0
    %3615 = vmatpush.msra.mxu0 %v3257
    %3616 = vmatpush.msra.mxu0 %v3256
    %3617 = vmatpush.msra.mxu0 %v3255
    %3618 = vmatpush.msra.mxu0 %v3254
    %3619 = vmatmul.f32.gmra.mxu0 %v3478
    %v3620 = vpop.f32.mrf.mxu0
    %v3621 = vadd.f32 0.0, %v3620
    %3622 = vdwg.mxu0
    %3623 = vmatpush.msra.mxu0 0.0
    %3624 = vmatpush.msra.mxu0 0.0
    %3625 = vmatpush.msra.mxu0 0.0
    %3626 = vmatpush.msra.mxu0 0.0
    %3627 = vmatpush.msra.mxu0 0.0
    %3628 = vmatpush.msra.mxu0 0.0
    %3629 = vmatpush.msra.mxu0 0.0
    %3630 = vmatpush.msra.mxu0 0.0
    %3631 = vmatpush.msra.mxu0 0.0
    %3632 = vmatpush.msra.mxu0 0.0
    %3633 = vmatpush.msra.mxu0 0.0
    %3634 = vmatpush.msra.mxu0 0.0
    %3635 = vmatpush.msra.mxu0 %v3252
    %3636 = vmatpush.msra.mxu0 %v3251
    %3637 = vmatpush.msra.mxu0 %v3250
    %3638 = vmatpush.msra.mxu0 %v3249
    %3639 = vmatmul.f32.gmra.mxu0 %v3406
    %v3640 = vpop.f32.mrf.mxu0
    %v3641 = vadd.f32 %v3621, %v3640
    %3642 = vdwg.mxu0
    %v3643 = vadd.f32 %v3641, %v3301
    %v3644 = vsub.f32 0.0, %v3561
    %v3645 = vmul.f32 %v3644, 1.442695
    %v3646 = vpow.pop %v3645
    %v3647 = vadd.f32 %v3646, 1.0
    %v3648 = vrcp.pop %v3647
    %v3649 = vmul.f32 %v3647, %v3648
    %v3650 = vsub.f32 1.0, %v3649
    %v3651 = vmul.f32 %v3648, %v3650
    %v3652 = vadd.f32 %v3648, %v3651
    %vm3653 = vweird.f32 %v3647
    %vm3654 = vweird.f32 %v3648
    %vm3655 = vmor %vm3653, %vm3654
    %v3656 = vsel %vm3655, %v3648, %v3652
    %v3657 = vand.u32 2147483647, %v3647
    %vm3658 = vcmp.eq.f32.partialorder %v3657, 8.507059e+37
    %v3659 = vand.u32 %v3647, 2147483648
    %v3660 = vor.u32 1.1754944e-38, %v3659
    %v3661 = vsel %vm3658, %v3660, %v3656
    %v3662 = vmul.f32 1.0, %v3661
    %v3663 = vmul.f32 %v3662, %v3364
    %v3664 = vsub.f32 0.0, %v3520
    %v3665 = vmul.f32 %v3664, 1.442695
    %v3666 = vpow.pop %v3665
    %v3667 = vadd.f32 %v3666, 1.0
    %v3668 = vrcp.pop %v3667
    %v3669 = vmul.f32 %v3667, %v3668
    %v3670 = vsub.f32 1.0, %v3669
    %v3671 = vmul.f32 %v3668, %v3670
    %v3672 = vadd.f32 %v3668, %v3671
    %vm3673 = vweird.f32 %v3667
    %vm3674 = vweird.f32 %v3668
    %vm3675 = vmor %vm3673, %vm3674
    %v3676 = vsel %vm3675, %v3668, %v3672
    %v3677 = vand.u32 2147483647, %v3667
    %vm3678 = vcmp.eq.f32.partialorder %v3677, 8.507059e+37
    %v3679 = vand.u32 %v3667, 2147483648
    %v3680 = vor.u32 1.1754944e-38, %v3679
    %v3681 = vsel %vm3678, %v3680, %v3676
    %v3682 = vmul.f32 1.0, %v3681
    %v3683 = vmul.f32 %v3602, -2.0
    %v3684 = vmul.f32 %v3683, 1.442695
    %v3685 = vpow.pop %v3684
    %v3686 = vadd.f32 %v3685, 1.0
    %v3687 = vrcp.pop %v3686
    %v3688 = vmul.f32 %v3686, %v3687
    %v3689 = vsub.f32 1.0, %v3688
    %v3690 = vmul.f32 %v3687, %v3689
    %v3691 = vadd.f32 %v3687, %v3690
    %vm3692 = vweird.f32 %v3686
    %vm3693 = vweird.f32 %v3687
    %vm3694 = vmor %vm3692, %vm3693
    %v3695 = vsel %vm3694, %v3687, %v3691
    %v3696 = vand.u32 2147483647, %v3686
    %vm3697 = vcmp.eq.f32.partialorder %v3696, 8.507059e+37
    %v3698 = vand.u32 %v3686, 2147483648
    %v3699 = vor.u32 1.1754944e-38, %v3698
    %v3700 = vsel %vm3697, %v3699, %v3695
    %v3701 = vmul.f32 2.0, %v3700
    %v3702 = vsub.f32 %v3701, 1.0
    %v3703 = vmul.f32 %v3682, %v3702
    %v3704 = vadd.f32 %v3663, %v3703
    %v3705 = vsub.f32 0.0, %v3643
    %v3706 = vmul.f32 %v3705, 1.442695
    %v3707 = vpow.pop %v3706
    %v3708 = vadd.f32 %v3707, 1.0
    %v3709 = vrcp.pop %v3708
    %v3710 = vmul.f32 %v3708, %v3709
    %v3711 = vsub.f32 1.0, %v3710
    %v3712 = vmul.f32 %v3709, %v3711
    %v3713 = vadd.f32 %v3709, %v3712
    %vm3714 = vweird.f32 %v3708
    %vm3715 = vweird.f32 %v3709
    %vm3716 = vmor %vm3714, %vm3715
    %v3717 = vsel %vm3716, %v3709, %v3713
    %v3718 = vand.u32 2147483647, %v3708
    %vm3719 = vcmp.eq.f32.partialorder %v3718, 8.507059e+37
    %v3720 = vand.u32 %v3708, 2147483648
    %v3721 = vor.u32 1.1754944e-38, %v3720
    %v3722 = vsel %vm3719, %v3721, %v3717
    %v3723 = vmul.f32 1.0, %v3722
    %v3724 = vmul.f32 %v3704, -2.0
    %v3725 = vmul.f32 %v3724, 1.442695
    %v3726 = vpow.pop %v3725
    %v3727 = vadd.f32 %v3726, 1.0
    %v3728 = vrcp.pop %v3727
    %v3729 = vmul.f32 %v3727, %v3728
    %v3730 = vsub.f32 1.0, %v3729
    %v3731 = vmul.f32 %v3728, %v3730
    %v3732 = vadd.f32 %v3728, %v3731
    %vm3733 = vweird.f32 %v3727
    %vm3734 = vweird.f32 %v3728
    %vm3735 = vmor %vm3733, %vm3734
    %v3736 = vsel %vm3735, %v3728, %v3732
    %v3737 = vand.u32 2147483647, %v3727
    %vm3738 = vcmp.eq.f32.partialorder %v3737, 8.507059e+37
    %v3739 = vand.u32 %v3727, 2147483648
    %v3740 = vor.u32 1.1754944e-38, %v3739
    %v3741 = vsel %vm3738, %v3740, %v3736
    %v3742 = vmul.f32 2.0, %v3741
    %v3743 = vsub.f32 %v3742, 1.0
    %v3744 = vmul.f32 %v3723, %v3743
    %v3746 = vsel %vm315, %v3744, 0
    %3748 = vmatpush.xpose.msra.mxu0 0.0
    %3749 = vmatpush.xpose.msra.mxu0 0.0
    %3750 = vmatpush.xpose.msra.mxu0 0.0
    %3751 = vmatpush.xpose.msra.mxu0 0.0
    %3752 = vmatpush.xpose.msra.mxu0 0.0
    %3753 = vmatpush.xpose.msra.mxu0 0.0
    %3754 = vmatpush.xpose.msra.mxu0 0.0
    %3755 = vmatpush.xpose.msra.mxu0 0.0
    %3756 = vmatpush.xpose.msra.mxu0 0.0
    %3757 = vmatpush.xpose.msra.mxu0 0.0
    %3758 = vmatpush.xpose.msra.mxu0 0.0
    %3759 = vmatpush.xpose.msra.mxu0 0.0
    %3760 = vmatpush.xpose.msra.mxu0 %v3418
    %3761 = vmatpush.xpose.msra.mxu0 %v3415
    %3762 = vmatpush.xpose.msra.mxu0 %v3412
    %3763 = vmatpush.xpose.msra.mxu0 %v3409
    %3764 = vmatmul.f32.gmra.mxu0 %v3746
    %v3765 = vpop.f32.mrf.mxu0
    %v3766 = vadd.f32 0.0, %v3765
    %3767 = vdwg.mxu0
    %v3768 = vsel %vm3077, %v3766, -1e+30
    %v3769 = vsel %vm3441, %v3768, -inf
    %3770 = vmax.xlane.f32.xlu0 %v3769
    %v3771 = vpop.xlane.xlu0 %3770
    %v3772 = vsub.f32 %v3768, %v3771
    %v3773 = vmul.f32 %v3772, 1.442695
    %v3774 = vpow.pop %v3773
    %v3775 = vmul.f32 %v3774, %v3079
    %v3776 = vsel %vm3441, %v3775, 0.0
    %3777 = vadd.xlane.f32.xlu0 %v3776
    %v3778 = vpop.xlane.xlu0 %3777
    %v3779 = vrcp.pop %v3778
    %v3780 = vmul.f32 %v3775, %v3779
    %v3782 = vsel %vm315, %v3780, 0
    %3784 = vmatpush.msra.mxu0 0.0
    %3785 = vmatpush.msra.mxu0 0.0
    %3786 = vmatpush.msra.mxu0 0.0
    %3787 = vmatpush.msra.mxu0 0.0
    %3788 = vmatpush.msra.mxu0 0.0
    %3789 = vmatpush.msra.mxu0 0.0
    %3790 = vmatpush.msra.mxu0 0.0
    %3791 = vmatpush.msra.mxu0 0.0
    %3792 = vmatpush.msra.mxu0 0.0
    %3793 = vmatpush.msra.mxu0 0.0
    %3794 = vmatpush.msra.mxu0 0.0
    %3795 = vmatpush.msra.mxu0 0.0
    %3796 = vmatpush.msra.mxu0 %v3067
    %3797 = vmatpush.msra.mxu0 %v3066
    %3798 = vmatpush.msra.mxu0 %v3065
    %3799 = vmatpush.msra.mxu0 %v3064
    %3800 = vmatmul.f32.gmra.mxu0 %v3782
    %v3801 = vpop.f32.mrf.mxu0
    %v3802 = vadd.f32 0.0, %v3801
    %3803 = vdwg.mxu0
    %v3805 = vsel %vm315, %v3802, 0
    %3807 = vmatpush.msra.mxu0 0.0
    %3808 = vmatpush.msra.mxu0 0.0
    %3809 = vmatpush.msra.mxu0 0.0
    %3810 = vmatpush.msra.mxu0 0.0
    %3811 = vmatpush.msra.mxu0 0.0
    %3812 = vmatpush.msra.mxu0 0.0
    %3813 = vmatpush.msra.mxu0 0.0
    %3814 = vmatpush.msra.mxu0 0.0
    %3815 = vmatpush.msra.mxu0 0.0
    %3816 = vmatpush.msra.mxu0 0.0
    %3817 = vmatpush.msra.mxu0 0.0
    %3818 = vmatpush.msra.mxu0 0.0
    %3819 = vmatpush.msra.mxu0 %v3087
    %3820 = vmatpush.msra.mxu0 %v3086
    %3821 = vmatpush.msra.mxu0 %v3085
    %3822 = vmatpush.msra.mxu0 %v3084
    %3823 = vmatmul.f32.gmra.mxu0 %v3805
    %v3824 = vpop.f32.mrf.mxu0
    %v3825 = vadd.f32 0.0, %v3824
    %3826 = vdwg.mxu0
    %3827 = vmatpush.msra.mxu0 0.0
    %3828 = vmatpush.msra.mxu0 0.0
    %3829 = vmatpush.msra.mxu0 0.0
    %3830 = vmatpush.msra.mxu0 0.0
    %3831 = vmatpush.msra.mxu0 0.0
    %3832 = vmatpush.msra.mxu0 0.0
    %3833 = vmatpush.msra.mxu0 0.0
    %3834 = vmatpush.msra.mxu0 0.0
    %3835 = vmatpush.msra.mxu0 0.0
    %3836 = vmatpush.msra.mxu0 0.0
    %3837 = vmatpush.msra.mxu0 0.0
    %3838 = vmatpush.msra.mxu0 0.0
    %3839 = vmatpush.msra.mxu0 %v3083
    %3840 = vmatpush.msra.mxu0 %v3082
    %3841 = vmatpush.msra.mxu0 %v3081
    %3842 = vmatpush.msra.mxu0 %v3080
    %3843 = vmatmul.f32.gmra.mxu0 %v3746
    %v3844 = vpop.f32.mrf.mxu0
    %v3845 = vadd.f32 %v3825, %v3844
    %3846 = vdwg.mxu0
    %v3847 = vadd.f32 %v3845, %v3133
    %3848 = vmatpush.msra.mxu0 0.0
    %3849 = vmatpush.msra.mxu0 0.0
    %3850 = vmatpush.msra.mxu0 0.0
    %3851 = vmatpush.msra.mxu0 0.0
    %3852 = vmatpush.msra.mxu0 0.0
    %3853 = vmatpush.msra.mxu0 0.0
    %3854 = vmatpush.msra.mxu0 0.0
    %3855 = vmatpush.msra.mxu0 0.0
    %3856 = vmatpush.msra.mxu0 0.0
    %3857 = vmatpush.msra.mxu0 0.0
    %3858 = vmatpush.msra.mxu0 0.0
    %3859 = vmatpush.msra.mxu0 0.0
    %3860 = vmatpush.msra.mxu0 %v3145
    %3861 = vmatpush.msra.mxu0 %v3144
    %3862 = vmatpush.msra.mxu0 %v3143
    %3863 = vmatpush.msra.mxu0 %v3142
    %3864 = vmatmul.f32.gmra.mxu0 %v3805
    %v3865 = vpop.f32.mrf.mxu0
    %v3866 = vadd.f32 0.0, %v3865
    %3867 = vdwg.mxu0
    %3868 = vmatpush.msra.mxu0 0.0
    %3869 = vmatpush.msra.mxu0 0.0
    %3870 = vmatpush.msra.mxu0 0.0
    %3871 = vmatpush.msra.mxu0 0.0
    %3872 = vmatpush.msra.mxu0 0.0
    %3873 = vmatpush.msra.mxu0 0.0
    %3874 = vmatpush.msra.mxu0 0.0
    %3875 = vmatpush.msra.mxu0 0.0
    %3876 = vmatpush.msra.mxu0 0.0
    %3877 = vmatpush.msra.mxu0 0.0
    %3878 = vmatpush.msra.mxu0 0.0
    %3879 = vmatpush.msra.mxu0 0.0
    %3880 = vmatpush.msra.mxu0 %v3140
    %3881 = vmatpush.msra.mxu0 %v3139
    %3882 = vmatpush.msra.mxu0 %v3138
    %3883 = vmatpush.msra.mxu0 %v3137
    %3884 = vmatmul.f32.gmra.mxu0 %v3746
    %v3885 = vpop.f32.mrf.mxu0
    %v3886 = vadd.f32 %v3866, %v3885
    %3887 = vdwg.mxu0
    %v3888 = vadd.f32 %v3886, %v3189
    %3889 = vmatpush.msra.mxu0 0.0
    %3890 = vmatpush.msra.mxu0 0.0
    %3891 = vmatpush.msra.mxu0 0.0
    %3892 = vmatpush.msra.mxu0 0.0
    %3893 = vmatpush.msra.mxu0 0.0
    %3894 = vmatpush.msra.mxu0 0.0
    %3895 = vmatpush.msra.mxu0 0.0
    %3896 = vmatpush.msra.mxu0 0.0
    %3897 = vmatpush.msra.mxu0 0.0
    %3898 = vmatpush.msra.mxu0 0.0
    %3899 = vmatpush.msra.mxu0 0.0
    %3900 = vmatpush.msra.mxu0 0.0
    %3901 = vmatpush.msra.mxu0 %v3201
    %3902 = vmatpush.msra.mxu0 %v3200
    %3903 = vmatpush.msra.mxu0 %v3199
    %3904 = vmatpush.msra.mxu0 %v3198
    %3905 = vmatmul.f32.gmra.mxu0 %v3805
    %v3906 = vpop.f32.mrf.mxu0
    %v3907 = vadd.f32 0.0, %v3906
    %3908 = vdwg.mxu0
    %3909 = vmatpush.msra.mxu0 0.0
    %3910 = vmatpush.msra.mxu0 0.0
    %3911 = vmatpush.msra.mxu0 0.0
    %3912 = vmatpush.msra.mxu0 0.0
    %3913 = vmatpush.msra.mxu0 0.0
    %3914 = vmatpush.msra.mxu0 0.0
    %3915 = vmatpush.msra.mxu0 0.0
    %3916 = vmatpush.msra.mxu0 0.0
    %3917 = vmatpush.msra.mxu0 0.0
    %3918 = vmatpush.msra.mxu0 0.0
    %3919 = vmatpush.msra.mxu0 0.0
    %3920 = vmatpush.msra.mxu0 0.0
    %3921 = vmatpush.msra.mxu0 %v3196
    %3922 = vmatpush.msra.mxu0 %v3195
    %3923 = vmatpush.msra.mxu0 %v3194
    %3924 = vmatpush.msra.mxu0 %v3193
    %3925 = vmatmul.f32.gmra.mxu0 %v3746
    %v3926 = vpop.f32.mrf.mxu0
    %v3927 = vadd.f32 %v3907, %v3926
    %3928 = vdwg.mxu0
    %v3929 = vadd.f32 %v3927, %v3245
    %3930 = vmatpush.msra.mxu0 0.0
    %3931 = vmatpush.msra.mxu0 0.0
    %3932 = vmatpush.msra.mxu0 0.0
    %3933 = vmatpush.msra.mxu0 0.0
    %3934 = vmatpush.msra.mxu0 0.0
    %3935 = vmatpush.msra.mxu0 0.0
    %3936 = vmatpush.msra.mxu0 0.0
    %3937 = vmatpush.msra.mxu0 0.0
    %3938 = vmatpush.msra.mxu0 0.0
    %3939 = vmatpush.msra.mxu0 0.0
    %3940 = vmatpush.msra.mxu0 0.0
    %3941 = vmatpush.msra.mxu0 0.0
    %3942 = vmatpush.msra.mxu0 %v3257
    %3943 = vmatpush.msra.mxu0 %v3256
    %3944 = vmatpush.msra.mxu0 %v3255
    %3945 = vmatpush.msra.mxu0 %v3254
    %3946 = vmatmul.f32.gmra.mxu0 %v3805
    %v3947 = vpop.f32.mrf.mxu0
    %v3948 = vadd.f32 0.0, %v3947
    %3949 = vdwg.mxu0
    %3950 = vmatpush.msra.mxu0 0.0
    %3951 = vmatpush.msra.mxu0 0.0
    %3952 = vmatpush.msra.mxu0 0.0
    %3953 = vmatpush.msra.mxu0 0.0
    %3954 = vmatpush.msra.mxu0 0.0
    %3955 = vmatpush.msra.mxu0 0.0
    %3956 = vmatpush.msra.mxu0 0.0
    %3957 = vmatpush.msra.mxu0 0.0
    %3958 = vmatpush.msra.mxu0 0.0
    %3959 = vmatpush.msra.mxu0 0.0
    %3960 = vmatpush.msra.mxu0 0.0
    %3961 = vmatpush.msra.mxu0 0.0
    %3962 = vmatpush.msra.mxu0 %v3252
    %3963 = vmatpush.msra.mxu0 %v3251
    %3964 = vmatpush.msra.mxu0 %v3250
    %3965 = vmatpush.msra.mxu0 %v3249
    %3966 = vmatmul.f32.gmra.mxu0 %v3746
    %v3967 = vpop.f32.mrf.mxu0
    %v3968 = vadd.f32 %v3948, %v3967
    %3969 = vdwg.mxu0
    %v3970 = vadd.f32 %v3968, %v3301
    %v3971 = vsub.f32 0.0, %v3888
    %v3972 = vmul.f32 %v3971, 1.442695
    %v3973 = vpow.pop %v3972
    %v3974 = vadd.f32 %v3973, 1.0
    %v3975 = vrcp.pop %v3974
    %v3976 = vmul.f32 %v3974, %v3975
    %v3977 = vsub.f32 1.0, %v3976
    %v3978 = vmul.f32 %v3975, %v3977
    %v3979 = vadd.f32 %v3975, %v3978
    %vm3980 = vweird.f32 %v3974
    %vm3981 = vweird.f32 %v3975
    %vm3982 = vmor %vm3980, %vm3981
    %v3983 = vsel %vm3982, %v3975, %v3979
    %v3984 = vand.u32 2147483647, %v3974
    %vm3985 = vcmp.eq.f32.partialorder %v3984, 8.507059e+37
    %v3986 = vand.u32 %v3974, 2147483648
    %v3987 = vor.u32 1.1754944e-38, %v3986
    %v3988 = vsel %vm3985, %v3987, %v3983
    %v3989 = vmul.f32 1.0, %v3988
    %v3990 = vmul.f32 %v3989, %v3704
    %v3991 = vsub.f32 0.0, %v3847
    %v3992 = vmul.f32 %v3991, 1.442695
    %v3993 = vpow.pop %v3992
    %v3994 = vadd.f32 %v3993, 1.0
    %v3995 = vrcp.pop %v3994
    %v3996 = vmul.f32 %v3994, %v3995
    %v3997 = vsub.f32 1.0, %v3996
    %v3998 = vmul.f32 %v3995, %v3997
    %v3999 = vadd.f32 %v3995, %v3998
    %vm4000 = vweird.f32 %v3994
    %vm4001 = vweird.f32 %v3995
    %vm4002 = vmor %vm4000, %vm4001
    %v4003 = vsel %vm4002, %v3995, %v3999
    %v4004 = vand.u32 2147483647, %v3994
    %vm4005 = vcmp.eq.f32.partialorder %v4004, 8.507059e+37
    %v4006 = vand.u32 %v3994, 2147483648
    %v4007 = vor.u32 1.1754944e-38, %v4006
    %v4008 = vsel %vm4005, %v4007, %v4003
    %v4009 = vmul.f32 1.0, %v4008
    %v4010 = vmul.f32 %v3929, -2.0
    %v4011 = vmul.f32 %v4010, 1.442695
    %v4012 = vpow.pop %v4011
    %v4013 = vadd.f32 %v4012, 1.0
    %v4014 = vrcp.pop %v4013
    %v4015 = vmul.f32 %v4013, %v4014
    %v4016 = vsub.f32 1.0, %v4015
    %v4017 = vmul.f32 %v4014, %v4016
    %v4018 = vadd.f32 %v4014, %v4017
    %vm4019 = vweird.f32 %v4013
    %vm4020 = vweird.f32 %v4014
    %vm4021 = vmor %vm4019, %vm4020
    %v4022 = vsel %vm4021, %v4014, %v4018
    %v4023 = vand.u32 2147483647, %v4013
    %vm4024 = vcmp.eq.f32.partialorder %v4023, 8.507059e+37
    %v4025 = vand.u32 %v4013, 2147483648
    %v4026 = vor.u32 1.1754944e-38, %v4025
    %v4027 = vsel %vm4024, %v4026, %v4022
    %v4028 = vmul.f32 2.0, %v4027
    %v4029 = vsub.f32 %v4028, 1.0
    %v4030 = vmul.f32 %v4009, %v4029
    %v4031 = vadd.f32 %v3990, %v4030
    %v4032 = vsub.f32 0.0, %v3970
    %v4033 = vmul.f32 %v4032, 1.442695
    %v4034 = vpow.pop %v4033
    %v4035 = vadd.f32 %v4034, 1.0
    %v4036 = vrcp.pop %v4035
    %v4037 = vmul.f32 %v4035, %v4036
    %v4038 = vsub.f32 1.0, %v4037
    %v4039 = vmul.f32 %v4036, %v4038
    %v4040 = vadd.f32 %v4036, %v4039
    %vm4041 = vweird.f32 %v4035
    %vm4042 = vweird.f32 %v4036
    %vm4043 = vmor %vm4041, %vm4042
    %v4044 = vsel %vm4043, %v4036, %v4040
    %v4045 = vand.u32 2147483647, %v4035
    %vm4046 = vcmp.eq.f32.partialorder %v4045, 8.507059e+37
    %v4047 = vand.u32 %v4035, 2147483648
    %v4048 = vor.u32 1.1754944e-38, %v4047
    %v4049 = vsel %vm4046, %v4048, %v4044
    %v4050 = vmul.f32 1.0, %v4049
    %v4051 = vmul.f32 %v4031, -2.0
    %v4052 = vmul.f32 %v4051, 1.442695
    %v4053 = vpow.pop %v4052
    %v4054 = vadd.f32 %v4053, 1.0
    %v4055 = vrcp.pop %v4054
    %v4056 = vmul.f32 %v4054, %v4055
    %v4057 = vsub.f32 1.0, %v4056
    %v4058 = vmul.f32 %v4055, %v4057
    %v4059 = vadd.f32 %v4055, %v4058
    %vm4060 = vweird.f32 %v4054
    %vm4061 = vweird.f32 %v4055
    %vm4062 = vmor %vm4060, %vm4061
    %v4063 = vsel %vm4062, %v4055, %v4059
    %v4064 = vand.u32 2147483647, %v4054
    %vm4065 = vcmp.eq.f32.partialorder %v4064, 8.507059e+37
    %v4066 = vand.u32 %v4054, 2147483648
    %v4067 = vor.u32 1.1754944e-38, %v4066
    %v4068 = vsel %vm4065, %v4067, %v4063
    %v4069 = vmul.f32 2.0, %v4068
    %v4070 = vsub.f32 %v4069, 1.0
    %v4071 = vmul.f32 %v4050, %v4070
    %v4073 = vsel %vm315, %v4071, 0
    %4075 = vmatpush.xpose.msra.mxu0 0.0
    %4076 = vmatpush.xpose.msra.mxu0 0.0
    %4077 = vmatpush.xpose.msra.mxu0 0.0
    %4078 = vmatpush.xpose.msra.mxu0 0.0
    %4079 = vmatpush.xpose.msra.mxu0 0.0
    %4080 = vmatpush.xpose.msra.mxu0 0.0
    %4081 = vmatpush.xpose.msra.mxu0 0.0
    %4082 = vmatpush.xpose.msra.mxu0 0.0
    %4083 = vmatpush.xpose.msra.mxu0 0.0
    %4084 = vmatpush.xpose.msra.mxu0 0.0
    %4085 = vmatpush.xpose.msra.mxu0 0.0
    %4086 = vmatpush.xpose.msra.mxu0 0.0
    %4087 = vmatpush.xpose.msra.mxu0 %v3418
    %4088 = vmatpush.xpose.msra.mxu0 %v3415
    %4089 = vmatpush.xpose.msra.mxu0 %v3412
    %4090 = vmatpush.xpose.msra.mxu0 %v3409
    %4091 = vmatmul.f32.gmra.mxu0 %v4073
    %v4092 = vpop.f32.mrf.mxu0
    %v4093 = vadd.f32 0.0, %v4092
    %4094 = vdwg.mxu0
    %v4095 = vsel %vm3077, %v4093, -1e+30
    %v4096 = vsel %vm3441, %v4095, -inf
    %4097 = vmax.xlane.f32.xlu0 %v4096
    %v4098 = vpop.xlane.xlu0 %4097
    %v4099 = vsub.f32 %v4095, %v4098
    %v4100 = vmul.f32 %v4099, 1.442695
    %v4101 = vpow.pop %v4100
    %v4102 = vmul.f32 %v4101, %v3079
    %v4103 = vsel %vm3441, %v4102, 0.0
    %4104 = vadd.xlane.f32.xlu0 %v4103
    %v4105 = vpop.xlane.xlu0 %4104
    %v4106 = vrcp.pop %v4105
    %v4107 = vmul.f32 %v4102, %v4106
    %v4109 = vsel %vm315, %v4107, 0
    %4111 = vmatpush.msra.mxu0 0.0
    %4112 = vmatpush.msra.mxu0 0.0
    %4113 = vmatpush.msra.mxu0 0.0
    %4114 = vmatpush.msra.mxu0 0.0
    %4115 = vmatpush.msra.mxu0 0.0
    %4116 = vmatpush.msra.mxu0 0.0
    %4117 = vmatpush.msra.mxu0 0.0
    %4118 = vmatpush.msra.mxu0 0.0
    %4119 = vmatpush.msra.mxu0 0.0
    %4120 = vmatpush.msra.mxu0 0.0
    %4121 = vmatpush.msra.mxu0 0.0
    %4122 = vmatpush.msra.mxu0 0.0
    %4123 = vmatpush.msra.mxu0 %v3067
    %4124 = vmatpush.msra.mxu0 %v3066
    %4125 = vmatpush.msra.mxu0 %v3065
    %4126 = vmatpush.msra.mxu0 %v3064
    %4127 = vmatmul.f32.gmra.mxu0 %v4109
    %v4128 = vpop.f32.mrf.mxu0
    %v4129 = vadd.f32 0.0, %v4128
    %4130 = vdwg.mxu0
    %v4132 = vsel %vm315, %v4129, 0
    %4134 = vmatpush.msra.mxu0 0.0
    %4135 = vmatpush.msra.mxu0 0.0
    %4136 = vmatpush.msra.mxu0 0.0
    %4137 = vmatpush.msra.mxu0 0.0
    %4138 = vmatpush.msra.mxu0 0.0
    %4139 = vmatpush.msra.mxu0 0.0
    %4140 = vmatpush.msra.mxu0 0.0
    %4141 = vmatpush.msra.mxu0 0.0
    %4142 = vmatpush.msra.mxu0 0.0
    %4143 = vmatpush.msra.mxu0 0.0
    %4144 = vmatpush.msra.mxu0 0.0
    %4145 = vmatpush.msra.mxu0 0.0
    %4146 = vmatpush.msra.mxu0 %v3087
    %4147 = vmatpush.msra.mxu0 %v3086
    %4148 = vmatpush.msra.mxu0 %v3085
    %4149 = vmatpush.msra.mxu0 %v3084
    %4150 = vmatmul.f32.gmra.mxu0 %v4132
    %v4151 = vpop.f32.mrf.mxu0
    %v4152 = vadd.f32 0.0, %v4151
    %4153 = vdwg.mxu0
    %4154 = vmatpush.msra.mxu0 0.0
    %4155 = vmatpush.msra.mxu0 0.0
    %4156 = vmatpush.msra.mxu0 0.0
    %4157 = vmatpush.msra.mxu0 0.0
    %4158 = vmatpush.msra.mxu0 0.0
    %4159 = vmatpush.msra.mxu0 0.0
    %4160 = vmatpush.msra.mxu0 0.0
    %4161 = vmatpush.msra.mxu0 0.0
    %4162 = vmatpush.msra.mxu0 0.0
    %4163 = vmatpush.msra.mxu0 0.0
    %4164 = vmatpush.msra.mxu0 0.0
    %4165 = vmatpush.msra.mxu0 0.0
    %4166 = vmatpush.msra.mxu0 %v3083
    %4167 = vmatpush.msra.mxu0 %v3082
    %4168 = vmatpush.msra.mxu0 %v3081
    %4169 = vmatpush.msra.mxu0 %v3080
    %4170 = vmatmul.f32.gmra.mxu0 %v4073
    %v4171 = vpop.f32.mrf.mxu0
    %v4172 = vadd.f32 %v4152, %v4171
    %4173 = vdwg.mxu0
    %v4174 = vadd.f32 %v4172, %v3133
    %4175 = vmatpush.msra.mxu0 0.0
    %4176 = vmatpush.msra.mxu0 0.0
    %4177 = vmatpush.msra.mxu0 0.0
    %4178 = vmatpush.msra.mxu0 0.0
    %4179 = vmatpush.msra.mxu0 0.0
    %4180 = vmatpush.msra.mxu0 0.0
    %4181 = vmatpush.msra.mxu0 0.0
    %4182 = vmatpush.msra.mxu0 0.0
    %4183 = vmatpush.msra.mxu0 0.0
    %4184 = vmatpush.msra.mxu0 0.0
    %4185 = vmatpush.msra.mxu0 0.0
    %4186 = vmatpush.msra.mxu0 0.0
    %4187 = vmatpush.msra.mxu0 %v3145
    %4188 = vmatpush.msra.mxu0 %v3144
    %4189 = vmatpush.msra.mxu0 %v3143
    %4190 = vmatpush.msra.mxu0 %v3142
    %4191 = vmatmul.f32.gmra.mxu0 %v4132
    %v4192 = vpop.f32.mrf.mxu0
    %v4193 = vadd.f32 0.0, %v4192
    %4194 = vdwg.mxu0
    %4195 = vmatpush.msra.mxu0 0.0
    %4196 = vmatpush.msra.mxu0 0.0
    %4197 = vmatpush.msra.mxu0 0.0
    %4198 = vmatpush.msra.mxu0 0.0
    %4199 = vmatpush.msra.mxu0 0.0
    %4200 = vmatpush.msra.mxu0 0.0
    %4201 = vmatpush.msra.mxu0 0.0
    %4202 = vmatpush.msra.mxu0 0.0
    %4203 = vmatpush.msra.mxu0 0.0
    %4204 = vmatpush.msra.mxu0 0.0
    %4205 = vmatpush.msra.mxu0 0.0
    %4206 = vmatpush.msra.mxu0 0.0
    %4207 = vmatpush.msra.mxu0 %v3140
    %4208 = vmatpush.msra.mxu0 %v3139
    %4209 = vmatpush.msra.mxu0 %v3138
    %4210 = vmatpush.msra.mxu0 %v3137
    %4211 = vmatmul.f32.gmra.mxu0 %v4073
    %v4212 = vpop.f32.mrf.mxu0
    %v4213 = vadd.f32 %v4193, %v4212
    %4214 = vdwg.mxu0
    %v4215 = vadd.f32 %v4213, %v3189
    %4216 = vmatpush.msra.mxu0 0.0
    %4217 = vmatpush.msra.mxu0 0.0
    %4218 = vmatpush.msra.mxu0 0.0
    %4219 = vmatpush.msra.mxu0 0.0
    %4220 = vmatpush.msra.mxu0 0.0
    %4221 = vmatpush.msra.mxu0 0.0
    %4222 = vmatpush.msra.mxu0 0.0
    %4223 = vmatpush.msra.mxu0 0.0
    %4224 = vmatpush.msra.mxu0 0.0
    %4225 = vmatpush.msra.mxu0 0.0
    %4226 = vmatpush.msra.mxu0 0.0
    %4227 = vmatpush.msra.mxu0 0.0
    %4228 = vmatpush.msra.mxu0 %v3201
    %4229 = vmatpush.msra.mxu0 %v3200
    %4230 = vmatpush.msra.mxu0 %v3199
    %4231 = vmatpush.msra.mxu0 %v3198
    %4232 = vmatmul.f32.gmra.mxu0 %v4132
    %v4233 = vpop.f32.mrf.mxu0
    %v4234 = vadd.f32 0.0, %v4233
    %4235 = vdwg.mxu0
    %4236 = vmatpush.msra.mxu0 0.0
    %4237 = vmatpush.msra.mxu0 0.0
    %4238 = vmatpush.msra.mxu0 0.0
    %4239 = vmatpush.msra.mxu0 0.0
    %4240 = vmatpush.msra.mxu0 0.0
    %4241 = vmatpush.msra.mxu0 0.0
    %4242 = vmatpush.msra.mxu0 0.0
    %4243 = vmatpush.msra.mxu0 0.0
    %4244 = vmatpush.msra.mxu0 0.0
    %4245 = vmatpush.msra.mxu0 0.0
    %4246 = vmatpush.msra.mxu0 0.0
    %4247 = vmatpush.msra.mxu0 0.0
    %4248 = vmatpush.msra.mxu0 %v3196
    %4249 = vmatpush.msra.mxu0 %v3195
    %4250 = vmatpush.msra.mxu0 %v3194
    %4251 = vmatpush.msra.mxu0 %v3193
    %4252 = vmatmul.f32.gmra.mxu0 %v4073
    %v4253 = vpop.f32.mrf.mxu0
    %v4254 = vadd.f32 %v4234, %v4253
    %4255 = vdwg.mxu0
    %v4256 = vadd.f32 %v4254, %v3245
    %4257 = vmatpush.msra.mxu0 0.0
    %4258 = vmatpush.msra.mxu0 0.0
    %4259 = vmatpush.msra.mxu0 0.0
    %4260 = vmatpush.msra.mxu0 0.0
    %4261 = vmatpush.msra.mxu0 0.0
    %4262 = vmatpush.msra.mxu0 0.0
    %4263 = vmatpush.msra.mxu0 0.0
    %4264 = vmatpush.msra.mxu0 0.0
    %4265 = vmatpush.msra.mxu0 0.0
    %4266 = vmatpush.msra.mxu0 0.0
    %4267 = vmatpush.msra.mxu0 0.0
    %4268 = vmatpush.msra.mxu0 0.0
    %4269 = vmatpush.msra.mxu0 %v3257
    %4270 = vmatpush.msra.mxu0 %v3256
    %4271 = vmatpush.msra.mxu0 %v3255
    %4272 = vmatpush.msra.mxu0 %v3254
    %4273 = vmatmul.f32.gmra.mxu0 %v4132
    %v4274 = vpop.f32.mrf.mxu0
    %v4275 = vadd.f32 0.0, %v4274
    %4276 = vdwg.mxu0
    %4277 = vmatpush.msra.mxu0 0.0
    %4278 = vmatpush.msra.mxu0 0.0
    %4279 = vmatpush.msra.mxu0 0.0
    %4280 = vmatpush.msra.mxu0 0.0
    %4281 = vmatpush.msra.mxu0 0.0
    %4282 = vmatpush.msra.mxu0 0.0
    %4283 = vmatpush.msra.mxu0 0.0
    %4284 = vmatpush.msra.mxu0 0.0
    %4285 = vmatpush.msra.mxu0 0.0
    %4286 = vmatpush.msra.mxu0 0.0
    %4287 = vmatpush.msra.mxu0 0.0
    %4288 = vmatpush.msra.mxu0 0.0
    %4289 = vmatpush.msra.mxu0 %v3252
    %4290 = vmatpush.msra.mxu0 %v3251
    %4291 = vmatpush.msra.mxu0 %v3250
    %4292 = vmatpush.msra.mxu0 %v3249
    %4293 = vmatmul.f32.gmra.mxu0 %v4073
    %v4294 = vpop.f32.mrf.mxu0
    %v4295 = vadd.f32 %v4275, %v4294
    %4296 = vdwg.mxu0
    %v4297 = vadd.f32 %v4295, %v3301
    %v4298 = vsub.f32 0.0, %v4215
    %v4299 = vmul.f32 %v4298, 1.442695
    %v4300 = vpow.pop %v4299
    %v4301 = vadd.f32 %v4300, 1.0
    %v4302 = vrcp.pop %v4301
    %v4303 = vmul.f32 %v4301, %v4302
    %v4304 = vsub.f32 1.0, %v4303
    %v4305 = vmul.f32 %v4302, %v4304
    %v4306 = vadd.f32 %v4302, %v4305
    %vm4307 = vweird.f32 %v4301
    %vm4308 = vweird.f32 %v4302
    %vm4309 = vmor %vm4307, %vm4308
    %v4310 = vsel %vm4309, %v4302, %v4306
    %v4311 = vand.u32 2147483647, %v4301
    %vm4312 = vcmp.eq.f32.partialorder %v4311, 8.507059e+37
    %v4313 = vand.u32 %v4301, 2147483648
    %v4314 = vor.u32 1.1754944e-38, %v4313
    %v4315 = vsel %vm4312, %v4314, %v4310
    %v4316 = vmul.f32 1.0, %v4315
    %v4317 = vmul.f32 %v4316, %v4031
    %v4318 = vsub.f32 0.0, %v4174
    %v4319 = vmul.f32 %v4318, 1.442695
    %v4320 = vpow.pop %v4319
    %v4321 = vadd.f32 %v4320, 1.0
    %v4322 = vrcp.pop %v4321
    %v4323 = vmul.f32 %v4321, %v4322
    %v4324 = vsub.f32 1.0, %v4323
    %v4325 = vmul.f32 %v4322, %v4324
    %v4326 = vadd.f32 %v4322, %v4325
    %vm4327 = vweird.f32 %v4321
    %vm4328 = vweird.f32 %v4322
    %vm4329 = vmor %vm4327, %vm4328
    %v4330 = vsel %vm4329, %v4322, %v4326
    %v4331 = vand.u32 2147483647, %v4321
    %vm4332 = vcmp.eq.f32.partialorder %v4331, 8.507059e+37
    %v4333 = vand.u32 %v4321, 2147483648
    %v4334 = vor.u32 1.1754944e-38, %v4333
    %v4335 = vsel %vm4332, %v4334, %v4330
    %v4336 = vmul.f32 1.0, %v4335
    %v4337 = vmul.f32 %v4256, -2.0
    %v4338 = vmul.f32 %v4337, 1.442695
    %v4339 = vpow.pop %v4338
    %v4340 = vadd.f32 %v4339, 1.0
    %v4341 = vrcp.pop %v4340
    %v4342 = vmul.f32 %v4340, %v4341
    %v4343 = vsub.f32 1.0, %v4342
    %v4344 = vmul.f32 %v4341, %v4343
    %v4345 = vadd.f32 %v4341, %v4344
    %vm4346 = vweird.f32 %v4340
    %vm4347 = vweird.f32 %v4341
    %vm4348 = vmor %vm4346, %vm4347
    %v4349 = vsel %vm4348, %v4341, %v4345
    %v4350 = vand.u32 2147483647, %v4340
    %vm4351 = vcmp.eq.f32.partialorder %v4350, 8.507059e+37
    %v4352 = vand.u32 %v4340, 2147483648
    %v4353 = vor.u32 1.1754944e-38, %v4352
    %v4354 = vsel %vm4351, %v4353, %v4349
    %v4355 = vmul.f32 2.0, %v4354
    %v4356 = vsub.f32 %v4355, 1.0
    %v4357 = vmul.f32 %v4336, %v4356
    %v4358 = vadd.f32 %v4317, %v4357
    %v4359 = vsub.f32 0.0, %v4297
    %v4360 = vmul.f32 %v4359, 1.442695
    %v4361 = vpow.pop %v4360
    %v4362 = vadd.f32 %v4361, 1.0
    %v4363 = vrcp.pop %v4362
    %v4364 = vmul.f32 %v4362, %v4363
    %v4365 = vsub.f32 1.0, %v4364
    %v4366 = vmul.f32 %v4363, %v4365
    %v4367 = vadd.f32 %v4363, %v4366
    %vm4368 = vweird.f32 %v4362
    %vm4369 = vweird.f32 %v4363
    %vm4370 = vmor %vm4368, %vm4369
    %v4371 = vsel %vm4370, %v4363, %v4367
    %v4372 = vand.u32 2147483647, %v4362
    %vm4373 = vcmp.eq.f32.partialorder %v4372, 8.507059e+37
    %v4374 = vand.u32 %v4362, 2147483648
    %v4375 = vor.u32 1.1754944e-38, %v4374
    %v4376 = vsel %vm4373, %v4375, %v4371
    %v4377 = vmul.f32 1.0, %v4376
    %v4378 = vmul.f32 %v4358, -2.0
    %v4379 = vmul.f32 %v4378, 1.442695
    %v4380 = vpow.pop %v4379
    %v4381 = vadd.f32 %v4380, 1.0
    %v4382 = vrcp.pop %v4381
    %v4383 = vmul.f32 %v4381, %v4382
    %v4384 = vsub.f32 1.0, %v4383
    %v4385 = vmul.f32 %v4382, %v4384
    %v4386 = vadd.f32 %v4382, %v4385
    %vm4387 = vweird.f32 %v4381
    %vm4388 = vweird.f32 %v4382
    %vm4389 = vmor %vm4387, %vm4388
    %v4390 = vsel %vm4389, %v4382, %v4386
    %v4391 = vand.u32 2147483647, %v4381
    %vm4392 = vcmp.eq.f32.partialorder %v4391, 8.507059e+37
    %v4393 = vand.u32 %v4381, 2147483648
    %v4394 = vor.u32 1.1754944e-38, %v4393
    %v4395 = vsel %vm4392, %v4394, %v4390
    %v4396 = vmul.f32 2.0, %v4395
    %v4397 = vsub.f32 %v4396, 1.0
    %v4398 = vmul.f32 %v4377, %v4397
    %v4400 = vsel %vm315, %v4398, 0
    %4402 = vmatpush.xpose.msra.mxu0 0.0
    %4403 = vmatpush.xpose.msra.mxu0 0.0
    %4404 = vmatpush.xpose.msra.mxu0 0.0
    %4405 = vmatpush.xpose.msra.mxu0 0.0
    %4406 = vmatpush.xpose.msra.mxu0 0.0
    %4407 = vmatpush.xpose.msra.mxu0 0.0
    %4408 = vmatpush.xpose.msra.mxu0 0.0
    %4409 = vmatpush.xpose.msra.mxu0 0.0
    %4410 = vmatpush.xpose.msra.mxu0 0.0
    %4411 = vmatpush.xpose.msra.mxu0 0.0
    %4412 = vmatpush.xpose.msra.mxu0 0.0
    %4413 = vmatpush.xpose.msra.mxu0 0.0
    %4414 = vmatpush.xpose.msra.mxu0 %v3418
    %4415 = vmatpush.xpose.msra.mxu0 %v3415
    %4416 = vmatpush.xpose.msra.mxu0 %v3412
    %4417 = vmatpush.xpose.msra.mxu0 %v3409
    %4418 = vmatmul.f32.gmra.mxu0 %v4400
    %v4419 = vpop.f32.mrf.mxu0
    %v4420 = vadd.f32 0.0, %v4419
    %4421 = vdwg.mxu0
    %v4422 = vsel %vm3077, %v4420, -1e+30
    %v4423 = vsel %vm3441, %v4422, -inf
    %4424 = vmax.xlane.f32.xlu0 %v4423
    %v4425 = vpop.xlane.xlu0 %4424
    %v4426 = vsub.f32 %v4422, %v4425
    %v4427 = vmul.f32 %v4426, 1.442695
    %v4428 = vpow.pop %v4427
    %v4429 = vmul.f32 %v4428, %v3079
    %v4430 = vsel %vm3441, %v4429, 0.0
    %4431 = vadd.xlane.f32.xlu0 %v4430
    %v4432 = vpop.xlane.xlu0 %4431
    %v4433 = vrcp.pop %v4432
    %v4434 = vmul.f32 %v4429, %v4433
    %v4436 = vsel %vm315, %v4434, 0
    %4438 = vmatpush.msra.mxu0 0.0
    %4439 = vmatpush.msra.mxu0 0.0
    %4440 = vmatpush.msra.mxu0 0.0
    %4441 = vmatpush.msra.mxu0 0.0
    %4442 = vmatpush.msra.mxu0 0.0
    %4443 = vmatpush.msra.mxu0 0.0
    %4444 = vmatpush.msra.mxu0 0.0
    %4445 = vmatpush.msra.mxu0 0.0
    %4446 = vmatpush.msra.mxu0 0.0
    %4447 = vmatpush.msra.mxu0 0.0
    %4448 = vmatpush.msra.mxu0 0.0
    %4449 = vmatpush.msra.mxu0 0.0
    %4450 = vmatpush.msra.mxu0 %v3067
    %4451 = vmatpush.msra.mxu0 %v3066
    %4452 = vmatpush.msra.mxu0 %v3065
    %4453 = vmatpush.msra.mxu0 %v3064
    %4454 = vmatmul.f32.gmra.mxu0 %v4436
    %v4455 = vpop.f32.mrf.mxu0
    %v4456 = vadd.f32 0.0, %v4455
    %4457 = vdwg.mxu0
    %v4459 = vsel %vm315, %v4456, 0
    %4461 = vmatpush.msra.mxu0 0.0
    %4462 = vmatpush.msra.mxu0 0.0
    %4463 = vmatpush.msra.mxu0 0.0
    %4464 = vmatpush.msra.mxu0 0.0
    %4465 = vmatpush.msra.mxu0 0.0
    %4466 = vmatpush.msra.mxu0 0.0
    %4467 = vmatpush.msra.mxu0 0.0
    %4468 = vmatpush.msra.mxu0 0.0
    %4469 = vmatpush.msra.mxu0 0.0
    %4470 = vmatpush.msra.mxu0 0.0
    %4471 = vmatpush.msra.mxu0 0.0
    %4472 = vmatpush.msra.mxu0 0.0
    %4473 = vmatpush.msra.mxu0 %v3087
    %4474 = vmatpush.msra.mxu0 %v3086
    %4475 = vmatpush.msra.mxu0 %v3085
    %4476 = vmatpush.msra.mxu0 %v3084
    %4477 = vmatmul.f32.gmra.mxu0 %v4459
    %v4478 = vpop.f32.mrf.mxu0
    %v4479 = vadd.f32 0.0, %v4478
    %4480 = vdwg.mxu0
    %4481 = vmatpush.msra.mxu0 0.0
    %4482 = vmatpush.msra.mxu0 0.0
    %4483 = vmatpush.msra.mxu0 0.0
    %4484 = vmatpush.msra.mxu0 0.0
    %4485 = vmatpush.msra.mxu0 0.0
    %4486 = vmatpush.msra.mxu0 0.0
    %4487 = vmatpush.msra.mxu0 0.0
    %4488 = vmatpush.msra.mxu0 0.0
    %4489 = vmatpush.msra.mxu0 0.0
    %4490 = vmatpush.msra.mxu0 0.0
    %4491 = vmatpush.msra.mxu0 0.0
    %4492 = vmatpush.msra.mxu0 0.0
    %4493 = vmatpush.msra.mxu0 %v3083
    %4494 = vmatpush.msra.mxu0 %v3082
    %4495 = vmatpush.msra.mxu0 %v3081
    %4496 = vmatpush.msra.mxu0 %v3080
    %4497 = vmatmul.f32.gmra.mxu0 %v4400
    %v4498 = vpop.f32.mrf.mxu0
    %v4499 = vadd.f32 %v4479, %v4498
    %4500 = vdwg.mxu0
    %v4501 = vadd.f32 %v4499, %v3133
    %4502 = vmatpush.msra.mxu0 0.0
    %4503 = vmatpush.msra.mxu0 0.0
    %4504 = vmatpush.msra.mxu0 0.0
    %4505 = vmatpush.msra.mxu0 0.0
    %4506 = vmatpush.msra.mxu0 0.0
    %4507 = vmatpush.msra.mxu0 0.0
    %4508 = vmatpush.msra.mxu0 0.0
    %4509 = vmatpush.msra.mxu0 0.0
    %4510 = vmatpush.msra.mxu0 0.0
    %4511 = vmatpush.msra.mxu0 0.0
    %4512 = vmatpush.msra.mxu0 0.0
    %4513 = vmatpush.msra.mxu0 0.0
    %4514 = vmatpush.msra.mxu0 %v3145
    %4515 = vmatpush.msra.mxu0 %v3144
    %4516 = vmatpush.msra.mxu0 %v3143
    %4517 = vmatpush.msra.mxu0 %v3142
    %4518 = vmatmul.f32.gmra.mxu0 %v4459
    %v4519 = vpop.f32.mrf.mxu0
    %v4520 = vadd.f32 0.0, %v4519
    %4521 = vdwg.mxu0
    %4522 = vmatpush.msra.mxu0 0.0
    %4523 = vmatpush.msra.mxu0 0.0
    %4524 = vmatpush.msra.mxu0 0.0
    %4525 = vmatpush.msra.mxu0 0.0
    %4526 = vmatpush.msra.mxu0 0.0
    %4527 = vmatpush.msra.mxu0 0.0
    %4528 = vmatpush.msra.mxu0 0.0
    %4529 = vmatpush.msra.mxu0 0.0
    %4530 = vmatpush.msra.mxu0 0.0
    %4531 = vmatpush.msra.mxu0 0.0
    %4532 = vmatpush.msra.mxu0 0.0
    %4533 = vmatpush.msra.mxu0 0.0
    %4534 = vmatpush.msra.mxu0 %v3140
    %4535 = vmatpush.msra.mxu0 %v3139
    %4536 = vmatpush.msra.mxu0 %v3138
    %4537 = vmatpush.msra.mxu0 %v3137
    %4538 = vmatmul.f32.gmra.mxu0 %v4400
    %v4539 = vpop.f32.mrf.mxu0
    %v4540 = vadd.f32 %v4520, %v4539
    %4541 = vdwg.mxu0
    %v4542 = vadd.f32 %v4540, %v3189
    %4543 = vmatpush.msra.mxu0 0.0
    %4544 = vmatpush.msra.mxu0 0.0
    %4545 = vmatpush.msra.mxu0 0.0
    %4546 = vmatpush.msra.mxu0 0.0
    %4547 = vmatpush.msra.mxu0 0.0
    %4548 = vmatpush.msra.mxu0 0.0
    %4549 = vmatpush.msra.mxu0 0.0
    %4550 = vmatpush.msra.mxu0 0.0
    %4551 = vmatpush.msra.mxu0 0.0
    %4552 = vmatpush.msra.mxu0 0.0
    %4553 = vmatpush.msra.mxu0 0.0
    %4554 = vmatpush.msra.mxu0 0.0
    %4555 = vmatpush.msra.mxu0 %v3201
    %4556 = vmatpush.msra.mxu0 %v3200
    %4557 = vmatpush.msra.mxu0 %v3199
    %4558 = vmatpush.msra.mxu0 %v3198
    %4559 = vmatmul.f32.gmra.mxu0 %v4459
    %v4560 = vpop.f32.mrf.mxu0
    %v4561 = vadd.f32 0.0, %v4560
    %4562 = vdwg.mxu0
    %4563 = vmatpush.msra.mxu0 0.0
    %4564 = vmatpush.msra.mxu0 0.0
    %4565 = vmatpush.msra.mxu0 0.0
    %4566 = vmatpush.msra.mxu0 0.0
    %4567 = vmatpush.msra.mxu0 0.0
    %4568 = vmatpush.msra.mxu0 0.0
    %4569 = vmatpush.msra.mxu0 0.0
    %4570 = vmatpush.msra.mxu0 0.0
    %4571 = vmatpush.msra.mxu0 0.0
    %4572 = vmatpush.msra.mxu0 0.0
    %4573 = vmatpush.msra.mxu0 0.0
    %4574 = vmatpush.msra.mxu0 0.0
    %4575 = vmatpush.msra.mxu0 %v3196
    %4576 = vmatpush.msra.mxu0 %v3195
    %4577 = vmatpush.msra.mxu0 %v3194
    %4578 = vmatpush.msra.mxu0 %v3193
    %4579 = vmatmul.f32.gmra.mxu0 %v4400
    %v4580 = vpop.f32.mrf.mxu0
    %v4581 = vadd.f32 %v4561, %v4580
    %4582 = vdwg.mxu0
    %v4583 = vadd.f32 %v4581, %v3245
    %4584 = vmatpush.msra.mxu0 0.0
    %4585 = vmatpush.msra.mxu0 0.0
    %4586 = vmatpush.msra.mxu0 0.0
    %4587 = vmatpush.msra.mxu0 0.0
    %4588 = vmatpush.msra.mxu0 0.0
    %4589 = vmatpush.msra.mxu0 0.0
    %4590 = vmatpush.msra.mxu0 0.0
    %4591 = vmatpush.msra.mxu0 0.0
    %4592 = vmatpush.msra.mxu0 0.0
    %4593 = vmatpush.msra.mxu0 0.0
    %4594 = vmatpush.msra.mxu0 0.0
    %4595 = vmatpush.msra.mxu0 0.0
    %4596 = vmatpush.msra.mxu0 %v3257
    %4597 = vmatpush.msra.mxu0 %v3256
    %4598 = vmatpush.msra.mxu0 %v3255
    %4599 = vmatpush.msra.mxu0 %v3254
    %4600 = vmatmul.f32.gmra.mxu0 %v4459
    %v4601 = vpop.f32.mrf.mxu0
    %v4602 = vadd.f32 0.0, %v4601
    %4603 = vdwg.mxu0
    %4604 = vmatpush.msra.mxu0 0.0
    %4605 = vmatpush.msra.mxu0 0.0
    %4606 = vmatpush.msra.mxu0 0.0
    %4607 = vmatpush.msra.mxu0 0.0
    %4608 = vmatpush.msra.mxu0 0.0
    %4609 = vmatpush.msra.mxu0 0.0
    %4610 = vmatpush.msra.mxu0 0.0
    %4611 = vmatpush.msra.mxu0 0.0
    %4612 = vmatpush.msra.mxu0 0.0
    %4613 = vmatpush.msra.mxu0 0.0
    %4614 = vmatpush.msra.mxu0 0.0
    %4615 = vmatpush.msra.mxu0 0.0
    %4616 = vmatpush.msra.mxu0 %v3252
    %4617 = vmatpush.msra.mxu0 %v3251
    %4618 = vmatpush.msra.mxu0 %v3250
    %4619 = vmatpush.msra.mxu0 %v3249
    %4620 = vmatmul.f32.gmra.mxu0 %v4400
    %v4621 = vpop.f32.mrf.mxu0
    %v4622 = vadd.f32 %v4602, %v4621
    %4623 = vdwg.mxu0
    %v4624 = vadd.f32 %v4622, %v3301
    %v4625 = vsub.f32 0.0, %v4542
    %v4626 = vmul.f32 %v4625, 1.442695
    %v4627 = vpow.pop %v4626
    %v4628 = vadd.f32 %v4627, 1.0
    %v4629 = vrcp.pop %v4628
    %v4630 = vmul.f32 %v4628, %v4629
    %v4631 = vsub.f32 1.0, %v4630
    %v4632 = vmul.f32 %v4629, %v4631
    %v4633 = vadd.f32 %v4629, %v4632
    %vm4634 = vweird.f32 %v4628
    %vm4635 = vweird.f32 %v4629
    %vm4636 = vmor %vm4634, %vm4635
    %v4637 = vsel %vm4636, %v4629, %v4633
    %v4638 = vand.u32 2147483647, %v4628
    %vm4639 = vcmp.eq.f32.partialorder %v4638, 8.507059e+37
    %v4640 = vand.u32 %v4628, 2147483648
    %v4641 = vor.u32 1.1754944e-38, %v4640
    %v4642 = vsel %vm4639, %v4641, %v4637
    %v4643 = vmul.f32 1.0, %v4642
    %v4644 = vmul.f32 %v4643, %v4358
    %v4645 = vsub.f32 0.0, %v4501
    %v4646 = vmul.f32 %v4645, 1.442695
    %v4647 = vpow.pop %v4646
    %v4648 = vadd.f32 %v4647, 1.0
    %v4649 = vrcp.pop %v4648
    %v4650 = vmul.f32 %v4648, %v4649
    %v4651 = vsub.f32 1.0, %v4650
    %v4652 = vmul.f32 %v4649, %v4651
    %v4653 = vadd.f32 %v4649, %v4652
    %vm4654 = vweird.f32 %v4648
    %vm4655 = vweird.f32 %v4649
    %vm4656 = vmor %vm4654, %vm4655
    %v4657 = vsel %vm4656, %v4649, %v4653
    %v4658 = vand.u32 2147483647, %v4648
    %vm4659 = vcmp.eq.f32.partialorder %v4658, 8.507059e+37
    %v4660 = vand.u32 %v4648, 2147483648
    %v4661 = vor.u32 1.1754944e-38, %v4660
    %v4662 = vsel %vm4659, %v4661, %v4657
    %v4663 = vmul.f32 1.0, %v4662
    %v4664 = vmul.f32 %v4583, -2.0
    %v4665 = vmul.f32 %v4664, 1.442695
    %v4666 = vpow.pop %v4665
    %v4667 = vadd.f32 %v4666, 1.0
    %v4668 = vrcp.pop %v4667
    %v4669 = vmul.f32 %v4667, %v4668
    %v4670 = vsub.f32 1.0, %v4669
    %v4671 = vmul.f32 %v4668, %v4670
    %v4672 = vadd.f32 %v4668, %v4671
    %vm4673 = vweird.f32 %v4667
    %vm4674 = vweird.f32 %v4668
    %vm4675 = vmor %vm4673, %vm4674
    %v4676 = vsel %vm4675, %v4668, %v4672
    %v4677 = vand.u32 2147483647, %v4667
    %vm4678 = vcmp.eq.f32.partialorder %v4677, 8.507059e+37
    %v4679 = vand.u32 %v4667, 2147483648
    %v4680 = vor.u32 1.1754944e-38, %v4679
    %v4681 = vsel %vm4678, %v4680, %v4676
    %v4682 = vmul.f32 2.0, %v4681
    %v4683 = vsub.f32 %v4682, 1.0
    %v4684 = vmul.f32 %v4663, %v4683
    %v4685 = vadd.f32 %v4644, %v4684
    %v4686 = vsub.f32 0.0, %v4624
    %v4687 = vmul.f32 %v4686, 1.442695
    %v4688 = vpow.pop %v4687
    %v4689 = vadd.f32 %v4688, 1.0
    %v4690 = vrcp.pop %v4689
    %v4691 = vmul.f32 %v4689, %v4690
    %v4692 = vsub.f32 1.0, %v4691
    %v4693 = vmul.f32 %v4690, %v4692
    %v4694 = vadd.f32 %v4690, %v4693
    %vm4695 = vweird.f32 %v4689
    %vm4696 = vweird.f32 %v4690
    %vm4697 = vmor %vm4695, %vm4696
    %v4698 = vsel %vm4697, %v4690, %v4694
    %v4699 = vand.u32 2147483647, %v4689
    %vm4700 = vcmp.eq.f32.partialorder %v4699, 8.507059e+37
    %v4701 = vand.u32 %v4689, 2147483648
    %v4702 = vor.u32 1.1754944e-38, %v4701
    %v4703 = vsel %vm4700, %v4702, %v4698
    %v4704 = vmul.f32 1.0, %v4703
    %v4705 = vmul.f32 %v4685, -2.0
    %v4706 = vmul.f32 %v4705, 1.442695
    %v4707 = vpow.pop %v4706
    %v4708 = vadd.f32 %v4707, 1.0
    %v4709 = vrcp.pop %v4708
    %v4710 = vmul.f32 %v4708, %v4709
    %v4711 = vsub.f32 1.0, %v4710
    %v4712 = vmul.f32 %v4709, %v4711
    %v4713 = vadd.f32 %v4709, %v4712
    %vm4714 = vweird.f32 %v4708
    %vm4715 = vweird.f32 %v4709
    %vm4716 = vmor %vm4714, %vm4715
    %v4717 = vsel %vm4716, %v4709, %v4713
    %v4718 = vand.u32 2147483647, %v4708
    %vm4719 = vcmp.eq.f32.partialorder %v4718, 8.507059e+37
    %v4720 = vand.u32 %v4708, 2147483648
    %v4721 = vor.u32 1.1754944e-38, %v4720
    %v4722 = vsel %vm4719, %v4721, %v4717
    %v4723 = vmul.f32 2.0, %v4722
    %v4724 = vsub.f32 %v4723, 1.0
    %v4725 = vmul.f32 %v4704, %v4724
    %v4727 = vsel %vm315, %v4725, 0
    %4729 = vmatpush.xpose.msra.mxu0 0.0
    %4730 = vmatpush.xpose.msra.mxu0 0.0
    %4731 = vmatpush.xpose.msra.mxu0 0.0
    %4732 = vmatpush.xpose.msra.mxu0 0.0
    %4733 = vmatpush.xpose.msra.mxu0 0.0
    %4734 = vmatpush.xpose.msra.mxu0 0.0
    %4735 = vmatpush.xpose.msra.mxu0 0.0
    %4736 = vmatpush.xpose.msra.mxu0 0.0
    %4737 = vmatpush.xpose.msra.mxu0 0.0
    %4738 = vmatpush.xpose.msra.mxu0 0.0
    %4739 = vmatpush.xpose.msra.mxu0 0.0
    %4740 = vmatpush.xpose.msra.mxu0 0.0
    %4741 = vmatpush.xpose.msra.mxu0 %v3418
    %4742 = vmatpush.xpose.msra.mxu0 %v3415
    %4743 = vmatpush.xpose.msra.mxu0 %v3412
    %4744 = vmatpush.xpose.msra.mxu0 %v3409
    %4745 = vmatmul.f32.gmra.mxu0 %v4727
    %v4746 = vpop.f32.mrf.mxu0
    %v4747 = vadd.f32 0.0, %v4746
    %4748 = vdwg.mxu0
    %v4749 = vsel %vm3077, %v4747, -1e+30
    %v4750 = vsel %vm3441, %v4749, -inf
    %4751 = vmax.xlane.f32.xlu0 %v4750
    %v4752 = vpop.xlane.xlu0 %4751
    %v4753 = vsub.f32 %v4749, %v4752
    %v4754 = vmul.f32 %v4753, 1.442695
    %v4755 = vpow.pop %v4754
    %v4756 = vmul.f32 %v4755, %v3079
    %v4757 = vsel %vm3441, %v4756, 0.0
    %4758 = vadd.xlane.f32.xlu0 %v4757
    %v4759 = vpop.xlane.xlu0 %4758
    %v4760 = vrcp.pop %v4759
    %v4761 = vmul.f32 %v4756, %v4760
    %v4763 = vsel %vm315, %v4761, 0
    %4765 = vmatpush.msra.mxu0 0.0
    %4766 = vmatpush.msra.mxu0 0.0
    %4767 = vmatpush.msra.mxu0 0.0
    %4768 = vmatpush.msra.mxu0 0.0
    %4769 = vmatpush.msra.mxu0 0.0
    %4770 = vmatpush.msra.mxu0 0.0
    %4771 = vmatpush.msra.mxu0 0.0
    %4772 = vmatpush.msra.mxu0 0.0
    %4773 = vmatpush.msra.mxu0 0.0
    %4774 = vmatpush.msra.mxu0 0.0
    %4775 = vmatpush.msra.mxu0 0.0
    %4776 = vmatpush.msra.mxu0 0.0
    %4777 = vmatpush.msra.mxu0 %v3067
    %4778 = vmatpush.msra.mxu0 %v3066
    %4779 = vmatpush.msra.mxu0 %v3065
    %4780 = vmatpush.msra.mxu0 %v3064
    %4781 = vmatmul.f32.gmra.mxu0 %v4763
    %v4782 = vpop.f32.mrf.mxu0
    %v4783 = vadd.f32 0.0, %v4782
    %4784 = vdwg.mxu0
    %v4786 = vsel %vm315, %v4783, 0
    %4788 = vmatpush.msra.mxu0 0.0
    %4789 = vmatpush.msra.mxu0 0.0
    %4790 = vmatpush.msra.mxu0 0.0
    %4791 = vmatpush.msra.mxu0 0.0
    %4792 = vmatpush.msra.mxu0 0.0
    %4793 = vmatpush.msra.mxu0 0.0
    %4794 = vmatpush.msra.mxu0 0.0
    %4795 = vmatpush.msra.mxu0 0.0
    %4796 = vmatpush.msra.mxu0 0.0
    %4797 = vmatpush.msra.mxu0 0.0
    %4798 = vmatpush.msra.mxu0 0.0
    %4799 = vmatpush.msra.mxu0 0.0
    %4800 = vmatpush.msra.mxu0 %v3087
    %4801 = vmatpush.msra.mxu0 %v3086
    %4802 = vmatpush.msra.mxu0 %v3085
    %4803 = vmatpush.msra.mxu0 %v3084
    %4804 = vmatmul.f32.gmra.mxu0 %v4786
    %v4805 = vpop.f32.mrf.mxu0
    %v4806 = vadd.f32 0.0, %v4805
    %4807 = vdwg.mxu0
    %4808 = vmatpush.msra.mxu0 0.0
    %4809 = vmatpush.msra.mxu0 0.0
    %4810 = vmatpush.msra.mxu0 0.0
    %4811 = vmatpush.msra.mxu0 0.0
    %4812 = vmatpush.msra.mxu0 0.0
    %4813 = vmatpush.msra.mxu0 0.0
    %4814 = vmatpush.msra.mxu0 0.0
    %4815 = vmatpush.msra.mxu0 0.0
    %4816 = vmatpush.msra.mxu0 0.0
    %4817 = vmatpush.msra.mxu0 0.0
    %4818 = vmatpush.msra.mxu0 0.0
    %4819 = vmatpush.msra.mxu0 0.0
    %4820 = vmatpush.msra.mxu0 %v3083
    %4821 = vmatpush.msra.mxu0 %v3082
    %4822 = vmatpush.msra.mxu0 %v3081
    %4823 = vmatpush.msra.mxu0 %v3080
    %4824 = vmatmul.f32.gmra.mxu0 %v4727
    %v4825 = vpop.f32.mrf.mxu0
    %v4826 = vadd.f32 %v4806, %v4825
    %4827 = vdwg.mxu0
    %v4828 = vadd.f32 %v4826, %v3133
    %4829 = vmatpush.msra.mxu0 0.0
    %4830 = vmatpush.msra.mxu0 0.0
    %4831 = vmatpush.msra.mxu0 0.0
    %4832 = vmatpush.msra.mxu0 0.0
    %4833 = vmatpush.msra.mxu0 0.0
    %4834 = vmatpush.msra.mxu0 0.0
    %4835 = vmatpush.msra.mxu0 0.0
    %4836 = vmatpush.msra.mxu0 0.0
    %4837 = vmatpush.msra.mxu0 0.0
    %4838 = vmatpush.msra.mxu0 0.0
    %4839 = vmatpush.msra.mxu0 0.0
    %4840 = vmatpush.msra.mxu0 0.0
    %4841 = vmatpush.msra.mxu0 %v3145
    %4842 = vmatpush.msra.mxu0 %v3144
    %4843 = vmatpush.msra.mxu0 %v3143
    %4844 = vmatpush.msra.mxu0 %v3142
    %4845 = vmatmul.f32.gmra.mxu0 %v4786
    %v4846 = vpop.f32.mrf.mxu0
    %v4847 = vadd.f32 0.0, %v4846
    %4848 = vdwg.mxu0
    %4849 = vmatpush.msra.mxu0 0.0
    %4850 = vmatpush.msra.mxu0 0.0
    %4851 = vmatpush.msra.mxu0 0.0
    %4852 = vmatpush.msra.mxu0 0.0
    %4853 = vmatpush.msra.mxu0 0.0
    %4854 = vmatpush.msra.mxu0 0.0
    %4855 = vmatpush.msra.mxu0 0.0
    %4856 = vmatpush.msra.mxu0 0.0
    %4857 = vmatpush.msra.mxu0 0.0
    %4858 = vmatpush.msra.mxu0 0.0
    %4859 = vmatpush.msra.mxu0 0.0
    %4860 = vmatpush.msra.mxu0 0.0
    %4861 = vmatpush.msra.mxu0 %v3140
    %4862 = vmatpush.msra.mxu0 %v3139
    %4863 = vmatpush.msra.mxu0 %v3138
    %4864 = vmatpush.msra.mxu0 %v3137
    %4865 = vmatmul.f32.gmra.mxu0 %v4727
    %v4866 = vpop.f32.mrf.mxu0
    %v4867 = vadd.f32 %v4847, %v4866
    %4868 = vdwg.mxu0
    %v4869 = vadd.f32 %v4867, %v3189
    %4870 = vmatpush.msra.mxu0 0.0
    %4871 = vmatpush.msra.mxu0 0.0
    %4872 = vmatpush.msra.mxu0 0.0
    %4873 = vmatpush.msra.mxu0 0.0
    %4874 = vmatpush.msra.mxu0 0.0
    %4875 = vmatpush.msra.mxu0 0.0
    %4876 = vmatpush.msra.mxu0 0.0
    %4877 = vmatpush.msra.mxu0 0.0
    %4878 = vmatpush.msra.mxu0 0.0
    %4879 = vmatpush.msra.mxu0 0.0
    %4880 = vmatpush.msra.mxu0 0.0
    %4881 = vmatpush.msra.mxu0 0.0
    %4882 = vmatpush.msra.mxu0 %v3201
    %4883 = vmatpush.msra.mxu0 %v3200
    %4884 = vmatpush.msra.mxu0 %v3199
    %4885 = vmatpush.msra.mxu0 %v3198
    %4886 = vmatmul.f32.gmra.mxu0 %v4786
    %v4887 = vpop.f32.mrf.mxu0
    %v4888 = vadd.f32 0.0, %v4887
    %4889 = vdwg.mxu0
    %4890 = vmatpush.msra.mxu0 0.0
    %4891 = vmatpush.msra.mxu0 0.0
    %4892 = vmatpush.msra.mxu0 0.0
    %4893 = vmatpush.msra.mxu0 0.0
    %4894 = vmatpush.msra.mxu0 0.0
    %4895 = vmatpush.msra.mxu0 0.0
    %4896 = vmatpush.msra.mxu0 0.0
    %4897 = vmatpush.msra.mxu0 0.0
    %4898 = vmatpush.msra.mxu0 0.0
    %4899 = vmatpush.msra.mxu0 0.0
    %4900 = vmatpush.msra.mxu0 0.0
    %4901 = vmatpush.msra.mxu0 0.0
    %4902 = vmatpush.msra.mxu0 %v3196
    %4903 = vmatpush.msra.mxu0 %v3195
    %4904 = vmatpush.msra.mxu0 %v3194
    %4905 = vmatpush.msra.mxu0 %v3193
    %4906 = vmatmul.f32.gmra.mxu0 %v4727
    %v4907 = vpop.f32.mrf.mxu0
    %v4908 = vadd.f32 %v4888, %v4907
    %4909 = vdwg.mxu0
    %v4910 = vadd.f32 %v4908, %v3245
    %4911 = vmatpush.msra.mxu0 0.0
    %4912 = vmatpush.msra.mxu0 0.0
    %4913 = vmatpush.msra.mxu0 0.0
    %4914 = vmatpush.msra.mxu0 0.0
    %4915 = vmatpush.msra.mxu0 0.0
    %4916 = vmatpush.msra.mxu0 0.0
    %4917 = vmatpush.msra.mxu0 0.0
    %4918 = vmatpush.msra.mxu0 0.0
    %4919 = vmatpush.msra.mxu0 0.0
    %4920 = vmatpush.msra.mxu0 0.0
    %4921 = vmatpush.msra.mxu0 0.0
    %4922 = vmatpush.msra.mxu0 0.0
    %4923 = vmatpush.msra.mxu0 %v3257
    %4924 = vmatpush.msra.mxu0 %v3256
    %4925 = vmatpush.msra.mxu0 %v3255
    %4926 = vmatpush.msra.mxu0 %v3254
    %4927 = vmatmul.f32.gmra.mxu0 %v4786
    %v4928 = vpop.f32.mrf.mxu0
    %v4929 = vadd.f32 0.0, %v4928
    %4930 = vdwg.mxu0
    %4931 = vmatpush.msra.mxu0 0.0
    %4932 = vmatpush.msra.mxu0 0.0
    %4933 = vmatpush.msra.mxu0 0.0
    %4934 = vmatpush.msra.mxu0 0.0
    %4935 = vmatpush.msra.mxu0 0.0
    %4936 = vmatpush.msra.mxu0 0.0
    %4937 = vmatpush.msra.mxu0 0.0
    %4938 = vmatpush.msra.mxu0 0.0
    %4939 = vmatpush.msra.mxu0 0.0
    %4940 = vmatpush.msra.mxu0 0.0
    %4941 = vmatpush.msra.mxu0 0.0
    %4942 = vmatpush.msra.mxu0 0.0
    %4943 = vmatpush.msra.mxu0 %v3252
    %4944 = vmatpush.msra.mxu0 %v3251
    %4945 = vmatpush.msra.mxu0 %v3250
    %4946 = vmatpush.msra.mxu0 %v3249
    %4947 = vmatmul.f32.gmra.mxu0 %v4727
    %v4948 = vpop.f32.mrf.mxu0
    %v4949 = vadd.f32 %v4929, %v4948
    %4950 = vdwg.mxu0
    %v4951 = vadd.f32 %v4949, %v3301
    %v4952 = vsub.f32 0.0, %v4869
    %v4953 = vmul.f32 %v4952, 1.442695
    %v4954 = vpow.pop %v4953
    %v4955 = vadd.f32 %v4954, 1.0
    %v4956 = vrcp.pop %v4955
    %v4957 = vmul.f32 %v4955, %v4956
    %v4958 = vsub.f32 1.0, %v4957
    %v4959 = vmul.f32 %v4956, %v4958
    %v4960 = vadd.f32 %v4956, %v4959
    %vm4961 = vweird.f32 %v4955
    %vm4962 = vweird.f32 %v4956
    %vm4963 = vmor %vm4961, %vm4962
    %v4964 = vsel %vm4963, %v4956, %v4960
    %v4965 = vand.u32 2147483647, %v4955
    %vm4966 = vcmp.eq.f32.partialorder %v4965, 8.507059e+37
    %v4967 = vand.u32 %v4955, 2147483648
    %v4968 = vor.u32 1.1754944e-38, %v4967
    %v4969 = vsel %vm4966, %v4968, %v4964
    %v4970 = vmul.f32 1.0, %v4969
    %v4971 = vmul.f32 %v4970, %v4685
    %v4972 = vsub.f32 0.0, %v4828
    %v4973 = vmul.f32 %v4972, 1.442695
    %v4974 = vpow.pop %v4973
    %v4975 = vadd.f32 %v4974, 1.0
    %v4976 = vrcp.pop %v4975
    %v4977 = vmul.f32 %v4975, %v4976
    %v4978 = vsub.f32 1.0, %v4977
    %v4979 = vmul.f32 %v4976, %v4978
    %v4980 = vadd.f32 %v4976, %v4979
    %vm4981 = vweird.f32 %v4975
    %vm4982 = vweird.f32 %v4976
    %vm4983 = vmor %vm4981, %vm4982
    %v4984 = vsel %vm4983, %v4976, %v4980
    %v4985 = vand.u32 2147483647, %v4975
    %vm4986 = vcmp.eq.f32.partialorder %v4985, 8.507059e+37
    %v4987 = vand.u32 %v4975, 2147483648
    %v4988 = vor.u32 1.1754944e-38, %v4987
    %v4989 = vsel %vm4986, %v4988, %v4984
    %v4990 = vmul.f32 1.0, %v4989
    %v4991 = vmul.f32 %v4910, -2.0
    %v4992 = vmul.f32 %v4991, 1.442695
    %v4993 = vpow.pop %v4992
    %v4994 = vadd.f32 %v4993, 1.0
    %v4995 = vrcp.pop %v4994
    %v4996 = vmul.f32 %v4994, %v4995
    %v4997 = vsub.f32 1.0, %v4996
    %v4998 = vmul.f32 %v4995, %v4997
    %v4999 = vadd.f32 %v4995, %v4998
    %vm5000 = vweird.f32 %v4994
    %vm5001 = vweird.f32 %v4995
    %vm5002 = vmor %vm5000, %vm5001
    %v5003 = vsel %vm5002, %v4995, %v4999
    %v5004 = vand.u32 2147483647, %v4994
    %vm5005 = vcmp.eq.f32.partialorder %v5004, 8.507059e+37
    %v5006 = vand.u32 %v4994, 2147483648
    %v5007 = vor.u32 1.1754944e-38, %v5006
    %v5008 = vsel %vm5005, %v5007, %v5003
    %v5009 = vmul.f32 2.0, %v5008
    %v5010 = vsub.f32 %v5009, 1.0
    %v5011 = vmul.f32 %v4990, %v5010
    %v5012 = vadd.f32 %v4971, %v5011
    %v5013 = vsub.f32 0.0, %v4951
    %v5014 = vmul.f32 %v5013, 1.442695
    %v5015 = vpow.pop %v5014
    %v5016 = vadd.f32 %v5015, 1.0
    %v5017 = vrcp.pop %v5016
    %v5018 = vmul.f32 %v5016, %v5017
    %v5019 = vsub.f32 1.0, %v5018
    %v5020 = vmul.f32 %v5017, %v5019
    %v5021 = vadd.f32 %v5017, %v5020
    %vm5022 = vweird.f32 %v5016
    %vm5023 = vweird.f32 %v5017
    %vm5024 = vmor %vm5022, %vm5023
    %v5025 = vsel %vm5024, %v5017, %v5021
    %v5026 = vand.u32 2147483647, %v5016
    %vm5027 = vcmp.eq.f32.partialorder %v5026, 8.507059e+37
    %v5028 = vand.u32 %v5016, 2147483648
    %v5029 = vor.u32 1.1754944e-38, %v5028
    %v5030 = vsel %vm5027, %v5029, %v5025
    %v5031 = vmul.f32 1.0, %v5030
    %v5032 = vmul.f32 %v5012, -2.0
    %v5033 = vmul.f32 %v5032, 1.442695
    %v5034 = vpow.pop %v5033
    %v5035 = vadd.f32 %v5034, 1.0
    %v5036 = vrcp.pop %v5035
    %v5037 = vmul.f32 %v5035, %v5036
    %v5038 = vsub.f32 1.0, %v5037
    %v5039 = vmul.f32 %v5036, %v5038
    %v5040 = vadd.f32 %v5036, %v5039
    %vm5041 = vweird.f32 %v5035
    %vm5042 = vweird.f32 %v5036
    %vm5043 = vmor %vm5041, %vm5042
    %v5044 = vsel %vm5043, %v5036, %v5040
    %v5045 = vand.u32 2147483647, %v5035
    %vm5046 = vcmp.eq.f32.partialorder %v5045, 8.507059e+37
    %v5047 = vand.u32 %v5035, 2147483648
    %v5048 = vor.u32 1.1754944e-38, %v5047
    %v5049 = vsel %vm5046, %v5048, %v5044
    %v5050 = vmul.f32 2.0, %v5049
    %v5051 = vsub.f32 %v5050, 1.0
    %v5052 = vmul.f32 %v5031, %v5051
    %v5054 = vsel %vm315, %v5052, 0
    %5056 = vmatpush.xpose.msra.mxu0 0.0
    %5057 = vmatpush.xpose.msra.mxu0 0.0
    %5058 = vmatpush.xpose.msra.mxu0 0.0
    %5059 = vmatpush.xpose.msra.mxu0 0.0
    %5060 = vmatpush.xpose.msra.mxu0 0.0
    %5061 = vmatpush.xpose.msra.mxu0 0.0
    %5062 = vmatpush.xpose.msra.mxu0 0.0
    %5063 = vmatpush.xpose.msra.mxu0 0.0
    %5064 = vmatpush.xpose.msra.mxu0 0.0
    %5065 = vmatpush.xpose.msra.mxu0 0.0
    %5066 = vmatpush.xpose.msra.mxu0 0.0
    %5067 = vmatpush.xpose.msra.mxu0 0.0
    %5068 = vmatpush.xpose.msra.mxu0 %v3418
    %5069 = vmatpush.xpose.msra.mxu0 %v3415
    %5070 = vmatpush.xpose.msra.mxu0 %v3412
    %5071 = vmatpush.xpose.msra.mxu0 %v3409
    %5072 = vmatmul.f32.gmra.mxu0 %v5054
    %v5073 = vpop.f32.mrf.mxu0
    %v5074 = vadd.f32 0.0, %v5073
    %5075 = vdwg.mxu0
    %v5076 = vsel %vm3077, %v5074, -1e+30
    %v5077 = vsel %vm3441, %v5076, -inf
    %5078 = vmax.xlane.f32.xlu0 %v5077
    %v5079 = vpop.xlane.xlu0 %5078
    %v5080 = vsub.f32 %v5076, %v5079
    %v5081 = vmul.f32 %v5080, 1.442695
    %v5082 = vpow.pop %v5081
    %v5083 = vmul.f32 %v5082, %v3079
    %v5084 = vsel %vm3441, %v5083, 0.0
    %5085 = vadd.xlane.f32.xlu0 %v5084
    %v5086 = vpop.xlane.xlu0 %5085
    %v5087 = vrcp.pop %v5086
    %v5088 = vmul.f32 %v5083, %v5087
    %v5090 = vsel %vm315, %v5088, 0
    %5092 = vmatpush.msra.mxu0 0.0
    %5093 = vmatpush.msra.mxu0 0.0
    %5094 = vmatpush.msra.mxu0 0.0
    %5095 = vmatpush.msra.mxu0 0.0
    %5096 = vmatpush.msra.mxu0 0.0
    %5097 = vmatpush.msra.mxu0 0.0
    %5098 = vmatpush.msra.mxu0 0.0
    %5099 = vmatpush.msra.mxu0 0.0
    %5100 = vmatpush.msra.mxu0 0.0
    %5101 = vmatpush.msra.mxu0 0.0
    %5102 = vmatpush.msra.mxu0 0.0
    %5103 = vmatpush.msra.mxu0 0.0
    %5104 = vmatpush.msra.mxu0 %v3067
    %5105 = vmatpush.msra.mxu0 %v3066
    %5106 = vmatpush.msra.mxu0 %v3065
    %5107 = vmatpush.msra.mxu0 %v3064
    %5108 = vmatmul.f32.gmra.mxu0 %v5090
    %v5109 = vpop.f32.mrf.mxu0
    %v5110 = vadd.f32 0.0, %v5109
    %5111 = vdwg.mxu0
    %v5112 = vld [vmem:[%s20] sm:$0xff]
    %v5113 = vld [vmem:[%s20 + $0x8] sm:$0xff]
    %v5114 = vld [vmem:[%s20 + $0x10] sm:$0xff]
    %v5115 = vld [vmem:[%s20 + $0x18] sm:$0xff]
    %v5116 = vld [vmem:[%s21] sm:$0xff]
    %v5117 = vld [vmem:[%s21 + $0x8] sm:$0xff]
    %v5118 = vld [vmem:[%s21 + $0x10] sm:$0xff]
    %v5119 = vld [vmem:[%s21 + $0x18] sm:$0xff]
    %v5121 = vsel %vm315, %v5110, 0
    %5123 = vmatpush.msra.mxu0 0.0
    %5124 = vmatpush.msra.mxu0 0.0
    %5125 = vmatpush.msra.mxu0 0.0
    %5126 = vmatpush.msra.mxu0 0.0
    %5127 = vmatpush.msra.mxu0 0.0
    %5128 = vmatpush.msra.mxu0 0.0
    %5129 = vmatpush.msra.mxu0 0.0
    %5130 = vmatpush.msra.mxu0 0.0
    %5131 = vmatpush.msra.mxu0 0.0
    %5132 = vmatpush.msra.mxu0 0.0
    %5133 = vmatpush.msra.mxu0 0.0
    %5134 = vmatpush.msra.mxu0 0.0
    %5135 = vmatpush.msra.mxu0 %v5119
    %5136 = vmatpush.msra.mxu0 %v5118
    %5137 = vmatpush.msra.mxu0 %v5117
    %5138 = vmatpush.msra.mxu0 %v5116
    %5139 = vmatmul.f32.gmra.mxu0 %v5121
    %v5140 = vpop.f32.mrf.mxu0
    %v5141 = vadd.f32 0.0, %v5140
    %5142 = vdwg.mxu0
    %5143 = vmatpush.msra.mxu0 0.0
    %5144 = vmatpush.msra.mxu0 0.0
    %5145 = vmatpush.msra.mxu0 0.0
    %5146 = vmatpush.msra.mxu0 0.0
    %5147 = vmatpush.msra.mxu0 0.0
    %5148 = vmatpush.msra.mxu0 0.0
    %5149 = vmatpush.msra.mxu0 0.0
    %5150 = vmatpush.msra.mxu0 0.0
    %5151 = vmatpush.msra.mxu0 0.0
    %5152 = vmatpush.msra.mxu0 0.0
    %5153 = vmatpush.msra.mxu0 0.0
    %5154 = vmatpush.msra.mxu0 0.0
    %5155 = vmatpush.msra.mxu0 %v5115
    %5156 = vmatpush.msra.mxu0 %v5114
    %5157 = vmatpush.msra.mxu0 %v5113
    %5158 = vmatpush.msra.mxu0 %v5112
    %5159 = vmatmul.f32.gmra.mxu0 %v5054
    %v5160 = vpop.f32.mrf.mxu0
    %v5161 = vadd.f32 %v5141, %v5160
    %5162 = vdwg.mxu0
    %v5163 = vld [vmem:[%s22] sm:$0x1]
    %v5165 = vperm.slane %v5163, 0
    %v5167 = vadd.f32 %v5161, %v5165
    %v5168 = vmax.f32 %v5167, 0.0
    %v5169 = vld [vmem:[%s23] sm:$0xff]
    %v5170 = vld [vmem:[%s23 + $0x8] sm:$0xff]
    %v5171 = vld [vmem:[%s23 + $0x10] sm:$0xff]
    %v5172 = vld [vmem:[%s23 + $0x18] sm:$0xff]
    %v5173 = vld [vmem:[%s24] sm:$0x1]
    %v5175 = vperm.slane %v5173, 0
    %v5178 = vsel %vm315, %v5168, 0
    %5180 = vmatpush.msra.mxu0 0.0
    %5181 = vmatpush.msra.mxu0 0.0
    %5182 = vmatpush.msra.mxu0 0.0
    %5183 = vmatpush.msra.mxu0 0.0
    %5184 = vmatpush.msra.mxu0 0.0
    %5185 = vmatpush.msra.mxu0 0.0
    %5186 = vmatpush.msra.mxu0 0.0
    %5187 = vmatpush.msra.mxu0 0.0
    %5188 = vmatpush.msra.mxu0 0.0
    %5189 = vmatpush.msra.mxu0 0.0
    %5190 = vmatpush.msra.mxu0 0.0
    %5191 = vmatpush.msra.mxu0 0.0
    %5192 = vmatpush.msra.mxu0 %v5172
    %5193 = vmatpush.msra.mxu0 %v5171
    %5194 = vmatpush.msra.mxu0 %v5170
    %5195 = vmatpush.msra.mxu0 %v5169
    %5196 = vmatmul.f32.gmra.mxu0 %v5178
    %v5197 = vpop.f32.mrf.mxu0
    %v5198 = vadd.f32 %v5175, %v5197
    %5199 = vdwg.mxu0
    %vm5200 = vcmask 123904
    %5201 = vst.msk [vmem:[#allocation25] sm:$0x3] %vm5200, %v5198
    // Predicated region
    $region158: #{netgin_forward.1} parent=1 // pred_check
      _
    $region159: #{netgin_forward.1} parent=1 // pred_check_branch
      %5203 = sbr.rel (0) target = $region161
    $region160: #{netgin_forward.1} parent=1 // pred_region
      %5205 = vsyncadd [#allocation4], 0
      %s5207 = sshll.u32 [#allocation25], 4
      %s5208 = int_to_ptr.vmem [resolvable:$true] %s5207
      %s5209 = sshll.u32 %s25, 4
      %s5210 = int_to_ptr.hbm [resolvable:$true] %s5209
      %5212 = dma.vmem_to_hbm [thread:$0]  %s5208, 32, %s5210, [#allocation4]
    $region161: #{netgin_forward.1} parent=1 // pred_fallthru
      _
    // Predicated region
    $region162: #{netgin_forward.1} parent=1 // pred_check
      _
    $region163: #{netgin_forward.1} parent=1 // pred_check_branch
      %5214 = sbr.rel (0) target = $region165
    $region164: #{netgin_forward.1} parent=1 // pred_region
      %5216 = dma.done [#allocation4], 32
    $region165: #{netgin_forward.1} parent=1 // pred_fallthru
      _
    %5217 = vsyncpa [#allocation3], 1
    %5218 = vsyncpa [#allocation8], 1
    %5219 = vsyncpa [#allocation11], 1
    %5220 = vsyncpa [#allocation14], 1
    %5221 = vsyncpa [#allocation17], 1
    %5222 = vsyncpa [#allocation20], 1
    %5223 = vsyncpa [#allocation23], 1
    %5224 = vsyncpa [#allocation4], 1
    %5225 = vsyncpa [#allocation5], 1

</llo_original>
